<compile_context>
chip_gen: v6e
topology: v6e:2x2x1
jax: 0.10.0
libtpu: 0.0.40
codegen_flags: <defaults>
</compile_context>

<pallas_src>
import math

import jax
import jax.numpy as jnp
from jax import lax
from jax.experimental import pallas as pl
from jax.experimental.pallas import tpu as pltpu


# ------------------------------ fused kernel --------------------------------

def cnn_fused_kernel(x_ref, w1_ref, b1_ref, w2_ref, b2_ref,
                     w3_ref, b3_ref, w4_ref, b4_ref, o_ref,
                     c1_s, p1_s, im_s, c2_s, f_s):
    f32 = jnp.float32
    bf16 = jnp.bfloat16

    # ---- conv1 (1 -> 32, 3x3, pad 1) + ReLU --------------------------------
    # Row-flat layout: c1_s row = h*30 + w (h in [0,28), w in [0,30); w>=28 is
    # junk, never read by pool1).  Input is replicated over the 32 lanes, so
    # each tap is a full-rate VPU FMA; 168-row chunks keep the acc spill-free.
    b1 = b1_ref[...]
    for r0 in range(0, 840, 168):
        acc = jnp.zeros((168, 32), f32)
        for kh in range(3):
            for kw in range(3):
                t = kh * 3 + kw
                off = r0 + kh * 30 + kw
                acc = acc + x_ref[0, off:off + 168, :] * w1_ref[t:t + 1, :]
        c1_s[r0:r0 + 168, :] = jnp.maximum(acc + b1, 0.0)

    # ---- maxpool1 2x2 -> zero halo scratch, sublane-aligned stores ---------
    # pool1 pixel (h, w) -> p1_s row (h+2)*16 + w.  Every row this loop does
    # not touch stays zero and provides the conv2 halo:
    #   padded (hp, wp) <-> p1_s row (hp+1)*16 + wp - 1   (hp, wp in [0,16)).
    p1_s[...] = jnp.zeros(p1_s.shape, f32)
    for ho in range(14):
        r = None
        for dh in range(2):
            for dw in range(2):
                v = c1_s[pl.ds((2 * ho + dh) * 30 + dw, 14, stride=2), :]
                r = v if r is None else jnp.maximum(r, v)
        p1_s[(ho + 2) * 16:(ho + 2) * 16 + 14, :] = r

    # ---- conv2 (32 -> 64, 3x3, pad 1) + ReLU: im2col + bf16 MXU matmuls ----
    # Output row = oh*16 + ow (oh in [0,14), ow in [0,16); ow>=14 junk).  The
    # nine shifted (224,32) windows are lane-concatenated into a (224,288)
    # bf16 slab and contracted against (288,64) bf16 weights (f32 accumulate).
    for kh in range(3):
        for kw in range(3):
            t = kh * 3 + kw
            off = kh * 16 + kw + 15                       # new aligned-halo origin
            im_s[:, t * 32:(t + 1) * 32] = p1_s[off:off + 224, :].astype(bf16)
    w2 = w2_ref[...]
    b2 = b2_ref[...]
    for r0 in (0, 112):                                    # 2 chunks bound vregs
        acc2 = jnp.dot(im_s[r0:r0 + 112, :], w2, preferred_element_type=f32)
        c2_s[r0:r0 + 112, :] = jnp.maximum(acc2 + b2, 0.0)

    # ---- maxpool2 2x2, stored flatten-ready: f_s[wo, ho*64 + c] ------------
    # One aligned (7,64) block store per output row instead of 49 scalar-row
    # masked stores; the fc1 weight permutation (host-side) absorbs the order.
    for ho in range(7):
        r = None
        for dh in range(2):
            for dw in range(2):
                v = c2_s[pl.ds((2 * ho + dh) * 16 + dw, 7, stride=2), :]
                r = v if r is None else jnp.maximum(r, v)
        f_s[0:7, ho * 64:(ho + 1) * 64] = r

    # ---- fc1 + ReLU (+ eval-mode dropout) + fc2 ----------------------------
    # fc1 = 7 accumulated MXU dots (one per wo row of f_s, K=448, f32 acc), so
    # no in-kernel flatten relayout is ever materialized.
    h = b3_ref[...]
    for wo in range(7):
        h = h + jnp.dot(f_s[wo:wo + 1, :].astype(bf16), w3_ref[wo],
                        preferred_element_type=f32)
    h = jnp.maximum(h, 0.0)
    # TODO(synk): nn.Dropout(0.5) is eval-mode identity here (no torch RNG match).
    y = jnp.dot(h.astype(bf16), w4_ref[...], preferred_element_type=f32)
    o_ref[0] = (y + b4_ref[...]).astype(o_ref.dtype)


# ------------------------------ JAX wrapper ----------------------------------

def cnn_forward(x_nchw, p):
    B = x_nchw.shape[0]
    # Zero-pad 28x28 -> 30x30, flatten row-major, pad rows to 904 so every
    # shifted 168-row window stays in bounds, then replicate across the 32
    # conv1 output-channel lanes (~116 KB/image of HBM DMA, fully hidden).
    xp = jnp.pad(x_nchw[:, 0], ((0, 0), (1, 1), (1, 1)))            # (B,30,30)
    xflat = jnp.pad(xp.reshape(B, 900), ((0, 0), (0, 4)))           # (B,904)
    xrep = jnp.broadcast_to(xflat[:, :, None], (B, 904, 32))

    flops = B * (2 * 840 * 32 * 9 + 2 * 224 * 288 * 64
                 + 2 * 3136 * 128 + 2 * 128 * 128)
    bytes_accessed = (xrep.size * 4
                      + p["conv1_wmat"].size * 4 + 32 * 4
                      + p["conv2_wmat"].size * 2 + 64 * 4
                      + p["fc1_wP"].size * 2 + 128 * 4
                      + p["fc2_wP"].size * 2 + 128 * 4
                      + B * 128 * 4)

    out = pl.pallas_call(
        cnn_fused_kernel,
        out_shape=jax.ShapeDtypeStruct((B, 1, 128), jnp.float32),
        grid=(B,),
        in_specs=[
            pl.BlockSpec((1, 904, 32), lambda b: (b, 0, 0)),   # replicated image
            pl.BlockSpec((9, 32), lambda b: (0, 0)),           # conv1 weights f32
            pl.BlockSpec((1, 32), lambda b: (0, 0)),           # conv1 bias
            pl.BlockSpec((288, 64), lambda b: (0, 0)),         # conv2 weights bf16
            pl.BlockSpec((1, 64), lambda b: (0, 0)),           # conv2 bias
            pl.BlockSpec((7, 448, 128), lambda b: (0, 0, 0)),  # fc1 weights bf16
            pl.BlockSpec((1, 128), lambda b: (0, 0)),          # fc1 bias
            pl.BlockSpec((128, 128), lambda b: (0, 0)),        # fc2 weights bf16
            pl.BlockSpec((1, 128), lambda b: (0, 0)),          # fc2 bias (padded)
        ],
        out_specs=pl.BlockSpec((1, 1, 128), lambda b: (b, 0, 0)),
        scratch_shapes=[
            pltpu.VMEM((840, 32), jnp.float32),    # conv1+relu (row-flat)
            pltpu.VMEM((280, 32), jnp.float32),    # pool1 + aligned zero halo
            pltpu.VMEM((224, 288), jnp.bfloat16),  # conv2 im2col slab
            pltpu.VMEM((224, 64), jnp.float32),    # conv2+relu (row-flat)
            pltpu.VMEM((8, 448), jnp.float32),     # pool2, flatten-ready rows
        ],
        compiler_params=pltpu.CompilerParams(dimension_semantics=("parallel",)),
        cost_estimate=pl.CostEstimate(flops=flops, transcendentals=0,
                                      bytes_accessed=bytes_accessed),
    )(xrep, p["conv1_wmat"], p["conv1_b2"], p["conv2_wmat"], p["conv2_b2"],
      p["fc1_wP"], p["fc1_b2"], p["fc2_wP"], p["fc2_b2"])
    return out.reshape(B, 128)[:, :10]


# ------------------------------ pure-JAX reference ---------------------------

def cnn_reference(x_nchw, p):
    dn = ("NCHW", "OIHW", "NCHW")
    y = lax.conv_general_dilated(x_nchw, p["conv1_w"], (1, 1), ((1, 1), (1, 1)),
                                 dimension_numbers=dn)
    y = jax.nn.relu(y + p["conv1_b"][None, :, None, None])
    y = lax.reduce_window(y, -jnp.inf, lax.max, (1, 1, 2, 2), (1, 1, 2, 2), "VALID")
    y = lax.conv_general_dilated(y, p["conv2_w"], (1, 1), ((1, 1), (1, 1)),
                                 dimension_numbers=dn)
    y = jax.nn.relu(y + p["conv2_b"][None, :, None, None])
    y = lax.reduce_window(y, -jnp.inf, lax.max, (1, 1, 2, 2), (1, 1, 2, 2), "VALID")
    y = y.reshape(y.shape[0], -1)
    y = jax.nn.relu(y @ p["fc1_w"].T + p["fc1_b"])
    y = y @ p["fc2_w"].T + p["fc2_b"]
    return y


# ------------------------------------ main -----------------------------------

def _uniform(key, shape, fan_in):
    bound = 1.0 / math.sqrt(fan_in)
    return jax.random.uniform(key, shape, jnp.float32, -bound, bound)


if __name__ == "__main__":
    key = jax.random.PRNGKey(0)
    ks = jax.random.split(key, 9)

    # Deterministic synthetic parameters (PyTorch-shaped).
    conv1_w = _uniform(ks[0], (32, 1, 3, 3), 1 * 9)
    conv1_b = _uniform(ks[1], (32,), 1 * 9)
    conv2_w = _uniform(ks[2], (64, 32, 3, 3), 32 * 9)
    conv2_b = _uniform(ks[3], (64,), 32 * 9)
    fc1_w = _uniform(ks[4], (128, 7 * 7 * 64), 7 * 7 * 64)
    fc1_b = _uniform(ks[5], (128,), 7 * 7 * 64)
    fc2_w = _uniform(ks[6], (10, 128), 128)
    fc2_b = _uniform(ks[7], (10,), 128)

    params = {
        # torch-shaped originals (used by the pure-JAX reference)
        "conv1_w": conv1_w, "conv1_b": conv1_b,
        "conv2_w": conv2_w, "conv2_b": conv2_b,
        "fc1_w": fc1_w, "fc1_b": fc1_b,
        "fc2_w": fc2_w, "fc2_b": fc2_b,
        # conv weights flattened to (kh, kw, cin, cout) to match the kernel's
        # shifted-window / im2col tap order.
        "conv1_wmat": jnp.transpose(conv1_w, (2, 3, 1, 0)).reshape(9, 32),
        "conv1_b2": conv1_b.reshape(1, 32),
        "conv2_wmat": jnp.transpose(conv2_w, (2, 3, 1, 0)).reshape(288, 64)
                         .astype(jnp.bfloat16),
        "conv2_b2": conv2_b.reshape(1, 64),
        # fc1 weights pre-permuted to W[wo, ho*64 + c, j] so the kernel's
        # flatten-free (7 x K=448) accumulation matches torch's NCHW view(B,-1).
        "fc1_wP": fc1_w.reshape(128, 64, 7, 7).transpose(3, 2, 1, 0)
                       .reshape(7, 7 * 64, 128).astype(jnp.bfloat16),
        "fc1_b2": fc1_b.reshape(1, 128),
        # fc2 padded to a lane-dense (128,128)/(1,128) path; logits sliced outside.
        "fc2_wP": jnp.pad(fc2_w.T, ((0, 0), (0, 118))).astype(jnp.bfloat16),
        "fc2_b2": jnp.pad(fc2_b, (0, 118)).reshape(1, 128),
    }

    # Input: the module's flatten (64*7*7) implies 28x28 spatial; small batch=2.
    x = jax.random.normal(ks[8], (2, 1, 28, 28), jnp.float32)

    out = jax.jit(cnn_forward)(x, params)
    out = jax.block_until_ready(out)

    ref = cnn_reference(x, params)
    assert out.shape == (2, 10), out.shape
    assert bool(jnp.all(jnp.isfinite(out)))
    max_err = float(jnp.max(jnp.abs(out - ref)))
    assert bool(jnp.allclose(out, ref, rtol=5e-2, atol=5e-2)), max_err

    print("KERNEL_OK")
</pallas_src>

<mosaic_0001>
module attributes {stable_mosaic.version = 11 : i64} {
  func.func @cnn_fused_kernel(%arg0: i32, %arg1: memref<1x904x32xf32, #tpu.memory_space<vmem>>, %arg2: memref<9x32xf32, #tpu.memory_space<vmem>>, %arg3: memref<1x32xf32, #tpu.memory_space<vmem>>, %arg4: memref<288x64xbf16, #tpu.memory_space<vmem>>, %arg5: memref<1x64xf32, #tpu.memory_space<vmem>>, %arg6: memref<7x448x128xbf16, #tpu.memory_space<vmem>>, %arg7: memref<1x128xf32, #tpu.memory_space<vmem>>, %arg8: memref<128x128xbf16, #tpu.memory_space<vmem>>, %arg9: memref<1x128xf32, #tpu.memory_space<vmem>>, %arg10: memref<1x1x128xf32, #tpu.memory_space<vmem>>, %arg11: memref<840x32xf32, #tpu.memory_space<vmem>>, %arg12: memref<280x32xf32, #tpu.memory_space<vmem>>, %arg13: memref<224x288xbf16, #tpu.memory_space<vmem>>, %arg14: memref<224x64xf32, #tpu.memory_space<vmem>>, %arg15: memref<8x448xf32, #tpu.memory_space<vmem>>) attributes {dimension_semantics = [#tpu.dimension_semantics<parallel>], iteration_bounds = array<i64: 2>, scalar_prefetch = 0 : i64, scratch_operands = 5 : i64, tpu.core_type = #tpu.core_type<tc>, window_params = [{transform_indices = @transform_0, window_bounds = array<i64: 1, 904, 32>}, {pipeline_mode = #tpu.pipeline_mode<synchronous>, transform_indices = @transform_1, window_bounds = array<i64: 9, 32>}, {pipeline_mode = #tpu.pipeline_mode<synchronous>, transform_indices = @transform_2, window_bounds = array<i64: 1, 32>}, {pipeline_mode = #tpu.pipeline_mode<synchronous>, transform_indices = @transform_3, window_bounds = array<i64: 288, 64>}, {pipeline_mode = #tpu.pipeline_mode<synchronous>, transform_indices = @transform_4, window_bounds = array<i64: 1, 64>}, {pipeline_mode = #tpu.pipeline_mode<synchronous>, transform_indices = @transform_5, window_bounds = array<i64: 7, 448, 128>}, {pipeline_mode = #tpu.pipeline_mode<synchronous>, transform_indices = @transform_6, window_bounds = array<i64: 1, 128>}, {pipeline_mode = #tpu.pipeline_mode<synchronous>, transform_indices = @transform_7, window_bounds = array<i64: 128, 128>}, {pipeline_mode = #tpu.pipeline_mode<synchronous>, transform_indices = @transform_8, window_bounds = array<i64: 1, 128>}, {transform_indices = @transform_9, window_bounds = array<i64: 1, 1, 128>}]} {
    %c0 = arith.constant 0 : index
    %c0_0 = arith.constant 0 : index
    %0 = vector.load %arg3[%c0, %c0_0] : memref<1x32xf32, #tpu.memory_space<vmem>>, vector<1x32xf32>
    %cst = arith.constant 0.000000e+00 : f32
    %1 = vector.broadcast %cst : f32 to vector<168x32xf32>
    %c0_1 = arith.constant 0 : index
    %c0_2 = arith.constant 0 : index
    %c0_3 = arith.constant 0 : index
    %2 = vector.load %arg1[%c0_1, %c0_2, %c0_3] : memref<1x904x32xf32, #tpu.memory_space<vmem>>, vector<1x168x32xf32>
    %3 = vector.shape_cast %2 : vector<1x168x32xf32> to vector<168x32xf32>
    %c0_4 = arith.constant 0 : index
    %c0_5 = arith.constant 0 : index
    %4 = vector.load %arg2[%c0_4, %c0_5] : memref<9x32xf32, #tpu.memory_space<vmem>>, vector<1x32xf32>
    %5 = vector.broadcast %4 : vector<1x32xf32> to vector<168x32xf32>
    %6 = arith.mulf %3, %5 : vector<168x32xf32>
    %7 = arith.addf %1, %6 : vector<168x32xf32>
    %c0_6 = arith.constant 0 : index
    %c1 = arith.constant 1 : index
    %c0_7 = arith.constant 0 : index
    %8 = vector.load %arg1[%c0_6, %c1, %c0_7] : memref<1x904x32xf32, #tpu.memory_space<vmem>>, vector<1x168x32xf32>
    %9 = vector.shape_cast %8 : vector<1x168x32xf32> to vector<168x32xf32>
    %c1_8 = arith.constant 1 : index
    %c0_9 = arith.constant 0 : index
    %10 = vector.load %arg2[%c1_8, %c0_9] : memref<9x32xf32, #tpu.memory_space<vmem>>, vector<1x32xf32>
    %11 = vector.broadcast %10 : vector<1x32xf32> to vector<168x32xf32>
    %12 = arith.mulf %9, %11 : vector<168x32xf32>
    %13 = arith.addf %7, %12 : vector<168x32xf32>
    %c0_10 = arith.constant 0 : index
    %c2 = arith.constant 2 : index
    %c0_11 = arith.constant 0 : index
    %14 = vector.load %arg1[%c0_10, %c2, %c0_11] : memref<1x904x32xf32, #tpu.memory_space<vmem>>, vector<1x168x32xf32>
    %15 = vector.shape_cast %14 : vector<1x168x32xf32> to vector<168x32xf32>
    %c2_12 = arith.constant 2 : index
    %c0_13 = arith.constant 0 : index
    %16 = vector.load %arg2[%c2_12, %c0_13] : memref<9x32xf32, #tpu.memory_space<vmem>>, vector<1x32xf32>
    %17 = vector.broadcast %16 : vector<1x32xf32> to vector<168x32xf32>
    %18 = arith.mulf %15, %17 : vector<168x32xf32>
    %19 = arith.addf %13, %18 : vector<168x32xf32>
    %c0_14 = arith.constant 0 : index
    %c30 = arith.constant 30 : index
    %c0_15 = arith.constant 0 : index
    %20 = vector.load %arg1[%c0_14, %c30, %c0_15] : memref<1x904x32xf32, #tpu.memory_space<vmem>>, vector<1x168x32xf32>
    %21 = vector.shape_cast %20 : vector<1x168x32xf32> to vector<168x32xf32>
    %c3 = arith.constant 3 : index
    %c0_16 = arith.constant 0 : index
    %22 = vector.load %arg2[%c3, %c0_16] : memref<9x32xf32, #tpu.memory_space<vmem>>, vector<1x32xf32>
    %23 = vector.broadcast %22 : vector<1x32xf32> to vector<168x32xf32>
    %24 = arith.mulf %21, %23 : vector<168x32xf32>
    %25 = arith.addf %19, %24 : vector<168x32xf32>
    %c0_17 = arith.constant 0 : index
    %c31 = arith.constant 31 : index
    %c0_18 = arith.constant 0 : index
    %26 = vector.load %arg1[%c0_17, %c31, %c0_18] : memref<1x904x32xf32, #tpu.memory_space<vmem>>, vector<1x168x32xf32>
    %27 = vector.shape_cast %26 : vector<1x168x32xf32> to vector<168x32xf32>
    %c4 = arith.constant 4 : index
    %c0_19 = arith.constant 0 : index
    %28 = vector.load %arg2[%c4, %c0_19] : memref<9x32xf32, #tpu.memory_space<vmem>>, vector<1x32xf32>
    %29 = vector.broadcast %28 : vector<1x32xf32> to vector<168x32xf32>
    %30 = arith.mulf %27, %29 : vector<168x32xf32>
    %31 = arith.addf %25, %30 : vector<168x32xf32>
    %c0_20 = arith.constant 0 : index
    %c32 = arith.constant 32 : index
    %c0_21 = arith.constant 0 : index
    %32 = vector.load %arg1[%c0_20, %c32, %c0_21] : memref<1x904x32xf32, #tpu.memory_space<vmem>>, vector<1x168x32xf32>
    %33 = vector.shape_cast %32 : vector<1x168x32xf32> to vector<168x32xf32>
    %c5 = arith.constant 5 : index
    %c0_22 = arith.constant 0 : index
    %34 = vector.load %arg2[%c5, %c0_22] : memref<9x32xf32, #tpu.memory_space<vmem>>, vector<1x32xf32>
    %35 = vector.broadcast %34 : vector<1x32xf32> to vector<168x32xf32>
    %36 = arith.mulf %33, %35 : vector<168x32xf32>
    %37 = arith.addf %31, %36 : vector<168x32xf32>
    %c0_23 = arith.constant 0 : index
    %c60 = arith.constant 60 : index
    %c0_24 = arith.constant 0 : index
    %38 = vector.load %arg1[%c0_23, %c60, %c0_24] : memref<1x904x32xf32, #tpu.memory_space<vmem>>, vector<1x168x32xf32>
    %39 = vector.shape_cast %38 : vector<1x168x32xf32> to vector<168x32xf32>
    %c6 = arith.constant 6 : index
    %c0_25 = arith.constant 0 : index
    %40 = vector.load %arg2[%c6, %c0_25] : memref<9x32xf32, #tpu.memory_space<vmem>>, vector<1x32xf32>
    %41 = vector.broadcast %40 : vector<1x32xf32> to vector<168x32xf32>
    %42 = arith.mulf %39, %41 : vector<168x32xf32>
    %43 = arith.addf %37, %42 : vector<168x32xf32>
    %c0_26 = arith.constant 0 : index
    %c61 = arith.constant 61 : index
    %c0_27 = arith.constant 0 : index
    %44 = vector.load %arg1[%c0_26, %c61, %c0_27] : memref<1x904x32xf32, #tpu.memory_space<vmem>>, vector<1x168x32xf32>
    %45 = vector.shape_cast %44 : vector<1x168x32xf32> to vector<168x32xf32>
    %c7 = arith.constant 7 : index
    %c0_28 = arith.constant 0 : index
    %46 = vector.load %arg2[%c7, %c0_28] : memref<9x32xf32, #tpu.memory_space<vmem>>, vector<1x32xf32>
    %47 = vector.broadcast %46 : vector<1x32xf32> to vector<168x32xf32>
    %48 = arith.mulf %45, %47 : vector<168x32xf32>
    %49 = arith.addf %43, %48 : vector<168x32xf32>
    %c0_29 = arith.constant 0 : index
    %c62 = arith.constant 62 : index
    %c0_30 = arith.constant 0 : index
    %50 = vector.load %arg1[%c0_29, %c62, %c0_30] : memref<1x904x32xf32, #tpu.memory_space<vmem>>, vector<1x168x32xf32>
    %51 = vector.shape_cast %50 : vector<1x168x32xf32> to vector<168x32xf32>
    %c8 = arith.constant 8 : index
    %c0_31 = arith.constant 0 : index
    %52 = vector.load %arg2[%c8, %c0_31] : memref<9x32xf32, #tpu.memory_space<vmem>>, vector<1x32xf32>
    %53 = vector.broadcast %52 : vector<1x32xf32> to vector<168x32xf32>
    %54 = arith.mulf %51, %53 : vector<168x32xf32>
    %55 = arith.addf %49, %54 : vector<168x32xf32>
    %56 = vector.broadcast %0 : vector<1x32xf32> to vector<168x32xf32>
    %57 = arith.addf %55, %56 : vector<168x32xf32>
    %cst_32 = arith.constant 0.000000e+00 : f32
    %58 = vector.broadcast %cst_32 : f32 to vector<168x32xf32>
    %59 = arith.maximumf %57, %58 : vector<168x32xf32>
    %c0_33 = arith.constant 0 : index
    %c0_34 = arith.constant 0 : index
    %60 = vector.load %arg11[%c0_33, %c0_34] : memref<840x32xf32, #tpu.memory_space<vmem>>, vector<168x32xf32>
    tpu.vector_store %arg11[%c0_33, %c0_34], %59 {strides = array<i32>} : memref<840x32xf32, #tpu.memory_space<vmem>>, vector<168x32xf32>,
    %cst_35 = arith.constant 0.000000e+00 : f32
    %61 = vector.broadcast %cst_35 : f32 to vector<168x32xf32>
    %c0_36 = arith.constant 0 : index
    %c168 = arith.constant 168 : index
    %c0_37 = arith.constant 0 : index
    %62 = vector.load %arg1[%c0_36, %c168, %c0_37] : memref<1x904x32xf32, #tpu.memory_space<vmem>>, vector<1x168x32xf32>
    %63 = vector.shape_cast %62 : vector<1x168x32xf32> to vector<168x32xf32>
    %c0_38 = arith.constant 0 : index
    %c0_39 = arith.constant 0 : index
    %64 = vector.load %arg2[%c0_38, %c0_39] : memref<9x32xf32, #tpu.memory_space<vmem>>, vector<1x32xf32>
    %65 = vector.broadcast %64 : vector<1x32xf32> to vector<168x32xf32>
    %66 = arith.mulf %63, %65 : vector<168x32xf32>
    %67 = arith.addf %61, %66 : vector<168x32xf32>
    %c0_40 = arith.constant 0 : index
    %c169 = arith.constant 169 : index
    %c0_41 = arith.constant 0 : index
    %68 = vector.load %arg1[%c0_40, %c169, %c0_41] : memref<1x904x32xf32, #tpu.memory_space<vmem>>, vector<1x168x32xf32>
    %69 = vector.shape_cast %68 : vector<1x168x32xf32> to vector<168x32xf32>
    %c1_42 = arith.constant 1 : index
    %c0_43 = arith.constant 0 : index
    %70 = vector.load %arg2[%c1_42, %c0_43] : memref<9x32xf32, #tpu.memory_space<vmem>>, vector<1x32xf32>
    %71 = vector.broadcast %70 : vector<1x32xf32> to vector<168x32xf32>
    %72 = arith.mulf %69, %71 : vector<168x32xf32>
    %73 = arith.addf %67, %72 : vector<168x32xf32>
    %c0_44 = arith.constant 0 : index
    %c170 = arith.constant 170 : index
    %c0_45 = arith.constant 0 : index
    %74 = vector.load %arg1[%c0_44, %c170, %c0_45] : memref<1x904x32xf32, #tpu.memory_space<vmem>>, vector<1x168x32xf32>
    %75 = vector.shape_cast %74 : vector<1x168x32xf32> to vector<168x32xf32>
    %c2_46 = arith.constant 2 : index
    %c0_47 = arith.constant 0 : index
    %76 = vector.load %arg2[%c2_46, %c0_47] : memref<9x32xf32, #tpu.memory_space<vmem>>, vector<1x32xf32>
    %77 = vector.broadcast %76 : vector<1x32xf32> to vector<168x32xf32>
    %78 = arith.mulf %75, %77 : vector<168x32xf32>
    %79 = arith.addf %73, %78 : vector<168x32xf32>
    %c0_48 = arith.constant 0 : index
    %c198 = arith.constant 198 : index
    %c0_49 = arith.constant 0 : index
    %80 = vector.load %arg1[%c0_48, %c198, %c0_49] : memref<1x904x32xf32, #tpu.memory_space<vmem>>, vector<1x168x32xf32>
    %81 = vector.shape_cast %80 : vector<1x168x32xf32> to vector<168x32xf32>
    %c3_50 = arith.constant 3 : index
    %c0_51 = arith.constant 0 : index
    %82 = vector.load %arg2[%c3_50, %c0_51] : memref<9x32xf32, #tpu.memory_space<vmem>>, vector<1x32xf32>
    %83 = vector.broadcast %82 : vector<1x32xf32> to vector<168x32xf32>
    %84 = arith.mulf %81, %83 : vector<168x32xf32>
    %85 = arith.addf %79, %84 : vector<168x32xf32>
    %c0_52 = arith.constant 0 : index
    %c199 = arith.constant 199 : index
    %c0_53 = arith.constant 0 : index
    %86 = vector.load %arg1[%c0_52, %c199, %c0_53] : memref<1x904x32xf32, #tpu.memory_space<vmem>>, vector<1x168x32xf32>
    %87 = vector.shape_cast %86 : vector<1x168x32xf32> to vector<168x32xf32>
    %c4_54 = arith.constant 4 : index
    %c0_55 = arith.constant 0 : index
    %88 = vector.load %arg2[%c4_54, %c0_55] : memref<9x32xf32, #tpu.memory_space<vmem>>, vector<1x32xf32>
    %89 = vector.broadcast %88 : vector<1x32xf32> to vector<168x32xf32>
    %90 = arith.mulf %87, %89 : vector<168x32xf32>
    %91 = arith.addf %85, %90 : vector<168x32xf32>
    %c0_56 = arith.constant 0 : index
    %c200 = arith.constant 200 : index
    %c0_57 = arith.constant 0 : index
    %92 = vector.load %arg1[%c0_56, %c200, %c0_57] : memref<1x904x32xf32, #tpu.memory_space<vmem>>, vector<1x168x32xf32>
    %93 = vector.shape_cast %92 : vector<1x168x32xf32> to vector<168x32xf32>
    %c5_58 = arith.constant 5 : index
    %c0_59 = arith.constant 0 : index
    %94 = vector.load %arg2[%c5_58, %c0_59] : memref<9x32xf32, #tpu.memory_space<vmem>>, vector<1x32xf32>
    %95 = vector.broadcast %94 : vector<1x32xf32> to vector<168x32xf32>
    %96 = arith.mulf %93, %95 : vector<168x32xf32>
    %97 = arith.addf %91, %96 : vector<168x32xf32>
    %c0_60 = arith.constant 0 : index
    %c228 = arith.constant 228 : index
    %c0_61 = arith.constant 0 : index
    %98 = vector.load %arg1[%c0_60, %c228, %c0_61] : memref<1x904x32xf32, #tpu.memory_space<vmem>>, vector<1x168x32xf32>
    %99 = vector.shape_cast %98 : vector<1x168x32xf32> to vector<168x32xf32>
    %c6_62 = arith.constant 6 : index
    %c0_63 = arith.constant 0 : index
    %100 = vector.load %arg2[%c6_62, %c0_63] : memref<9x32xf32, #tpu.memory_space<vmem>>, vector<1x32xf32>
    %101 = vector.broadcast %100 : vector<1x32xf32> to vector<168x32xf32>
    %102 = arith.mulf %99, %101 : vector<168x32xf32>
    %103 = arith.addf %97, %102 : vector<168x32xf32>
    %c0_64 = arith.constant 0 : index
    %c229 = arith.constant 229 : index
    %c0_65 = arith.constant 0 : index
    %104 = vector.load %arg1[%c0_64, %c229, %c0_65] : memref<1x904x32xf32, #tpu.memory_space<vmem>>, vector<1x168x32xf32>
    %105 = vector.shape_cast %104 : vector<1x168x32xf32> to vector<168x32xf32>
    %c7_66 = arith.constant 7 : index
    %c0_67 = arith.constant 0 : index
    %106 = vector.load %arg2[%c7_66, %c0_67] : memref<9x32xf32, #tpu.memory_space<vmem>>, vector<1x32xf32>
    %107 = vector.broadcast %106 : vector<1x32xf32> to vector<168x32xf32>
    %108 = arith.mulf %105, %107 : vector<168x32xf32>
    %109 = arith.addf %103, %108 : vector<168x32xf32>
    %c0_68 = arith.constant 0 : index
    %c230 = arith.constant 230 : index
    %c0_69 = arith.constant 0 : index
    %110 = vector.load %arg1[%c0_68, %c230, %c0_69] : memref<1x904x32xf32, #tpu.memory_space<vmem>>, vector<1x168x32xf32>
    %111 = vector.shape_cast %110 : vector<1x168x32xf32> to vector<168x32xf32>
    %c8_70 = arith.constant 8 : index
    %c0_71 = arith.constant 0 : index
    %112 = vector.load %arg2[%c8_70, %c0_71] : memref<9x32xf32, #tpu.memory_space<vmem>>, vector<1x32xf32>
    %113 = vector.broadcast %112 : vector<1x32xf32> to vector<168x32xf32>
    %114 = arith.mulf %111, %113 : vector<168x32xf32>
    %115 = arith.addf %109, %114 : vector<168x32xf32>
    %116 = vector.broadcast %0 : vector<1x32xf32> to vector<168x32xf32>
    %117 = arith.addf %115, %116 : vector<168x32xf32>
    %cst_72 = arith.constant 0.000000e+00 : f32
    %118 = vector.broadcast %cst_72 : f32 to vector<168x32xf32>
    %119 = arith.maximumf %117, %118 : vector<168x32xf32>
    %c168_73 = arith.constant 168 : index
    %c0_74 = arith.constant 0 : index
    %120 = vector.load %arg11[%c168_73, %c0_74] : memref<840x32xf32, #tpu.memory_space<vmem>>, vector<168x32xf32>
    tpu.vector_store %arg11[%c168_73, %c0_74], %119 {strides = array<i32>} : memref<840x32xf32, #tpu.memory_space<vmem>>, vector<168x32xf32>,
    %cst_75 = arith.constant 0.000000e+00 : f32
    %121 = vector.broadcast %cst_75 : f32 to vector<168x32xf32>
    %c0_76 = arith.constant 0 : index
    %c336 = arith.constant 336 : index
    %c0_77 = arith.constant 0 : index
    %122 = vector.load %arg1[%c0_76, %c336, %c0_77] : memref<1x904x32xf32, #tpu.memory_space<vmem>>, vector<1x168x32xf32>
    %123 = vector.shape_cast %122 : vector<1x168x32xf32> to vector<168x32xf32>
    %c0_78 = arith.constant 0 : index
    %c0_79 = arith.constant 0 : index
    %124 = vector.load %arg2[%c0_78, %c0_79] : memref<9x32xf32, #tpu.memory_space<vmem>>, vector<1x32xf32>
    %125 = vector.broadcast %124 : vector<1x32xf32> to vector<168x32xf32>
    %126 = arith.mulf %123, %125 : vector<168x32xf32>
    %127 = arith.addf %121, %126 : vector<168x32xf32>
    %c0_80 = arith.constant 0 : index
    %c337 = arith.constant 337 : index
    %c0_81 = arith.constant 0 : index
    %128 = vector.load %arg1[%c0_80, %c337, %c0_81] : memref<1x904x32xf32, #tpu.memory_space<vmem>>, vector<1x168x32xf32>
    %129 = vector.shape_cast %128 : vector<1x168x32xf32> to vector<168x32xf32>
    %c1_82 = arith.constant 1 : index
    %c0_83 = arith.constant 0 : index
    %130 = vector.load %arg2[%c1_82, %c0_83] : memref<9x32xf32, #tpu.memory_space<vmem>>, vector<1x32xf32>
    %131 = vector.broadcast %130 : vector<1x32xf32> to vector<168x32xf32>
    %132 = arith.mulf %129, %131 : vector<168x32xf32>
    %133 = arith.addf %127, %132 : vector<168x32xf32>
    %c0_84 = arith.constant 0 : index
    %c338 = arith.constant 338 : index
    %c0_85 = arith.constant 0 : index
    %134 = vector.load %arg1[%c0_84, %c338, %c0_85] : memref<1x904x32xf32, #tpu.memory_space<vmem>>, vector<1x168x32xf32>
    %135 = vector.shape_cast %134 : vector<1x168x32xf32> to vector<168x32xf32>
    %c2_86 = arith.constant 2 : index
    %c0_87 = arith.constant 0 : index
    %136 = vector.load %arg2[%c2_86, %c0_87] : memref<9x32xf32, #tpu.memory_space<vmem>>, vector<1x32xf32>
    %137 = vector.broadcast %136 : vector<1x32xf32> to vector<168x32xf32>
    %138 = arith.mulf %135, %137 : vector<168x32xf32>
    %139 = arith.addf %133, %138 : vector<168x32xf32>
    %c0_88 = arith.constant 0 : index
    %c366 = arith.constant 366 : index
    %c0_89 = arith.constant 0 : index
    %140 = vector.load %arg1[%c0_88, %c366, %c0_89] : memref<1x904x32xf32, #tpu.memory_space<vmem>>, vector<1x168x32xf32>
    %141 = vector.shape_cast %140 : vector<1x168x32xf32> to vector<168x32xf32>
    %c3_90 = arith.constant 3 : index
    %c0_91 = arith.constant 0 : index
    %142 = vector.load %arg2[%c3_90, %c0_91] : memref<9x32xf32, #tpu.memory_space<vmem>>, vector<1x32xf32>
    %143 = vector.broadcast %142 : vector<1x32xf32> to vector<168x32xf32>
    %144 = arith.mulf %141, %143 : vector<168x32xf32>
    %145 = arith.addf %139, %144 : vector<168x32xf32>
    %c0_92 = arith.constant 0 : index
    %c367 = arith.constant 367 : index
    %c0_93 = arith.constant 0 : index
    %146 = vector.load %arg1[%c0_92, %c367, %c0_93] : memref<1x904x32xf32, #tpu.memory_space<vmem>>, vector<1x168x32xf32>
    %147 = vector.shape_cast %146 : vector<1x168x32xf32> to vector<168x32xf32>
    %c4_94 = arith.constant 4 : index
    %c0_95 = arith.constant 0 : index
    %148 = vector.load %arg2[%c4_94, %c0_95] : memref<9x32xf32, #tpu.memory_space<vmem>>, vector<1x32xf32>
    %149 = vector.broadcast %148 : vector<1x32xf32> to vector<168x32xf32>
    %150 = arith.mulf %147, %149 : vector<168x32xf32>
    %151 = arith.addf %145, %150 : vector<168x32xf32>
    %c0_96 = arith.constant 0 : index
    %c368 = arith.constant 368 : index
    %c0_97 = arith.constant 0 : index
    %152 = vector.load %arg1[%c0_96, %c368, %c0_97] : memref<1x904x32xf32, #tpu.memory_space<vmem>>, vector<1x168x32xf32>
    %153 = vector.shape_cast %152 : vector<1x168x32xf32> to vector<168x32xf32>
    %c5_98 = arith.constant 5 : index
    %c0_99 = arith.constant 0 : index
    %154 = vector.load %arg2[%c5_98, %c0_99] : memref<9x32xf32, #tpu.memory_space<vmem>>, vector<1x32xf32>
    %155 = vector.broadcast %154 : vector<1x32xf32> to vector<168x32xf32>
    %156 = arith.mulf %153, %155 : vector<168x32xf32>
    %157 = arith.addf %151, %156 : vector<168x32xf32>
    %c0_100 = arith.constant 0 : index
    %c396 = arith.constant 396 : index
    %c0_101 = arith.constant 0 : index
    %158 = vector.load %arg1[%c0_100, %c396, %c0_101] : memref<1x904x32xf32, #tpu.memory_space<vmem>>, vector<1x168x32xf32>
    %159 = vector.shape_cast %158 : vector<1x168x32xf32> to vector<168x32xf32>
    %c6_102 = arith.constant 6 : index
    %c0_103 = arith.constant 0 : index
    %160 = vector.load %arg2[%c6_102, %c0_103] : memref<9x32xf32, #tpu.memory_space<vmem>>, vector<1x32xf32>
    %161 = vector.broadcast %160 : vector<1x32xf32> to vector<168x32xf32>
    %162 = arith.mulf %159, %161 : vector<168x32xf32>
    %163 = arith.addf %157, %162 : vector<168x32xf32>
    %c0_104 = arith.constant 0 : index
    %c397 = arith.constant 397 : index
    %c0_105 = arith.constant 0 : index
    %164 = vector.load %arg1[%c0_104, %c397, %c0_105] : memref<1x904x32xf32, #tpu.memory_space<vmem>>, vector<1x168x32xf32>
    %165 = vector.shape_cast %164 : vector<1x168x32xf32> to vector<168x32xf32>
    %c7_106 = arith.constant 7 : index
    %c0_107 = arith.constant 0 : index
    %166 = vector.load %arg2[%c7_106, %c0_107] : memref<9x32xf32, #tpu.memory_space<vmem>>, vector<1x32xf32>
    %167 = vector.broadcast %166 : vector<1x32xf32> to vector<168x32xf32>
    %168 = arith.mulf %165, %167 : vector<168x32xf32>
    %169 = arith.addf %163, %168 : vector<168x32xf32>
    %c0_108 = arith.constant 0 : index
    %c398 = arith.constant 398 : index
    %c0_109 = arith.constant 0 : index
    %170 = vector.load %arg1[%c0_108, %c398, %c0_109] : memref<1x904x32xf32, #tpu.memory_space<vmem>>, vector<1x168x32xf32>
    %171 = vector.shape_cast %170 : vector<1x168x32xf32> to vector<168x32xf32>
    %c8_110 = arith.constant 8 : index
    %c0_111 = arith.constant 0 : index
    %172 = vector.load %arg2[%c8_110, %c0_111] : memref<9x32xf32, #tpu.memory_space<vmem>>, vector<1x32xf32>
    %173 = vector.broadcast %172 : vector<1x32xf32> to vector<168x32xf32>
    %174 = arith.mulf %171, %173 : vector<168x32xf32>
    %175 = arith.addf %169, %174 : vector<168x32xf32>
    %176 = vector.broadcast %0 : vector<1x32xf32> to vector<168x32xf32>
    %177 = arith.addf %175, %176 : vector<168x32xf32>
    %cst_112 = arith.constant 0.000000e+00 : f32
    %178 = vector.broadcast %cst_112 : f32 to vector<168x32xf32>
    %179 = arith.maximumf %177, %178 : vector<168x32xf32>
    %c336_113 = arith.constant 336 : index
    %c0_114 = arith.constant 0 : index
    %180 = vector.load %arg11[%c336_113, %c0_114] : memref<840x32xf32, #tpu.memory_space<vmem>>, vector<168x32xf32>
    tpu.vector_store %arg11[%c336_113, %c0_114], %179 {strides = array<i32>} : memref<840x32xf32, #tpu.memory_space<vmem>>, vector<168x32xf32>,
    %cst_115 = arith.constant 0.000000e+00 : f32
    %181 = vector.broadcast %cst_115 : f32 to vector<168x32xf32>
    %c0_116 = arith.constant 0 : index
    %c504 = arith.constant 504 : index
    %c0_117 = arith.constant 0 : index
    %182 = vector.load %arg1[%c0_116, %c504, %c0_117] : memref<1x904x32xf32, #tpu.memory_space<vmem>>, vector<1x168x32xf32>
    %183 = vector.shape_cast %182 : vector<1x168x32xf32> to vector<168x32xf32>
    %c0_118 = arith.constant 0 : index
    %c0_119 = arith.constant 0 : index
    %184 = vector.load %arg2[%c0_118, %c0_119] : memref<9x32xf32, #tpu.memory_space<vmem>>, vector<1x32xf32>
    %185 = vector.broadcast %184 : vector<1x32xf32> to vector<168x32xf32>
    %186 = arith.mulf %183, %185 : vector<168x32xf32>
    %187 = arith.addf %181, %186 : vector<168x32xf32>
    %c0_120 = arith.constant 0 : index
    %c505 = arith.constant 505 : index
    %c0_121 = arith.constant 0 : index
    %188 = vector.load %arg1[%c0_120, %c505, %c0_121] : memref<1x904x32xf32, #tpu.memory_space<vmem>>, vector<1x168x32xf32>
    %189 = vector.shape_cast %188 : vector<1x168x32xf32> to vector<168x32xf32>
    %c1_122 = arith.constant 1 : index
    %c0_123 = arith.constant 0 : index
    %190 = vector.load %arg2[%c1_122, %c0_123] : memref<9x32xf32, #tpu.memory_space<vmem>>, vector<1x32xf32>
    %191 = vector.broadcast %190 : vector<1x32xf32> to vector<168x32xf32>
    %192 = arith.mulf %189, %191 : vector<168x32xf32>
    %193 = arith.addf %187, %192 : vector<168x32xf32>
    %c0_124 = arith.constant 0 : index
    %c506 = arith.constant 506 : index
    %c0_125 = arith.constant 0 : index
    %194 = vector.load %arg1[%c0_124, %c506, %c0_125] : memref<1x904x32xf32, #tpu.memory_space<vmem>>, vector<1x168x32xf32>
    %195 = vector.shape_cast %194 : vector<1x168x32xf32> to vector<168x32xf32>
    %c2_126 = arith.constant 2 : index
    %c0_127 = arith.constant 0 : index
    %196 = vector.load %arg2[%c2_126, %c0_127] : memref<9x32xf32, #tpu.memory_space<vmem>>, vector<1x32xf32>
    %197 = vector.broadcast %196 : vector<1x32xf32> to vector<168x32xf32>
    %198 = arith.mulf %195, %197 : vector<168x32xf32>
    %199 = arith.addf %193, %198 : vector<168x32xf32>
    %c0_128 = arith.constant 0 : index
    %c534 = arith.constant 534 : index
    %c0_129 = arith.constant 0 : index
    %200 = vector.load %arg1[%c0_128, %c534, %c0_129] : memref<1x904x32xf32, #tpu.memory_space<vmem>>, vector<1x168x32xf32>
    %201 = vector.shape_cast %200 : vector<1x168x32xf32> to vector<168x32xf32>
    %c3_130 = arith.constant 3 : index
    %c0_131 = arith.constant 0 : index
    %202 = vector.load %arg2[%c3_130, %c0_131] : memref<9x32xf32, #tpu.memory_space<vmem>>, vector<1x32xf32>
    %203 = vector.broadcast %202 : vector<1x32xf32> to vector<168x32xf32>
    %204 = arith.mulf %201, %203 : vector<168x32xf32>
    %205 = arith.addf %199, %204 : vector<168x32xf32>
    %c0_132 = arith.constant 0 : index
    %c535 = arith.constant 535 : index
    %c0_133 = arith.constant 0 : index
    %206 = vector.load %arg1[%c0_132, %c535, %c0_133] : memref<1x904x32xf32, #tpu.memory_space<vmem>>, vector<1x168x32xf32>
    %207 = vector.shape_cast %206 : vector<1x168x32xf32> to vector<168x32xf32>
    %c4_134 = arith.constant 4 : index
    %c0_135 = arith.constant 0 : index
    %208 = vector.load %arg2[%c4_134, %c0_135] : memref<9x32xf32, #tpu.memory_space<vmem>>, vector<1x32xf32>
    %209 = vector.broadcast %208 : vector<1x32xf32> to vector<168x32xf32>
    %210 = arith.mulf %207, %209 : vector<168x32xf32>
    %211 = arith.addf %205, %210 : vector<168x32xf32>
    %c0_136 = arith.constant 0 : index
    %c536 = arith.constant 536 : index
    %c0_137 = arith.constant 0 : index
    %212 = vector.load %arg1[%c0_136, %c536, %c0_137] : memref<1x904x32xf32, #tpu.memory_space<vmem>>, vector<1x168x32xf32>
    %213 = vector.shape_cast %212 : vector<1x168x32xf32> to vector<168x32xf32>
    %c5_138 = arith.constant 5 : index
    %c0_139 = arith.constant 0 : index
    %214 = vector.load %arg2[%c5_138, %c0_139] : memref<9x32xf32, #tpu.memory_space<vmem>>, vector<1x32xf32>
    %215 = vector.broadcast %214 : vector<1x32xf32> to vector<168x32xf32>
    %216 = arith.mulf %213, %215 : vector<168x32xf32>
    %217 = arith.addf %211, %216 : vector<168x32xf32>
    %c0_140 = arith.constant 0 : index
    %c564 = arith.constant 564 : index
    %c0_141 = arith.constant 0 : index
    %218 = vector.load %arg1[%c0_140, %c564, %c0_141] : memref<1x904x32xf32, #tpu.memory_space<vmem>>, vector<1x168x32xf32>
    %219 = vector.shape_cast %218 : vector<1x168x32xf32> to vector<168x32xf32>
    %c6_142 = arith.constant 6 : index
    %c0_143 = arith.constant 0 : index
    %220 = vector.load %arg2[%c6_142, %c0_143] : memref<9x32xf32, #tpu.memory_space<vmem>>, vector<1x32xf32>
    %221 = vector.broadcast %220 : vector<1x32xf32> to vector<168x32xf32>
    %222 = arith.mulf %219, %221 : vector<168x32xf32>
    %223 = arith.addf %217, %222 : vector<168x32xf32>
    %c0_144 = arith.constant 0 : index
    %c565 = arith.constant 565 : index
    %c0_145 = arith.constant 0 : index
    %224 = vector.load %arg1[%c0_144, %c565, %c0_145] : memref<1x904x32xf32, #tpu.memory_space<vmem>>, vector<1x168x32xf32>
    %225 = vector.shape_cast %224 : vector<1x168x32xf32> to vector<168x32xf32>
    %c7_146 = arith.constant 7 : index
    %c0_147 = arith.constant 0 : index
    %226 = vector.load %arg2[%c7_146, %c0_147] : memref<9x32xf32, #tpu.memory_space<vmem>>, vector<1x32xf32>
    %227 = vector.broadcast %226 : vector<1x32xf32> to vector<168x32xf32>
    %228 = arith.mulf %225, %227 : vector<168x32xf32>
    %229 = arith.addf %223, %228 : vector<168x32xf32>
    %c0_148 = arith.constant 0 : index
    %c566 = arith.constant 566 : index
    %c0_149 = arith.constant 0 : index
    %230 = vector.load %arg1[%c0_148, %c566, %c0_149] : memref<1x904x32xf32, #tpu.memory_space<vmem>>, vector<1x168x32xf32>
    %231 = vector.shape_cast %230 : vector<1x168x32xf32> to vector<168x32xf32>
    %c8_150 = arith.constant 8 : index
    %c0_151 = arith.constant 0 : index
    %232 = vector.load %arg2[%c8_150, %c0_151] : memref<9x32xf32, #tpu.memory_space<vmem>>, vector<1x32xf32>
    %233 = vector.broadcast %232 : vector<1x32xf32> to vector<168x32xf32>
    %234 = arith.mulf %231, %233 : vector<168x32xf32>
    %235 = arith.addf %229, %234 : vector<168x32xf32>
    %236 = vector.broadcast %0 : vector<1x32xf32> to vector<168x32xf32>
    %237 = arith.addf %235, %236 : vector<168x32xf32>
    %cst_152 = arith.constant 0.000000e+00 : f32
    %238 = vector.broadcast %cst_152 : f32 to vector<168x32xf32>
    %239 = arith.maximumf %237, %238 : vector<168x32xf32>
    %c504_153 = arith.constant 504 : index
    %c0_154 = arith.constant 0 : index
    %240 = vector.load %arg11[%c504_153, %c0_154] : memref<840x32xf32, #tpu.memory_space<vmem>>, vector<168x32xf32>
    tpu.vector_store %arg11[%c504_153, %c0_154], %239 {strides = array<i32>} : memref<840x32xf32, #tpu.memory_space<vmem>>, vector<168x32xf32>,
    %cst_155 = arith.constant 0.000000e+00 : f32
    %241 = vector.broadcast %cst_155 : f32 to vector<168x32xf32>
    %c0_156 = arith.constant 0 : index
    %c672 = arith.constant 672 : index
    %c0_157 = arith.constant 0 : index
    %242 = vector.load %arg1[%c0_156, %c672, %c0_157] : memref<1x904x32xf32, #tpu.memory_space<vmem>>, vector<1x168x32xf32>
    %243 = vector.shape_cast %242 : vector<1x168x32xf32> to vector<168x32xf32>
    %c0_158 = arith.constant 0 : index
    %c0_159 = arith.constant 0 : index
    %244 = vector.load %arg2[%c0_158, %c0_159] : memref<9x32xf32, #tpu.memory_space<vmem>>, vector<1x32xf32>
    %245 = vector.broadcast %244 : vector<1x32xf32> to vector<168x32xf32>
    %246 = arith.mulf %243, %245 : vector<168x32xf32>
    %247 = arith.addf %241, %246 : vector<168x32xf32>
    %c0_160 = arith.constant 0 : index
    %c673 = arith.constant 673 : index
    %c0_161 = arith.constant 0 : index
    %248 = vector.load %arg1[%c0_160, %c673, %c0_161] : memref<1x904x32xf32, #tpu.memory_space<vmem>>, vector<1x168x32xf32>
    %249 = vector.shape_cast %248 : vector<1x168x32xf32> to vector<168x32xf32>
    %c1_162 = arith.constant 1 : index
    %c0_163 = arith.constant 0 : index
    %250 = vector.load %arg2[%c1_162, %c0_163] : memref<9x32xf32, #tpu.memory_space<vmem>>, vector<1x32xf32>
    %251 = vector.broadcast %250 : vector<1x32xf32> to vector<168x32xf32>
    %252 = arith.mulf %249, %251 : vector<168x32xf32>
    %253 = arith.addf %247, %252 : vector<168x32xf32>
    %c0_164 = arith.constant 0 : index
    %c674 = arith.constant 674 : index
    %c0_165 = arith.constant 0 : index
    %254 = vector.load %arg1[%c0_164, %c674, %c0_165] : memref<1x904x32xf32, #tpu.memory_space<vmem>>, vector<1x168x32xf32>
    %255 = vector.shape_cast %254 : vector<1x168x32xf32> to vector<168x32xf32>
    %c2_166 = arith.constant 2 : index
    %c0_167 = arith.constant 0 : index
    %256 = vector.load %arg2[%c2_166, %c0_167] : memref<9x32xf32, #tpu.memory_space<vmem>>, vector<1x32xf32>
    %257 = vector.broadcast %256 : vector<1x32xf32> to vector<168x32xf32>
    %258 = arith.mulf %255, %257 : vector<168x32xf32>
    %259 = arith.addf %253, %258 : vector<168x32xf32>
    %c0_168 = arith.constant 0 : index
    %c702 = arith.constant 702 : index
    %c0_169 = arith.constant 0 : index
    %260 = vector.load %arg1[%c0_168, %c702, %c0_169] : memref<1x904x32xf32, #tpu.memory_space<vmem>>, vector<1x168x32xf32>
    %261 = vector.shape_cast %260 : vector<1x168x32xf32> to vector<168x32xf32>
    %c3_170 = arith.constant 3 : index
    %c0_171 = arith.constant 0 : index
    %262 = vector.load %arg2[%c3_170, %c0_171] : memref<9x32xf32, #tpu.memory_space<vmem>>, vector<1x32xf32>
    %263 = vector.broadcast %262 : vector<1x32xf32> to vector<168x32xf32>
    %264 = arith.mulf %261, %263 : vector<168x32xf32>
    %265 = arith.addf %259, %264 : vector<168x32xf32>
    %c0_172 = arith.constant 0 : index
    %c703 = arith.constant 703 : index
    %c0_173 = arith.constant 0 : index
    %266 = vector.load %arg1[%c0_172, %c703, %c0_173] : memref<1x904x32xf32, #tpu.memory_space<vmem>>, vector<1x168x32xf32>
    %267 = vector.shape_cast %266 : vector<1x168x32xf32> to vector<168x32xf32>
    %c4_174 = arith.constant 4 : index
    %c0_175 = arith.constant 0 : index
    %268 = vector.load %arg2[%c4_174, %c0_175] : memref<9x32xf32, #tpu.memory_space<vmem>>, vector<1x32xf32>
    %269 = vector.broadcast %268 : vector<1x32xf32> to vector<168x32xf32>
    %270 = arith.mulf %267, %269 : vector<168x32xf32>
    %271 = arith.addf %265, %270 : vector<168x32xf32>
    %c0_176 = arith.constant 0 : index
    %c704 = arith.constant 704 : index
    %c0_177 = arith.constant 0 : index
    %272 = vector.load %arg1[%c0_176, %c704, %c0_177] : memref<1x904x32xf32, #tpu.memory_space<vmem>>, vector<1x168x32xf32>
    %273 = vector.shape_cast %272 : vector<1x168x32xf32> to vector<168x32xf32>
    %c5_178 = arith.constant 5 : index
    %c0_179 = arith.constant 0 : index
    %274 = vector.load %arg2[%c5_178, %c0_179] : memref<9x32xf32, #tpu.memory_space<vmem>>, vector<1x32xf32>
    %275 = vector.broadcast %274 : vector<1x32xf32> to vector<168x32xf32>
    %276 = arith.mulf %273, %275 : vector<168x32xf32>
    %277 = arith.addf %271, %276 : vector<168x32xf32>
    %c0_180 = arith.constant 0 : index
    %c732 = arith.constant 732 : index
    %c0_181 = arith.constant 0 : index
    %278 = vector.load %arg1[%c0_180, %c732, %c0_181] : memref<1x904x32xf32, #tpu.memory_space<vmem>>, vector<1x168x32xf32>
    %279 = vector.shape_cast %278 : vector<1x168x32xf32> to vector<168x32xf32>
    %c6_182 = arith.constant 6 : index
    %c0_183 = arith.constant 0 : index
    %280 = vector.load %arg2[%c6_182, %c0_183] : memref<9x32xf32, #tpu.memory_space<vmem>>, vector<1x32xf32>
    %281 = vector.broadcast %280 : vector<1x32xf32> to vector<168x32xf32>
    %282 = arith.mulf %279, %281 : vector<168x32xf32>
    %283 = arith.addf %277, %282 : vector<168x32xf32>
    %c0_184 = arith.constant 0 : index
    %c733 = arith.constant 733 : index
    %c0_185 = arith.constant 0 : index
    %284 = vector.load %arg1[%c0_184, %c733, %c0_185] : memref<1x904x32xf32, #tpu.memory_space<vmem>>, vector<1x168x32xf32>
    %285 = vector.shape_cast %284 : vector<1x168x32xf32> to vector<168x32xf32>
    %c7_186 = arith.constant 7 : index
    %c0_187 = arith.constant 0 : index
    %286 = vector.load %arg2[%c7_186, %c0_187] : memref<9x32xf32, #tpu.memory_space<vmem>>, vector<1x32xf32>
    %287 = vector.broadcast %286 : vector<1x32xf32> to vector<168x32xf32>
    %288 = arith.mulf %285, %287 : vector<168x32xf32>
    %289 = arith.addf %283, %288 : vector<168x32xf32>
    %c0_188 = arith.constant 0 : index
    %c734 = arith.constant 734 : index
    %c0_189 = arith.constant 0 : index
    %290 = vector.load %arg1[%c0_188, %c734, %c0_189] : memref<1x904x32xf32, #tpu.memory_space<vmem>>, vector<1x168x32xf32>
    %291 = vector.shape_cast %290 : vector<1x168x32xf32> to vector<168x32xf32>
    %c8_190 = arith.constant 8 : index
    %c0_191 = arith.constant 0 : index
    %292 = vector.load %arg2[%c8_190, %c0_191] : memref<9x32xf32, #tpu.memory_space<vmem>>, vector<1x32xf32>
    %293 = vector.broadcast %292 : vector<1x32xf32> to vector<168x32xf32>
    %294 = arith.mulf %291, %293 : vector<168x32xf32>
    %295 = arith.addf %289, %294 : vector<168x32xf32>
    %296 = vector.broadcast %0 : vector<1x32xf32> to vector<168x32xf32>
    %297 = arith.addf %295, %296 : vector<168x32xf32>
    %cst_192 = arith.constant 0.000000e+00 : f32
    %298 = vector.broadcast %cst_192 : f32 to vector<168x32xf32>
    %299 = arith.maximumf %297, %298 : vector<168x32xf32>
    %c672_193 = arith.constant 672 : index
    %c0_194 = arith.constant 0 : index
    %300 = vector.load %arg11[%c672_193, %c0_194] : memref<840x32xf32, #tpu.memory_space<vmem>>, vector<168x32xf32>
    tpu.vector_store %arg11[%c672_193, %c0_194], %299 {strides = array<i32>} : memref<840x32xf32, #tpu.memory_space<vmem>>, vector<168x32xf32>,
    %cst_195 = arith.constant 0.000000e+00 : f32
    %301 = vector.broadcast %cst_195 : f32 to vector<280x32xf32>
    %c0_196 = arith.constant 0 : index
    %c0_197 = arith.constant 0 : index
    %302 = vector.load %arg12[%c0_196, %c0_197] : memref<280x32xf32, #tpu.memory_space<vmem>>, vector<280x32xf32>
    tpu.vector_store %arg12[%c0_196, %c0_197], %301 {strides = array<i32>} : memref<280x32xf32, #tpu.memory_space<vmem>>, vector<280x32xf32>,
    %c0_198 = arith.constant 0 : index
    %c0_199 = arith.constant 0 : index
    %303 = tpu.strided_load %arg11[%c0_198, %c0_199] {strides = array<i32: 2, 1>} : memref<840x32xf32, #tpu.memory_space<vmem>>, vector<14x32xf32>
    %c1_200 = arith.constant 1 : index
    %c0_201 = arith.constant 0 : index
    %304 = tpu.strided_load %arg11[%c1_200, %c0_201] {strides = array<i32: 2, 1>} : memref<840x32xf32, #tpu.memory_space<vmem>>, vector<14x32xf32>
    %305 = arith.maximumf %303, %304 : vector<14x32xf32>
    %c30_202 = arith.constant 30 : index
    %c0_203 = arith.constant 0 : index
    %306 = tpu.strided_load %arg11[%c30_202, %c0_203] {strides = array<i32: 2, 1>} : memref<840x32xf32, #tpu.memory_space<vmem>>, vector<14x32xf32>
    %307 = arith.maximumf %305, %306 : vector<14x32xf32>
    %c31_204 = arith.constant 31 : index
    %c0_205 = arith.constant 0 : index
    %308 = tpu.strided_load %arg11[%c31_204, %c0_205] {strides = array<i32: 2, 1>} : memref<840x32xf32, #tpu.memory_space<vmem>>, vector<14x32xf32>
    %309 = arith.maximumf %307, %308 : vector<14x32xf32>
    %c32_206 = arith.constant 32 : index
    %c0_207 = arith.constant 0 : index
    %310 = vector.load %arg12[%c32_206, %c0_207] : memref<280x32xf32, #tpu.memory_space<vmem>>, vector<14x32xf32>
    tpu.vector_store %arg12[%c32_206, %c0_207], %309 {strides = array<i32>} : memref<280x32xf32, #tpu.memory_space<vmem>>, vector<14x32xf32>,
    %c60_208 = arith.constant 60 : index
    %c0_209 = arith.constant 0 : index
    %311 = tpu.strided_load %arg11[%c60_208, %c0_209] {strides = array<i32: 2, 1>} : memref<840x32xf32, #tpu.memory_space<vmem>>, vector<14x32xf32>
    %c61_210 = arith.constant 61 : index
    %c0_211 = arith.constant 0 : index
    %312 = tpu.strided_load %arg11[%c61_210, %c0_211] {strides = array<i32: 2, 1>} : memref<840x32xf32, #tpu.memory_space<vmem>>, vector<14x32xf32>
    %313 = arith.maximumf %311, %312 : vector<14x32xf32>
    %c90 = arith.constant 90 : index
    %c0_212 = arith.constant 0 : index
    %314 = tpu.strided_load %arg11[%c90, %c0_212] {strides = array<i32: 2, 1>} : memref<840x32xf32, #tpu.memory_space<vmem>>, vector<14x32xf32>
    %315 = arith.maximumf %313, %314 : vector<14x32xf32>
    %c91 = arith.constant 91 : index
    %c0_213 = arith.constant 0 : index
    %316 = tpu.strided_load %arg11[%c91, %c0_213] {strides = array<i32: 2, 1>} : memref<840x32xf32, #tpu.memory_space<vmem>>, vector<14x32xf32>
    %317 = arith.maximumf %315, %316 : vector<14x32xf32>
    %c48 = arith.constant 48 : index
    %c0_214 = arith.constant 0 : index
    %318 = vector.load %arg12[%c48, %c0_214] : memref<280x32xf32, #tpu.memory_space<vmem>>, vector<14x32xf32>
    tpu.vector_store %arg12[%c48, %c0_214], %317 {strides = array<i32>} : memref<280x32xf32, #tpu.memory_space<vmem>>, vector<14x32xf32>,
    %c120 = arith.constant 120 : index
    %c0_215 = arith.constant 0 : index
    %319 = tpu.strided_load %arg11[%c120, %c0_215] {strides = array<i32: 2, 1>} : memref<840x32xf32, #tpu.memory_space<vmem>>, vector<14x32xf32>
    %c121 = arith.constant 121 : index
    %c0_216 = arith.constant 0 : index
    %320 = tpu.strided_load %arg11[%c121, %c0_216] {strides = array<i32: 2, 1>} : memref<840x32xf32, #tpu.memory_space<vmem>>, vector<14x32xf32>
    %321 = arith.maximumf %319, %320 : vector<14x32xf32>
    %c150 = arith.constant 150 : index
    %c0_217 = arith.constant 0 : index
    %322 = tpu.strided_load %arg11[%c150, %c0_217] {strides = array<i32: 2, 1>} : memref<840x32xf32, #tpu.memory_space<vmem>>, vector<14x32xf32>
    %323 = arith.maximumf %321, %322 : vector<14x32xf32>
    %c151 = arith.constant 151 : index
    %c0_218 = arith.constant 0 : index
    %324 = tpu.strided_load %arg11[%c151, %c0_218] {strides = array<i32: 2, 1>} : memref<840x32xf32, #tpu.memory_space<vmem>>, vector<14x32xf32>
    %325 = arith.maximumf %323, %324 : vector<14x32xf32>
    %c64 = arith.constant 64 : index
    %c0_219 = arith.constant 0 : index
    %326 = vector.load %arg12[%c64, %c0_219] : memref<280x32xf32, #tpu.memory_space<vmem>>, vector<14x32xf32>
    tpu.vector_store %arg12[%c64, %c0_219], %325 {strides = array<i32>} : memref<280x32xf32, #tpu.memory_space<vmem>>, vector<14x32xf32>,
    %c180 = arith.constant 180 : index
    %c0_220 = arith.constant 0 : index
    %327 = tpu.strided_load %arg11[%c180, %c0_220] {strides = array<i32: 2, 1>} : memref<840x32xf32, #tpu.memory_space<vmem>>, vector<14x32xf32>
    %c181 = arith.constant 181 : index
    %c0_221 = arith.constant 0 : index
    %328 = tpu.strided_load %arg11[%c181, %c0_221] {strides = array<i32: 2, 1>} : memref<840x32xf32, #tpu.memory_space<vmem>>, vector<14x32xf32>
    %329 = arith.maximumf %327, %328 : vector<14x32xf32>
    %c210 = arith.constant 210 : index
    %c0_222 = arith.constant 0 : index
    %330 = tpu.strided_load %arg11[%c210, %c0_222] {strides = array<i32: 2, 1>} : memref<840x32xf32, #tpu.memory_space<vmem>>, vector<14x32xf32>
    %331 = arith.maximumf %329, %330 : vector<14x32xf32>
    %c211 = arith.constant 211 : index
    %c0_223 = arith.constant 0 : index
    %332 = tpu.strided_load %arg11[%c211, %c0_223] {strides = array<i32: 2, 1>} : memref<840x32xf32, #tpu.memory_space<vmem>>, vector<14x32xf32>
    %333 = arith.maximumf %331, %332 : vector<14x32xf32>
    %c80 = arith.constant 80 : index
    %c0_224 = arith.constant 0 : index
    %334 = vector.load %arg12[%c80, %c0_224] : memref<280x32xf32, #tpu.memory_space<vmem>>, vector<14x32xf32>
    tpu.vector_store %arg12[%c80, %c0_224], %333 {strides = array<i32>} : memref<280x32xf32, #tpu.memory_space<vmem>>, vector<14x32xf32>,
    %c240 = arith.constant 240 : index
    %c0_225 = arith.constant 0 : index
    %335 = tpu.strided_load %arg11[%c240, %c0_225] {strides = array<i32: 2, 1>} : memref<840x32xf32, #tpu.memory_space<vmem>>, vector<14x32xf32>
    %c241 = arith.constant 241 : index
    %c0_226 = arith.constant 0 : index
    %336 = tpu.strided_load %arg11[%c241, %c0_226] {strides = array<i32: 2, 1>} : memref<840x32xf32, #tpu.memory_space<vmem>>, vector<14x32xf32>
    %337 = arith.maximumf %335, %336 : vector<14x32xf32>
    %c270 = arith.constant 270 : index
    %c0_227 = arith.constant 0 : index
    %338 = tpu.strided_load %arg11[%c270, %c0_227] {strides = array<i32: 2, 1>} : memref<840x32xf32, #tpu.memory_space<vmem>>, vector<14x32xf32>
    %339 = arith.maximumf %337, %338 : vector<14x32xf32>
    %c271 = arith.constant 271 : index
    %c0_228 = arith.constant 0 : index
    %340 = tpu.strided_load %arg11[%c271, %c0_228] {strides = array<i32: 2, 1>} : memref<840x32xf32, #tpu.memory_space<vmem>>, vector<14x32xf32>
    %341 = arith.maximumf %339, %340 : vector<14x32xf32>
    %c96 = arith.constant 96 : index
    %c0_229 = arith.constant 0 : index
    %342 = vector.load %arg12[%c96, %c0_229] : memref<280x32xf32, #tpu.memory_space<vmem>>, vector<14x32xf32>
    tpu.vector_store %arg12[%c96, %c0_229], %341 {strides = array<i32>} : memref<280x32xf32, #tpu.memory_space<vmem>>, vector<14x32xf32>,
    %c300 = arith.constant 300 : index
    %c0_230 = arith.constant 0 : index
    %343 = tpu.strided_load %arg11[%c300, %c0_230] {strides = array<i32: 2, 1>} : memref<840x32xf32, #tpu.memory_space<vmem>>, vector<14x32xf32>
    %c301 = arith.constant 301 : index
    %c0_231 = arith.constant 0 : index
    %344 = tpu.strided_load %arg11[%c301, %c0_231] {strides = array<i32: 2, 1>} : memref<840x32xf32, #tpu.memory_space<vmem>>, vector<14x32xf32>
    %345 = arith.maximumf %343, %344 : vector<14x32xf32>
    %c330 = arith.constant 330 : index
    %c0_232 = arith.constant 0 : index
    %346 = tpu.strided_load %arg11[%c330, %c0_232] {strides = array<i32: 2, 1>} : memref<840x32xf32, #tpu.memory_space<vmem>>, vector<14x32xf32>
    %347 = arith.maximumf %345, %346 : vector<14x32xf32>
    %c331 = arith.constant 331 : index
    %c0_233 = arith.constant 0 : index
    %348 = tpu.strided_load %arg11[%c331, %c0_233] {strides = array<i32: 2, 1>} : memref<840x32xf32, #tpu.memory_space<vmem>>, vector<14x32xf32>
    %349 = arith.maximumf %347, %348 : vector<14x32xf32>
    %c112 = arith.constant 112 : index
    %c0_234 = arith.constant 0 : index
    %350 = vector.load %arg12[%c112, %c0_234] : memref<280x32xf32, #tpu.memory_space<vmem>>, vector<14x32xf32>
    tpu.vector_store %arg12[%c112, %c0_234], %349 {strides = array<i32>} : memref<280x32xf32, #tpu.memory_space<vmem>>, vector<14x32xf32>,
    %c360 = arith.constant 360 : index
    %c0_235 = arith.constant 0 : index
    %351 = tpu.strided_load %arg11[%c360, %c0_235] {strides = array<i32: 2, 1>} : memref<840x32xf32, #tpu.memory_space<vmem>>, vector<14x32xf32>
    %c361 = arith.constant 361 : index
    %c0_236 = arith.constant 0 : index
    %352 = tpu.strided_load %arg11[%c361, %c0_236] {strides = array<i32: 2, 1>} : memref<840x32xf32, #tpu.memory_space<vmem>>, vector<14x32xf32>
    %353 = arith.maximumf %351, %352 : vector<14x32xf32>
    %c390 = arith.constant 390 : index
    %c0_237 = arith.constant 0 : index
    %354 = tpu.strided_load %arg11[%c390, %c0_237] {strides = array<i32: 2, 1>} : memref<840x32xf32, #tpu.memory_space<vmem>>, vector<14x32xf32>
    %355 = arith.maximumf %353, %354 : vector<14x32xf32>
    %c391 = arith.constant 391 : index
    %c0_238 = arith.constant 0 : index
    %356 = tpu.strided_load %arg11[%c391, %c0_238] {strides = array<i32: 2, 1>} : memref<840x32xf32, #tpu.memory_space<vmem>>, vector<14x32xf32>
    %357 = arith.maximumf %355, %356 : vector<14x32xf32>
    %c128 = arith.constant 128 : index
    %c0_239 = arith.constant 0 : index
    %358 = vector.load %arg12[%c128, %c0_239] : memref<280x32xf32, #tpu.memory_space<vmem>>, vector<14x32xf32>
    tpu.vector_store %arg12[%c128, %c0_239], %357 {strides = array<i32>} : memref<280x32xf32, #tpu.memory_space<vmem>>, vector<14x32xf32>,
    %c420 = arith.constant 420 : index
    %c0_240 = arith.constant 0 : index
    %359 = tpu.strided_load %arg11[%c420, %c0_240] {strides = array<i32: 2, 1>} : memref<840x32xf32, #tpu.memory_space<vmem>>, vector<14x32xf32>
    %c421 = arith.constant 421 : index
    %c0_241 = arith.constant 0 : index
    %360 = tpu.strided_load %arg11[%c421, %c0_241] {strides = array<i32: 2, 1>} : memref<840x32xf32, #tpu.memory_space<vmem>>, vector<14x32xf32>
    %361 = arith.maximumf %359, %360 : vector<14x32xf32>
    %c450 = arith.constant 450 : index
    %c0_242 = arith.constant 0 : index
    %362 = tpu.strided_load %arg11[%c450, %c0_242] {strides = array<i32: 2, 1>} : memref<840x32xf32, #tpu.memory_space<vmem>>, vector<14x32xf32>
    %363 = arith.maximumf %361, %362 : vector<14x32xf32>
    %c451 = arith.constant 451 : index
    %c0_243 = arith.constant 0 : index
    %364 = tpu.strided_load %arg11[%c451, %c0_243] {strides = array<i32: 2, 1>} : memref<840x32xf32, #tpu.memory_space<vmem>>, vector<14x32xf32>
    %365 = arith.maximumf %363, %364 : vector<14x32xf32>
    %c144 = arith.constant 144 : index
    %c0_244 = arith.constant 0 : index
    %366 = vector.load %arg12[%c144, %c0_244] : memref<280x32xf32, #tpu.memory_space<vmem>>, vector<14x32xf32>
    tpu.vector_store %arg12[%c144, %c0_244], %365 {strides = array<i32>} : memref<280x32xf32, #tpu.memory_space<vmem>>, vector<14x32xf32>,
    %c480 = arith.constant 480 : index
    %c0_245 = arith.constant 0 : index
    %367 = tpu.strided_load %arg11[%c480, %c0_245] {strides = array<i32: 2, 1>} : memref<840x32xf32, #tpu.memory_space<vmem>>, vector<14x32xf32>
    %c481 = arith.constant 481 : index
    %c0_246 = arith.constant 0 : index
    %368 = tpu.strided_load %arg11[%c481, %c0_246] {strides = array<i32: 2, 1>} : memref<840x32xf32, #tpu.memory_space<vmem>>, vector<14x32xf32>
    %369 = arith.maximumf %367, %368 : vector<14x32xf32>
    %c510 = arith.constant 510 : index
    %c0_247 = arith.constant 0 : index
    %370 = tpu.strided_load %arg11[%c510, %c0_247] {strides = array<i32: 2, 1>} : memref<840x32xf32, #tpu.memory_space<vmem>>, vector<14x32xf32>
    %371 = arith.maximumf %369, %370 : vector<14x32xf32>
    %c511 = arith.constant 511 : index
    %c0_248 = arith.constant 0 : index
    %372 = tpu.strided_load %arg11[%c511, %c0_248] {strides = array<i32: 2, 1>} : memref<840x32xf32, #tpu.memory_space<vmem>>, vector<14x32xf32>
    %373 = arith.maximumf %371, %372 : vector<14x32xf32>
    %c160 = arith.constant 160 : index
    %c0_249 = arith.constant 0 : index
    %374 = vector.load %arg12[%c160, %c0_249] : memref<280x32xf32, #tpu.memory_space<vmem>>, vector<14x32xf32>
    tpu.vector_store %arg12[%c160, %c0_249], %373 {strides = array<i32>} : memref<280x32xf32, #tpu.memory_space<vmem>>, vector<14x32xf32>,
    %c540 = arith.constant 540 : index
    %c0_250 = arith.constant 0 : index
    %375 = tpu.strided_load %arg11[%c540, %c0_250] {strides = array<i32: 2, 1>} : memref<840x32xf32, #tpu.memory_space<vmem>>, vector<14x32xf32>
    %c541 = arith.constant 541 : index
    %c0_251 = arith.constant 0 : index
    %376 = tpu.strided_load %arg11[%c541, %c0_251] {strides = array<i32: 2, 1>} : memref<840x32xf32, #tpu.memory_space<vmem>>, vector<14x32xf32>
    %377 = arith.maximumf %375, %376 : vector<14x32xf32>
    %c570 = arith.constant 570 : index
    %c0_252 = arith.constant 0 : index
    %378 = tpu.strided_load %arg11[%c570, %c0_252] {strides = array<i32: 2, 1>} : memref<840x32xf32, #tpu.memory_space<vmem>>, vector<14x32xf32>
    %379 = arith.maximumf %377, %378 : vector<14x32xf32>
    %c571 = arith.constant 571 : index
    %c0_253 = arith.constant 0 : index
    %380 = tpu.strided_load %arg11[%c571, %c0_253] {strides = array<i32: 2, 1>} : memref<840x32xf32, #tpu.memory_space<vmem>>, vector<14x32xf32>
    %381 = arith.maximumf %379, %380 : vector<14x32xf32>
    %c176 = arith.constant 176 : index
    %c0_254 = arith.constant 0 : index
    %382 = vector.load %arg12[%c176, %c0_254] : memref<280x32xf32, #tpu.memory_space<vmem>>, vector<14x32xf32>
    tpu.vector_store %arg12[%c176, %c0_254], %381 {strides = array<i32>} : memref<280x32xf32, #tpu.memory_space<vmem>>, vector<14x32xf32>,
    %c600 = arith.constant 600 : index
    %c0_255 = arith.constant 0 : index
    %383 = tpu.strided_load %arg11[%c600, %c0_255] {strides = array<i32: 2, 1>} : memref<840x32xf32, #tpu.memory_space<vmem>>, vector<14x32xf32>
    %c601 = arith.constant 601 : index
    %c0_256 = arith.constant 0 : index
    %384 = tpu.strided_load %arg11[%c601, %c0_256] {strides = array<i32: 2, 1>} : memref<840x32xf32, #tpu.memory_space<vmem>>, vector<14x32xf32>
    %385 = arith.maximumf %383, %384 : vector<14x32xf32>
    %c630 = arith.constant 630 : index
    %c0_257 = arith.constant 0 : index
    %386 = tpu.strided_load %arg11[%c630, %c0_257] {strides = array<i32: 2, 1>} : memref<840x32xf32, #tpu.memory_space<vmem>>, vector<14x32xf32>
    %387 = arith.maximumf %385, %386 : vector<14x32xf32>
    %c631 = arith.constant 631 : index
    %c0_258 = arith.constant 0 : index
    %388 = tpu.strided_load %arg11[%c631, %c0_258] {strides = array<i32: 2, 1>} : memref<840x32xf32, #tpu.memory_space<vmem>>, vector<14x32xf32>
    %389 = arith.maximumf %387, %388 : vector<14x32xf32>
    %c192 = arith.constant 192 : index
    %c0_259 = arith.constant 0 : index
    %390 = vector.load %arg12[%c192, %c0_259] : memref<280x32xf32, #tpu.memory_space<vmem>>, vector<14x32xf32>
    tpu.vector_store %arg12[%c192, %c0_259], %389 {strides = array<i32>} : memref<280x32xf32, #tpu.memory_space<vmem>>, vector<14x32xf32>,
    %c660 = arith.constant 660 : index
    %c0_260 = arith.constant 0 : index
    %391 = tpu.strided_load %arg11[%c660, %c0_260] {strides = array<i32: 2, 1>} : memref<840x32xf32, #tpu.memory_space<vmem>>, vector<14x32xf32>
    %c661 = arith.constant 661 : index
    %c0_261 = arith.constant 0 : index
    %392 = tpu.strided_load %arg11[%c661, %c0_261] {strides = array<i32: 2, 1>} : memref<840x32xf32, #tpu.memory_space<vmem>>, vector<14x32xf32>
    %393 = arith.maximumf %391, %392 : vector<14x32xf32>
    %c690 = arith.constant 690 : index
    %c0_262 = arith.constant 0 : index
    %394 = tpu.strided_load %arg11[%c690, %c0_262] {strides = array<i32: 2, 1>} : memref<840x32xf32, #tpu.memory_space<vmem>>, vector<14x32xf32>
    %395 = arith.maximumf %393, %394 : vector<14x32xf32>
    %c691 = arith.constant 691 : index
    %c0_263 = arith.constant 0 : index
    %396 = tpu.strided_load %arg11[%c691, %c0_263] {strides = array<i32: 2, 1>} : memref<840x32xf32, #tpu.memory_space<vmem>>, vector<14x32xf32>
    %397 = arith.maximumf %395, %396 : vector<14x32xf32>
    %c208 = arith.constant 208 : index
    %c0_264 = arith.constant 0 : index
    %398 = vector.load %arg12[%c208, %c0_264] : memref<280x32xf32, #tpu.memory_space<vmem>>, vector<14x32xf32>
    tpu.vector_store %arg12[%c208, %c0_264], %397 {strides = array<i32>} : memref<280x32xf32, #tpu.memory_space<vmem>>, vector<14x32xf32>,
    %c720 = arith.constant 720 : index
    %c0_265 = arith.constant 0 : index
    %399 = tpu.strided_load %arg11[%c720, %c0_265] {strides = array<i32: 2, 1>} : memref<840x32xf32, #tpu.memory_space<vmem>>, vector<14x32xf32>
    %c721 = arith.constant 721 : index
    %c0_266 = arith.constant 0 : index
    %400 = tpu.strided_load %arg11[%c721, %c0_266] {strides = array<i32: 2, 1>} : memref<840x32xf32, #tpu.memory_space<vmem>>, vector<14x32xf32>
    %401 = arith.maximumf %399, %400 : vector<14x32xf32>
    %c750 = arith.constant 750 : index
    %c0_267 = arith.constant 0 : index
    %402 = tpu.strided_load %arg11[%c750, %c0_267] {strides = array<i32: 2, 1>} : memref<840x32xf32, #tpu.memory_space<vmem>>, vector<14x32xf32>
    %403 = arith.maximumf %401, %402 : vector<14x32xf32>
    %c751 = arith.constant 751 : index
    %c0_268 = arith.constant 0 : index
    %404 = tpu.strided_load %arg11[%c751, %c0_268] {strides = array<i32: 2, 1>} : memref<840x32xf32, #tpu.memory_space<vmem>>, vector<14x32xf32>
    %405 = arith.maximumf %403, %404 : vector<14x32xf32>
    %c224 = arith.constant 224 : index
    %c0_269 = arith.constant 0 : index
    %406 = vector.load %arg12[%c224, %c0_269] : memref<280x32xf32, #tpu.memory_space<vmem>>, vector<14x32xf32>
    tpu.vector_store %arg12[%c224, %c0_269], %405 {strides = array<i32>} : memref<280x32xf32, #tpu.memory_space<vmem>>, vector<14x32xf32>,
    %c780 = arith.constant 780 : index
    %c0_270 = arith.constant 0 : index
    %407 = tpu.strided_load %arg11[%c780, %c0_270] {strides = array<i32: 2, 1>} : memref<840x32xf32, #tpu.memory_space<vmem>>, vector<14x32xf32>
    %c781 = arith.constant 781 : index
    %c0_271 = arith.constant 0 : index
    %408 = tpu.strided_load %arg11[%c781, %c0_271] {strides = array<i32: 2, 1>} : memref<840x32xf32, #tpu.memory_space<vmem>>, vector<14x32xf32>
    %409 = arith.maximumf %407, %408 : vector<14x32xf32>
    %c810 = arith.constant 810 : index
    %c0_272 = arith.constant 0 : index
    %410 = tpu.strided_load %arg11[%c810, %c0_272] {strides = array<i32: 2, 1>} : memref<840x32xf32, #tpu.memory_space<vmem>>, vector<14x32xf32>
    %411 = arith.maximumf %409, %410 : vector<14x32xf32>
    %c811 = arith.constant 811 : index
    %c0_273 = arith.constant 0 : index
    %412 = tpu.strided_load %arg11[%c811, %c0_273] {strides = array<i32: 2, 1>} : memref<840x32xf32, #tpu.memory_space<vmem>>, vector<14x32xf32>
    %413 = arith.maximumf %411, %412 : vector<14x32xf32>
    %c240_274 = arith.constant 240 : index
    %c0_275 = arith.constant 0 : index
    %414 = vector.load %arg12[%c240_274, %c0_275] : memref<280x32xf32, #tpu.memory_space<vmem>>, vector<14x32xf32>
    tpu.vector_store %arg12[%c240_274, %c0_275], %413 {strides = array<i32>} : memref<280x32xf32, #tpu.memory_space<vmem>>, vector<14x32xf32>,
    %c15 = arith.constant 15 : index
    %c0_276 = arith.constant 0 : index
    %415 = vector.load %arg12[%c15, %c0_276] : memref<280x32xf32, #tpu.memory_space<vmem>>, vector<224x32xf32>
    %416 = arith.truncf %415 : vector<224x32xf32> to vector<224x32xbf16>
    %c0_277 = arith.constant 0 : index
    %c0_278 = arith.constant 0 : index
    %417 = vector.load %arg13[%c0_277, %c0_278] : memref<224x288xbf16, #tpu.memory_space<vmem>>, vector<224x32xbf16>
    tpu.vector_store %arg13[%c0_277, %c0_278], %416 {strides = array<i32>} : memref<224x288xbf16, #tpu.memory_space<vmem>>, vector<224x32xbf16>,
    %c16 = arith.constant 16 : index
    %c0_279 = arith.constant 0 : index
    %418 = vector.load %arg12[%c16, %c0_279] : memref<280x32xf32, #tpu.memory_space<vmem>>, vector<224x32xf32>
    %419 = arith.truncf %418 : vector<224x32xf32> to vector<224x32xbf16>
    %c0_280 = arith.constant 0 : index
    %c32_281 = arith.constant 32 : index
    %420 = vector.load %arg13[%c0_280, %c32_281] : memref<224x288xbf16, #tpu.memory_space<vmem>>, vector<224x32xbf16>
    tpu.vector_store %arg13[%c0_280, %c32_281], %419 {strides = array<i32>} : memref<224x288xbf16, #tpu.memory_space<vmem>>, vector<224x32xbf16>,
    %c17 = arith.constant 17 : index
    %c0_282 = arith.constant 0 : index
    %421 = vector.load %arg12[%c17, %c0_282] : memref<280x32xf32, #tpu.memory_space<vmem>>, vector<224x32xf32>
    %422 = arith.truncf %421 : vector<224x32xf32> to vector<224x32xbf16>
    %c0_283 = arith.constant 0 : index
    %c64_284 = arith.constant 64 : index
    %423 = vector.load %arg13[%c0_283, %c64_284] : memref<224x288xbf16, #tpu.memory_space<vmem>>, vector<224x32xbf16>
    tpu.vector_store %arg13[%c0_283, %c64_284], %422 {strides = array<i32>} : memref<224x288xbf16, #tpu.memory_space<vmem>>, vector<224x32xbf16>,
    %c31_285 = arith.constant 31 : index
    %c0_286 = arith.constant 0 : index
    %424 = vector.load %arg12[%c31_285, %c0_286] : memref<280x32xf32, #tpu.memory_space<vmem>>, vector<224x32xf32>
    %425 = arith.truncf %424 : vector<224x32xf32> to vector<224x32xbf16>
    %c0_287 = arith.constant 0 : index
    %c96_288 = arith.constant 96 : index
    %426 = vector.load %arg13[%c0_287, %c96_288] : memref<224x288xbf16, #tpu.memory_space<vmem>>, vector<224x32xbf16>
    tpu.vector_store %arg13[%c0_287, %c96_288], %425 {strides = array<i32>} : memref<224x288xbf16, #tpu.memory_space<vmem>>, vector<224x32xbf16>,
    %c32_289 = arith.constant 32 : index
    %c0_290 = arith.constant 0 : index
    %427 = vector.load %arg12[%c32_289, %c0_290] : memref<280x32xf32, #tpu.memory_space<vmem>>, vector<224x32xf32>
    %428 = arith.truncf %427 : vector<224x32xf32> to vector<224x32xbf16>
    %c0_291 = arith.constant 0 : index
    %c128_292 = arith.constant 128 : index
    %429 = vector.load %arg13[%c0_291, %c128_292] : memref<224x288xbf16, #tpu.memory_space<vmem>>, vector<224x32xbf16>
    tpu.vector_store %arg13[%c0_291, %c128_292], %428 {strides = array<i32>} : memref<224x288xbf16, #tpu.memory_space<vmem>>, vector<224x32xbf16>,
    %c33 = arith.constant 33 : index
    %c0_293 = arith.constant 0 : index
    %430 = vector.load %arg12[%c33, %c0_293] : memref<280x32xf32, #tpu.memory_space<vmem>>, vector<224x32xf32>
    %431 = arith.truncf %430 : vector<224x32xf32> to vector<224x32xbf16>
    %c0_294 = arith.constant 0 : index
    %c160_295 = arith.constant 160 : index
    %432 = vector.load %arg13[%c0_294, %c160_295] : memref<224x288xbf16, #tpu.memory_space<vmem>>, vector<224x32xbf16>
    tpu.vector_store %arg13[%c0_294, %c160_295], %431 {strides = array<i32>} : memref<224x288xbf16, #tpu.memory_space<vmem>>, vector<224x32xbf16>,
    %c47 = arith.constant 47 : index
    %c0_296 = arith.constant 0 : index
    %433 = vector.load %arg12[%c47, %c0_296] : memref<280x32xf32, #tpu.memory_space<vmem>>, vector<224x32xf32>
    %434 = arith.truncf %433 : vector<224x32xf32> to vector<224x32xbf16>
    %c0_297 = arith.constant 0 : index
    %c192_298 = arith.constant 192 : index
    %435 = vector.load %arg13[%c0_297, %c192_298] : memref<224x288xbf16, #tpu.memory_space<vmem>>, vector<224x32xbf16>
    tpu.vector_store %arg13[%c0_297, %c192_298], %434 {strides = array<i32>} : memref<224x288xbf16, #tpu.memory_space<vmem>>, vector<224x32xbf16>,
    %c48_299 = arith.constant 48 : index
    %c0_300 = arith.constant 0 : index
    %436 = vector.load %arg12[%c48_299, %c0_300] : memref<280x32xf32, #tpu.memory_space<vmem>>, vector<224x32xf32>
    %437 = arith.truncf %436 : vector<224x32xf32> to vector<224x32xbf16>
    %c0_301 = arith.constant 0 : index
    %c224_302 = arith.constant 224 : index
    %438 = vector.load %arg13[%c0_301, %c224_302] : memref<224x288xbf16, #tpu.memory_space<vmem>>, vector<224x32xbf16>
    tpu.vector_store %arg13[%c0_301, %c224_302], %437 {strides = array<i32>} : memref<224x288xbf16, #tpu.memory_space<vmem>>, vector<224x32xbf16>,
    %c49 = arith.constant 49 : index
    %c0_303 = arith.constant 0 : index
    %439 = vector.load %arg12[%c49, %c0_303] : memref<280x32xf32, #tpu.memory_space<vmem>>, vector<224x32xf32>
    %440 = arith.truncf %439 : vector<224x32xf32> to vector<224x32xbf16>
    %c0_304 = arith.constant 0 : index
    %c256 = arith.constant 256 : index
    %441 = vector.load %arg13[%c0_304, %c256] : memref<224x288xbf16, #tpu.memory_space<vmem>>, vector<224x32xbf16>
    tpu.vector_store %arg13[%c0_304, %c256], %440 {strides = array<i32>} : memref<224x288xbf16, #tpu.memory_space<vmem>>, vector<224x32xbf16>,
    %c0_305 = arith.constant 0 : index
    %c0_306 = arith.constant 0 : index
    %442 = vector.load %arg4[%c0_305, %c0_306] : memref<288x64xbf16, #tpu.memory_space<vmem>>, vector<288x64xbf16>
    %c0_307 = arith.constant 0 : index
    %c0_308 = arith.constant 0 : index
    %443 = vector.load %arg5[%c0_307, %c0_308] : memref<1x64xf32, #tpu.memory_space<vmem>>, vector<1x64xf32>
    %c0_309 = arith.constant 0 : index
    %c0_310 = arith.constant 0 : index
    %444 = vector.load %arg13[%c0_309, %c0_310] : memref<224x288xbf16, #tpu.memory_space<vmem>>, vector<112x288xbf16>
    %cst_311 = arith.constant dense<0.000000e+00> : vector<112x64xf32>
    %445 = tpu.matmul %444, %442, %cst_311 {dimension_numbers = #tpu.dot_dimension_numbers<[1], [0], [0], [1], [0, 0, 1, 1], [], []>} : vector<112x288xbf16>, vector<288x64xbf16>, vector<112x64xf32> -> vector<112x64xf32>
    %446 = vector.broadcast %443 : vector<1x64xf32> to vector<112x64xf32>
    %447 = arith.addf %445, %446 : vector<112x64xf32>
    %cst_312 = arith.constant 0.000000e+00 : f32
    %448 = vector.broadcast %cst_312 : f32 to vector<112x64xf32>
    %449 = arith.maximumf %447, %448 : vector<112x64xf32>
    %c0_313 = arith.constant 0 : index
    %c0_314 = arith.constant 0 : index
    %450 = vector.load %arg14[%c0_313, %c0_314] : memref<224x64xf32, #tpu.memory_space<vmem>>, vector<112x64xf32>
    tpu.vector_store %arg14[%c0_313, %c0_314], %449 {strides = array<i32>} : memref<224x64xf32, #tpu.memory_space<vmem>>, vector<112x64xf32>,
    %c112_315 = arith.constant 112 : index
    %c0_316 = arith.constant 0 : index
    %451 = vector.load %arg13[%c112_315, %c0_316] : memref<224x288xbf16, #tpu.memory_space<vmem>>, vector<112x288xbf16>
    %cst_317 = arith.constant dense<0.000000e+00> : vector<112x64xf32>
    %452 = tpu.matmul %451, %442, %cst_317 {dimension_numbers = #tpu.dot_dimension_numbers<[1], [0], [0], [1], [0, 0, 1, 1], [], []>} : vector<112x288xbf16>, vector<288x64xbf16>, vector<112x64xf32> -> vector<112x64xf32>
    %453 = vector.broadcast %443 : vector<1x64xf32> to vector<112x64xf32>
    %454 = arith.addf %452, %453 : vector<112x64xf32>
    %cst_318 = arith.constant 0.000000e+00 : f32
    %455 = vector.broadcast %cst_318 : f32 to vector<112x64xf32>
    %456 = arith.maximumf %454, %455 : vector<112x64xf32>
    %c112_319 = arith.constant 112 : index
    %c0_320 = arith.constant 0 : index
    %457 = vector.load %arg14[%c112_319, %c0_320] : memref<224x64xf32, #tpu.memory_space<vmem>>, vector<112x64xf32>
    tpu.vector_store %arg14[%c112_319, %c0_320], %456 {strides = array<i32>} : memref<224x64xf32, #tpu.memory_space<vmem>>, vector<112x64xf32>,
    %c0_321 = arith.constant 0 : index
    %c0_322 = arith.constant 0 : index
    %458 = tpu.strided_load %arg14[%c0_321, %c0_322] {strides = array<i32: 2, 1>} : memref<224x64xf32, #tpu.memory_space<vmem>>, vector<7x64xf32>
    %c1_323 = arith.constant 1 : index
    %c0_324 = arith.constant 0 : index
    %459 = tpu.strided_load %arg14[%c1_323, %c0_324] {strides = array<i32: 2, 1>} : memref<224x64xf32, #tpu.memory_space<vmem>>, vector<7x64xf32>
    %460 = arith.maximumf %458, %459 : vector<7x64xf32>
    %c16_325 = arith.constant 16 : index
    %c0_326 = arith.constant 0 : index
    %461 = tpu.strided_load %arg14[%c16_325, %c0_326] {strides = array<i32: 2, 1>} : memref<224x64xf32, #tpu.memory_space<vmem>>, vector<7x64xf32>
    %462 = arith.maximumf %460, %461 : vector<7x64xf32>
    %c17_327 = arith.constant 17 : index
    %c0_328 = arith.constant 0 : index
    %463 = tpu.strided_load %arg14[%c17_327, %c0_328] {strides = array<i32: 2, 1>} : memref<224x64xf32, #tpu.memory_space<vmem>>, vector<7x64xf32>
    %464 = arith.maximumf %462, %463 : vector<7x64xf32>
    %c0_329 = arith.constant 0 : index
    %c0_330 = arith.constant 0 : index
    %465 = vector.load %arg15[%c0_329, %c0_330] : memref<8x448xf32, #tpu.memory_space<vmem>>, vector<7x64xf32>
    tpu.vector_store %arg15[%c0_329, %c0_330], %464 {strides = array<i32>} : memref<8x448xf32, #tpu.memory_space<vmem>>, vector<7x64xf32>,
    %c32_331 = arith.constant 32 : index
    %c0_332 = arith.constant 0 : index
    %466 = tpu.strided_load %arg14[%c32_331, %c0_332] {strides = array<i32: 2, 1>} : memref<224x64xf32, #tpu.memory_space<vmem>>, vector<7x64xf32>
    %c33_333 = arith.constant 33 : index
    %c0_334 = arith.constant 0 : index
    %467 = tpu.strided_load %arg14[%c33_333, %c0_334] {strides = array<i32: 2, 1>} : memref<224x64xf32, #tpu.memory_space<vmem>>, vector<7x64xf32>
    %468 = arith.maximumf %466, %467 : vector<7x64xf32>
    %c48_335 = arith.constant 48 : index
    %c0_336 = arith.constant 0 : index
    %469 = tpu.strided_load %arg14[%c48_335, %c0_336] {strides = array<i32: 2, 1>} : memref<224x64xf32, #tpu.memory_space<vmem>>, vector<7x64xf32>
    %470 = arith.maximumf %468, %469 : vector<7x64xf32>
    %c49_337 = arith.constant 49 : index
    %c0_338 = arith.constant 0 : index
    %471 = tpu.strided_load %arg14[%c49_337, %c0_338] {strides = array<i32: 2, 1>} : memref<224x64xf32, #tpu.memory_space<vmem>>, vector<7x64xf32>
    %472 = arith.maximumf %470, %471 : vector<7x64xf32>
    %c0_339 = arith.constant 0 : index
    %c64_340 = arith.constant 64 : index
    %473 = vector.load %arg15[%c0_339, %c64_340] : memref<8x448xf32, #tpu.memory_space<vmem>>, vector<7x64xf32>
    tpu.vector_store %arg15[%c0_339, %c64_340], %472 {strides = array<i32>} : memref<8x448xf32, #tpu.memory_space<vmem>>, vector<7x64xf32>,
    %c64_341 = arith.constant 64 : index
    %c0_342 = arith.constant 0 : index
    %474 = tpu.strided_load %arg14[%c64_341, %c0_342] {strides = array<i32: 2, 1>} : memref<224x64xf32, #tpu.memory_space<vmem>>, vector<7x64xf32>
    %c65 = arith.constant 65 : index
    %c0_343 = arith.constant 0 : index
    %475 = tpu.strided_load %arg14[%c65, %c0_343] {strides = array<i32: 2, 1>} : memref<224x64xf32, #tpu.memory_space<vmem>>, vector<7x64xf32>
    %476 = arith.maximumf %474, %475 : vector<7x64xf32>
    %c80_344 = arith.constant 80 : index
    %c0_345 = arith.constant 0 : index
    %477 = tpu.strided_load %arg14[%c80_344, %c0_345] {strides = array<i32: 2, 1>} : memref<224x64xf32, #tpu.memory_space<vmem>>, vector<7x64xf32>
    %478 = arith.maximumf %476, %477 : vector<7x64xf32>
    %c81 = arith.constant 81 : index
    %c0_346 = arith.constant 0 : index
    %479 = tpu.strided_load %arg14[%c81, %c0_346] {strides = array<i32: 2, 1>} : memref<224x64xf32, #tpu.memory_space<vmem>>, vector<7x64xf32>
    %480 = arith.maximumf %478, %479 : vector<7x64xf32>
    %c0_347 = arith.constant 0 : index
    %c128_348 = arith.constant 128 : index
    %481 = vector.load %arg15[%c0_347, %c128_348] : memref<8x448xf32, #tpu.memory_space<vmem>>, vector<7x64xf32>
    tpu.vector_store %arg15[%c0_347, %c128_348], %480 {strides = array<i32>} : memref<8x448xf32, #tpu.memory_space<vmem>>, vector<7x64xf32>,
    %c96_349 = arith.constant 96 : index
    %c0_350 = arith.constant 0 : index
    %482 = tpu.strided_load %arg14[%c96_349, %c0_350] {strides = array<i32: 2, 1>} : memref<224x64xf32, #tpu.memory_space<vmem>>, vector<7x64xf32>
    %c97 = arith.constant 97 : index
    %c0_351 = arith.constant 0 : index
    %483 = tpu.strided_load %arg14[%c97, %c0_351] {strides = array<i32: 2, 1>} : memref<224x64xf32, #tpu.memory_space<vmem>>, vector<7x64xf32>
    %484 = arith.maximumf %482, %483 : vector<7x64xf32>
    %c112_352 = arith.constant 112 : index
    %c0_353 = arith.constant 0 : index
    %485 = tpu.strided_load %arg14[%c112_352, %c0_353] {strides = array<i32: 2, 1>} : memref<224x64xf32, #tpu.memory_space<vmem>>, vector<7x64xf32>
    %486 = arith.maximumf %484, %485 : vector<7x64xf32>
    %c113 = arith.constant 113 : index
    %c0_354 = arith.constant 0 : index
    %487 = tpu.strided_load %arg14[%c113, %c0_354] {strides = array<i32: 2, 1>} : memref<224x64xf32, #tpu.memory_space<vmem>>, vector<7x64xf32>
    %488 = arith.maximumf %486, %487 : vector<7x64xf32>
    %c0_355 = arith.constant 0 : index
    %c192_356 = arith.constant 192 : index
    %489 = vector.load %arg15[%c0_355, %c192_356] : memref<8x448xf32, #tpu.memory_space<vmem>>, vector<7x64xf32>
    tpu.vector_store %arg15[%c0_355, %c192_356], %488 {strides = array<i32>} : memref<8x448xf32, #tpu.memory_space<vmem>>, vector<7x64xf32>,
    %c128_357 = arith.constant 128 : index
    %c0_358 = arith.constant 0 : index
    %490 = tpu.strided_load %arg14[%c128_357, %c0_358] {strides = array<i32: 2, 1>} : memref<224x64xf32, #tpu.memory_space<vmem>>, vector<7x64xf32>
    %c129 = arith.constant 129 : index
    %c0_359 = arith.constant 0 : index
    %491 = tpu.strided_load %arg14[%c129, %c0_359] {strides = array<i32: 2, 1>} : memref<224x64xf32, #tpu.memory_space<vmem>>, vector<7x64xf32>
    %492 = arith.maximumf %490, %491 : vector<7x64xf32>
    %c144_360 = arith.constant 144 : index
    %c0_361 = arith.constant 0 : index
    %493 = tpu.strided_load %arg14[%c144_360, %c0_361] {strides = array<i32: 2, 1>} : memref<224x64xf32, #tpu.memory_space<vmem>>, vector<7x64xf32>
    %494 = arith.maximumf %492, %493 : vector<7x64xf32>
    %c145 = arith.constant 145 : index
    %c0_362 = arith.constant 0 : index
    %495 = tpu.strided_load %arg14[%c145, %c0_362] {strides = array<i32: 2, 1>} : memref<224x64xf32, #tpu.memory_space<vmem>>, vector<7x64xf32>
    %496 = arith.maximumf %494, %495 : vector<7x64xf32>
    %c0_363 = arith.constant 0 : index
    %c256_364 = arith.constant 256 : index
    %497 = vector.load %arg15[%c0_363, %c256_364] : memref<8x448xf32, #tpu.memory_space<vmem>>, vector<7x64xf32>
    tpu.vector_store %arg15[%c0_363, %c256_364], %496 {strides = array<i32>} : memref<8x448xf32, #tpu.memory_space<vmem>>, vector<7x64xf32>,
    %c160_365 = arith.constant 160 : index
    %c0_366 = arith.constant 0 : index
    %498 = tpu.strided_load %arg14[%c160_365, %c0_366] {strides = array<i32: 2, 1>} : memref<224x64xf32, #tpu.memory_space<vmem>>, vector<7x64xf32>
    %c161 = arith.constant 161 : index
    %c0_367 = arith.constant 0 : index
    %499 = tpu.strided_load %arg14[%c161, %c0_367] {strides = array<i32: 2, 1>} : memref<224x64xf32, #tpu.memory_space<vmem>>, vector<7x64xf32>
    %500 = arith.maximumf %498, %499 : vector<7x64xf32>
    %c176_368 = arith.constant 176 : index
    %c0_369 = arith.constant 0 : index
    %501 = tpu.strided_load %arg14[%c176_368, %c0_369] {strides = array<i32: 2, 1>} : memref<224x64xf32, #tpu.memory_space<vmem>>, vector<7x64xf32>
    %502 = arith.maximumf %500, %501 : vector<7x64xf32>
    %c177 = arith.constant 177 : index
    %c0_370 = arith.constant 0 : index
    %503 = tpu.strided_load %arg14[%c177, %c0_370] {strides = array<i32: 2, 1>} : memref<224x64xf32, #tpu.memory_space<vmem>>, vector<7x64xf32>
    %504 = arith.maximumf %502, %503 : vector<7x64xf32>
    %c0_371 = arith.constant 0 : index
    %c320 = arith.constant 320 : index
    %505 = vector.load %arg15[%c0_371, %c320] : memref<8x448xf32, #tpu.memory_space<vmem>>, vector<7x64xf32>
    tpu.vector_store %arg15[%c0_371, %c320], %504 {strides = array<i32>} : memref<8x448xf32, #tpu.memory_space<vmem>>, vector<7x64xf32>,
    %c192_372 = arith.constant 192 : index
    %c0_373 = arith.constant 0 : index
    %506 = tpu.strided_load %arg14[%c192_372, %c0_373] {strides = array<i32: 2, 1>} : memref<224x64xf32, #tpu.memory_space<vmem>>, vector<7x64xf32>
    %c193 = arith.constant 193 : index
    %c0_374 = arith.constant 0 : index
    %507 = tpu.strided_load %arg14[%c193, %c0_374] {strides = array<i32: 2, 1>} : memref<224x64xf32, #tpu.memory_space<vmem>>, vector<7x64xf32>
    %508 = arith.maximumf %506, %507 : vector<7x64xf32>
    %c208_375 = arith.constant 208 : index
    %c0_376 = arith.constant 0 : index
    %509 = tpu.strided_load %arg14[%c208_375, %c0_376] {strides = array<i32: 2, 1>} : memref<224x64xf32, #tpu.memory_space<vmem>>, vector<7x64xf32>
    %510 = arith.maximumf %508, %509 : vector<7x64xf32>
    %c209 = arith.constant 209 : index
    %c0_377 = arith.constant 0 : index
    %511 = tpu.strided_load %arg14[%c209, %c0_377] {strides = array<i32: 2, 1>} : memref<224x64xf32, #tpu.memory_space<vmem>>, vector<7x64xf32>
    %512 = arith.maximumf %510, %511 : vector<7x64xf32>
    %c0_378 = arith.constant 0 : index
    %c384 = arith.constant 384 : index
    %513 = vector.load %arg15[%c0_378, %c384] : memref<8x448xf32, #tpu.memory_space<vmem>>, vector<7x64xf32>
    tpu.vector_store %arg15[%c0_378, %c384], %512 {strides = array<i32>} : memref<8x448xf32, #tpu.memory_space<vmem>>, vector<7x64xf32>,
    %c0_379 = arith.constant 0 : index
    %c0_380 = arith.constant 0 : index
    %514 = vector.load %arg7[%c0_379, %c0_380] : memref<1x128xf32, #tpu.memory_space<vmem>>, vector<1x128xf32>
    %c0_381 = arith.constant 0 : index
    %c0_382 = arith.constant 0 : index
    %515 = vector.load %arg15[%c0_381, %c0_382] : memref<8x448xf32, #tpu.memory_space<vmem>>, vector<1x448xf32>
    %516 = arith.truncf %515 : vector<1x448xf32> to vector<1x448xbf16>
    %c0_383 = arith.constant 0 : index
    %c0_384 = arith.constant 0 : index
    %c0_385 = arith.constant 0 : index
    %517 = vector.load %arg6[%c0_383, %c0_384, %c0_385] : memref<7x448x128xbf16, #tpu.memory_space<vmem>>, vector<1x448x128xbf16>
    %518 = vector.shape_cast %517 : vector<1x448x128xbf16> to vector<448x128xbf16>
    %cst_386 = arith.constant dense<0.000000e+00> : vector<1x128xf32>
    %519 = tpu.matmul %516, %518, %cst_386 {dimension_numbers = #tpu.dot_dimension_numbers<[1], [0], [0], [1], [0, 0, 1, 1], [], []>} : vector<1x448xbf16>, vector<448x128xbf16>, vector<1x128xf32> -> vector<1x128xf32>
    %520 = arith.addf %514, %519 : vector<1x128xf32>
    %c1_387 = arith.constant 1 : index
    %c0_388 = arith.constant 0 : index
    %521 = vector.load %arg15[%c1_387, %c0_388] : memref<8x448xf32, #tpu.memory_space<vmem>>, vector<1x448xf32>
    %522 = arith.truncf %521 : vector<1x448xf32> to vector<1x448xbf16>
    %c1_389 = arith.constant 1 : index
    %c0_390 = arith.constant 0 : index
    %c0_391 = arith.constant 0 : index
    %523 = vector.load %arg6[%c1_389, %c0_390, %c0_391] : memref<7x448x128xbf16, #tpu.memory_space<vmem>>, vector<1x448x128xbf16>
    %524 = vector.shape_cast %523 : vector<1x448x128xbf16> to vector<448x128xbf16>
    %cst_392 = arith.constant dense<0.000000e+00> : vector<1x128xf32>
    %525 = tpu.matmul %522, %524, %cst_392 {dimension_numbers = #tpu.dot_dimension_numbers<[1], [0], [0], [1], [0, 0, 1, 1], [], []>} : vector<1x448xbf16>, vector<448x128xbf16>, vector<1x128xf32> -> vector<1x128xf32>
    %526 = arith.addf %520, %525 : vector<1x128xf32>
    %c2_393 = arith.constant 2 : index
    %c0_394 = arith.constant 0 : index
    %527 = vector.load %arg15[%c2_393, %c0_394] : memref<8x448xf32, #tpu.memory_space<vmem>>, vector<1x448xf32>
    %528 = arith.truncf %527 : vector<1x448xf32> to vector<1x448xbf16>
    %c2_395 = arith.constant 2 : index
    %c0_396 = arith.constant 0 : index
    %c0_397 = arith.constant 0 : index
    %529 = vector.load %arg6[%c2_395, %c0_396, %c0_397] : memref<7x448x128xbf16, #tpu.memory_space<vmem>>, vector<1x448x128xbf16>
    %530 = vector.shape_cast %529 : vector<1x448x128xbf16> to vector<448x128xbf16>
    %cst_398 = arith.constant dense<0.000000e+00> : vector<1x128xf32>
    %531 = tpu.matmul %528, %530, %cst_398 {dimension_numbers = #tpu.dot_dimension_numbers<[1], [0], [0], [1], [0, 0, 1, 1], [], []>} : vector<1x448xbf16>, vector<448x128xbf16>, vector<1x128xf32> -> vector<1x128xf32>
    %532 = arith.addf %526, %531 : vector<1x128xf32>
    %c3_399 = arith.constant 3 : index
    %c0_400 = arith.constant 0 : index
    %533 = vector.load %arg15[%c3_399, %c0_400] : memref<8x448xf32, #tpu.memory_space<vmem>>, vector<1x448xf32>
    %534 = arith.truncf %533 : vector<1x448xf32> to vector<1x448xbf16>
    %c3_401 = arith.constant 3 : index
    %c0_402 = arith.constant 0 : index
    %c0_403 = arith.constant 0 : index
    %535 = vector.load %arg6[%c3_401, %c0_402, %c0_403] : memref<7x448x128xbf16, #tpu.memory_space<vmem>>, vector<1x448x128xbf16>
    %536 = vector.shape_cast %535 : vector<1x448x128xbf16> to vector<448x128xbf16>
    %cst_404 = arith.constant dense<0.000000e+00> : vector<1x128xf32>
    %537 = tpu.matmul %534, %536, %cst_404 {dimension_numbers = #tpu.dot_dimension_numbers<[1], [0], [0], [1], [0, 0, 1, 1], [], []>} : vector<1x448xbf16>, vector<448x128xbf16>, vector<1x128xf32> -> vector<1x128xf32>
    %538 = arith.addf %532, %537 : vector<1x128xf32>
    %c4_405 = arith.constant 4 : index
    %c0_406 = arith.constant 0 : index
    %539 = vector.load %arg15[%c4_405, %c0_406] : memref<8x448xf32, #tpu.memory_space<vmem>>, vector<1x448xf32>
    %540 = arith.truncf %539 : vector<1x448xf32> to vector<1x448xbf16>
    %c4_407 = arith.constant 4 : index
    %c0_408 = arith.constant 0 : index
    %c0_409 = arith.constant 0 : index
    %541 = vector.load %arg6[%c4_407, %c0_408, %c0_409] : memref<7x448x128xbf16, #tpu.memory_space<vmem>>, vector<1x448x128xbf16>
    %542 = vector.shape_cast %541 : vector<1x448x128xbf16> to vector<448x128xbf16>
    %cst_410 = arith.constant dense<0.000000e+00> : vector<1x128xf32>
    %543 = tpu.matmul %540, %542, %cst_410 {dimension_numbers = #tpu.dot_dimension_numbers<[1], [0], [0], [1], [0, 0, 1, 1], [], []>} : vector<1x448xbf16>, vector<448x128xbf16>, vector<1x128xf32> -> vector<1x128xf32>
    %544 = arith.addf %538, %543 : vector<1x128xf32>
    %c5_411 = arith.constant 5 : index
    %c0_412 = arith.constant 0 : index
    %545 = vector.load %arg15[%c5_411, %c0_412] : memref<8x448xf32, #tpu.memory_space<vmem>>, vector<1x448xf32>
    %546 = arith.truncf %545 : vector<1x448xf32> to vector<1x448xbf16>
    %c5_413 = arith.constant 5 : index
    %c0_414 = arith.constant 0 : index
    %c0_415 = arith.constant 0 : index
    %547 = vector.load %arg6[%c5_413, %c0_414, %c0_415] : memref<7x448x128xbf16, #tpu.memory_space<vmem>>, vector<1x448x128xbf16>
    %548 = vector.shape_cast %547 : vector<1x448x128xbf16> to vector<448x128xbf16>
    %cst_416 = arith.constant dense<0.000000e+00> : vector<1x128xf32>
    %549 = tpu.matmul %546, %548, %cst_416 {dimension_numbers = #tpu.dot_dimension_numbers<[1], [0], [0], [1], [0, 0, 1, 1], [], []>} : vector<1x448xbf16>, vector<448x128xbf16>, vector<1x128xf32> -> vector<1x128xf32>
    %550 = arith.addf %544, %549 : vector<1x128xf32>
    %c6_417 = arith.constant 6 : index
    %c0_418 = arith.constant 0 : index
    %551 = vector.load %arg15[%c6_417, %c0_418] : memref<8x448xf32, #tpu.memory_space<vmem>>, vector<1x448xf32>
    %552 = arith.truncf %551 : vector<1x448xf32> to vector<1x448xbf16>
    %c6_419 = arith.constant 6 : index
    %c0_420 = arith.constant 0 : index
    %c0_421 = arith.constant 0 : index
    %553 = vector.load %arg6[%c6_419, %c0_420, %c0_421] : memref<7x448x128xbf16, #tpu.memory_space<vmem>>, vector<1x448x128xbf16>
    %554 = vector.shape_cast %553 : vector<1x448x128xbf16> to vector<448x128xbf16>
    %cst_422 = arith.constant dense<0.000000e+00> : vector<1x128xf32>
    %555 = tpu.matmul %552, %554, %cst_422 {dimension_numbers = #tpu.dot_dimension_numbers<[1], [0], [0], [1], [0, 0, 1, 1], [], []>} : vector<1x448xbf16>, vector<448x128xbf16>, vector<1x128xf32> -> vector<1x128xf32>
    %556 = arith.addf %550, %555 : vector<1x128xf32>
    %cst_423 = arith.constant 0.000000e+00 : f32
    %557 = vector.broadcast %cst_423 : f32 to vector<1x128xf32>
    %558 = arith.maximumf %556, %557 : vector<1x128xf32>
    %559 = arith.truncf %558 : vector<1x128xf32> to vector<1x128xbf16>
    %c0_424 = arith.constant 0 : index
    %c0_425 = arith.constant 0 : index
    %560 = vector.load %arg8[%c0_424, %c0_425] : memref<128x128xbf16, #tpu.memory_space<vmem>>, vector<128x128xbf16>
    %cst_426 = arith.constant dense<0.000000e+00> : vector<1x128xf32>
    %561 = tpu.matmul %559, %560, %cst_426 {dimension_numbers = #tpu.dot_dimension_numbers<[1], [0], [0], [1], [0, 0, 1, 1], [], []>} : vector<1x128xbf16>, vector<128x128xbf16>, vector<1x128xf32> -> vector<1x128xf32>
    %c0_427 = arith.constant 0 : index
    %c0_428 = arith.constant 0 : index
    %562 = vector.load %arg9[%c0_427, %c0_428] : memref<1x128xf32, #tpu.memory_space<vmem>>, vector<1x128xf32>
    %563 = arith.addf %561, %562 : vector<1x128xf32>
    %c0_429 = arith.constant 0 : index
    %c0_430 = arith.constant 0 : index
    %c0_431 = arith.constant 0 : index
    %564 = vector.load %arg10[%c0_429, %c0_430, %c0_431] : memref<1x1x128xf32, #tpu.memory_space<vmem>>, vector<1x1x128xf32>
    %565 = vector.shape_cast %564 : vector<1x1x128xf32> to vector<1x128xf32>
    %566 = vector.shape_cast %563 : vector<1x128xf32> to vector<1x1x128xf32>
    tpu.vector_store %arg10[%c0_429, %c0_430, %c0_431], %566 {strides = array<i32>} : memref<1x1x128xf32, #tpu.memory_space<vmem>>, vector<1x1x128xf32>,
    return
  }
  func.func @transform_0(%arg0: i32) -> (i32, i32, i32) {
    %c0_i32 = arith.constant 0 : i32
    %c0_i32_0 = arith.constant 0 : i32
    %c0_i32_1 = arith.constant 0 : i32
    return %arg0, %c0_i32, %c0_i32_0 : i32, i32, i32
  }
  func.func @transform_1(%arg0: i32) -> (i32, i32) {
    %c0_i32 = arith.constant 0 : i32
    %c0_i32_0 = arith.constant 0 : i32
    %c0_i32_1 = arith.constant 0 : i32
    return %c0_i32, %c0_i32_0 : i32, i32
  }
  func.func @transform_2(%arg0: i32) -> (i32, i32) {
    %c0_i32 = arith.constant 0 : i32
    %c0_i32_0 = arith.constant 0 : i32
    %c0_i32_1 = arith.constant 0 : i32
    return %c0_i32, %c0_i32_0 : i32, i32
  }
  func.func @transform_3(%arg0: i32) -> (i32, i32) {
    %c0_i32 = arith.constant 0 : i32
    %c0_i32_0 = arith.constant 0 : i32
    %c0_i32_1 = arith.constant 0 : i32
    return %c0_i32, %c0_i32_0 : i32, i32
  }
  func.func @transform_4(%arg0: i32) -> (i32, i32) {
    %c0_i32 = arith.constant 0 : i32
    %c0_i32_0 = arith.constant 0 : i32
    %c0_i32_1 = arith.constant 0 : i32
    return %c0_i32, %c0_i32_0 : i32, i32
  }
  func.func @transform_5(%arg0: i32) -> (i32, i32, i32) {
    %c0_i32 = arith.constant 0 : i32
    %c0_i32_0 = arith.constant 0 : i32
    %c0_i32_1 = arith.constant 0 : i32
    %c0_i32_2 = arith.constant 0 : i32
    return %c0_i32, %c0_i32_0, %c0_i32_1 : i32, i32, i32
  }
  func.func @transform_6(%arg0: i32) -> (i32, i32) {
    %c0_i32 = arith.constant 0 : i32
    %c0_i32_0 = arith.constant 0 : i32
    %c0_i32_1 = arith.constant 0 : i32
    return %c0_i32, %c0_i32_0 : i32, i32
  }
  func.func @transform_7(%arg0: i32) -> (i32, i32) {
    %c0_i32 = arith.constant 0 : i32
    %c0_i32_0 = arith.constant 0 : i32
    %c0_i32_1 = arith.constant 0 : i32
    return %c0_i32, %c0_i32_0 : i32, i32
  }
  func.func @transform_8(%arg0: i32) -> (i32, i32) {
    %c0_i32 = arith.constant 0 : i32
    %c0_i32_0 = arith.constant 0 : i32
    %c0_i32_1 = arith.constant 0 : i32
    return %c0_i32, %c0_i32_0 : i32, i32
  }
  func.func @transform_9(%arg0: i32) -> (i32, i32, i32) {
    %c0_i32 = arith.constant 0 : i32
    %c0_i32_0 = arith.constant 0 : i32
    %c0_i32_1 = arith.constant 0 : i32
    return %arg0, %c0_i32, %c0_i32_0 : i32, i32, i32
  }
}

</mosaic_0001>

<llo_original>
// kernel: cnn_forward.1
$region0: #{cnn_forward.1}
  #allocation0 [shape = 'u32[]', space=smem, size = 0x4, offset = 0x4, fixed_abs, tag = 'smem constant byte address 0x4 - core index']
  #allocation1 [shape = 'u32[144,128]{1,0:T(1,128)}', space=vmem, size = 0x12000, scoped, tag = 'internal scratch']
  #allocation2 [shape = 'f32[840,32]{1,0:T(8,128)}', space=vmem, size = 0x69000, scoped, tag = 'scratch operand']
  #allocation3 [shape = 'f32[280,32]{1,0:T(8,128)}', space=vmem, size = 0x23000, scoped, tag = 'scratch operand']
  #allocation4 [shape = 'bf16[224,288]{1,0:T(8,128)(2,1)}', space=vmem, size = 0x2a000, scoped, tag = 'scratch operand']
  #allocation5 [shape = 'f32[224,64]{1,0:T(8,128)}', space=vmem, size = 0x1c000, scoped, tag = 'scratch operand']
  #allocation6 [shape = 'f32[8,448]{1,0:T(8,128)}', space=vmem, size = 0x4000, scoped, tag = 'scratch operand']
  %s0 = inlined_call_operand.vmem [shape: f32[2,904,32], index: 0, kind: input, shape index: {}]
  %s1 = inlined_call_operand.vmem [shape: f32[9,32], index: 1, kind: input, shape index: {}]
  %s2 = inlined_call_operand.vmem [shape: f32[1,32], index: 2, kind: input, shape index: {}]
  %s3 = inlined_call_operand.vmem [shape: bf16[288,64], index: 3, kind: input, shape index: {}]
  %s4 = inlined_call_operand.vmem [shape: f32[1,64], index: 4, kind: input, shape index: {}]
  %s5 = inlined_call_operand.vmem [shape: bf16[7,448,128], index: 5, kind: input, shape index: {}]
  %s6 = inlined_call_operand.vmem [shape: f32[1,128], index: 6, kind: input, shape index: {}]
  %s7 = inlined_call_operand.vmem [shape: bf16[128,128], index: 7, kind: input, shape index: {}]
  %s8 = inlined_call_operand.vmem [shape: f32[1,128], index: 8, kind: input, shape index: {}]
  %s9 = inlined_call_operand.hbm [shape: f32[2,1,128], index: 9, kind: output, shape index: {}]
  %s10 = sld [smem:[#allocation0]]
  $region69: #{cnn_forward.1} parent=0
    _
  %s12 = ssub.s32 1, %s10
  %s13 = scalar_select 0, %s12, %s10
  $region1: #{cnn_forward.1} parent=0
    #allocation7 [shape = 'u8[1024]{0}', space=vmem, size = 0x400, scoped, tag = 'output window, operand 0']
    #allocation8 [shape = 's32[2]{0}', space=sflag, size = 0x8, scoped, tag = 'scoped memory for cnn_forward.1']
    %14 = vsyncpa [#allocation8], 0
    %s15 = scalar_lea.sflag [#allocation8], 1
    %16 = vsyncpa %s15, 0
    loop: start=0, step=1, limit=4
    $region2: #{cnn_forward.1} parent=1 // loop_pre_header
      _
    $region3: #{cnn_forward.1} parent=1 // loop_header
      %s18 = sphi 0, %s22
      %p19 = scmp.ge.s32.totalorder %s18, 4
      %s28 = sphi 0, %s30
      %s31 = sphi 0, %s28
      %s32 = sphi 0, %s31
      %s48 = sphi 0, %s32
      %s52 = sphi 0, %s52
      %s54 = sphi 0, %s52
      %s55 = sphi 0, %s54
      %s69 = sphi 0, %s55
      %s73 = sphi 0, %s73
      %s75 = sphi 0, %s73
      %s76 = sphi 0, %s75
      %s90 = sphi 0, %s76
      %s94 = sphi 0, %s94
      %s96 = sphi 0, %s94
      %s97 = sphi 0, %s96
      %s111 = sphi 0, %s97
      %s115 = sphi 0, %s115
      %s117 = sphi 0, %s115
      %s118 = sphi 0, %s117
      %s132 = sphi 0, %s118
      %s136 = sphi 0, %s136
      %s138 = sphi 0, %s136
      %s139 = sphi 0, %s138
      %s153 = sphi 0, %s139
      %s157 = sphi 0, %s157
      %s159 = sphi 0, %s157
      %s160 = sphi 0, %s159
      %s174 = sphi 0, %s160
      %s178 = sphi 0, %s178
      %s180 = sphi 0, %s178
      %s181 = sphi 0, %s180
      %s195 = sphi 0, %s181
      %s199 = sphi 0, %s199
      %s201 = sphi 0, %s199
      %s202 = sphi 0, %s201
      %s216 = sphi 0, %s202
      %s222 = sphi 0, %s224
      %s225 = sphi 0, %s222
      %s226 = sphi 0, %s225
      %s242 = sphi 0, %s226
    $region4: #{cnn_forward.1} parent=1 // loop_header_branch
      %21 = sbr.rel (%p19) target = $region8
    $region5: #{cnn_forward.1} parent=1 // loop_body
      %s23 = ssub.s32 %s18, 1
      %s24 = ssub.s32 %s18, 2
      %s25 = sadd.s32 %s18, 1
      %s26 = ssub.s32 %s18, %s25
      %p27 = scmp.eq.s32.totalorder %s26, 0
      %s29 = sadd.s32 %s28, 1
      %s30 = scalar_select %p27, %s28, %s29
      %p33 = pneg %p27
      %p34 = scmp.eq.s32.totalorder %s18, 1
      %p35 = por %p33, %p34
      %p36 = scmp.ne.s32.totalorder %s28, %s31
      %p37 = scmp.eq.s32.totalorder %s18, 0
      %p38 = por %p36, %p37
      %p39 = scmp.ne.s32.totalorder %s28, %s31
      %p40 = scmp.eq.s32.totalorder %s23, 1
      %p41 = por %p39, %p40
      %p42 = scmp.ne.s32.totalorder %s31, %s32
      %p43 = scmp.eq.s32.totalorder %s23, 0
      %p44 = por %p42, %p43
      %p45 = scmp.ne.s32.totalorder %s31, %s32
      %p46 = scmp.eq.s32.totalorder %s24, 1
      %p47 = por %p45, %p46
      %p49 = scmp.ne.s32.totalorder %s32, %s48
      %p50 = scmp.eq.s32.totalorder %s24, 0
      %p51 = por %p49, %p50
      %s53 = sadd.s32 %s52, 1
      %p56 = scmp.eq.s32.totalorder %s18, 1
      %p57 = scmp.ne.s32.totalorder %s52, %s54
      %p58 = scmp.eq.s32.totalorder %s18, 0
      %p59 = por %p57, %p58
      %p60 = scmp.ne.s32.totalorder %s52, %s54
      %p61 = scmp.eq.s32.totalorder %s23, 1
      %p62 = por %p60, %p61
      %p63 = scmp.ne.s32.totalorder %s54, %s55
      %p64 = scmp.eq.s32.totalorder %s23, 0
      %p65 = por %p63, %p64
      %p66 = scmp.ne.s32.totalorder %s54, %s55
      %p67 = scmp.eq.s32.totalorder %s24, 1
      %p68 = por %p66, %p67
      %p70 = scmp.ne.s32.totalorder %s55, %s69
      %p71 = scmp.eq.s32.totalorder %s24, 0
      %p72 = por %p70, %p71
      %s74 = sadd.s32 %s73, 1
      %p77 = scmp.eq.s32.totalorder %s18, 1
      %p78 = scmp.ne.s32.totalorder %s73, %s75
      %p79 = scmp.eq.s32.totalorder %s18, 0
      %p80 = por %p78, %p79
      %p81 = scmp.ne.s32.totalorder %s73, %s75
      %p82 = scmp.eq.s32.totalorder %s23, 1
      %p83 = por %p81, %p82
      %p84 = scmp.ne.s32.totalorder %s75, %s76
      %p85 = scmp.eq.s32.totalorder %s23, 0
      %p86 = por %p84, %p85
      %p87 = scmp.ne.s32.totalorder %s75, %s76
      %p88 = scmp.eq.s32.totalorder %s24, 1
      %p89 = por %p87, %p88
      %p91 = scmp.ne.s32.totalorder %s76, %s90
      %p92 = scmp.eq.s32.totalorder %s24, 0
      %p93 = por %p91, %p92
      %s95 = sadd.s32 %s94, 1
      %p98 = scmp.eq.s32.totalorder %s18, 1
      %p99 = scmp.ne.s32.totalorder %s94, %s96
      %p100 = scmp.eq.s32.totalorder %s18, 0
      %p101 = por %p99, %p100
      %p102 = scmp.ne.s32.totalorder %s94, %s96
      %p103 = scmp.eq.s32.totalorder %s23, 1
      %p104 = por %p102, %p103
      %p105 = scmp.ne.s32.totalorder %s96, %s97
      %p106 = scmp.eq.s32.totalorder %s23, 0
      %p107 = por %p105, %p106
      %p108 = scmp.ne.s32.totalorder %s96, %s97
      %p109 = scmp.eq.s32.totalorder %s24, 1
      %p110 = por %p108, %p109
      %p112 = scmp.ne.s32.totalorder %s97, %s111
      %p113 = scmp.eq.s32.totalorder %s24, 0
      %p114 = por %p112, %p113
      %s116 = sadd.s32 %s115, 1
      %p119 = scmp.eq.s32.totalorder %s18, 1
      %p120 = scmp.ne.s32.totalorder %s115, %s117
      %p121 = scmp.eq.s32.totalorder %s18, 0
      %p122 = por %p120, %p121
      %p123 = scmp.ne.s32.totalorder %s115, %s117
      %p124 = scmp.eq.s32.totalorder %s23, 1
      %p125 = por %p123, %p124
      %p126 = scmp.ne.s32.totalorder %s117, %s118
      %p127 = scmp.eq.s32.totalorder %s23, 0
      %p128 = por %p126, %p127
      %p129 = scmp.ne.s32.totalorder %s117, %s118
      %p130 = scmp.eq.s32.totalorder %s24, 1
      %p131 = por %p129, %p130
      %p133 = scmp.ne.s32.totalorder %s118, %s132
      %p134 = scmp.eq.s32.totalorder %s24, 0
      %p135 = por %p133, %p134
      %s137 = sadd.s32 %s136, 1
      %p140 = scmp.eq.s32.totalorder %s18, 1
      %p141 = scmp.ne.s32.totalorder %s136, %s138
      %p142 = scmp.eq.s32.totalorder %s18, 0
      %p143 = por %p141, %p142
      %p144 = scmp.ne.s32.totalorder %s136, %s138
      %p145 = scmp.eq.s32.totalorder %s23, 1
      %p146 = por %p144, %p145
      %p147 = scmp.ne.s32.totalorder %s138, %s139
      %p148 = scmp.eq.s32.totalorder %s23, 0
      %p149 = por %p147, %p148
      %p150 = scmp.ne.s32.totalorder %s138, %s139
      %p151 = scmp.eq.s32.totalorder %s24, 1
      %p152 = por %p150, %p151
      %p154 = scmp.ne.s32.totalorder %s139, %s153
      %p155 = scmp.eq.s32.totalorder %s24, 0
      %p156 = por %p154, %p155
      %s158 = sadd.s32 %s157, 1
      %p161 = scmp.eq.s32.totalorder %s18, 1
      %p162 = scmp.ne.s32.totalorder %s157, %s159
      %p163 = scmp.eq.s32.totalorder %s18, 0
      %p164 = por %p162, %p163
      %p165 = scmp.ne.s32.totalorder %s157, %s159
      %p166 = scmp.eq.s32.totalorder %s23, 1
      %p167 = por %p165, %p166
      %p168 = scmp.ne.s32.totalorder %s159, %s160
      %p169 = scmp.eq.s32.totalorder %s23, 0
      %p170 = por %p168, %p169
      %p171 = scmp.ne.s32.totalorder %s159, %s160
      %p172 = scmp.eq.s32.totalorder %s24, 1
      %p173 = por %p171, %p172
      %p175 = scmp.ne.s32.totalorder %s160, %s174
      %p176 = scmp.eq.s32.totalorder %s24, 0
      %p177 = por %p175, %p176
      %s179 = sadd.s32 %s178, 1
      %p182 = scmp.eq.s32.totalorder %s18, 1
      %p183 = scmp.ne.s32.totalorder %s178, %s180
      %p184 = scmp.eq.s32.totalorder %s18, 0
      %p185 = por %p183, %p184
      %p186 = scmp.ne.s32.totalorder %s178, %s180
      %p187 = scmp.eq.s32.totalorder %s23, 1
      %p188 = por %p186, %p187
      %p189 = scmp.ne.s32.totalorder %s180, %s181
      %p190 = scmp.eq.s32.totalorder %s23, 0
      %p191 = por %p189, %p190
      %p192 = scmp.ne.s32.totalorder %s180, %s181
      %p193 = scmp.eq.s32.totalorder %s24, 1
      %p194 = por %p192, %p193
      %p196 = scmp.ne.s32.totalorder %s181, %s195
      %p197 = scmp.eq.s32.totalorder %s24, 0
      %p198 = por %p196, %p197
      %s200 = sadd.s32 %s199, 1
      %p203 = scmp.eq.s32.totalorder %s18, 1
      %p204 = scmp.ne.s32.totalorder %s199, %s201
      %p205 = scmp.eq.s32.totalorder %s18, 0
      %p206 = por %p204, %p205
      %p207 = scmp.ne.s32.totalorder %s199, %s201
      %p208 = scmp.eq.s32.totalorder %s23, 1
      %p209 = por %p207, %p208
      %p210 = scmp.ne.s32.totalorder %s201, %s202
      %p211 = scmp.eq.s32.totalorder %s23, 0
      %p212 = por %p210, %p211
      %p213 = scmp.ne.s32.totalorder %s201, %s202
      %p214 = scmp.eq.s32.totalorder %s24, 1
      %p215 = por %p213, %p214
      %p217 = scmp.ne.s32.totalorder %s202, %s216
      %p218 = scmp.eq.s32.totalorder %s24, 0
      %p219 = por %p217, %p218
      %s220 = ssub.s32 %s18, %s25
      %p221 = scmp.eq.s32.totalorder %s220, 0
      %s223 = sadd.s32 %s222, 1
      %s224 = scalar_select %p221, %s222, %s223
      %p227 = pneg %p221
      %p228 = scmp.eq.s32.totalorder %s18, 1
      %p229 = por %p227, %p228
      %p230 = scmp.ne.s32.totalorder %s222, %s225
      %p231 = scmp.eq.s32.totalorder %s18, 0
      %p232 = por %p230, %p231
      %p233 = scmp.ne.s32.totalorder %s222, %s225
      %p234 = scmp.eq.s32.totalorder %s23, 1
      %p235 = por %p233, %p234
      %p236 = scmp.ne.s32.totalorder %s225, %s226
      %p237 = scmp.eq.s32.totalorder %s23, 0
      %p238 = por %p236, %p237
      %p239 = scmp.ne.s32.totalorder %s225, %s226
      %p240 = scmp.eq.s32.totalorder %s24, 1
      %p241 = por %p239, %p240
      %p243 = scmp.ne.s32.totalorder %s226, %s242
      %p244 = scmp.eq.s32.totalorder %s24, 0
      %p245 = por %p243, %p244
      %p246 = scmp.le.s32.totalorder 1, %s18
      %p247 = scmp.lt.s32.totalorder %s18, 3
      %p248 = pnand %p246, %p247
      %p249 = pneg %p248
      // Predicated region
      $region9: #{cnn_forward.1} parent=5 // pred_check
        _
      $region10: #{cnn_forward.1} parent=5 // pred_check_branch
        %251 = sbr.rel (%p248) target = $region12
      $region11: #{cnn_forward.1} parent=5 // pred_region
        %s252 = ssub.s32 %s18, 1
        // Predicated region
        $region13: #{cnn_forward.1} parent=11 // pred_check
          %p253 = pneg %p65
        $region14: #{cnn_forward.1} parent=11 // pred_check_branch
          %255 = sbr.rel (%p253) target = $region16
        $region15: #{cnn_forward.1} parent=11 // pred_region
          _
        $region16: #{cnn_forward.1} parent=11 // pred_fallthru
          _
        // Predicated region
        $region17: #{cnn_forward.1} parent=11 // pred_check
          %p256 = pneg %p86
        $region18: #{cnn_forward.1} parent=11 // pred_check_branch
          %258 = sbr.rel (%p256) target = $region20
        $region19: #{cnn_forward.1} parent=11 // pred_region
          _
        $region20: #{cnn_forward.1} parent=11 // pred_fallthru
          _
        // Predicated region
        $region21: #{cnn_forward.1} parent=11 // pred_check
          %p259 = pneg %p107
        $region22: #{cnn_forward.1} parent=11 // pred_check_branch
          %261 = sbr.rel (%p259) target = $region24
        $region23: #{cnn_forward.1} parent=11 // pred_region
          _
        $region24: #{cnn_forward.1} parent=11 // pred_fallthru
          _
        // Predicated region
        $region25: #{cnn_forward.1} parent=11 // pred_check
          %p262 = pneg %p128
        $region26: #{cnn_forward.1} parent=11 // pred_check_branch
          %264 = sbr.rel (%p262) target = $region28
        $region27: #{cnn_forward.1} parent=11 // pred_region
          _
        $region28: #{cnn_forward.1} parent=11 // pred_fallthru
          _
        // Predicated region
        $region29: #{cnn_forward.1} parent=11 // pred_check
          %p265 = pneg %p149
        $region30: #{cnn_forward.1} parent=11 // pred_check_branch
          %267 = sbr.rel (%p265) target = $region32
        $region31: #{cnn_forward.1} parent=11 // pred_region
          _
        $region32: #{cnn_forward.1} parent=11 // pred_fallthru
          _
        // Predicated region
        $region33: #{cnn_forward.1} parent=11 // pred_check
          %p268 = pneg %p170
        $region34: #{cnn_forward.1} parent=11 // pred_check_branch
          %270 = sbr.rel (%p268) target = $region36
        $region35: #{cnn_forward.1} parent=11 // pred_region
          _
        $region36: #{cnn_forward.1} parent=11 // pred_fallthru
          _
        // Predicated region
        $region37: #{cnn_forward.1} parent=11 // pred_check
          %p271 = pneg %p191
        $region38: #{cnn_forward.1} parent=11 // pred_check_branch
          %273 = sbr.rel (%p271) target = $region40
        $region39: #{cnn_forward.1} parent=11 // pred_region
          _
        $region40: #{cnn_forward.1} parent=11 // pred_fallthru
          _
        // Predicated region
        $region41: #{cnn_forward.1} parent=11 // pred_check
          %p274 = pneg %p212
        $region42: #{cnn_forward.1} parent=11 // pred_check_branch
          %276 = sbr.rel (%p274) target = $region44
        $region43: #{cnn_forward.1} parent=11 // pred_region
          _
        $region44: #{cnn_forward.1} parent=11 // pred_fallthru
          _
      $region12: #{cnn_forward.1} parent=5 // pred_fallthru
        _
      %p277 = scmp.lt.s32.totalorder %s18, 2
      // Predicated region
      $region45: #{cnn_forward.1} parent=5 // pred_check
        %p278 = pneg %p277
      $region46: #{cnn_forward.1} parent=5 // pred_check_branch
        %280 = sbr.rel (%p278) target = $region48
      $region47: #{cnn_forward.1} parent=5 // pred_region
        // Predicated region
        $region49: #{cnn_forward.1} parent=47 // pred_check
          %p281 = pneg %p38
        $region50: #{cnn_forward.1} parent=47 // pred_check_branch
          %283 = sbr.rel (%p281) target = $region52
        $region51: #{cnn_forward.1} parent=47 // pred_region
          %p284 = scmp.lt.s32.totalorder %s18, 1
          %s285 = scalar_select %p284, %s18, 1
          %s286 = smul.addr %s285, 113
          %s287 = smul.addr %s286, 8
          %s288 = scalar_lea.vmem %s0, %s287
        $region52: #{cnn_forward.1} parent=47 // pred_fallthru
          _
      $region48: #{cnn_forward.1} parent=5 // pred_fallthru
        _
      %p289 = scmp.le.s32.totalorder 1, %s18
      %p290 = scmp.lt.s32.totalorder %s18, 3
      %p291 = pnand %p289, %p290
      %p292 = pneg %p291
      // Predicated region
      $region53: #{cnn_forward.1} parent=5 // pred_check
        _
      $region54: #{cnn_forward.1} parent=5 // pred_check_branch
        %294 = sbr.rel (%p291) target = $region56
      $region55: #{cnn_forward.1} parent=5 // pred_region
        %s295 = ssub.s32 %s18, 1
        %p296 = scmp.lt.s32.totalorder %s23, 1
        %s297 = scalar_select %p296, %s23, 1
        %s298 = smul.addr %s297, 113
        %s299 = smul.addr %s298, 8
        %s300 = scalar_lea.vmem %s0, %s299
        %p301 = pneg %p44
        %p302 = pneg %p41
        %p303 = pneg %p65
        %p304 = pneg %p62
        %p305 = pneg %p86
        %p306 = pneg %p83
        %p307 = pneg %p107
        %p308 = pneg %p104
        %p309 = pneg %p128
        %p310 = pneg %p125
        %p311 = pneg %p149
        %p312 = pneg %p146
        %p313 = pneg %p170
        %p314 = pneg %p167
        %p315 = pneg %p191
        %p316 = pneg %p188
        %p317 = pneg %p212
        %p318 = pneg %p209
        %p319 = pneg %p238
        %p320 = pneg %p235
        %s321 = sand.u32 %s225, 1
        %s322 = scalar_lea.sflag [#allocation8], %s321
        %s323 = sand.u32 %s225, 1
        %s324 = scalar_lea.vmem [#allocation7], %s323
        %p325 = scmp.lt.s32.totalorder %s23, 1
        %s326 = scalar_select %p325, %s23, 1
        %s327 = smul.addr %s326, 113
        %s328 = smul.addr %s327, 8
        %s329 = scalar_lea.vmem %s0, %s328
        %v331 = vld [vmem:[%s2] sm:$0x1]
        %v332 = vld [vmem:[%s329] sm:$0xff]
        %v333 = vld [vmem:[%s329 + $0x8] sm:$0xff]
        %v334 = vld [vmem:[%s329 + $0x10] sm:$0xff]
        %v335 = vld [vmem:[%s329 + $0x18] sm:$0xff]
        %v336 = vld [vmem:[%s329 + $0x20] sm:$0xff]
        %v337 = vld [vmem:[%s329 + $0x28] sm:$0xff]
        %v338 = vld [vmem:[%s329 + $0x30] sm:$0xff]
        %v339 = vld [vmem:[%s329 + $0x38] sm:$0xff]
        %v340 = vld [vmem:[%s329 + $0x40] sm:$0xff]
        %v341 = vld [vmem:[%s329 + $0x48] sm:$0xff]
        %v342 = vld [vmem:[%s329 + $0x50] sm:$0xff]
        %v343 = vld [vmem:[%s329 + $0x58] sm:$0xff]
        %v344 = vld [vmem:[%s329 + $0x60] sm:$0xff]
        %v345 = vld [vmem:[%s329 + $0x68] sm:$0xff]
        %v346 = vld [vmem:[%s329 + $0x70] sm:$0xff]
        %v347 = vld [vmem:[%s329 + $0x78] sm:$0xff]
        %v348 = vld [vmem:[%s329 + $0x80] sm:$0xff]
        %v349 = vld [vmem:[%s329 + $0x88] sm:$0xff]
        %v350 = vld [vmem:[%s329 + $0x90] sm:$0xff]
        %v351 = vld [vmem:[%s329 + $0x98] sm:$0xff]
        %v352 = vld [vmem:[%s329 + $0xa0] sm:$0xff]
        %v353 = vld [vmem:[%s1] sm:$0x1]
        %v354 = vlaneseq
        %v355 = vshrl.u32 %v354, 7
        %v356 = vsub.s32 0, %v355
        %v357 = vrot.slane %v353, %v356
        %v358 = vmul.f32 %v332, %v357
        %v359 = vmul.f32 %v333, %v357
        %v360 = vmul.f32 %v334, %v357
        %v361 = vmul.f32 %v335, %v357
        %v362 = vmul.f32 %v336, %v357
        %v363 = vmul.f32 %v337, %v357
        %v364 = vmul.f32 %v338, %v357
        %v365 = vmul.f32 %v339, %v357
        %v366 = vmul.f32 %v340, %v357
        %v367 = vmul.f32 %v341, %v357
        %v368 = vmul.f32 %v342, %v357
        %v369 = vmul.f32 %v343, %v357
        %v370 = vmul.f32 %v344, %v357
        %v371 = vmul.f32 %v345, %v357
        %v372 = vmul.f32 %v346, %v357
        %v373 = vmul.f32 %v347, %v357
        %v374 = vmul.f32 %v348, %v357
        %v375 = vmul.f32 %v349, %v357
        %v376 = vmul.f32 %v350, %v357
        %v377 = vmul.f32 %v351, %v357
        %v378 = vmul.f32 %v352, %v357
        %v379 = vadd.f32 %v358, 0.0
        %v380 = vadd.f32 %v359, 0.0
        %v381 = vadd.f32 %v360, 0.0
        %v382 = vadd.f32 %v361, 0.0
        %v383 = vadd.f32 %v362, 0.0
        %v384 = vadd.f32 %v363, 0.0
        %v385 = vadd.f32 %v364, 0.0
        %v386 = vadd.f32 %v365, 0.0
        %v387 = vadd.f32 %v366, 0.0
        %v388 = vadd.f32 %v367, 0.0
        %v389 = vadd.f32 %v368, 0.0
        %v390 = vadd.f32 %v369, 0.0
        %v391 = vadd.f32 %v370, 0.0
        %v392 = vadd.f32 %v371, 0.0
        %v393 = vadd.f32 %v372, 0.0
        %v394 = vadd.f32 %v373, 0.0
        %v395 = vadd.f32 %v374, 0.0
        %v396 = vadd.f32 %v375, 0.0
        %v397 = vadd.f32 %v376, 0.0
        %v398 = vadd.f32 %v377, 0.0
        %v399 = vadd.f32 %v378, 0.0
        %v400 = vld [vmem:[%s329 + $0x1] sm:$0xff]
        %v401 = vld [vmem:[%s329 + $0x9] sm:$0xff]
        %v402 = vld [vmem:[%s329 + $0x11] sm:$0xff]
        %v403 = vld [vmem:[%s329 + $0x19] sm:$0xff]
        %v404 = vld [vmem:[%s329 + $0x21] sm:$0xff]
        %v405 = vld [vmem:[%s329 + $0x29] sm:$0xff]
        %v406 = vld [vmem:[%s329 + $0x31] sm:$0xff]
        %v407 = vld [vmem:[%s329 + $0x39] sm:$0xff]
        %v408 = vld [vmem:[%s329 + $0x41] sm:$0xff]
        %v409 = vld [vmem:[%s329 + $0x49] sm:$0xff]
        %v410 = vld [vmem:[%s329 + $0x51] sm:$0xff]
        %v411 = vld [vmem:[%s329 + $0x59] sm:$0xff]
        %v412 = vld [vmem:[%s329 + $0x61] sm:$0xff]
        %v413 = vld [vmem:[%s329 + $0x69] sm:$0xff]
        %v414 = vld [vmem:[%s329 + $0x71] sm:$0xff]
        %v415 = vld [vmem:[%s329 + $0x79] sm:$0xff]
        %v416 = vld [vmem:[%s329 + $0x81] sm:$0xff]
        %v417 = vld [vmem:[%s329 + $0x89] sm:$0xff]
        %v418 = vld [vmem:[%s329 + $0x91] sm:$0xff]
        %v419 = vld [vmem:[%s329 + $0x99] sm:$0xff]
        %v420 = vld [vmem:[%s329 + $0xa1] sm:$0xff]
        %v421 = vld [vmem:[%s1 + $0x1] sm:$0x1]
        %v422 = vlaneseq
        %v423 = vshrl.u32 %v422, 7
        %v424 = vsub.s32 0, %v423
        %v425 = vrot.slane %v421, %v424
        %v426 = vmul.f32 %v400, %v425
        %v427 = vmul.f32 %v401, %v425
        %v428 = vmul.f32 %v402, %v425
        %v429 = vmul.f32 %v403, %v425
        %v430 = vmul.f32 %v404, %v425
        %v431 = vmul.f32 %v405, %v425
        %v432 = vmul.f32 %v406, %v425
        %v433 = vmul.f32 %v407, %v425
        %v434 = vmul.f32 %v408, %v425
        %v435 = vmul.f32 %v409, %v425
        %v436 = vmul.f32 %v410, %v425
        %v437 = vmul.f32 %v411, %v425
        %v438 = vmul.f32 %v412, %v425
        %v439 = vmul.f32 %v413, %v425
        %v440 = vmul.f32 %v414, %v425
        %v441 = vmul.f32 %v415, %v425
        %v442 = vmul.f32 %v416, %v425
        %v443 = vmul.f32 %v417, %v425
        %v444 = vmul.f32 %v418, %v425
        %v445 = vmul.f32 %v419, %v425
        %v446 = vmul.f32 %v420, %v425
        %v447 = vadd.f32 %v379, %v426
        %v448 = vadd.f32 %v380, %v427
        %v449 = vadd.f32 %v381, %v428
        %v450 = vadd.f32 %v382, %v429
        %v451 = vadd.f32 %v383, %v430
        %v452 = vadd.f32 %v384, %v431
        %v453 = vadd.f32 %v385, %v432
        %v454 = vadd.f32 %v386, %v433
        %v455 = vadd.f32 %v387, %v434
        %v456 = vadd.f32 %v388, %v435
        %v457 = vadd.f32 %v389, %v436
        %v458 = vadd.f32 %v390, %v437
        %v459 = vadd.f32 %v391, %v438
        %v460 = vadd.f32 %v392, %v439
        %v461 = vadd.f32 %v393, %v440
        %v462 = vadd.f32 %v394, %v441
        %v463 = vadd.f32 %v395, %v442
        %v464 = vadd.f32 %v396, %v443
        %v465 = vadd.f32 %v397, %v444
        %v466 = vadd.f32 %v398, %v445
        %v467 = vadd.f32 %v399, %v446
        %v468 = vld [vmem:[%s329 + $0x2] sm:$0xff]
        %v469 = vld [vmem:[%s329 + $0xa] sm:$0xff]
        %v470 = vld [vmem:[%s329 + $0x12] sm:$0xff]
        %v471 = vld [vmem:[%s329 + $0x1a] sm:$0xff]
        %v472 = vld [vmem:[%s329 + $0x22] sm:$0xff]
        %v473 = vld [vmem:[%s329 + $0x2a] sm:$0xff]
        %v474 = vld [vmem:[%s329 + $0x32] sm:$0xff]
        %v475 = vld [vmem:[%s329 + $0x3a] sm:$0xff]
        %v476 = vld [vmem:[%s329 + $0x42] sm:$0xff]
        %v477 = vld [vmem:[%s329 + $0x4a] sm:$0xff]
        %v478 = vld [vmem:[%s329 + $0x52] sm:$0xff]
        %v479 = vld [vmem:[%s329 + $0x5a] sm:$0xff]
        %v480 = vld [vmem:[%s329 + $0x62] sm:$0xff]
        %v481 = vld [vmem:[%s329 + $0x6a] sm:$0xff]
        %v482 = vld [vmem:[%s329 + $0x72] sm:$0xff]
        %v483 = vld [vmem:[%s329 + $0x7a] sm:$0xff]
        %v484 = vld [vmem:[%s329 + $0x82] sm:$0xff]
        %v485 = vld [vmem:[%s329 + $0x8a] sm:$0xff]
        %v486 = vld [vmem:[%s329 + $0x92] sm:$0xff]
        %v487 = vld [vmem:[%s329 + $0x9a] sm:$0xff]
        %v488 = vld [vmem:[%s329 + $0xa2] sm:$0xff]
        %v489 = vld [vmem:[%s1 + $0x2] sm:$0x1]
        %v490 = vlaneseq
        %v491 = vshrl.u32 %v490, 7
        %v492 = vsub.s32 0, %v491
        %v493 = vrot.slane %v489, %v492
        %v494 = vmul.f32 %v468, %v493
        %v495 = vmul.f32 %v469, %v493
        %v496 = vmul.f32 %v470, %v493
        %v497 = vmul.f32 %v471, %v493
        %v498 = vmul.f32 %v472, %v493
        %v499 = vmul.f32 %v473, %v493
        %v500 = vmul.f32 %v474, %v493
        %v501 = vmul.f32 %v475, %v493
        %v502 = vmul.f32 %v476, %v493
        %v503 = vmul.f32 %v477, %v493
        %v504 = vmul.f32 %v478, %v493
        %v505 = vmul.f32 %v479, %v493
        %v506 = vmul.f32 %v480, %v493
        %v507 = vmul.f32 %v481, %v493
        %v508 = vmul.f32 %v482, %v493
        %v509 = vmul.f32 %v483, %v493
        %v510 = vmul.f32 %v484, %v493
        %v511 = vmul.f32 %v485, %v493
        %v512 = vmul.f32 %v486, %v493
        %v513 = vmul.f32 %v487, %v493
        %v514 = vmul.f32 %v488, %v493
        %v515 = vadd.f32 %v447, %v494
        %v516 = vadd.f32 %v448, %v495
        %v517 = vadd.f32 %v449, %v496
        %v518 = vadd.f32 %v450, %v497
        %v519 = vadd.f32 %v451, %v498
        %v520 = vadd.f32 %v452, %v499
        %v521 = vadd.f32 %v453, %v500
        %v522 = vadd.f32 %v454, %v501
        %v523 = vadd.f32 %v455, %v502
        %v524 = vadd.f32 %v456, %v503
        %v525 = vadd.f32 %v457, %v504
        %v526 = vadd.f32 %v458, %v505
        %v527 = vadd.f32 %v459, %v506
        %v528 = vadd.f32 %v460, %v507
        %v529 = vadd.f32 %v461, %v508
        %v530 = vadd.f32 %v462, %v509
        %v531 = vadd.f32 %v463, %v510
        %v532 = vadd.f32 %v464, %v511
        %v533 = vadd.f32 %v465, %v512
        %v534 = vadd.f32 %v466, %v513
        %v535 = vadd.f32 %v467, %v514
        %v536 = vld [vmem:[%s329 + $0x1e] sm:$0xff]
        %v537 = vld [vmem:[%s329 + $0x26] sm:$0xff]
        %v538 = vld [vmem:[%s329 + $0x2e] sm:$0xff]
        %v539 = vld [vmem:[%s329 + $0x36] sm:$0xff]
        %v540 = vld [vmem:[%s329 + $0x3e] sm:$0xff]
        %v541 = vld [vmem:[%s329 + $0x46] sm:$0xff]
        %v542 = vld [vmem:[%s329 + $0x4e] sm:$0xff]
        %v543 = vld [vmem:[%s329 + $0x56] sm:$0xff]
        %v544 = vld [vmem:[%s329 + $0x5e] sm:$0xff]
        %v545 = vld [vmem:[%s329 + $0x66] sm:$0xff]
        %v546 = vld [vmem:[%s329 + $0x6e] sm:$0xff]
        %v547 = vld [vmem:[%s329 + $0x76] sm:$0xff]
        %v548 = vld [vmem:[%s329 + $0x7e] sm:$0xff]
        %v549 = vld [vmem:[%s329 + $0x86] sm:$0xff]
        %v550 = vld [vmem:[%s329 + $0x8e] sm:$0xff]
        %v551 = vld [vmem:[%s329 + $0x96] sm:$0xff]
        %v552 = vld [vmem:[%s329 + $0x9e] sm:$0xff]
        %v553 = vld [vmem:[%s329 + $0xa6] sm:$0xff]
        %v554 = vld [vmem:[%s329 + $0xae] sm:$0xff]
        %v555 = vld [vmem:[%s329 + $0xb6] sm:$0xff]
        %v556 = vld [vmem:[%s329 + $0xbe] sm:$0xff]
        %v557 = vld [vmem:[%s1 + $0x3] sm:$0x1]
        %v558 = vlaneseq
        %v559 = vshrl.u32 %v558, 7
        %v560 = vsub.s32 0, %v559
        %v561 = vrot.slane %v557, %v560
        %v562 = vmul.f32 %v536, %v561
        %v563 = vmul.f32 %v537, %v561
        %v564 = vmul.f32 %v538, %v561
        %v565 = vmul.f32 %v539, %v561
        %v566 = vmul.f32 %v540, %v561
        %v567 = vmul.f32 %v541, %v561
        %v568 = vmul.f32 %v542, %v561
        %v569 = vmul.f32 %v543, %v561
        %v570 = vmul.f32 %v544, %v561
        %v571 = vmul.f32 %v545, %v561
        %v572 = vmul.f32 %v546, %v561
        %v573 = vmul.f32 %v547, %v561
        %v574 = vmul.f32 %v548, %v561
        %v575 = vmul.f32 %v549, %v561
        %v576 = vmul.f32 %v550, %v561
        %v577 = vmul.f32 %v551, %v561
        %v578 = vmul.f32 %v552, %v561
        %v579 = vmul.f32 %v553, %v561
        %v580 = vmul.f32 %v554, %v561
        %v581 = vmul.f32 %v555, %v561
        %v582 = vmul.f32 %v556, %v561
        %v583 = vadd.f32 %v515, %v562
        %v584 = vadd.f32 %v516, %v563
        %v585 = vadd.f32 %v517, %v564
        %v586 = vadd.f32 %v518, %v565
        %v587 = vadd.f32 %v519, %v566
        %v588 = vadd.f32 %v520, %v567
        %v589 = vadd.f32 %v521, %v568
        %v590 = vadd.f32 %v522, %v569
        %v591 = vadd.f32 %v523, %v570
        %v592 = vadd.f32 %v524, %v571
        %v593 = vadd.f32 %v525, %v572
        %v594 = vadd.f32 %v526, %v573
        %v595 = vadd.f32 %v527, %v574
        %v596 = vadd.f32 %v528, %v575
        %v597 = vadd.f32 %v529, %v576
        %v598 = vadd.f32 %v530, %v577
        %v599 = vadd.f32 %v531, %v578
        %v600 = vadd.f32 %v532, %v579
        %v601 = vadd.f32 %v533, %v580
        %v602 = vadd.f32 %v534, %v581
        %v603 = vadd.f32 %v535, %v582
        %v604 = vld [vmem:[%s329 + $0x1f] sm:$0xff]
        %v605 = vld [vmem:[%s329 + $0x27] sm:$0xff]
        %v606 = vld [vmem:[%s329 + $0x2f] sm:$0xff]
        %v607 = vld [vmem:[%s329 + $0x37] sm:$0xff]
        %v608 = vld [vmem:[%s329 + $0x3f] sm:$0xff]
        %v609 = vld [vmem:[%s329 + $0x47] sm:$0xff]
        %v610 = vld [vmem:[%s329 + $0x4f] sm:$0xff]
        %v611 = vld [vmem:[%s329 + $0x57] sm:$0xff]
        %v612 = vld [vmem:[%s329 + $0x5f] sm:$0xff]
        %v613 = vld [vmem:[%s329 + $0x67] sm:$0xff]
        %v614 = vld [vmem:[%s329 + $0x6f] sm:$0xff]
        %v615 = vld [vmem:[%s329 + $0x77] sm:$0xff]
        %v616 = vld [vmem:[%s329 + $0x7f] sm:$0xff]
        %v617 = vld [vmem:[%s329 + $0x87] sm:$0xff]
        %v618 = vld [vmem:[%s329 + $0x8f] sm:$0xff]
        %v619 = vld [vmem:[%s329 + $0x97] sm:$0xff]
        %v620 = vld [vmem:[%s329 + $0x9f] sm:$0xff]
        %v621 = vld [vmem:[%s329 + $0xa7] sm:$0xff]
        %v622 = vld [vmem:[%s329 + $0xaf] sm:$0xff]
        %v623 = vld [vmem:[%s329 + $0xb7] sm:$0xff]
        %v624 = vld [vmem:[%s329 + $0xbf] sm:$0xff]
        %v625 = vld [vmem:[%s1 + $0x4] sm:$0x1]
        %v626 = vlaneseq
        %v627 = vshrl.u32 %v626, 7
        %v628 = vsub.s32 0, %v627
        %v629 = vrot.slane %v625, %v628
        %v630 = vmul.f32 %v604, %v629
        %v631 = vmul.f32 %v605, %v629
        %v632 = vmul.f32 %v606, %v629
        %v633 = vmul.f32 %v607, %v629
        %v634 = vmul.f32 %v608, %v629
        %v635 = vmul.f32 %v609, %v629
        %v636 = vmul.f32 %v610, %v629
        %v637 = vmul.f32 %v611, %v629
        %v638 = vmul.f32 %v612, %v629
        %v639 = vmul.f32 %v613, %v629
        %v640 = vmul.f32 %v614, %v629
        %v641 = vmul.f32 %v615, %v629
        %v642 = vmul.f32 %v616, %v629
        %v643 = vmul.f32 %v617, %v629
        %v644 = vmul.f32 %v618, %v629
        %v645 = vmul.f32 %v619, %v629
        %v646 = vmul.f32 %v620, %v629
        %v647 = vmul.f32 %v621, %v629
        %v648 = vmul.f32 %v622, %v629
        %v649 = vmul.f32 %v623, %v629
        %v650 = vmul.f32 %v624, %v629
        %v651 = vadd.f32 %v583, %v630
        %v652 = vadd.f32 %v584, %v631
        %v653 = vadd.f32 %v585, %v632
        %v654 = vadd.f32 %v586, %v633
        %v655 = vadd.f32 %v587, %v634
        %v656 = vadd.f32 %v588, %v635
        %v657 = vadd.f32 %v589, %v636
        %v658 = vadd.f32 %v590, %v637
        %v659 = vadd.f32 %v591, %v638
        %v660 = vadd.f32 %v592, %v639
        %v661 = vadd.f32 %v593, %v640
        %v662 = vadd.f32 %v594, %v641
        %v663 = vadd.f32 %v595, %v642
        %v664 = vadd.f32 %v596, %v643
        %v665 = vadd.f32 %v597, %v644
        %v666 = vadd.f32 %v598, %v645
        %v667 = vadd.f32 %v599, %v646
        %v668 = vadd.f32 %v600, %v647
        %v669 = vadd.f32 %v601, %v648
        %v670 = vadd.f32 %v602, %v649
        %v671 = vadd.f32 %v603, %v650
        %v672 = vld [vmem:[%s329 + $0xa8] sm:$0xff]
        %v673 = vld [vmem:[%s329 + $0xb0] sm:$0xff]
        %v674 = vld [vmem:[%s329 + $0xb8] sm:$0xff]
        %v675 = vld [vmem:[%s329 + $0xc0] sm:$0xff]
        %v676 = vld [vmem:[%s1 + $0x5] sm:$0x1]
        %v677 = vlaneseq
        %v678 = vshrl.u32 %v677, 7
        %v679 = vsub.s32 0, %v678
        %v680 = vrot.slane %v676, %v679
        %v681 = vmul.f32 %v336, %v680
        %v682 = vmul.f32 %v337, %v680
        %v683 = vmul.f32 %v338, %v680
        %v684 = vmul.f32 %v339, %v680
        %v685 = vmul.f32 %v340, %v680
        %v686 = vmul.f32 %v341, %v680
        %v687 = vmul.f32 %v342, %v680
        %v688 = vmul.f32 %v343, %v680
        %v689 = vmul.f32 %v344, %v680
        %v690 = vmul.f32 %v345, %v680
        %v691 = vmul.f32 %v346, %v680
        %v692 = vmul.f32 %v347, %v680
        %v693 = vmul.f32 %v348, %v680
        %v694 = vmul.f32 %v349, %v680
        %v695 = vmul.f32 %v350, %v680
        %v696 = vmul.f32 %v351, %v680
        %v697 = vmul.f32 %v352, %v680
        %v698 = vmul.f32 %v672, %v680
        %v699 = vmul.f32 %v673, %v680
        %v700 = vmul.f32 %v674, %v680
        %v701 = vmul.f32 %v675, %v680
        %v702 = vadd.f32 %v651, %v681
        %v703 = vadd.f32 %v652, %v682
        %v704 = vadd.f32 %v653, %v683
        %v705 = vadd.f32 %v654, %v684
        %v706 = vadd.f32 %v655, %v685
        %v707 = vadd.f32 %v656, %v686
        %v708 = vadd.f32 %v657, %v687
        %v709 = vadd.f32 %v658, %v688
        %v710 = vadd.f32 %v659, %v689
        %v711 = vadd.f32 %v660, %v690
        %v712 = vadd.f32 %v661, %v691
        %v713 = vadd.f32 %v662, %v692
        %v714 = vadd.f32 %v663, %v693
        %v715 = vadd.f32 %v664, %v694
        %v716 = vadd.f32 %v665, %v695
        %v717 = vadd.f32 %v666, %v696
        %v718 = vadd.f32 %v667, %v697
        %v719 = vadd.f32 %v668, %v698
        %v720 = vadd.f32 %v669, %v699
        %v721 = vadd.f32 %v670, %v700
        %v722 = vadd.f32 %v671, %v701
        %v723 = vld [vmem:[%s329 + $0x3c] sm:$0xff]
        %v724 = vld [vmem:[%s329 + $0x44] sm:$0xff]
        %v725 = vld [vmem:[%s329 + $0x4c] sm:$0xff]
        %v726 = vld [vmem:[%s329 + $0x54] sm:$0xff]
        %v727 = vld [vmem:[%s329 + $0x5c] sm:$0xff]
        %v728 = vld [vmem:[%s329 + $0x64] sm:$0xff]
        %v729 = vld [vmem:[%s329 + $0x6c] sm:$0xff]
        %v730 = vld [vmem:[%s329 + $0x74] sm:$0xff]
        %v731 = vld [vmem:[%s329 + $0x7c] sm:$0xff]
        %v732 = vld [vmem:[%s329 + $0x84] sm:$0xff]
        %v733 = vld [vmem:[%s329 + $0x8c] sm:$0xff]
        %v734 = vld [vmem:[%s329 + $0x94] sm:$0xff]
        %v735 = vld [vmem:[%s329 + $0x9c] sm:$0xff]
        %v736 = vld [vmem:[%s329 + $0xa4] sm:$0xff]
        %v737 = vld [vmem:[%s329 + $0xac] sm:$0xff]
        %v738 = vld [vmem:[%s329 + $0xb4] sm:$0xff]
        %v739 = vld [vmem:[%s329 + $0xbc] sm:$0xff]
        %v740 = vld [vmem:[%s329 + $0xc4] sm:$0xff]
        %v741 = vld [vmem:[%s329 + $0xcc] sm:$0xff]
        %v742 = vld [vmem:[%s329 + $0xd4] sm:$0xff]
        %v743 = vld [vmem:[%s329 + $0xdc] sm:$0xff]
        %v744 = vld [vmem:[%s1 + $0x6] sm:$0x1]
        %v745 = vlaneseq
        %v746 = vshrl.u32 %v745, 7
        %v747 = vsub.s32 0, %v746
        %v748 = vrot.slane %v744, %v747
        %v749 = vmul.f32 %v723, %v748
        %v750 = vmul.f32 %v724, %v748
        %v751 = vmul.f32 %v725, %v748
        %v752 = vmul.f32 %v726, %v748
        %v753 = vmul.f32 %v727, %v748
        %v754 = vmul.f32 %v728, %v748
        %v755 = vmul.f32 %v729, %v748
        %v756 = vmul.f32 %v730, %v748
        %v757 = vmul.f32 %v731, %v748
        %v758 = vmul.f32 %v732, %v748
        %v759 = vmul.f32 %v733, %v748
        %v760 = vmul.f32 %v734, %v748
        %v761 = vmul.f32 %v735, %v748
        %v762 = vmul.f32 %v736, %v748
        %v763 = vmul.f32 %v737, %v748
        %v764 = vmul.f32 %v738, %v748
        %v765 = vmul.f32 %v739, %v748
        %v766 = vmul.f32 %v740, %v748
        %v767 = vmul.f32 %v741, %v748
        %v768 = vmul.f32 %v742, %v748
        %v769 = vmul.f32 %v743, %v748
        %v770 = vadd.f32 %v702, %v749
        %v771 = vadd.f32 %v703, %v750
        %v772 = vadd.f32 %v704, %v751
        %v773 = vadd.f32 %v705, %v752
        %v774 = vadd.f32 %v706, %v753
        %v775 = vadd.f32 %v707, %v754
        %v776 = vadd.f32 %v708, %v755
        %v777 = vadd.f32 %v709, %v756
        %v778 = vadd.f32 %v710, %v757
        %v779 = vadd.f32 %v711, %v758
        %v780 = vadd.f32 %v712, %v759
        %v781 = vadd.f32 %v713, %v760
        %v782 = vadd.f32 %v714, %v761
        %v783 = vadd.f32 %v715, %v762
        %v784 = vadd.f32 %v716, %v763
        %v785 = vadd.f32 %v717, %v764
        %v786 = vadd.f32 %v718, %v765
        %v787 = vadd.f32 %v719, %v766
        %v788 = vadd.f32 %v720, %v767
        %v789 = vadd.f32 %v721, %v768
        %v790 = vadd.f32 %v722, %v769
        %v791 = vld [vmem:[%s329 + $0x3d] sm:$0xff]
        %v792 = vld [vmem:[%s329 + $0x45] sm:$0xff]
        %v793 = vld [vmem:[%s329 + $0x4d] sm:$0xff]
        %v794 = vld [vmem:[%s329 + $0x55] sm:$0xff]
        %v795 = vld [vmem:[%s329 + $0x5d] sm:$0xff]
        %v796 = vld [vmem:[%s329 + $0x65] sm:$0xff]
        %v797 = vld [vmem:[%s329 + $0x6d] sm:$0xff]
        %v798 = vld [vmem:[%s329 + $0x75] sm:$0xff]
        %v799 = vld [vmem:[%s329 + $0x7d] sm:$0xff]
        %v800 = vld [vmem:[%s329 + $0x85] sm:$0xff]
        %v801 = vld [vmem:[%s329 + $0x8d] sm:$0xff]
        %v802 = vld [vmem:[%s329 + $0x95] sm:$0xff]
        %v803 = vld [vmem:[%s329 + $0x9d] sm:$0xff]
        %v804 = vld [vmem:[%s329 + $0xa5] sm:$0xff]
        %v805 = vld [vmem:[%s329 + $0xad] sm:$0xff]
        %v806 = vld [vmem:[%s329 + $0xb5] sm:$0xff]
        %v807 = vld [vmem:[%s329 + $0xbd] sm:$0xff]
        %v808 = vld [vmem:[%s329 + $0xc5] sm:$0xff]
        %v809 = vld [vmem:[%s329 + $0xcd] sm:$0xff]
        %v810 = vld [vmem:[%s329 + $0xd5] sm:$0xff]
        %v811 = vld [vmem:[%s329 + $0xdd] sm:$0xff]
        %v812 = vld [vmem:[%s1 + $0x7] sm:$0x1]
        %v813 = vlaneseq
        %v814 = vshrl.u32 %v813, 7
        %v815 = vsub.s32 0, %v814
        %v816 = vrot.slane %v812, %v815
        %v817 = vmul.f32 %v791, %v816
        %v818 = vmul.f32 %v792, %v816
        %v819 = vmul.f32 %v793, %v816
        %v820 = vmul.f32 %v794, %v816
        %v821 = vmul.f32 %v795, %v816
        %v822 = vmul.f32 %v796, %v816
        %v823 = vmul.f32 %v797, %v816
        %v824 = vmul.f32 %v798, %v816
        %v825 = vmul.f32 %v799, %v816
        %v826 = vmul.f32 %v800, %v816
        %v827 = vmul.f32 %v801, %v816
        %v828 = vmul.f32 %v802, %v816
        %v829 = vmul.f32 %v803, %v816
        %v830 = vmul.f32 %v804, %v816
        %v831 = vmul.f32 %v805, %v816
        %v832 = vmul.f32 %v806, %v816
        %v833 = vmul.f32 %v807, %v816
        %v834 = vmul.f32 %v808, %v816
        %v835 = vmul.f32 %v809, %v816
        %v836 = vmul.f32 %v810, %v816
        %v837 = vmul.f32 %v811, %v816
        %v838 = vadd.f32 %v770, %v817
        %v839 = vadd.f32 %v771, %v818
        %v840 = vadd.f32 %v772, %v819
        %v841 = vadd.f32 %v773, %v820
        %v842 = vadd.f32 %v774, %v821
        %v843 = vadd.f32 %v775, %v822
        %v844 = vadd.f32 %v776, %v823
        %v845 = vadd.f32 %v777, %v824
        %v846 = vadd.f32 %v778, %v825
        %v847 = vadd.f32 %v779, %v826
        %v848 = vadd.f32 %v780, %v827
        %v849 = vadd.f32 %v781, %v828
        %v850 = vadd.f32 %v782, %v829
        %v851 = vadd.f32 %v783, %v830
        %v852 = vadd.f32 %v784, %v831
        %v853 = vadd.f32 %v785, %v832
        %v854 = vadd.f32 %v786, %v833
        %v855 = vadd.f32 %v787, %v834
        %v856 = vadd.f32 %v788, %v835
        %v857 = vadd.f32 %v789, %v836
        %v858 = vadd.f32 %v790, %v837
        %v859 = vld [vmem:[%s329 + $0xc6] sm:$0xff]
        %v860 = vld [vmem:[%s329 + $0xce] sm:$0xff]
        %v861 = vld [vmem:[%s329 + $0xd6] sm:$0xff]
        %v862 = vld [vmem:[%s329 + $0xde] sm:$0xff]
        %v863 = vld [vmem:[%s1 + $0x8] sm:$0x1]
        %v864 = vlaneseq
        %v865 = vshrl.u32 %v864, 7
        %v866 = vsub.s32 0, %v865
        %v867 = vrot.slane %v863, %v866
        %v868 = vmul.f32 %v540, %v867
        %v869 = vmul.f32 %v541, %v867
        %v870 = vmul.f32 %v542, %v867
        %v871 = vmul.f32 %v543, %v867
        %v872 = vmul.f32 %v544, %v867
        %v873 = vmul.f32 %v545, %v867
        %v874 = vmul.f32 %v546, %v867
        %v875 = vmul.f32 %v547, %v867
        %v876 = vmul.f32 %v548, %v867
        %v877 = vmul.f32 %v549, %v867
        %v878 = vmul.f32 %v550, %v867
        %v879 = vmul.f32 %v551, %v867
        %v880 = vmul.f32 %v552, %v867
        %v881 = vmul.f32 %v553, %v867
        %v882 = vmul.f32 %v554, %v867
        %v883 = vmul.f32 %v555, %v867
        %v884 = vmul.f32 %v556, %v867
        %v885 = vmul.f32 %v859, %v867
        %v886 = vmul.f32 %v860, %v867
        %v887 = vmul.f32 %v861, %v867
        %v888 = vmul.f32 %v862, %v867
        %v889 = vadd.f32 %v838, %v868
        %v890 = vadd.f32 %v839, %v869
        %v891 = vadd.f32 %v840, %v870
        %v892 = vadd.f32 %v841, %v871
        %v893 = vadd.f32 %v842, %v872
        %v894 = vadd.f32 %v843, %v873
        %v895 = vadd.f32 %v844, %v874
        %v896 = vadd.f32 %v845, %v875
        %v897 = vadd.f32 %v846, %v876
        %v898 = vadd.f32 %v847, %v877
        %v899 = vadd.f32 %v848, %v878
        %v900 = vadd.f32 %v849, %v879
        %v901 = vadd.f32 %v850, %v880
        %v902 = vadd.f32 %v851, %v881
        %v903 = vadd.f32 %v852, %v882
        %v904 = vadd.f32 %v853, %v883
        %v905 = vadd.f32 %v854, %v884
        %v906 = vadd.f32 %v855, %v885
        %v907 = vadd.f32 %v856, %v886
        %v908 = vadd.f32 %v857, %v887
        %v909 = vadd.f32 %v858, %v888
        %v911 = vlaneseq
        %v912 = vshrl.u32 %v911, 7
        %v913 = vsub.s32 0, %v912
        %v914 = vrot.slane %v331, %v913
        %v916 = vadd.f32 %v889, %v914
        %v917 = vadd.f32 %v890, %v914
        %v918 = vadd.f32 %v891, %v914
        %v919 = vadd.f32 %v892, %v914
        %v920 = vadd.f32 %v893, %v914
        %v921 = vadd.f32 %v894, %v914
        %v922 = vadd.f32 %v895, %v914
        %v923 = vadd.f32 %v896, %v914
        %v924 = vadd.f32 %v897, %v914
        %v925 = vadd.f32 %v898, %v914
        %v926 = vadd.f32 %v899, %v914
        %v927 = vadd.f32 %v900, %v914
        %v928 = vadd.f32 %v901, %v914
        %v929 = vadd.f32 %v902, %v914
        %v930 = vadd.f32 %v903, %v914
        %v931 = vadd.f32 %v904, %v914
        %v932 = vadd.f32 %v905, %v914
        %v933 = vadd.f32 %v906, %v914
        %v934 = vadd.f32 %v907, %v914
        %v935 = vadd.f32 %v908, %v914
        %v936 = vadd.f32 %v909, %v914
        %v937 = vmax.f32 %v916, 0.0
        %v938 = vmax.f32 %v917, 0.0
        %v939 = vmax.f32 %v918, 0.0
        %v940 = vmax.f32 %v919, 0.0
        %v941 = vmax.f32 %v920, 0.0
        %v942 = vmax.f32 %v921, 0.0
        %v943 = vmax.f32 %v922, 0.0
        %v944 = vmax.f32 %v923, 0.0
        %v945 = vmax.f32 %v924, 0.0
        %v946 = vmax.f32 %v925, 0.0
        %v947 = vmax.f32 %v926, 0.0
        %v948 = vmax.f32 %v927, 0.0
        %v949 = vmax.f32 %v928, 0.0
        %v950 = vmax.f32 %v929, 0.0
        %v951 = vmax.f32 %v930, 0.0
        %v952 = vmax.f32 %v931, 0.0
        %v953 = vmax.f32 %v932, 0.0
        %v954 = vmax.f32 %v933, 0.0
        %v955 = vmax.f32 %v934, 0.0
        %v956 = vmax.f32 %v935, 0.0
        %v957 = vmax.f32 %v936, 0.0
        %vm958 = vcmask 261120
        %959 = vst.msk [vmem:[#allocation2] sm:$0xff] %vm958, %v937
        %960 = vst.msk [vmem:[#allocation2 + $0x8] sm:$0xff] %vm958, %v938
        %961 = vst.msk [vmem:[#allocation2 + $0x10] sm:$0xff] %vm958, %v939
        %962 = vst.msk [vmem:[#allocation2 + $0x18] sm:$0xff] %vm958, %v940
        %963 = vst.msk [vmem:[#allocation2 + $0x20] sm:$0xff] %vm958, %v941
        %964 = vst.msk [vmem:[#allocation2 + $0x28] sm:$0xff] %vm958, %v942
        %965 = vst.msk [vmem:[#allocation2 + $0x30] sm:$0xff] %vm958, %v943
        %966 = vst.msk [vmem:[#allocation2 + $0x38] sm:$0xff] %vm958, %v944
        %967 = vst.msk [vmem:[#allocation2 + $0x40] sm:$0xff] %vm958, %v945
        %968 = vst.msk [vmem:[#allocation2 + $0x48] sm:$0xff] %vm958, %v946
        %969 = vst.msk [vmem:[#allocation2 + $0x50] sm:$0xff] %vm958, %v947
        %970 = vst.msk [vmem:[#allocation2 + $0x58] sm:$0xff] %vm958, %v948
        %971 = vst.msk [vmem:[#allocation2 + $0x60] sm:$0xff] %vm958, %v949
        %972 = vst.msk [vmem:[#allocation2 + $0x68] sm:$0xff] %vm958, %v950
        %973 = vst.msk [vmem:[#allocation2 + $0x70] sm:$0xff] %vm958, %v951
        %974 = vst.msk [vmem:[#allocation2 + $0x78] sm:$0xff] %vm958, %v952
        %975 = vst.msk [vmem:[#allocation2 + $0x80] sm:$0xff] %vm958, %v953
        %976 = vst.msk [vmem:[#allocation2 + $0x88] sm:$0xff] %vm958, %v954
        %977 = vst.msk [vmem:[#allocation2 + $0x90] sm:$0xff] %vm958, %v955
        %978 = vst.msk [vmem:[#allocation2 + $0x98] sm:$0xff] %vm958, %v956
        %979 = vst.msk [vmem:[#allocation2 + $0xa0] sm:$0xff] %vm958, %v957
        %v980 = vld [vmem:[%s329 + $0xa8] sm:$0xff]
        %v981 = vld [vmem:[%s329 + $0xb0] sm:$0xff]
        %v982 = vld [vmem:[%s329 + $0xb8] sm:$0xff]
        %v983 = vld [vmem:[%s329 + $0xc0] sm:$0xff]
        %v984 = vld [vmem:[%s329 + $0xc8] sm:$0xff]
        %v985 = vld [vmem:[%s329 + $0xd0] sm:$0xff]
        %v986 = vld [vmem:[%s329 + $0xd8] sm:$0xff]
        %v987 = vld [vmem:[%s329 + $0xe0] sm:$0xff]
        %v988 = vld [vmem:[%s329 + $0xe8] sm:$0xff]
        %v989 = vld [vmem:[%s329 + $0xf0] sm:$0xff]
        %v990 = vld [vmem:[%s329 + $0xf8] sm:$0xff]
        %v991 = vld [vmem:[%s329 + $0x100] sm:$0xff]
        %v992 = vld [vmem:[%s329 + $0x108] sm:$0xff]
        %v993 = vld [vmem:[%s329 + $0x110] sm:$0xff]
        %v994 = vld [vmem:[%s329 + $0x118] sm:$0xff]
        %v995 = vld [vmem:[%s329 + $0x120] sm:$0xff]
        %v996 = vld [vmem:[%s329 + $0x128] sm:$0xff]
        %v997 = vld [vmem:[%s329 + $0x130] sm:$0xff]
        %v998 = vld [vmem:[%s329 + $0x138] sm:$0xff]
        %v999 = vld [vmem:[%s329 + $0x140] sm:$0xff]
        %v1000 = vld [vmem:[%s329 + $0x148] sm:$0xff]
        %v1001 = vld [vmem:[%s1] sm:$0x1]
        %v1002 = vlaneseq
        %v1003 = vshrl.u32 %v1002, 7
        %v1004 = vsub.s32 0, %v1003
        %v1005 = vrot.slane %v1001, %v1004
        %v1006 = vmul.f32 %v980, %v1005
        %v1007 = vmul.f32 %v981, %v1005
        %v1008 = vmul.f32 %v982, %v1005
        %v1009 = vmul.f32 %v983, %v1005
        %v1010 = vmul.f32 %v984, %v1005
        %v1011 = vmul.f32 %v985, %v1005
        %v1012 = vmul.f32 %v986, %v1005
        %v1013 = vmul.f32 %v987, %v1005
        %v1014 = vmul.f32 %v988, %v1005
        %v1015 = vmul.f32 %v989, %v1005
        %v1016 = vmul.f32 %v990, %v1005
        %v1017 = vmul.f32 %v991, %v1005
        %v1018 = vmul.f32 %v992, %v1005
        %v1019 = vmul.f32 %v993, %v1005
        %v1020 = vmul.f32 %v994, %v1005
        %v1021 = vmul.f32 %v995, %v1005
        %v1022 = vmul.f32 %v996, %v1005
        %v1023 = vmul.f32 %v997, %v1005
        %v1024 = vmul.f32 %v998, %v1005
        %v1025 = vmul.f32 %v999, %v1005
        %v1026 = vmul.f32 %v1000, %v1005
        %v1027 = vadd.f32 %v1006, 0.0
        %v1028 = vadd.f32 %v1007, 0.0
        %v1029 = vadd.f32 %v1008, 0.0
        %v1030 = vadd.f32 %v1009, 0.0
        %v1031 = vadd.f32 %v1010, 0.0
        %v1032 = vadd.f32 %v1011, 0.0
        %v1033 = vadd.f32 %v1012, 0.0
        %v1034 = vadd.f32 %v1013, 0.0
        %v1035 = vadd.f32 %v1014, 0.0
        %v1036 = vadd.f32 %v1015, 0.0
        %v1037 = vadd.f32 %v1016, 0.0
        %v1038 = vadd.f32 %v1017, 0.0
        %v1039 = vadd.f32 %v1018, 0.0
        %v1040 = vadd.f32 %v1019, 0.0
        %v1041 = vadd.f32 %v1020, 0.0
        %v1042 = vadd.f32 %v1021, 0.0
        %v1043 = vadd.f32 %v1022, 0.0
        %v1044 = vadd.f32 %v1023, 0.0
        %v1045 = vadd.f32 %v1024, 0.0
        %v1046 = vadd.f32 %v1025, 0.0
        %v1047 = vadd.f32 %v1026, 0.0
        %v1048 = vld [vmem:[%s329 + $0xa9] sm:$0xff]
        %v1049 = vld [vmem:[%s329 + $0xb1] sm:$0xff]
        %v1050 = vld [vmem:[%s329 + $0xb9] sm:$0xff]
        %v1051 = vld [vmem:[%s329 + $0xc1] sm:$0xff]
        %v1052 = vld [vmem:[%s329 + $0xc9] sm:$0xff]
        %v1053 = vld [vmem:[%s329 + $0xd1] sm:$0xff]
        %v1054 = vld [vmem:[%s329 + $0xd9] sm:$0xff]
        %v1055 = vld [vmem:[%s329 + $0xe1] sm:$0xff]
        %v1056 = vld [vmem:[%s329 + $0xe9] sm:$0xff]
        %v1057 = vld [vmem:[%s329 + $0xf1] sm:$0xff]
        %v1058 = vld [vmem:[%s329 + $0xf9] sm:$0xff]
        %v1059 = vld [vmem:[%s329 + $0x101] sm:$0xff]
        %v1060 = vld [vmem:[%s329 + $0x109] sm:$0xff]
        %v1061 = vld [vmem:[%s329 + $0x111] sm:$0xff]
        %v1062 = vld [vmem:[%s329 + $0x119] sm:$0xff]
        %v1063 = vld [vmem:[%s329 + $0x121] sm:$0xff]
        %v1064 = vld [vmem:[%s329 + $0x129] sm:$0xff]
        %v1065 = vld [vmem:[%s329 + $0x131] sm:$0xff]
        %v1066 = vld [vmem:[%s329 + $0x139] sm:$0xff]
        %v1067 = vld [vmem:[%s329 + $0x141] sm:$0xff]
        %v1068 = vld [vmem:[%s329 + $0x149] sm:$0xff]
        %v1069 = vld [vmem:[%s1 + $0x1] sm:$0x1]
        %v1070 = vlaneseq
        %v1071 = vshrl.u32 %v1070, 7
        %v1072 = vsub.s32 0, %v1071
        %v1073 = vrot.slane %v1069, %v1072
        %v1074 = vmul.f32 %v1048, %v1073
        %v1075 = vmul.f32 %v1049, %v1073
        %v1076 = vmul.f32 %v1050, %v1073
        %v1077 = vmul.f32 %v1051, %v1073
        %v1078 = vmul.f32 %v1052, %v1073
        %v1079 = vmul.f32 %v1053, %v1073
        %v1080 = vmul.f32 %v1054, %v1073
        %v1081 = vmul.f32 %v1055, %v1073
        %v1082 = vmul.f32 %v1056, %v1073
        %v1083 = vmul.f32 %v1057, %v1073
        %v1084 = vmul.f32 %v1058, %v1073
        %v1085 = vmul.f32 %v1059, %v1073
        %v1086 = vmul.f32 %v1060, %v1073
        %v1087 = vmul.f32 %v1061, %v1073
        %v1088 = vmul.f32 %v1062, %v1073
        %v1089 = vmul.f32 %v1063, %v1073
        %v1090 = vmul.f32 %v1064, %v1073
        %v1091 = vmul.f32 %v1065, %v1073
        %v1092 = vmul.f32 %v1066, %v1073
        %v1093 = vmul.f32 %v1067, %v1073
        %v1094 = vmul.f32 %v1068, %v1073
        %v1095 = vadd.f32 %v1027, %v1074
        %v1096 = vadd.f32 %v1028, %v1075
        %v1097 = vadd.f32 %v1029, %v1076
        %v1098 = vadd.f32 %v1030, %v1077
        %v1099 = vadd.f32 %v1031, %v1078
        %v1100 = vadd.f32 %v1032, %v1079
        %v1101 = vadd.f32 %v1033, %v1080
        %v1102 = vadd.f32 %v1034, %v1081
        %v1103 = vadd.f32 %v1035, %v1082
        %v1104 = vadd.f32 %v1036, %v1083
        %v1105 = vadd.f32 %v1037, %v1084
        %v1106 = vadd.f32 %v1038, %v1085
        %v1107 = vadd.f32 %v1039, %v1086
        %v1108 = vadd.f32 %v1040, %v1087
        %v1109 = vadd.f32 %v1041, %v1088
        %v1110 = vadd.f32 %v1042, %v1089
        %v1111 = vadd.f32 %v1043, %v1090
        %v1112 = vadd.f32 %v1044, %v1091
        %v1113 = vadd.f32 %v1045, %v1092
        %v1114 = vadd.f32 %v1046, %v1093
        %v1115 = vadd.f32 %v1047, %v1094
        %v1116 = vld [vmem:[%s329 + $0xaa] sm:$0xff]
        %v1117 = vld [vmem:[%s329 + $0xb2] sm:$0xff]
        %v1118 = vld [vmem:[%s329 + $0xba] sm:$0xff]
        %v1119 = vld [vmem:[%s329 + $0xc2] sm:$0xff]
        %v1120 = vld [vmem:[%s329 + $0xca] sm:$0xff]
        %v1121 = vld [vmem:[%s329 + $0xd2] sm:$0xff]
        %v1122 = vld [vmem:[%s329 + $0xda] sm:$0xff]
        %v1123 = vld [vmem:[%s329 + $0xe2] sm:$0xff]
        %v1124 = vld [vmem:[%s329 + $0xea] sm:$0xff]
        %v1125 = vld [vmem:[%s329 + $0xf2] sm:$0xff]
        %v1126 = vld [vmem:[%s329 + $0xfa] sm:$0xff]
        %v1127 = vld [vmem:[%s329 + $0x102] sm:$0xff]
        %v1128 = vld [vmem:[%s329 + $0x10a] sm:$0xff]
        %v1129 = vld [vmem:[%s329 + $0x112] sm:$0xff]
        %v1130 = vld [vmem:[%s329 + $0x11a] sm:$0xff]
        %v1131 = vld [vmem:[%s329 + $0x122] sm:$0xff]
        %v1132 = vld [vmem:[%s329 + $0x12a] sm:$0xff]
        %v1133 = vld [vmem:[%s329 + $0x132] sm:$0xff]
        %v1134 = vld [vmem:[%s329 + $0x13a] sm:$0xff]
        %v1135 = vld [vmem:[%s329 + $0x142] sm:$0xff]
        %v1136 = vld [vmem:[%s329 + $0x14a] sm:$0xff]
        %v1137 = vld [vmem:[%s1 + $0x2] sm:$0x1]
        %v1138 = vlaneseq
        %v1139 = vshrl.u32 %v1138, 7
        %v1140 = vsub.s32 0, %v1139
        %v1141 = vrot.slane %v1137, %v1140
        %v1142 = vmul.f32 %v1116, %v1141
        %v1143 = vmul.f32 %v1117, %v1141
        %v1144 = vmul.f32 %v1118, %v1141
        %v1145 = vmul.f32 %v1119, %v1141
        %v1146 = vmul.f32 %v1120, %v1141
        %v1147 = vmul.f32 %v1121, %v1141
        %v1148 = vmul.f32 %v1122, %v1141
        %v1149 = vmul.f32 %v1123, %v1141
        %v1150 = vmul.f32 %v1124, %v1141
        %v1151 = vmul.f32 %v1125, %v1141
        %v1152 = vmul.f32 %v1126, %v1141
        %v1153 = vmul.f32 %v1127, %v1141
        %v1154 = vmul.f32 %v1128, %v1141
        %v1155 = vmul.f32 %v1129, %v1141
        %v1156 = vmul.f32 %v1130, %v1141
        %v1157 = vmul.f32 %v1131, %v1141
        %v1158 = vmul.f32 %v1132, %v1141
        %v1159 = vmul.f32 %v1133, %v1141
        %v1160 = vmul.f32 %v1134, %v1141
        %v1161 = vmul.f32 %v1135, %v1141
        %v1162 = vmul.f32 %v1136, %v1141
        %v1163 = vadd.f32 %v1095, %v1142
        %v1164 = vadd.f32 %v1096, %v1143
        %v1165 = vadd.f32 %v1097, %v1144
        %v1166 = vadd.f32 %v1098, %v1145
        %v1167 = vadd.f32 %v1099, %v1146
        %v1168 = vadd.f32 %v1100, %v1147
        %v1169 = vadd.f32 %v1101, %v1148
        %v1170 = vadd.f32 %v1102, %v1149
        %v1171 = vadd.f32 %v1103, %v1150
        %v1172 = vadd.f32 %v1104, %v1151
        %v1173 = vadd.f32 %v1105, %v1152
        %v1174 = vadd.f32 %v1106, %v1153
        %v1175 = vadd.f32 %v1107, %v1154
        %v1176 = vadd.f32 %v1108, %v1155
        %v1177 = vadd.f32 %v1109, %v1156
        %v1178 = vadd.f32 %v1110, %v1157
        %v1179 = vadd.f32 %v1111, %v1158
        %v1180 = vadd.f32 %v1112, %v1159
        %v1181 = vadd.f32 %v1113, %v1160
        %v1182 = vadd.f32 %v1114, %v1161
        %v1183 = vadd.f32 %v1115, %v1162
        %v1184 = vld [vmem:[%s329 + $0xc6] sm:$0xff]
        %v1185 = vld [vmem:[%s329 + $0xce] sm:$0xff]
        %v1186 = vld [vmem:[%s329 + $0xd6] sm:$0xff]
        %v1187 = vld [vmem:[%s329 + $0xde] sm:$0xff]
        %v1188 = vld [vmem:[%s329 + $0xe6] sm:$0xff]
        %v1189 = vld [vmem:[%s329 + $0xee] sm:$0xff]
        %v1190 = vld [vmem:[%s329 + $0xf6] sm:$0xff]
        %v1191 = vld [vmem:[%s329 + $0xfe] sm:$0xff]
        %v1192 = vld [vmem:[%s329 + $0x106] sm:$0xff]
        %v1193 = vld [vmem:[%s329 + $0x10e] sm:$0xff]
        %v1194 = vld [vmem:[%s329 + $0x116] sm:$0xff]
        %v1195 = vld [vmem:[%s329 + $0x11e] sm:$0xff]
        %v1196 = vld [vmem:[%s329 + $0x126] sm:$0xff]
        %v1197 = vld [vmem:[%s329 + $0x12e] sm:$0xff]
        %v1198 = vld [vmem:[%s329 + $0x136] sm:$0xff]
        %v1199 = vld [vmem:[%s329 + $0x13e] sm:$0xff]
        %v1200 = vld [vmem:[%s329 + $0x146] sm:$0xff]
        %v1201 = vld [vmem:[%s329 + $0x14e] sm:$0xff]
        %v1202 = vld [vmem:[%s329 + $0x156] sm:$0xff]
        %v1203 = vld [vmem:[%s329 + $0x15e] sm:$0xff]
        %v1204 = vld [vmem:[%s329 + $0x166] sm:$0xff]
        %v1205 = vld [vmem:[%s1 + $0x3] sm:$0x1]
        %v1206 = vlaneseq
        %v1207 = vshrl.u32 %v1206, 7
        %v1208 = vsub.s32 0, %v1207
        %v1209 = vrot.slane %v1205, %v1208
        %v1210 = vmul.f32 %v1184, %v1209
        %v1211 = vmul.f32 %v1185, %v1209
        %v1212 = vmul.f32 %v1186, %v1209
        %v1213 = vmul.f32 %v1187, %v1209
        %v1214 = vmul.f32 %v1188, %v1209
        %v1215 = vmul.f32 %v1189, %v1209
        %v1216 = vmul.f32 %v1190, %v1209
        %v1217 = vmul.f32 %v1191, %v1209
        %v1218 = vmul.f32 %v1192, %v1209
        %v1219 = vmul.f32 %v1193, %v1209
        %v1220 = vmul.f32 %v1194, %v1209
        %v1221 = vmul.f32 %v1195, %v1209
        %v1222 = vmul.f32 %v1196, %v1209
        %v1223 = vmul.f32 %v1197, %v1209
        %v1224 = vmul.f32 %v1198, %v1209
        %v1225 = vmul.f32 %v1199, %v1209
        %v1226 = vmul.f32 %v1200, %v1209
        %v1227 = vmul.f32 %v1201, %v1209
        %v1228 = vmul.f32 %v1202, %v1209
        %v1229 = vmul.f32 %v1203, %v1209
        %v1230 = vmul.f32 %v1204, %v1209
        %v1231 = vadd.f32 %v1163, %v1210
        %v1232 = vadd.f32 %v1164, %v1211
        %v1233 = vadd.f32 %v1165, %v1212
        %v1234 = vadd.f32 %v1166, %v1213
        %v1235 = vadd.f32 %v1167, %v1214
        %v1236 = vadd.f32 %v1168, %v1215
        %v1237 = vadd.f32 %v1169, %v1216
        %v1238 = vadd.f32 %v1170, %v1217
        %v1239 = vadd.f32 %v1171, %v1218
        %v1240 = vadd.f32 %v1172, %v1219
        %v1241 = vadd.f32 %v1173, %v1220
        %v1242 = vadd.f32 %v1174, %v1221
        %v1243 = vadd.f32 %v1175, %v1222
        %v1244 = vadd.f32 %v1176, %v1223
        %v1245 = vadd.f32 %v1177, %v1224
        %v1246 = vadd.f32 %v1178, %v1225
        %v1247 = vadd.f32 %v1179, %v1226
        %v1248 = vadd.f32 %v1180, %v1227
        %v1249 = vadd.f32 %v1181, %v1228
        %v1250 = vadd.f32 %v1182, %v1229
        %v1251 = vadd.f32 %v1183, %v1230
        %v1252 = vld [vmem:[%s329 + $0xc7] sm:$0xff]
        %v1253 = vld [vmem:[%s329 + $0xcf] sm:$0xff]
        %v1254 = vld [vmem:[%s329 + $0xd7] sm:$0xff]
        %v1255 = vld [vmem:[%s329 + $0xdf] sm:$0xff]
        %v1256 = vld [vmem:[%s329 + $0xe7] sm:$0xff]
        %v1257 = vld [vmem:[%s329 + $0xef] sm:$0xff]
        %v1258 = vld [vmem:[%s329 + $0xf7] sm:$0xff]
        %v1259 = vld [vmem:[%s329 + $0xff] sm:$0xff]
        %v1260 = vld [vmem:[%s329 + $0x107] sm:$0xff]
        %v1261 = vld [vmem:[%s329 + $0x10f] sm:$0xff]
        %v1262 = vld [vmem:[%s329 + $0x117] sm:$0xff]
        %v1263 = vld [vmem:[%s329 + $0x11f] sm:$0xff]
        %v1264 = vld [vmem:[%s329 + $0x127] sm:$0xff]
        %v1265 = vld [vmem:[%s329 + $0x12f] sm:$0xff]
        %v1266 = vld [vmem:[%s329 + $0x137] sm:$0xff]
        %v1267 = vld [vmem:[%s329 + $0x13f] sm:$0xff]
        %v1268 = vld [vmem:[%s329 + $0x147] sm:$0xff]
        %v1269 = vld [vmem:[%s329 + $0x14f] sm:$0xff]
        %v1270 = vld [vmem:[%s329 + $0x157] sm:$0xff]
        %v1271 = vld [vmem:[%s329 + $0x15f] sm:$0xff]
        %v1272 = vld [vmem:[%s329 + $0x167] sm:$0xff]
        %v1273 = vld [vmem:[%s1 + $0x4] sm:$0x1]
        %v1274 = vlaneseq
        %v1275 = vshrl.u32 %v1274, 7
        %v1276 = vsub.s32 0, %v1275
        %v1277 = vrot.slane %v1273, %v1276
        %v1278 = vmul.f32 %v1252, %v1277
        %v1279 = vmul.f32 %v1253, %v1277
        %v1280 = vmul.f32 %v1254, %v1277
        %v1281 = vmul.f32 %v1255, %v1277
        %v1282 = vmul.f32 %v1256, %v1277
        %v1283 = vmul.f32 %v1257, %v1277
        %v1284 = vmul.f32 %v1258, %v1277
        %v1285 = vmul.f32 %v1259, %v1277
        %v1286 = vmul.f32 %v1260, %v1277
        %v1287 = vmul.f32 %v1261, %v1277
        %v1288 = vmul.f32 %v1262, %v1277
        %v1289 = vmul.f32 %v1263, %v1277
        %v1290 = vmul.f32 %v1264, %v1277
        %v1291 = vmul.f32 %v1265, %v1277
        %v1292 = vmul.f32 %v1266, %v1277
        %v1293 = vmul.f32 %v1267, %v1277
        %v1294 = vmul.f32 %v1268, %v1277
        %v1295 = vmul.f32 %v1269, %v1277
        %v1296 = vmul.f32 %v1270, %v1277
        %v1297 = vmul.f32 %v1271, %v1277
        %v1298 = vmul.f32 %v1272, %v1277
        %v1299 = vadd.f32 %v1231, %v1278
        %v1300 = vadd.f32 %v1232, %v1279
        %v1301 = vadd.f32 %v1233, %v1280
        %v1302 = vadd.f32 %v1234, %v1281
        %v1303 = vadd.f32 %v1235, %v1282
        %v1304 = vadd.f32 %v1236, %v1283
        %v1305 = vadd.f32 %v1237, %v1284
        %v1306 = vadd.f32 %v1238, %v1285
        %v1307 = vadd.f32 %v1239, %v1286
        %v1308 = vadd.f32 %v1240, %v1287
        %v1309 = vadd.f32 %v1241, %v1288
        %v1310 = vadd.f32 %v1242, %v1289
        %v1311 = vadd.f32 %v1243, %v1290
        %v1312 = vadd.f32 %v1244, %v1291
        %v1313 = vadd.f32 %v1245, %v1292
        %v1314 = vadd.f32 %v1246, %v1293
        %v1315 = vadd.f32 %v1247, %v1294
        %v1316 = vadd.f32 %v1248, %v1295
        %v1317 = vadd.f32 %v1249, %v1296
        %v1318 = vadd.f32 %v1250, %v1297
        %v1319 = vadd.f32 %v1251, %v1298
        %v1320 = vld [vmem:[%s329 + $0x150] sm:$0xff]
        %v1321 = vld [vmem:[%s329 + $0x158] sm:$0xff]
        %v1322 = vld [vmem:[%s329 + $0x160] sm:$0xff]
        %v1323 = vld [vmem:[%s329 + $0x168] sm:$0xff]
        %v1324 = vld [vmem:[%s1 + $0x5] sm:$0x1]
        %v1325 = vlaneseq
        %v1326 = vshrl.u32 %v1325, 7
        %v1327 = vsub.s32 0, %v1326
        %v1328 = vrot.slane %v1324, %v1327
        %v1329 = vmul.f32 %v984, %v1328
        %v1330 = vmul.f32 %v985, %v1328
        %v1331 = vmul.f32 %v986, %v1328
        %v1332 = vmul.f32 %v987, %v1328
        %v1333 = vmul.f32 %v988, %v1328
        %v1334 = vmul.f32 %v989, %v1328
        %v1335 = vmul.f32 %v990, %v1328
        %v1336 = vmul.f32 %v991, %v1328
        %v1337 = vmul.f32 %v992, %v1328
        %v1338 = vmul.f32 %v993, %v1328
        %v1339 = vmul.f32 %v994, %v1328
        %v1340 = vmul.f32 %v995, %v1328
        %v1341 = vmul.f32 %v996, %v1328
        %v1342 = vmul.f32 %v997, %v1328
        %v1343 = vmul.f32 %v998, %v1328
        %v1344 = vmul.f32 %v999, %v1328
        %v1345 = vmul.f32 %v1000, %v1328
        %v1346 = vmul.f32 %v1320, %v1328
        %v1347 = vmul.f32 %v1321, %v1328
        %v1348 = vmul.f32 %v1322, %v1328
        %v1349 = vmul.f32 %v1323, %v1328
        %v1350 = vadd.f32 %v1299, %v1329
        %v1351 = vadd.f32 %v1300, %v1330
        %v1352 = vadd.f32 %v1301, %v1331
        %v1353 = vadd.f32 %v1302, %v1332
        %v1354 = vadd.f32 %v1303, %v1333
        %v1355 = vadd.f32 %v1304, %v1334
        %v1356 = vadd.f32 %v1305, %v1335
        %v1357 = vadd.f32 %v1306, %v1336
        %v1358 = vadd.f32 %v1307, %v1337
        %v1359 = vadd.f32 %v1308, %v1338
        %v1360 = vadd.f32 %v1309, %v1339
        %v1361 = vadd.f32 %v1310, %v1340
        %v1362 = vadd.f32 %v1311, %v1341
        %v1363 = vadd.f32 %v1312, %v1342
        %v1364 = vadd.f32 %v1313, %v1343
        %v1365 = vadd.f32 %v1314, %v1344
        %v1366 = vadd.f32 %v1315, %v1345
        %v1367 = vadd.f32 %v1316, %v1346
        %v1368 = vadd.f32 %v1317, %v1347
        %v1369 = vadd.f32 %v1318, %v1348
        %v1370 = vadd.f32 %v1319, %v1349
        %v1371 = vld [vmem:[%s329 + $0xe4] sm:$0xff]
        %v1372 = vld [vmem:[%s329 + $0xec] sm:$0xff]
        %v1373 = vld [vmem:[%s329 + $0xf4] sm:$0xff]
        %v1374 = vld [vmem:[%s329 + $0xfc] sm:$0xff]
        %v1375 = vld [vmem:[%s329 + $0x104] sm:$0xff]
        %v1376 = vld [vmem:[%s329 + $0x10c] sm:$0xff]
        %v1377 = vld [vmem:[%s329 + $0x114] sm:$0xff]
        %v1378 = vld [vmem:[%s329 + $0x11c] sm:$0xff]
        %v1379 = vld [vmem:[%s329 + $0x124] sm:$0xff]
        %v1380 = vld [vmem:[%s329 + $0x12c] sm:$0xff]
        %v1381 = vld [vmem:[%s329 + $0x134] sm:$0xff]
        %v1382 = vld [vmem:[%s329 + $0x13c] sm:$0xff]
        %v1383 = vld [vmem:[%s329 + $0x144] sm:$0xff]
        %v1384 = vld [vmem:[%s329 + $0x14c] sm:$0xff]
        %v1385 = vld [vmem:[%s329 + $0x154] sm:$0xff]
        %v1386 = vld [vmem:[%s329 + $0x15c] sm:$0xff]
        %v1387 = vld [vmem:[%s329 + $0x164] sm:$0xff]
        %v1388 = vld [vmem:[%s329 + $0x16c] sm:$0xff]
        %v1389 = vld [vmem:[%s329 + $0x174] sm:$0xff]
        %v1390 = vld [vmem:[%s329 + $0x17c] sm:$0xff]
        %v1391 = vld [vmem:[%s329 + $0x184] sm:$0xff]
        %v1392 = vld [vmem:[%s1 + $0x6] sm:$0x1]
        %v1393 = vlaneseq
        %v1394 = vshrl.u32 %v1393, 7
        %v1395 = vsub.s32 0, %v1394
        %v1396 = vrot.slane %v1392, %v1395
        %v1397 = vmul.f32 %v1371, %v1396
        %v1398 = vmul.f32 %v1372, %v1396
        %v1399 = vmul.f32 %v1373, %v1396
        %v1400 = vmul.f32 %v1374, %v1396
        %v1401 = vmul.f32 %v1375, %v1396
        %v1402 = vmul.f32 %v1376, %v1396
        %v1403 = vmul.f32 %v1377, %v1396
        %v1404 = vmul.f32 %v1378, %v1396
        %v1405 = vmul.f32 %v1379, %v1396
        %v1406 = vmul.f32 %v1380, %v1396
        %v1407 = vmul.f32 %v1381, %v1396
        %v1408 = vmul.f32 %v1382, %v1396
        %v1409 = vmul.f32 %v1383, %v1396
        %v1410 = vmul.f32 %v1384, %v1396
        %v1411 = vmul.f32 %v1385, %v1396
        %v1412 = vmul.f32 %v1386, %v1396
        %v1413 = vmul.f32 %v1387, %v1396
        %v1414 = vmul.f32 %v1388, %v1396
        %v1415 = vmul.f32 %v1389, %v1396
        %v1416 = vmul.f32 %v1390, %v1396
        %v1417 = vmul.f32 %v1391, %v1396
        %v1418 = vadd.f32 %v1350, %v1397
        %v1419 = vadd.f32 %v1351, %v1398
        %v1420 = vadd.f32 %v1352, %v1399
        %v1421 = vadd.f32 %v1353, %v1400
        %v1422 = vadd.f32 %v1354, %v1401
        %v1423 = vadd.f32 %v1355, %v1402
        %v1424 = vadd.f32 %v1356, %v1403
        %v1425 = vadd.f32 %v1357, %v1404
        %v1426 = vadd.f32 %v1358, %v1405
        %v1427 = vadd.f32 %v1359, %v1406
        %v1428 = vadd.f32 %v1360, %v1407
        %v1429 = vadd.f32 %v1361, %v1408
        %v1430 = vadd.f32 %v1362, %v1409
        %v1431 = vadd.f32 %v1363, %v1410
        %v1432 = vadd.f32 %v1364, %v1411
        %v1433 = vadd.f32 %v1365, %v1412
        %v1434 = vadd.f32 %v1366, %v1413
        %v1435 = vadd.f32 %v1367, %v1414
        %v1436 = vadd.f32 %v1368, %v1415
        %v1437 = vadd.f32 %v1369, %v1416
        %v1438 = vadd.f32 %v1370, %v1417
        %v1439 = vld [vmem:[%s329 + $0xe5] sm:$0xff]
        %v1440 = vld [vmem:[%s329 + $0xed] sm:$0xff]
        %v1441 = vld [vmem:[%s329 + $0xf5] sm:$0xff]
        %v1442 = vld [vmem:[%s329 + $0xfd] sm:$0xff]
        %v1443 = vld [vmem:[%s329 + $0x105] sm:$0xff]
        %v1444 = vld [vmem:[%s329 + $0x10d] sm:$0xff]
        %v1445 = vld [vmem:[%s329 + $0x115] sm:$0xff]
        %v1446 = vld [vmem:[%s329 + $0x11d] sm:$0xff]
        %v1447 = vld [vmem:[%s329 + $0x125] sm:$0xff]
        %v1448 = vld [vmem:[%s329 + $0x12d] sm:$0xff]
        %v1449 = vld [vmem:[%s329 + $0x135] sm:$0xff]
        %v1450 = vld [vmem:[%s329 + $0x13d] sm:$0xff]
        %v1451 = vld [vmem:[%s329 + $0x145] sm:$0xff]
        %v1452 = vld [vmem:[%s329 + $0x14d] sm:$0xff]
        %v1453 = vld [vmem:[%s329 + $0x155] sm:$0xff]
        %v1454 = vld [vmem:[%s329 + $0x15d] sm:$0xff]
        %v1455 = vld [vmem:[%s329 + $0x165] sm:$0xff]
        %v1456 = vld [vmem:[%s329 + $0x16d] sm:$0xff]
        %v1457 = vld [vmem:[%s329 + $0x175] sm:$0xff]
        %v1458 = vld [vmem:[%s329 + $0x17d] sm:$0xff]
        %v1459 = vld [vmem:[%s329 + $0x185] sm:$0xff]
        %v1460 = vld [vmem:[%s1 + $0x7] sm:$0x1]
        %v1461 = vlaneseq
        %v1462 = vshrl.u32 %v1461, 7
        %v1463 = vsub.s32 0, %v1462
        %v1464 = vrot.slane %v1460, %v1463
        %v1465 = vmul.f32 %v1439, %v1464
        %v1466 = vmul.f32 %v1440, %v1464
        %v1467 = vmul.f32 %v1441, %v1464
        %v1468 = vmul.f32 %v1442, %v1464
        %v1469 = vmul.f32 %v1443, %v1464
        %v1470 = vmul.f32 %v1444, %v1464
        %v1471 = vmul.f32 %v1445, %v1464
        %v1472 = vmul.f32 %v1446, %v1464
        %v1473 = vmul.f32 %v1447, %v1464
        %v1474 = vmul.f32 %v1448, %v1464
        %v1475 = vmul.f32 %v1449, %v1464
        %v1476 = vmul.f32 %v1450, %v1464
        %v1477 = vmul.f32 %v1451, %v1464
        %v1478 = vmul.f32 %v1452, %v1464
        %v1479 = vmul.f32 %v1453, %v1464
        %v1480 = vmul.f32 %v1454, %v1464
        %v1481 = vmul.f32 %v1455, %v1464
        %v1482 = vmul.f32 %v1456, %v1464
        %v1483 = vmul.f32 %v1457, %v1464
        %v1484 = vmul.f32 %v1458, %v1464
        %v1485 = vmul.f32 %v1459, %v1464
        %v1486 = vadd.f32 %v1418, %v1465
        %v1487 = vadd.f32 %v1419, %v1466
        %v1488 = vadd.f32 %v1420, %v1467
        %v1489 = vadd.f32 %v1421, %v1468
        %v1490 = vadd.f32 %v1422, %v1469
        %v1491 = vadd.f32 %v1423, %v1470
        %v1492 = vadd.f32 %v1424, %v1471
        %v1493 = vadd.f32 %v1425, %v1472
        %v1494 = vadd.f32 %v1426, %v1473
        %v1495 = vadd.f32 %v1427, %v1474
        %v1496 = vadd.f32 %v1428, %v1475
        %v1497 = vadd.f32 %v1429, %v1476
        %v1498 = vadd.f32 %v1430, %v1477
        %v1499 = vadd.f32 %v1431, %v1478
        %v1500 = vadd.f32 %v1432, %v1479
        %v1501 = vadd.f32 %v1433, %v1480
        %v1502 = vadd.f32 %v1434, %v1481
        %v1503 = vadd.f32 %v1435, %v1482
        %v1504 = vadd.f32 %v1436, %v1483
        %v1505 = vadd.f32 %v1437, %v1484
        %v1506 = vadd.f32 %v1438, %v1485
        %v1507 = vld [vmem:[%s329 + $0x16e] sm:$0xff]
        %v1508 = vld [vmem:[%s329 + $0x176] sm:$0xff]
        %v1509 = vld [vmem:[%s329 + $0x17e] sm:$0xff]
        %v1510 = vld [vmem:[%s329 + $0x186] sm:$0xff]
        %v1511 = vld [vmem:[%s1 + $0x8] sm:$0x1]
        %v1512 = vlaneseq
        %v1513 = vshrl.u32 %v1512, 7
        %v1514 = vsub.s32 0, %v1513
        %v1515 = vrot.slane %v1511, %v1514
        %v1516 = vmul.f32 %v1188, %v1515
        %v1517 = vmul.f32 %v1189, %v1515
        %v1518 = vmul.f32 %v1190, %v1515
        %v1519 = vmul.f32 %v1191, %v1515
        %v1520 = vmul.f32 %v1192, %v1515
        %v1521 = vmul.f32 %v1193, %v1515
        %v1522 = vmul.f32 %v1194, %v1515
        %v1523 = vmul.f32 %v1195, %v1515
        %v1524 = vmul.f32 %v1196, %v1515
        %v1525 = vmul.f32 %v1197, %v1515
        %v1526 = vmul.f32 %v1198, %v1515
        %v1527 = vmul.f32 %v1199, %v1515
        %v1528 = vmul.f32 %v1200, %v1515
        %v1529 = vmul.f32 %v1201, %v1515
        %v1530 = vmul.f32 %v1202, %v1515
        %v1531 = vmul.f32 %v1203, %v1515
        %v1532 = vmul.f32 %v1204, %v1515
        %v1533 = vmul.f32 %v1507, %v1515
        %v1534 = vmul.f32 %v1508, %v1515
        %v1535 = vmul.f32 %v1509, %v1515
        %v1536 = vmul.f32 %v1510, %v1515
        %v1537 = vadd.f32 %v1486, %v1516
        %v1538 = vadd.f32 %v1487, %v1517
        %v1539 = vadd.f32 %v1488, %v1518
        %v1540 = vadd.f32 %v1489, %v1519
        %v1541 = vadd.f32 %v1490, %v1520
        %v1542 = vadd.f32 %v1491, %v1521
        %v1543 = vadd.f32 %v1492, %v1522
        %v1544 = vadd.f32 %v1493, %v1523
        %v1545 = vadd.f32 %v1494, %v1524
        %v1546 = vadd.f32 %v1495, %v1525
        %v1547 = vadd.f32 %v1496, %v1526
        %v1548 = vadd.f32 %v1497, %v1527
        %v1549 = vadd.f32 %v1498, %v1528
        %v1550 = vadd.f32 %v1499, %v1529
        %v1551 = vadd.f32 %v1500, %v1530
        %v1552 = vadd.f32 %v1501, %v1531
        %v1553 = vadd.f32 %v1502, %v1532
        %v1554 = vadd.f32 %v1503, %v1533
        %v1555 = vadd.f32 %v1504, %v1534
        %v1556 = vadd.f32 %v1505, %v1535
        %v1557 = vadd.f32 %v1506, %v1536
        %v1558 = vadd.f32 %v1537, %v914
        %v1559 = vadd.f32 %v1538, %v914
        %v1560 = vadd.f32 %v1539, %v914
        %v1561 = vadd.f32 %v1540, %v914
        %v1562 = vadd.f32 %v1541, %v914
        %v1563 = vadd.f32 %v1542, %v914
        %v1564 = vadd.f32 %v1543, %v914
        %v1565 = vadd.f32 %v1544, %v914
        %v1566 = vadd.f32 %v1545, %v914
        %v1567 = vadd.f32 %v1546, %v914
        %v1568 = vadd.f32 %v1547, %v914
        %v1569 = vadd.f32 %v1548, %v914
        %v1570 = vadd.f32 %v1549, %v914
        %v1571 = vadd.f32 %v1550, %v914
        %v1572 = vadd.f32 %v1551, %v914
        %v1573 = vadd.f32 %v1552, %v914
        %v1574 = vadd.f32 %v1553, %v914
        %v1575 = vadd.f32 %v1554, %v914
        %v1576 = vadd.f32 %v1555, %v914
        %v1577 = vadd.f32 %v1556, %v914
        %v1578 = vadd.f32 %v1557, %v914
        %v1579 = vmax.f32 %v1558, 0.0
        %v1580 = vmax.f32 %v1559, 0.0
        %v1581 = vmax.f32 %v1560, 0.0
        %v1582 = vmax.f32 %v1561, 0.0
        %v1583 = vmax.f32 %v1562, 0.0
        %v1584 = vmax.f32 %v1563, 0.0
        %v1585 = vmax.f32 %v1564, 0.0
        %v1586 = vmax.f32 %v1565, 0.0
        %v1587 = vmax.f32 %v1566, 0.0
        %v1588 = vmax.f32 %v1567, 0.0
        %v1589 = vmax.f32 %v1568, 0.0
        %v1590 = vmax.f32 %v1569, 0.0
        %v1591 = vmax.f32 %v1570, 0.0
        %v1592 = vmax.f32 %v1571, 0.0
        %v1593 = vmax.f32 %v1572, 0.0
        %v1594 = vmax.f32 %v1573, 0.0
        %v1595 = vmax.f32 %v1574, 0.0
        %v1596 = vmax.f32 %v1575, 0.0
        %v1597 = vmax.f32 %v1576, 0.0
        %v1598 = vmax.f32 %v1577, 0.0
        %v1599 = vmax.f32 %v1578, 0.0
        %1600 = vst.msk [vmem:[#allocation2 + $0xa8] sm:$0xff] %vm958, %v1579
        %1601 = vst.msk [vmem:[#allocation2 + $0xb0] sm:$0xff] %vm958, %v1580
        %1602 = vst.msk [vmem:[#allocation2 + $0xb8] sm:$0xff] %vm958, %v1581
        %1603 = vst.msk [vmem:[#allocation2 + $0xc0] sm:$0xff] %vm958, %v1582
        %1604 = vst.msk [vmem:[#allocation2 + $0xc8] sm:$0xff] %vm958, %v1583
        %1605 = vst.msk [vmem:[#allocation2 + $0xd0] sm:$0xff] %vm958, %v1584
        %1606 = vst.msk [vmem:[#allocation2 + $0xd8] sm:$0xff] %vm958, %v1585
        %1607 = vst.msk [vmem:[#allocation2 + $0xe0] sm:$0xff] %vm958, %v1586
        %1608 = vst.msk [vmem:[#allocation2 + $0xe8] sm:$0xff] %vm958, %v1587
        %1609 = vst.msk [vmem:[#allocation2 + $0xf0] sm:$0xff] %vm958, %v1588
        %1610 = vst.msk [vmem:[#allocation2 + $0xf8] sm:$0xff] %vm958, %v1589
        %1611 = vst.msk [vmem:[#allocation2 + $0x100] sm:$0xff] %vm958, %v1590
        %1612 = vst.msk [vmem:[#allocation2 + $0x108] sm:$0xff] %vm958, %v1591
        %1613 = vst.msk [vmem:[#allocation2 + $0x110] sm:$0xff] %vm958, %v1592
        %1614 = vst.msk [vmem:[#allocation2 + $0x118] sm:$0xff] %vm958, %v1593
        %1615 = vst.msk [vmem:[#allocation2 + $0x120] sm:$0xff] %vm958, %v1594
        %1616 = vst.msk [vmem:[#allocation2 + $0x128] sm:$0xff] %vm958, %v1595
        %1617 = vst.msk [vmem:[#allocation2 + $0x130] sm:$0xff] %vm958, %v1596
        %1618 = vst.msk [vmem:[#allocation2 + $0x138] sm:$0xff] %vm958, %v1597
        %1619 = vst.msk [vmem:[#allocation2 + $0x140] sm:$0xff] %vm958, %v1598
        %1620 = vst.msk [vmem:[#allocation2 + $0x148] sm:$0xff] %vm958, %v1599
        %v1621 = vld [vmem:[%s329 + $0x150] sm:$0xff]
        %v1622 = vld [vmem:[%s329 + $0x158] sm:$0xff]
        %v1623 = vld [vmem:[%s329 + $0x160] sm:$0xff]
        %v1624 = vld [vmem:[%s329 + $0x168] sm:$0xff]
        %v1625 = vld [vmem:[%s329 + $0x170] sm:$0xff]
        %v1626 = vld [vmem:[%s329 + $0x178] sm:$0xff]
        %v1627 = vld [vmem:[%s329 + $0x180] sm:$0xff]
        %v1628 = vld [vmem:[%s329 + $0x188] sm:$0xff]
        %v1629 = vld [vmem:[%s329 + $0x190] sm:$0xff]
        %v1630 = vld [vmem:[%s329 + $0x198] sm:$0xff]
        %v1631 = vld [vmem:[%s329 + $0x1a0] sm:$0xff]
        %v1632 = vld [vmem:[%s329 + $0x1a8] sm:$0xff]
        %v1633 = vld [vmem:[%s329 + $0x1b0] sm:$0xff]
        %v1634 = vld [vmem:[%s329 + $0x1b8] sm:$0xff]
        %v1635 = vld [vmem:[%s329 + $0x1c0] sm:$0xff]
        %v1636 = vld [vmem:[%s329 + $0x1c8] sm:$0xff]
        %v1637 = vld [vmem:[%s329 + $0x1d0] sm:$0xff]
        %v1638 = vld [vmem:[%s329 + $0x1d8] sm:$0xff]
        %v1639 = vld [vmem:[%s329 + $0x1e0] sm:$0xff]
        %v1640 = vld [vmem:[%s329 + $0x1e8] sm:$0xff]
        %v1641 = vld [vmem:[%s329 + $0x1f0] sm:$0xff]
        %v1642 = vld [vmem:[%s1] sm:$0x1]
        %v1643 = vlaneseq
        %v1644 = vshrl.u32 %v1643, 7
        %v1645 = vsub.s32 0, %v1644
        %v1646 = vrot.slane %v1642, %v1645
        %v1647 = vmul.f32 %v1621, %v1646
        %v1648 = vmul.f32 %v1622, %v1646
        %v1649 = vmul.f32 %v1623, %v1646
        %v1650 = vmul.f32 %v1624, %v1646
        %v1651 = vmul.f32 %v1625, %v1646
        %v1652 = vmul.f32 %v1626, %v1646
        %v1653 = vmul.f32 %v1627, %v1646
        %v1654 = vmul.f32 %v1628, %v1646
        %v1655 = vmul.f32 %v1629, %v1646
        %v1656 = vmul.f32 %v1630, %v1646
        %v1657 = vmul.f32 %v1631, %v1646
        %v1658 = vmul.f32 %v1632, %v1646
        %v1659 = vmul.f32 %v1633, %v1646
        %v1660 = vmul.f32 %v1634, %v1646
        %v1661 = vmul.f32 %v1635, %v1646
        %v1662 = vmul.f32 %v1636, %v1646
        %v1663 = vmul.f32 %v1637, %v1646
        %v1664 = vmul.f32 %v1638, %v1646
        %v1665 = vmul.f32 %v1639, %v1646
        %v1666 = vmul.f32 %v1640, %v1646
        %v1667 = vmul.f32 %v1641, %v1646
        %v1668 = vadd.f32 %v1647, 0.0
        %v1669 = vadd.f32 %v1648, 0.0
        %v1670 = vadd.f32 %v1649, 0.0
        %v1671 = vadd.f32 %v1650, 0.0
        %v1672 = vadd.f32 %v1651, 0.0
        %v1673 = vadd.f32 %v1652, 0.0
        %v1674 = vadd.f32 %v1653, 0.0
        %v1675 = vadd.f32 %v1654, 0.0
        %v1676 = vadd.f32 %v1655, 0.0
        %v1677 = vadd.f32 %v1656, 0.0
        %v1678 = vadd.f32 %v1657, 0.0
        %v1679 = vadd.f32 %v1658, 0.0
        %v1680 = vadd.f32 %v1659, 0.0
        %v1681 = vadd.f32 %v1660, 0.0
        %v1682 = vadd.f32 %v1661, 0.0
        %v1683 = vadd.f32 %v1662, 0.0
        %v1684 = vadd.f32 %v1663, 0.0
        %v1685 = vadd.f32 %v1664, 0.0
        %v1686 = vadd.f32 %v1665, 0.0
        %v1687 = vadd.f32 %v1666, 0.0
        %v1688 = vadd.f32 %v1667, 0.0
        %v1689 = vld [vmem:[%s329 + $0x151] sm:$0xff]
        %v1690 = vld [vmem:[%s329 + $0x159] sm:$0xff]
        %v1691 = vld [vmem:[%s329 + $0x161] sm:$0xff]
        %v1692 = vld [vmem:[%s329 + $0x169] sm:$0xff]
        %v1693 = vld [vmem:[%s329 + $0x171] sm:$0xff]
        %v1694 = vld [vmem:[%s329 + $0x179] sm:$0xff]
        %v1695 = vld [vmem:[%s329 + $0x181] sm:$0xff]
        %v1696 = vld [vmem:[%s329 + $0x189] sm:$0xff]
        %v1697 = vld [vmem:[%s329 + $0x191] sm:$0xff]
        %v1698 = vld [vmem:[%s329 + $0x199] sm:$0xff]
        %v1699 = vld [vmem:[%s329 + $0x1a1] sm:$0xff]
        %v1700 = vld [vmem:[%s329 + $0x1a9] sm:$0xff]
        %v1701 = vld [vmem:[%s329 + $0x1b1] sm:$0xff]
        %v1702 = vld [vmem:[%s329 + $0x1b9] sm:$0xff]
        %v1703 = vld [vmem:[%s329 + $0x1c1] sm:$0xff]
        %v1704 = vld [vmem:[%s329 + $0x1c9] sm:$0xff]
        %v1705 = vld [vmem:[%s329 + $0x1d1] sm:$0xff]
        %v1706 = vld [vmem:[%s329 + $0x1d9] sm:$0xff]
        %v1707 = vld [vmem:[%s329 + $0x1e1] sm:$0xff]
        %v1708 = vld [vmem:[%s329 + $0x1e9] sm:$0xff]
        %v1709 = vld [vmem:[%s329 + $0x1f1] sm:$0xff]
        %v1710 = vld [vmem:[%s1 + $0x1] sm:$0x1]
        %v1711 = vlaneseq
        %v1712 = vshrl.u32 %v1711, 7
        %v1713 = vsub.s32 0, %v1712
        %v1714 = vrot.slane %v1710, %v1713
        %v1715 = vmul.f32 %v1689, %v1714
        %v1716 = vmul.f32 %v1690, %v1714
        %v1717 = vmul.f32 %v1691, %v1714
        %v1718 = vmul.f32 %v1692, %v1714
        %v1719 = vmul.f32 %v1693, %v1714
        %v1720 = vmul.f32 %v1694, %v1714
        %v1721 = vmul.f32 %v1695, %v1714
        %v1722 = vmul.f32 %v1696, %v1714
        %v1723 = vmul.f32 %v1697, %v1714
        %v1724 = vmul.f32 %v1698, %v1714
        %v1725 = vmul.f32 %v1699, %v1714
        %v1726 = vmul.f32 %v1700, %v1714
        %v1727 = vmul.f32 %v1701, %v1714
        %v1728 = vmul.f32 %v1702, %v1714
        %v1729 = vmul.f32 %v1703, %v1714
        %v1730 = vmul.f32 %v1704, %v1714
        %v1731 = vmul.f32 %v1705, %v1714
        %v1732 = vmul.f32 %v1706, %v1714
        %v1733 = vmul.f32 %v1707, %v1714
        %v1734 = vmul.f32 %v1708, %v1714
        %v1735 = vmul.f32 %v1709, %v1714
        %v1736 = vadd.f32 %v1668, %v1715
        %v1737 = vadd.f32 %v1669, %v1716
        %v1738 = vadd.f32 %v1670, %v1717
        %v1739 = vadd.f32 %v1671, %v1718
        %v1740 = vadd.f32 %v1672, %v1719
        %v1741 = vadd.f32 %v1673, %v1720
        %v1742 = vadd.f32 %v1674, %v1721
        %v1743 = vadd.f32 %v1675, %v1722
        %v1744 = vadd.f32 %v1676, %v1723
        %v1745 = vadd.f32 %v1677, %v1724
        %v1746 = vadd.f32 %v1678, %v1725
        %v1747 = vadd.f32 %v1679, %v1726
        %v1748 = vadd.f32 %v1680, %v1727
        %v1749 = vadd.f32 %v1681, %v1728
        %v1750 = vadd.f32 %v1682, %v1729
        %v1751 = vadd.f32 %v1683, %v1730
        %v1752 = vadd.f32 %v1684, %v1731
        %v1753 = vadd.f32 %v1685, %v1732
        %v1754 = vadd.f32 %v1686, %v1733
        %v1755 = vadd.f32 %v1687, %v1734
        %v1756 = vadd.f32 %v1688, %v1735
        %v1757 = vld [vmem:[%s329 + $0x152] sm:$0xff]
        %v1758 = vld [vmem:[%s329 + $0x15a] sm:$0xff]
        %v1759 = vld [vmem:[%s329 + $0x162] sm:$0xff]
        %v1760 = vld [vmem:[%s329 + $0x16a] sm:$0xff]
        %v1761 = vld [vmem:[%s329 + $0x172] sm:$0xff]
        %v1762 = vld [vmem:[%s329 + $0x17a] sm:$0xff]
        %v1763 = vld [vmem:[%s329 + $0x182] sm:$0xff]
        %v1764 = vld [vmem:[%s329 + $0x18a] sm:$0xff]
        %v1765 = vld [vmem:[%s329 + $0x192] sm:$0xff]
        %v1766 = vld [vmem:[%s329 + $0x19a] sm:$0xff]
        %v1767 = vld [vmem:[%s329 + $0x1a2] sm:$0xff]
        %v1768 = vld [vmem:[%s329 + $0x1aa] sm:$0xff]
        %v1769 = vld [vmem:[%s329 + $0x1b2] sm:$0xff]
        %v1770 = vld [vmem:[%s329 + $0x1ba] sm:$0xff]
        %v1771 = vld [vmem:[%s329 + $0x1c2] sm:$0xff]
        %v1772 = vld [vmem:[%s329 + $0x1ca] sm:$0xff]
        %v1773 = vld [vmem:[%s329 + $0x1d2] sm:$0xff]
        %v1774 = vld [vmem:[%s329 + $0x1da] sm:$0xff]
        %v1775 = vld [vmem:[%s329 + $0x1e2] sm:$0xff]
        %v1776 = vld [vmem:[%s329 + $0x1ea] sm:$0xff]
        %v1777 = vld [vmem:[%s329 + $0x1f2] sm:$0xff]
        %v1778 = vld [vmem:[%s1 + $0x2] sm:$0x1]
        %v1779 = vlaneseq
        %v1780 = vshrl.u32 %v1779, 7
        %v1781 = vsub.s32 0, %v1780
        %v1782 = vrot.slane %v1778, %v1781
        %v1783 = vmul.f32 %v1757, %v1782
        %v1784 = vmul.f32 %v1758, %v1782
        %v1785 = vmul.f32 %v1759, %v1782
        %v1786 = vmul.f32 %v1760, %v1782
        %v1787 = vmul.f32 %v1761, %v1782
        %v1788 = vmul.f32 %v1762, %v1782
        %v1789 = vmul.f32 %v1763, %v1782
        %v1790 = vmul.f32 %v1764, %v1782
        %v1791 = vmul.f32 %v1765, %v1782
        %v1792 = vmul.f32 %v1766, %v1782
        %v1793 = vmul.f32 %v1767, %v1782
        %v1794 = vmul.f32 %v1768, %v1782
        %v1795 = vmul.f32 %v1769, %v1782
        %v1796 = vmul.f32 %v1770, %v1782
        %v1797 = vmul.f32 %v1771, %v1782
        %v1798 = vmul.f32 %v1772, %v1782
        %v1799 = vmul.f32 %v1773, %v1782
        %v1800 = vmul.f32 %v1774, %v1782
        %v1801 = vmul.f32 %v1775, %v1782
        %v1802 = vmul.f32 %v1776, %v1782
        %v1803 = vmul.f32 %v1777, %v1782
        %v1804 = vadd.f32 %v1736, %v1783
        %v1805 = vadd.f32 %v1737, %v1784
        %v1806 = vadd.f32 %v1738, %v1785
        %v1807 = vadd.f32 %v1739, %v1786
        %v1808 = vadd.f32 %v1740, %v1787
        %v1809 = vadd.f32 %v1741, %v1788
        %v1810 = vadd.f32 %v1742, %v1789
        %v1811 = vadd.f32 %v1743, %v1790
        %v1812 = vadd.f32 %v1744, %v1791
        %v1813 = vadd.f32 %v1745, %v1792
        %v1814 = vadd.f32 %v1746, %v1793
        %v1815 = vadd.f32 %v1747, %v1794
        %v1816 = vadd.f32 %v1748, %v1795
        %v1817 = vadd.f32 %v1749, %v1796
        %v1818 = vadd.f32 %v1750, %v1797
        %v1819 = vadd.f32 %v1751, %v1798
        %v1820 = vadd.f32 %v1752, %v1799
        %v1821 = vadd.f32 %v1753, %v1800
        %v1822 = vadd.f32 %v1754, %v1801
        %v1823 = vadd.f32 %v1755, %v1802
        %v1824 = vadd.f32 %v1756, %v1803
        %v1825 = vld [vmem:[%s329 + $0x16e] sm:$0xff]
        %v1826 = vld [vmem:[%s329 + $0x176] sm:$0xff]
        %v1827 = vld [vmem:[%s329 + $0x17e] sm:$0xff]
        %v1828 = vld [vmem:[%s329 + $0x186] sm:$0xff]
        %v1829 = vld [vmem:[%s329 + $0x18e] sm:$0xff]
        %v1830 = vld [vmem:[%s329 + $0x196] sm:$0xff]
        %v1831 = vld [vmem:[%s329 + $0x19e] sm:$0xff]
        %v1832 = vld [vmem:[%s329 + $0x1a6] sm:$0xff]
        %v1833 = vld [vmem:[%s329 + $0x1ae] sm:$0xff]
        %v1834 = vld [vmem:[%s329 + $0x1b6] sm:$0xff]
        %v1835 = vld [vmem:[%s329 + $0x1be] sm:$0xff]
        %v1836 = vld [vmem:[%s329 + $0x1c6] sm:$0xff]
        %v1837 = vld [vmem:[%s329 + $0x1ce] sm:$0xff]
        %v1838 = vld [vmem:[%s329 + $0x1d6] sm:$0xff]
        %v1839 = vld [vmem:[%s329 + $0x1de] sm:$0xff]
        %v1840 = vld [vmem:[%s329 + $0x1e6] sm:$0xff]
        %v1841 = vld [vmem:[%s329 + $0x1ee] sm:$0xff]
        %v1842 = vld [vmem:[%s329 + $0x1f6] sm:$0xff]
        %v1843 = vld [vmem:[%s329 + $0x1fe] sm:$0xff]
        %v1844 = vld [vmem:[%s329 + $0x206] sm:$0xff]
        %v1845 = vld [vmem:[%s329 + $0x20e] sm:$0xff]
        %v1846 = vld [vmem:[%s1 + $0x3] sm:$0x1]
        %v1847 = vlaneseq
        %v1848 = vshrl.u32 %v1847, 7
        %v1849 = vsub.s32 0, %v1848
        %v1850 = vrot.slane %v1846, %v1849
        %v1851 = vmul.f32 %v1825, %v1850
        %v1852 = vmul.f32 %v1826, %v1850
        %v1853 = vmul.f32 %v1827, %v1850
        %v1854 = vmul.f32 %v1828, %v1850
        %v1855 = vmul.f32 %v1829, %v1850
        %v1856 = vmul.f32 %v1830, %v1850
        %v1857 = vmul.f32 %v1831, %v1850
        %v1858 = vmul.f32 %v1832, %v1850
        %v1859 = vmul.f32 %v1833, %v1850
        %v1860 = vmul.f32 %v1834, %v1850
        %v1861 = vmul.f32 %v1835, %v1850
        %v1862 = vmul.f32 %v1836, %v1850
        %v1863 = vmul.f32 %v1837, %v1850
        %v1864 = vmul.f32 %v1838, %v1850
        %v1865 = vmul.f32 %v1839, %v1850
        %v1866 = vmul.f32 %v1840, %v1850
        %v1867 = vmul.f32 %v1841, %v1850
        %v1868 = vmul.f32 %v1842, %v1850
        %v1869 = vmul.f32 %v1843, %v1850
        %v1870 = vmul.f32 %v1844, %v1850
        %v1871 = vmul.f32 %v1845, %v1850
        %v1872 = vadd.f32 %v1804, %v1851
        %v1873 = vadd.f32 %v1805, %v1852
        %v1874 = vadd.f32 %v1806, %v1853
        %v1875 = vadd.f32 %v1807, %v1854
        %v1876 = vadd.f32 %v1808, %v1855
        %v1877 = vadd.f32 %v1809, %v1856
        %v1878 = vadd.f32 %v1810, %v1857
        %v1879 = vadd.f32 %v1811, %v1858
        %v1880 = vadd.f32 %v1812, %v1859
        %v1881 = vadd.f32 %v1813, %v1860
        %v1882 = vadd.f32 %v1814, %v1861
        %v1883 = vadd.f32 %v1815, %v1862
        %v1884 = vadd.f32 %v1816, %v1863
        %v1885 = vadd.f32 %v1817, %v1864
        %v1886 = vadd.f32 %v1818, %v1865
        %v1887 = vadd.f32 %v1819, %v1866
        %v1888 = vadd.f32 %v1820, %v1867
        %v1889 = vadd.f32 %v1821, %v1868
        %v1890 = vadd.f32 %v1822, %v1869
        %v1891 = vadd.f32 %v1823, %v1870
        %v1892 = vadd.f32 %v1824, %v1871
        %v1893 = vld [vmem:[%s329 + $0x16f] sm:$0xff]
        %v1894 = vld [vmem:[%s329 + $0x177] sm:$0xff]
        %v1895 = vld [vmem:[%s329 + $0x17f] sm:$0xff]
        %v1896 = vld [vmem:[%s329 + $0x187] sm:$0xff]
        %v1897 = vld [vmem:[%s329 + $0x18f] sm:$0xff]
        %v1898 = vld [vmem:[%s329 + $0x197] sm:$0xff]
        %v1899 = vld [vmem:[%s329 + $0x19f] sm:$0xff]
        %v1900 = vld [vmem:[%s329 + $0x1a7] sm:$0xff]
        %v1901 = vld [vmem:[%s329 + $0x1af] sm:$0xff]
        %v1902 = vld [vmem:[%s329 + $0x1b7] sm:$0xff]
        %v1903 = vld [vmem:[%s329 + $0x1bf] sm:$0xff]
        %v1904 = vld [vmem:[%s329 + $0x1c7] sm:$0xff]
        %v1905 = vld [vmem:[%s329 + $0x1cf] sm:$0xff]
        %v1906 = vld [vmem:[%s329 + $0x1d7] sm:$0xff]
        %v1907 = vld [vmem:[%s329 + $0x1df] sm:$0xff]
        %v1908 = vld [vmem:[%s329 + $0x1e7] sm:$0xff]
        %v1909 = vld [vmem:[%s329 + $0x1ef] sm:$0xff]
        %v1910 = vld [vmem:[%s329 + $0x1f7] sm:$0xff]
        %v1911 = vld [vmem:[%s329 + $0x1ff] sm:$0xff]
        %v1912 = vld [vmem:[%s329 + $0x207] sm:$0xff]
        %v1913 = vld [vmem:[%s329 + $0x20f] sm:$0xff]
        %v1914 = vld [vmem:[%s1 + $0x4] sm:$0x1]
        %v1915 = vlaneseq
        %v1916 = vshrl.u32 %v1915, 7
        %v1917 = vsub.s32 0, %v1916
        %v1918 = vrot.slane %v1914, %v1917
        %v1919 = vmul.f32 %v1893, %v1918
        %v1920 = vmul.f32 %v1894, %v1918
        %v1921 = vmul.f32 %v1895, %v1918
        %v1922 = vmul.f32 %v1896, %v1918
        %v1923 = vmul.f32 %v1897, %v1918
        %v1924 = vmul.f32 %v1898, %v1918
        %v1925 = vmul.f32 %v1899, %v1918
        %v1926 = vmul.f32 %v1900, %v1918
        %v1927 = vmul.f32 %v1901, %v1918
        %v1928 = vmul.f32 %v1902, %v1918
        %v1929 = vmul.f32 %v1903, %v1918
        %v1930 = vmul.f32 %v1904, %v1918
        %v1931 = vmul.f32 %v1905, %v1918
        %v1932 = vmul.f32 %v1906, %v1918
        %v1933 = vmul.f32 %v1907, %v1918
        %v1934 = vmul.f32 %v1908, %v1918
        %v1935 = vmul.f32 %v1909, %v1918
        %v1936 = vmul.f32 %v1910, %v1918
        %v1937 = vmul.f32 %v1911, %v1918
        %v1938 = vmul.f32 %v1912, %v1918
        %v1939 = vmul.f32 %v1913, %v1918
        %v1940 = vadd.f32 %v1872, %v1919
        %v1941 = vadd.f32 %v1873, %v1920
        %v1942 = vadd.f32 %v1874, %v1921
        %v1943 = vadd.f32 %v1875, %v1922
        %v1944 = vadd.f32 %v1876, %v1923
        %v1945 = vadd.f32 %v1877, %v1924
        %v1946 = vadd.f32 %v1878, %v1925
        %v1947 = vadd.f32 %v1879, %v1926
        %v1948 = vadd.f32 %v1880, %v1927
        %v1949 = vadd.f32 %v1881, %v1928
        %v1950 = vadd.f32 %v1882, %v1929
        %v1951 = vadd.f32 %v1883, %v1930
        %v1952 = vadd.f32 %v1884, %v1931
        %v1953 = vadd.f32 %v1885, %v1932
        %v1954 = vadd.f32 %v1886, %v1933
        %v1955 = vadd.f32 %v1887, %v1934
        %v1956 = vadd.f32 %v1888, %v1935
        %v1957 = vadd.f32 %v1889, %v1936
        %v1958 = vadd.f32 %v1890, %v1937
        %v1959 = vadd.f32 %v1891, %v1938
        %v1960 = vadd.f32 %v1892, %v1939
        %v1961 = vld [vmem:[%s329 + $0x1f8] sm:$0xff]
        %v1962 = vld [vmem:[%s329 + $0x200] sm:$0xff]
        %v1963 = vld [vmem:[%s329 + $0x208] sm:$0xff]
        %v1964 = vld [vmem:[%s329 + $0x210] sm:$0xff]
        %v1965 = vld [vmem:[%s1 + $0x5] sm:$0x1]
        %v1966 = vlaneseq
        %v1967 = vshrl.u32 %v1966, 7
        %v1968 = vsub.s32 0, %v1967
        %v1969 = vrot.slane %v1965, %v1968
        %v1970 = vmul.f32 %v1625, %v1969
        %v1971 = vmul.f32 %v1626, %v1969
        %v1972 = vmul.f32 %v1627, %v1969
        %v1973 = vmul.f32 %v1628, %v1969
        %v1974 = vmul.f32 %v1629, %v1969
        %v1975 = vmul.f32 %v1630, %v1969
        %v1976 = vmul.f32 %v1631, %v1969
        %v1977 = vmul.f32 %v1632, %v1969
        %v1978 = vmul.f32 %v1633, %v1969
        %v1979 = vmul.f32 %v1634, %v1969
        %v1980 = vmul.f32 %v1635, %v1969
        %v1981 = vmul.f32 %v1636, %v1969
        %v1982 = vmul.f32 %v1637, %v1969
        %v1983 = vmul.f32 %v1638, %v1969
        %v1984 = vmul.f32 %v1639, %v1969
        %v1985 = vmul.f32 %v1640, %v1969
        %v1986 = vmul.f32 %v1641, %v1969
        %v1987 = vmul.f32 %v1961, %v1969
        %v1988 = vmul.f32 %v1962, %v1969
        %v1989 = vmul.f32 %v1963, %v1969
        %v1990 = vmul.f32 %v1964, %v1969
        %v1991 = vadd.f32 %v1940, %v1970
        %v1992 = vadd.f32 %v1941, %v1971
        %v1993 = vadd.f32 %v1942, %v1972
        %v1994 = vadd.f32 %v1943, %v1973
        %v1995 = vadd.f32 %v1944, %v1974
        %v1996 = vadd.f32 %v1945, %v1975
        %v1997 = vadd.f32 %v1946, %v1976
        %v1998 = vadd.f32 %v1947, %v1977
        %v1999 = vadd.f32 %v1948, %v1978
        %v2000 = vadd.f32 %v1949, %v1979
        %v2001 = vadd.f32 %v1950, %v1980
        %v2002 = vadd.f32 %v1951, %v1981
        %v2003 = vadd.f32 %v1952, %v1982
        %v2004 = vadd.f32 %v1953, %v1983
        %v2005 = vadd.f32 %v1954, %v1984
        %v2006 = vadd.f32 %v1955, %v1985
        %v2007 = vadd.f32 %v1956, %v1986
        %v2008 = vadd.f32 %v1957, %v1987
        %v2009 = vadd.f32 %v1958, %v1988
        %v2010 = vadd.f32 %v1959, %v1989
        %v2011 = vadd.f32 %v1960, %v1990
        %v2012 = vld [vmem:[%s329 + $0x18c] sm:$0xff]
        %v2013 = vld [vmem:[%s329 + $0x194] sm:$0xff]
        %v2014 = vld [vmem:[%s329 + $0x19c] sm:$0xff]
        %v2015 = vld [vmem:[%s329 + $0x1a4] sm:$0xff]
        %v2016 = vld [vmem:[%s329 + $0x1ac] sm:$0xff]
        %v2017 = vld [vmem:[%s329 + $0x1b4] sm:$0xff]
        %v2018 = vld [vmem:[%s329 + $0x1bc] sm:$0xff]
        %v2019 = vld [vmem:[%s329 + $0x1c4] sm:$0xff]
        %v2020 = vld [vmem:[%s329 + $0x1cc] sm:$0xff]
        %v2021 = vld [vmem:[%s329 + $0x1d4] sm:$0xff]
        %v2022 = vld [vmem:[%s329 + $0x1dc] sm:$0xff]
        %v2023 = vld [vmem:[%s329 + $0x1e4] sm:$0xff]
        %v2024 = vld [vmem:[%s329 + $0x1ec] sm:$0xff]
        %v2025 = vld [vmem:[%s329 + $0x1f4] sm:$0xff]
        %v2026 = vld [vmem:[%s329 + $0x1fc] sm:$0xff]
        %v2027 = vld [vmem:[%s329 + $0x204] sm:$0xff]
        %v2028 = vld [vmem:[%s329 + $0x20c] sm:$0xff]
        %v2029 = vld [vmem:[%s329 + $0x214] sm:$0xff]
        %v2030 = vld [vmem:[%s329 + $0x21c] sm:$0xff]
        %v2031 = vld [vmem:[%s329 + $0x224] sm:$0xff]
        %v2032 = vld [vmem:[%s329 + $0x22c] sm:$0xff]
        %v2033 = vld [vmem:[%s1 + $0x6] sm:$0x1]
        %v2034 = vlaneseq
        %v2035 = vshrl.u32 %v2034, 7
        %v2036 = vsub.s32 0, %v2035
        %v2037 = vrot.slane %v2033, %v2036
        %v2038 = vmul.f32 %v2012, %v2037
        %v2039 = vmul.f32 %v2013, %v2037
        %v2040 = vmul.f32 %v2014, %v2037
        %v2041 = vmul.f32 %v2015, %v2037
        %v2042 = vmul.f32 %v2016, %v2037
        %v2043 = vmul.f32 %v2017, %v2037
        %v2044 = vmul.f32 %v2018, %v2037
        %v2045 = vmul.f32 %v2019, %v2037
        %v2046 = vmul.f32 %v2020, %v2037
        %v2047 = vmul.f32 %v2021, %v2037
        %v2048 = vmul.f32 %v2022, %v2037
        %v2049 = vmul.f32 %v2023, %v2037
        %v2050 = vmul.f32 %v2024, %v2037
        %v2051 = vmul.f32 %v2025, %v2037
        %v2052 = vmul.f32 %v2026, %v2037
        %v2053 = vmul.f32 %v2027, %v2037
        %v2054 = vmul.f32 %v2028, %v2037
        %v2055 = vmul.f32 %v2029, %v2037
        %v2056 = vmul.f32 %v2030, %v2037
        %v2057 = vmul.f32 %v2031, %v2037
        %v2058 = vmul.f32 %v2032, %v2037
        %v2059 = vadd.f32 %v1991, %v2038
        %v2060 = vadd.f32 %v1992, %v2039
        %v2061 = vadd.f32 %v1993, %v2040
        %v2062 = vadd.f32 %v1994, %v2041
        %v2063 = vadd.f32 %v1995, %v2042
        %v2064 = vadd.f32 %v1996, %v2043
        %v2065 = vadd.f32 %v1997, %v2044
        %v2066 = vadd.f32 %v1998, %v2045
        %v2067 = vadd.f32 %v1999, %v2046
        %v2068 = vadd.f32 %v2000, %v2047
        %v2069 = vadd.f32 %v2001, %v2048
        %v2070 = vadd.f32 %v2002, %v2049
        %v2071 = vadd.f32 %v2003, %v2050
        %v2072 = vadd.f32 %v2004, %v2051
        %v2073 = vadd.f32 %v2005, %v2052
        %v2074 = vadd.f32 %v2006, %v2053
        %v2075 = vadd.f32 %v2007, %v2054
        %v2076 = vadd.f32 %v2008, %v2055
        %v2077 = vadd.f32 %v2009, %v2056
        %v2078 = vadd.f32 %v2010, %v2057
        %v2079 = vadd.f32 %v2011, %v2058
        %v2080 = vld [vmem:[%s329 + $0x18d] sm:$0xff]
        %v2081 = vld [vmem:[%s329 + $0x195] sm:$0xff]
        %v2082 = vld [vmem:[%s329 + $0x19d] sm:$0xff]
        %v2083 = vld [vmem:[%s329 + $0x1a5] sm:$0xff]
        %v2084 = vld [vmem:[%s329 + $0x1ad] sm:$0xff]
        %v2085 = vld [vmem:[%s329 + $0x1b5] sm:$0xff]
        %v2086 = vld [vmem:[%s329 + $0x1bd] sm:$0xff]
        %v2087 = vld [vmem:[%s329 + $0x1c5] sm:$0xff]
        %v2088 = vld [vmem:[%s329 + $0x1cd] sm:$0xff]
        %v2089 = vld [vmem:[%s329 + $0x1d5] sm:$0xff]
        %v2090 = vld [vmem:[%s329 + $0x1dd] sm:$0xff]
        %v2091 = vld [vmem:[%s329 + $0x1e5] sm:$0xff]
        %v2092 = vld [vmem:[%s329 + $0x1ed] sm:$0xff]
        %v2093 = vld [vmem:[%s329 + $0x1f5] sm:$0xff]
        %v2094 = vld [vmem:[%s329 + $0x1fd] sm:$0xff]
        %v2095 = vld [vmem:[%s329 + $0x205] sm:$0xff]
        %v2096 = vld [vmem:[%s329 + $0x20d] sm:$0xff]
        %v2097 = vld [vmem:[%s329 + $0x215] sm:$0xff]
        %v2098 = vld [vmem:[%s329 + $0x21d] sm:$0xff]
        %v2099 = vld [vmem:[%s329 + $0x225] sm:$0xff]
        %v2100 = vld [vmem:[%s329 + $0x22d] sm:$0xff]
        %v2101 = vld [vmem:[%s1 + $0x7] sm:$0x1]
        %v2102 = vlaneseq
        %v2103 = vshrl.u32 %v2102, 7
        %v2104 = vsub.s32 0, %v2103
        %v2105 = vrot.slane %v2101, %v2104
        %v2106 = vmul.f32 %v2080, %v2105
        %v2107 = vmul.f32 %v2081, %v2105
        %v2108 = vmul.f32 %v2082, %v2105
        %v2109 = vmul.f32 %v2083, %v2105
        %v2110 = vmul.f32 %v2084, %v2105
        %v2111 = vmul.f32 %v2085, %v2105
        %v2112 = vmul.f32 %v2086, %v2105
        %v2113 = vmul.f32 %v2087, %v2105
        %v2114 = vmul.f32 %v2088, %v2105
        %v2115 = vmul.f32 %v2089, %v2105
        %v2116 = vmul.f32 %v2090, %v2105
        %v2117 = vmul.f32 %v2091, %v2105
        %v2118 = vmul.f32 %v2092, %v2105
        %v2119 = vmul.f32 %v2093, %v2105
        %v2120 = vmul.f32 %v2094, %v2105
        %v2121 = vmul.f32 %v2095, %v2105
        %v2122 = vmul.f32 %v2096, %v2105
        %v2123 = vmul.f32 %v2097, %v2105
        %v2124 = vmul.f32 %v2098, %v2105
        %v2125 = vmul.f32 %v2099, %v2105
        %v2126 = vmul.f32 %v2100, %v2105
        %v2127 = vadd.f32 %v2059, %v2106
        %v2128 = vadd.f32 %v2060, %v2107
        %v2129 = vadd.f32 %v2061, %v2108
        %v2130 = vadd.f32 %v2062, %v2109
        %v2131 = vadd.f32 %v2063, %v2110
        %v2132 = vadd.f32 %v2064, %v2111
        %v2133 = vadd.f32 %v2065, %v2112
        %v2134 = vadd.f32 %v2066, %v2113
        %v2135 = vadd.f32 %v2067, %v2114
        %v2136 = vadd.f32 %v2068, %v2115
        %v2137 = vadd.f32 %v2069, %v2116
        %v2138 = vadd.f32 %v2070, %v2117
        %v2139 = vadd.f32 %v2071, %v2118
        %v2140 = vadd.f32 %v2072, %v2119
        %v2141 = vadd.f32 %v2073, %v2120
        %v2142 = vadd.f32 %v2074, %v2121
        %v2143 = vadd.f32 %v2075, %v2122
        %v2144 = vadd.f32 %v2076, %v2123
        %v2145 = vadd.f32 %v2077, %v2124
        %v2146 = vadd.f32 %v2078, %v2125
        %v2147 = vadd.f32 %v2079, %v2126
        %v2148 = vld [vmem:[%s329 + $0x216] sm:$0xff]
        %v2149 = vld [vmem:[%s329 + $0x21e] sm:$0xff]
        %v2150 = vld [vmem:[%s329 + $0x226] sm:$0xff]
        %v2151 = vld [vmem:[%s329 + $0x22e] sm:$0xff]
        %v2152 = vld [vmem:[%s1 + $0x8] sm:$0x1]
        %v2153 = vlaneseq
        %v2154 = vshrl.u32 %v2153, 7
        %v2155 = vsub.s32 0, %v2154
        %v2156 = vrot.slane %v2152, %v2155
        %v2157 = vmul.f32 %v1829, %v2156
        %v2158 = vmul.f32 %v1830, %v2156
        %v2159 = vmul.f32 %v1831, %v2156
        %v2160 = vmul.f32 %v1832, %v2156
        %v2161 = vmul.f32 %v1833, %v2156
        %v2162 = vmul.f32 %v1834, %v2156
        %v2163 = vmul.f32 %v1835, %v2156
        %v2164 = vmul.f32 %v1836, %v2156
        %v2165 = vmul.f32 %v1837, %v2156
        %v2166 = vmul.f32 %v1838, %v2156
        %v2167 = vmul.f32 %v1839, %v2156
        %v2168 = vmul.f32 %v1840, %v2156
        %v2169 = vmul.f32 %v1841, %v2156
        %v2170 = vmul.f32 %v1842, %v2156
        %v2171 = vmul.f32 %v1843, %v2156
        %v2172 = vmul.f32 %v1844, %v2156
        %v2173 = vmul.f32 %v1845, %v2156
        %v2174 = vmul.f32 %v2148, %v2156
        %v2175 = vmul.f32 %v2149, %v2156
        %v2176 = vmul.f32 %v2150, %v2156
        %v2177 = vmul.f32 %v2151, %v2156
        %v2178 = vadd.f32 %v2127, %v2157
        %v2179 = vadd.f32 %v2128, %v2158
        %v2180 = vadd.f32 %v2129, %v2159
        %v2181 = vadd.f32 %v2130, %v2160
        %v2182 = vadd.f32 %v2131, %v2161
        %v2183 = vadd.f32 %v2132, %v2162
        %v2184 = vadd.f32 %v2133, %v2163
        %v2185 = vadd.f32 %v2134, %v2164
        %v2186 = vadd.f32 %v2135, %v2165
        %v2187 = vadd.f32 %v2136, %v2166
        %v2188 = vadd.f32 %v2137, %v2167
        %v2189 = vadd.f32 %v2138, %v2168
        %v2190 = vadd.f32 %v2139, %v2169
        %v2191 = vadd.f32 %v2140, %v2170
        %v2192 = vadd.f32 %v2141, %v2171
        %v2193 = vadd.f32 %v2142, %v2172
        %v2194 = vadd.f32 %v2143, %v2173
        %v2195 = vadd.f32 %v2144, %v2174
        %v2196 = vadd.f32 %v2145, %v2175
        %v2197 = vadd.f32 %v2146, %v2176
        %v2198 = vadd.f32 %v2147, %v2177
        %v2199 = vadd.f32 %v2178, %v914
        %v2200 = vadd.f32 %v2179, %v914
        %v2201 = vadd.f32 %v2180, %v914
        %v2202 = vadd.f32 %v2181, %v914
        %v2203 = vadd.f32 %v2182, %v914
        %v2204 = vadd.f32 %v2183, %v914
        %v2205 = vadd.f32 %v2184, %v914
        %v2206 = vadd.f32 %v2185, %v914
        %v2207 = vadd.f32 %v2186, %v914
        %v2208 = vadd.f32 %v2187, %v914
        %v2209 = vadd.f32 %v2188, %v914
        %v2210 = vadd.f32 %v2189, %v914
        %v2211 = vadd.f32 %v2190, %v914
        %v2212 = vadd.f32 %v2191, %v914
        %v2213 = vadd.f32 %v2192, %v914
        %v2214 = vadd.f32 %v2193, %v914
        %v2215 = vadd.f32 %v2194, %v914
        %v2216 = vadd.f32 %v2195, %v914
        %v2217 = vadd.f32 %v2196, %v914
        %v2218 = vadd.f32 %v2197, %v914
        %v2219 = vadd.f32 %v2198, %v914
        %v2220 = vmax.f32 %v2199, 0.0
        %v2221 = vmax.f32 %v2200, 0.0
        %v2222 = vmax.f32 %v2201, 0.0
        %v2223 = vmax.f32 %v2202, 0.0
        %v2224 = vmax.f32 %v2203, 0.0
        %v2225 = vmax.f32 %v2204, 0.0
        %v2226 = vmax.f32 %v2205, 0.0
        %v2227 = vmax.f32 %v2206, 0.0
        %v2228 = vmax.f32 %v2207, 0.0
        %v2229 = vmax.f32 %v2208, 0.0
        %v2230 = vmax.f32 %v2209, 0.0
        %v2231 = vmax.f32 %v2210, 0.0
        %v2232 = vmax.f32 %v2211, 0.0
        %v2233 = vmax.f32 %v2212, 0.0
        %v2234 = vmax.f32 %v2213, 0.0
        %v2235 = vmax.f32 %v2214, 0.0
        %v2236 = vmax.f32 %v2215, 0.0
        %v2237 = vmax.f32 %v2216, 0.0
        %v2238 = vmax.f32 %v2217, 0.0
        %v2239 = vmax.f32 %v2218, 0.0
        %v2240 = vmax.f32 %v2219, 0.0
        %2241 = vst.msk [vmem:[#allocation2 + $0x150] sm:$0xff] %vm958, %v2220
        %2242 = vst.msk [vmem:[#allocation2 + $0x158] sm:$0xff] %vm958, %v2221
        %2243 = vst.msk [vmem:[#allocation2 + $0x160] sm:$0xff] %vm958, %v2222
        %2244 = vst.msk [vmem:[#allocation2 + $0x168] sm:$0xff] %vm958, %v2223
        %2245 = vst.msk [vmem:[#allocation2 + $0x170] sm:$0xff] %vm958, %v2224
        %2246 = vst.msk [vmem:[#allocation2 + $0x178] sm:$0xff] %vm958, %v2225
        %2247 = vst.msk [vmem:[#allocation2 + $0x180] sm:$0xff] %vm958, %v2226
        %2248 = vst.msk [vmem:[#allocation2 + $0x188] sm:$0xff] %vm958, %v2227
        %2249 = vst.msk [vmem:[#allocation2 + $0x190] sm:$0xff] %vm958, %v2228
        %2250 = vst.msk [vmem:[#allocation2 + $0x198] sm:$0xff] %vm958, %v2229
        %2251 = vst.msk [vmem:[#allocation2 + $0x1a0] sm:$0xff] %vm958, %v2230
        %2252 = vst.msk [vmem:[#allocation2 + $0x1a8] sm:$0xff] %vm958, %v2231
        %2253 = vst.msk [vmem:[#allocation2 + $0x1b0] sm:$0xff] %vm958, %v2232
        %2254 = vst.msk [vmem:[#allocation2 + $0x1b8] sm:$0xff] %vm958, %v2233
        %2255 = vst.msk [vmem:[#allocation2 + $0x1c0] sm:$0xff] %vm958, %v2234
        %2256 = vst.msk [vmem:[#allocation2 + $0x1c8] sm:$0xff] %vm958, %v2235
        %2257 = vst.msk [vmem:[#allocation2 + $0x1d0] sm:$0xff] %vm958, %v2236
        %2258 = vst.msk [vmem:[#allocation2 + $0x1d8] sm:$0xff] %vm958, %v2237
        %2259 = vst.msk [vmem:[#allocation2 + $0x1e0] sm:$0xff] %vm958, %v2238
        %2260 = vst.msk [vmem:[#allocation2 + $0x1e8] sm:$0xff] %vm958, %v2239
        %2261 = vst.msk [vmem:[#allocation2 + $0x1f0] sm:$0xff] %vm958, %v2240
        %v2262 = vld [vmem:[%s329 + $0x1f8] sm:$0xff]
        %v2263 = vld [vmem:[%s329 + $0x200] sm:$0xff]
        %v2264 = vld [vmem:[%s329 + $0x208] sm:$0xff]
        %v2265 = vld [vmem:[%s329 + $0x210] sm:$0xff]
        %v2266 = vld [vmem:[%s329 + $0x218] sm:$0xff]
        %v2267 = vld [vmem:[%s329 + $0x220] sm:$0xff]
        %v2268 = vld [vmem:[%s329 + $0x228] sm:$0xff]
        %v2269 = vld [vmem:[%s329 + $0x230] sm:$0xff]
        %v2270 = vld [vmem:[%s329 + $0x238] sm:$0xff]
        %v2271 = vld [vmem:[%s329 + $0x240] sm:$0xff]
        %v2272 = vld [vmem:[%s329 + $0x248] sm:$0xff]
        %v2273 = vld [vmem:[%s329 + $0x250] sm:$0xff]
        %v2274 = vld [vmem:[%s329 + $0x258] sm:$0xff]
        %v2275 = vld [vmem:[%s329 + $0x260] sm:$0xff]
        %v2276 = vld [vmem:[%s329 + $0x268] sm:$0xff]
        %v2277 = vld [vmem:[%s329 + $0x270] sm:$0xff]
        %v2278 = vld [vmem:[%s329 + $0x278] sm:$0xff]
        %v2279 = vld [vmem:[%s329 + $0x280] sm:$0xff]
        %v2280 = vld [vmem:[%s329 + $0x288] sm:$0xff]
        %v2281 = vld [vmem:[%s329 + $0x290] sm:$0xff]
        %v2282 = vld [vmem:[%s329 + $0x298] sm:$0xff]
        %v2283 = vld [vmem:[%s1] sm:$0x1]
        %v2284 = vlaneseq
        %v2285 = vshrl.u32 %v2284, 7
        %v2286 = vsub.s32 0, %v2285
        %v2287 = vrot.slane %v2283, %v2286
        %v2288 = vmul.f32 %v2262, %v2287
        %v2289 = vmul.f32 %v2263, %v2287
        %v2290 = vmul.f32 %v2264, %v2287
        %v2291 = vmul.f32 %v2265, %v2287
        %v2292 = vmul.f32 %v2266, %v2287
        %v2293 = vmul.f32 %v2267, %v2287
        %v2294 = vmul.f32 %v2268, %v2287
        %v2295 = vmul.f32 %v2269, %v2287
        %v2296 = vmul.f32 %v2270, %v2287
        %v2297 = vmul.f32 %v2271, %v2287
        %v2298 = vmul.f32 %v2272, %v2287
        %v2299 = vmul.f32 %v2273, %v2287
        %v2300 = vmul.f32 %v2274, %v2287
        %v2301 = vmul.f32 %v2275, %v2287
        %v2302 = vmul.f32 %v2276, %v2287
        %v2303 = vmul.f32 %v2277, %v2287
        %v2304 = vmul.f32 %v2278, %v2287
        %v2305 = vmul.f32 %v2279, %v2287
        %v2306 = vmul.f32 %v2280, %v2287
        %v2307 = vmul.f32 %v2281, %v2287
        %v2308 = vmul.f32 %v2282, %v2287
        %v2309 = vadd.f32 %v2288, 0.0
        %v2310 = vadd.f32 %v2289, 0.0
        %v2311 = vadd.f32 %v2290, 0.0
        %v2312 = vadd.f32 %v2291, 0.0
        %v2313 = vadd.f32 %v2292, 0.0
        %v2314 = vadd.f32 %v2293, 0.0
        %v2315 = vadd.f32 %v2294, 0.0
        %v2316 = vadd.f32 %v2295, 0.0
        %v2317 = vadd.f32 %v2296, 0.0
        %v2318 = vadd.f32 %v2297, 0.0
        %v2319 = vadd.f32 %v2298, 0.0
        %v2320 = vadd.f32 %v2299, 0.0
        %v2321 = vadd.f32 %v2300, 0.0
        %v2322 = vadd.f32 %v2301, 0.0
        %v2323 = vadd.f32 %v2302, 0.0
        %v2324 = vadd.f32 %v2303, 0.0
        %v2325 = vadd.f32 %v2304, 0.0
        %v2326 = vadd.f32 %v2305, 0.0
        %v2327 = vadd.f32 %v2306, 0.0
        %v2328 = vadd.f32 %v2307, 0.0
        %v2329 = vadd.f32 %v2308, 0.0
        %v2330 = vld [vmem:[%s329 + $0x1f9] sm:$0xff]
        %v2331 = vld [vmem:[%s329 + $0x201] sm:$0xff]
        %v2332 = vld [vmem:[%s329 + $0x209] sm:$0xff]
        %v2333 = vld [vmem:[%s329 + $0x211] sm:$0xff]
        %v2334 = vld [vmem:[%s329 + $0x219] sm:$0xff]
        %v2335 = vld [vmem:[%s329 + $0x221] sm:$0xff]
        %v2336 = vld [vmem:[%s329 + $0x229] sm:$0xff]
        %v2337 = vld [vmem:[%s329 + $0x231] sm:$0xff]
        %v2338 = vld [vmem:[%s329 + $0x239] sm:$0xff]
        %v2339 = vld [vmem:[%s329 + $0x241] sm:$0xff]
        %v2340 = vld [vmem:[%s329 + $0x249] sm:$0xff]
        %v2341 = vld [vmem:[%s329 + $0x251] sm:$0xff]
        %v2342 = vld [vmem:[%s329 + $0x259] sm:$0xff]
        %v2343 = vld [vmem:[%s329 + $0x261] sm:$0xff]
        %v2344 = vld [vmem:[%s329 + $0x269] sm:$0xff]
        %v2345 = vld [vmem:[%s329 + $0x271] sm:$0xff]
        %v2346 = vld [vmem:[%s329 + $0x279] sm:$0xff]
        %v2347 = vld [vmem:[%s329 + $0x281] sm:$0xff]
        %v2348 = vld [vmem:[%s329 + $0x289] sm:$0xff]
        %v2349 = vld [vmem:[%s329 + $0x291] sm:$0xff]
        %v2350 = vld [vmem:[%s329 + $0x299] sm:$0xff]
        %v2351 = vld [vmem:[%s1 + $0x1] sm:$0x1]
        %v2352 = vlaneseq
        %v2353 = vshrl.u32 %v2352, 7
        %v2354 = vsub.s32 0, %v2353
        %v2355 = vrot.slane %v2351, %v2354
        %v2356 = vmul.f32 %v2330, %v2355
        %v2357 = vmul.f32 %v2331, %v2355
        %v2358 = vmul.f32 %v2332, %v2355
        %v2359 = vmul.f32 %v2333, %v2355
        %v2360 = vmul.f32 %v2334, %v2355
        %v2361 = vmul.f32 %v2335, %v2355
        %v2362 = vmul.f32 %v2336, %v2355
        %v2363 = vmul.f32 %v2337, %v2355
        %v2364 = vmul.f32 %v2338, %v2355
        %v2365 = vmul.f32 %v2339, %v2355
        %v2366 = vmul.f32 %v2340, %v2355
        %v2367 = vmul.f32 %v2341, %v2355
        %v2368 = vmul.f32 %v2342, %v2355
        %v2369 = vmul.f32 %v2343, %v2355
        %v2370 = vmul.f32 %v2344, %v2355
        %v2371 = vmul.f32 %v2345, %v2355
        %v2372 = vmul.f32 %v2346, %v2355
        %v2373 = vmul.f32 %v2347, %v2355
        %v2374 = vmul.f32 %v2348, %v2355
        %v2375 = vmul.f32 %v2349, %v2355
        %v2376 = vmul.f32 %v2350, %v2355
        %v2377 = vadd.f32 %v2309, %v2356
        %v2378 = vadd.f32 %v2310, %v2357
        %v2379 = vadd.f32 %v2311, %v2358
        %v2380 = vadd.f32 %v2312, %v2359
        %v2381 = vadd.f32 %v2313, %v2360
        %v2382 = vadd.f32 %v2314, %v2361
        %v2383 = vadd.f32 %v2315, %v2362
        %v2384 = vadd.f32 %v2316, %v2363
        %v2385 = vadd.f32 %v2317, %v2364
        %v2386 = vadd.f32 %v2318, %v2365
        %v2387 = vadd.f32 %v2319, %v2366
        %v2388 = vadd.f32 %v2320, %v2367
        %v2389 = vadd.f32 %v2321, %v2368
        %v2390 = vadd.f32 %v2322, %v2369
        %v2391 = vadd.f32 %v2323, %v2370
        %v2392 = vadd.f32 %v2324, %v2371
        %v2393 = vadd.f32 %v2325, %v2372
        %v2394 = vadd.f32 %v2326, %v2373
        %v2395 = vadd.f32 %v2327, %v2374
        %v2396 = vadd.f32 %v2328, %v2375
        %v2397 = vadd.f32 %v2329, %v2376
        %v2398 = vld [vmem:[%s329 + $0x1fa] sm:$0xff]
        %v2399 = vld [vmem:[%s329 + $0x202] sm:$0xff]
        %v2400 = vld [vmem:[%s329 + $0x20a] sm:$0xff]
        %v2401 = vld [vmem:[%s329 + $0x212] sm:$0xff]
        %v2402 = vld [vmem:[%s329 + $0x21a] sm:$0xff]
        %v2403 = vld [vmem:[%s329 + $0x222] sm:$0xff]
        %v2404 = vld [vmem:[%s329 + $0x22a] sm:$0xff]
        %v2405 = vld [vmem:[%s329 + $0x232] sm:$0xff]
        %v2406 = vld [vmem:[%s329 + $0x23a] sm:$0xff]
        %v2407 = vld [vmem:[%s329 + $0x242] sm:$0xff]
        %v2408 = vld [vmem:[%s329 + $0x24a] sm:$0xff]
        %v2409 = vld [vmem:[%s329 + $0x252] sm:$0xff]
        %v2410 = vld [vmem:[%s329 + $0x25a] sm:$0xff]
        %v2411 = vld [vmem:[%s329 + $0x262] sm:$0xff]
        %v2412 = vld [vmem:[%s329 + $0x26a] sm:$0xff]
        %v2413 = vld [vmem:[%s329 + $0x272] sm:$0xff]
        %v2414 = vld [vmem:[%s329 + $0x27a] sm:$0xff]
        %v2415 = vld [vmem:[%s329 + $0x282] sm:$0xff]
        %v2416 = vld [vmem:[%s329 + $0x28a] sm:$0xff]
        %v2417 = vld [vmem:[%s329 + $0x292] sm:$0xff]
        %v2418 = vld [vmem:[%s329 + $0x29a] sm:$0xff]
        %v2419 = vld [vmem:[%s1 + $0x2] sm:$0x1]
        %v2420 = vlaneseq
        %v2421 = vshrl.u32 %v2420, 7
        %v2422 = vsub.s32 0, %v2421
        %v2423 = vrot.slane %v2419, %v2422
        %v2424 = vmul.f32 %v2398, %v2423
        %v2425 = vmul.f32 %v2399, %v2423
        %v2426 = vmul.f32 %v2400, %v2423
        %v2427 = vmul.f32 %v2401, %v2423
        %v2428 = vmul.f32 %v2402, %v2423
        %v2429 = vmul.f32 %v2403, %v2423
        %v2430 = vmul.f32 %v2404, %v2423
        %v2431 = vmul.f32 %v2405, %v2423
        %v2432 = vmul.f32 %v2406, %v2423
        %v2433 = vmul.f32 %v2407, %v2423
        %v2434 = vmul.f32 %v2408, %v2423
        %v2435 = vmul.f32 %v2409, %v2423
        %v2436 = vmul.f32 %v2410, %v2423
        %v2437 = vmul.f32 %v2411, %v2423
        %v2438 = vmul.f32 %v2412, %v2423
        %v2439 = vmul.f32 %v2413, %v2423
        %v2440 = vmul.f32 %v2414, %v2423
        %v2441 = vmul.f32 %v2415, %v2423
        %v2442 = vmul.f32 %v2416, %v2423
        %v2443 = vmul.f32 %v2417, %v2423
        %v2444 = vmul.f32 %v2418, %v2423
        %v2445 = vadd.f32 %v2377, %v2424
        %v2446 = vadd.f32 %v2378, %v2425
        %v2447 = vadd.f32 %v2379, %v2426
        %v2448 = vadd.f32 %v2380, %v2427
        %v2449 = vadd.f32 %v2381, %v2428
        %v2450 = vadd.f32 %v2382, %v2429
        %v2451 = vadd.f32 %v2383, %v2430
        %v2452 = vadd.f32 %v2384, %v2431
        %v2453 = vadd.f32 %v2385, %v2432
        %v2454 = vadd.f32 %v2386, %v2433
        %v2455 = vadd.f32 %v2387, %v2434
        %v2456 = vadd.f32 %v2388, %v2435
        %v2457 = vadd.f32 %v2389, %v2436
        %v2458 = vadd.f32 %v2390, %v2437
        %v2459 = vadd.f32 %v2391, %v2438
        %v2460 = vadd.f32 %v2392, %v2439
        %v2461 = vadd.f32 %v2393, %v2440
        %v2462 = vadd.f32 %v2394, %v2441
        %v2463 = vadd.f32 %v2395, %v2442
        %v2464 = vadd.f32 %v2396, %v2443
        %v2465 = vadd.f32 %v2397, %v2444
        %v2466 = vld [vmem:[%s329 + $0x216] sm:$0xff]
        %v2467 = vld [vmem:[%s329 + $0x21e] sm:$0xff]
        %v2468 = vld [vmem:[%s329 + $0x226] sm:$0xff]
        %v2469 = vld [vmem:[%s329 + $0x22e] sm:$0xff]
        %v2470 = vld [vmem:[%s329 + $0x236] sm:$0xff]
        %v2471 = vld [vmem:[%s329 + $0x23e] sm:$0xff]
        %v2472 = vld [vmem:[%s329 + $0x246] sm:$0xff]
        %v2473 = vld [vmem:[%s329 + $0x24e] sm:$0xff]
        %v2474 = vld [vmem:[%s329 + $0x256] sm:$0xff]
        %v2475 = vld [vmem:[%s329 + $0x25e] sm:$0xff]
        %v2476 = vld [vmem:[%s329 + $0x266] sm:$0xff]
        %v2477 = vld [vmem:[%s329 + $0x26e] sm:$0xff]
        %v2478 = vld [vmem:[%s329 + $0x276] sm:$0xff]
        %v2479 = vld [vmem:[%s329 + $0x27e] sm:$0xff]
        %v2480 = vld [vmem:[%s329 + $0x286] sm:$0xff]
        %v2481 = vld [vmem:[%s329 + $0x28e] sm:$0xff]
        %v2482 = vld [vmem:[%s329 + $0x296] sm:$0xff]
        %v2483 = vld [vmem:[%s329 + $0x29e] sm:$0xff]
        %v2484 = vld [vmem:[%s329 + $0x2a6] sm:$0xff]
        %v2485 = vld [vmem:[%s329 + $0x2ae] sm:$0xff]
        %v2486 = vld [vmem:[%s329 + $0x2b6] sm:$0xff]
        %v2487 = vld [vmem:[%s1 + $0x3] sm:$0x1]
        %v2488 = vlaneseq
        %v2489 = vshrl.u32 %v2488, 7
        %v2490 = vsub.s32 0, %v2489
        %v2491 = vrot.slane %v2487, %v2490
        %v2492 = vmul.f32 %v2466, %v2491
        %v2493 = vmul.f32 %v2467, %v2491
        %v2494 = vmul.f32 %v2468, %v2491
        %v2495 = vmul.f32 %v2469, %v2491
        %v2496 = vmul.f32 %v2470, %v2491
        %v2497 = vmul.f32 %v2471, %v2491
        %v2498 = vmul.f32 %v2472, %v2491
        %v2499 = vmul.f32 %v2473, %v2491
        %v2500 = vmul.f32 %v2474, %v2491
        %v2501 = vmul.f32 %v2475, %v2491
        %v2502 = vmul.f32 %v2476, %v2491
        %v2503 = vmul.f32 %v2477, %v2491
        %v2504 = vmul.f32 %v2478, %v2491
        %v2505 = vmul.f32 %v2479, %v2491
        %v2506 = vmul.f32 %v2480, %v2491
        %v2507 = vmul.f32 %v2481, %v2491
        %v2508 = vmul.f32 %v2482, %v2491
        %v2509 = vmul.f32 %v2483, %v2491
        %v2510 = vmul.f32 %v2484, %v2491
        %v2511 = vmul.f32 %v2485, %v2491
        %v2512 = vmul.f32 %v2486, %v2491
        %v2513 = vadd.f32 %v2445, %v2492
        %v2514 = vadd.f32 %v2446, %v2493
        %v2515 = vadd.f32 %v2447, %v2494
        %v2516 = vadd.f32 %v2448, %v2495
        %v2517 = vadd.f32 %v2449, %v2496
        %v2518 = vadd.f32 %v2450, %v2497
        %v2519 = vadd.f32 %v2451, %v2498
        %v2520 = vadd.f32 %v2452, %v2499
        %v2521 = vadd.f32 %v2453, %v2500
        %v2522 = vadd.f32 %v2454, %v2501
        %v2523 = vadd.f32 %v2455, %v2502
        %v2524 = vadd.f32 %v2456, %v2503
        %v2525 = vadd.f32 %v2457, %v2504
        %v2526 = vadd.f32 %v2458, %v2505
        %v2527 = vadd.f32 %v2459, %v2506
        %v2528 = vadd.f32 %v2460, %v2507
        %v2529 = vadd.f32 %v2461, %v2508
        %v2530 = vadd.f32 %v2462, %v2509
        %v2531 = vadd.f32 %v2463, %v2510
        %v2532 = vadd.f32 %v2464, %v2511
        %v2533 = vadd.f32 %v2465, %v2512
        %v2534 = vld [vmem:[%s329 + $0x217] sm:$0xff]
        %v2535 = vld [vmem:[%s329 + $0x21f] sm:$0xff]
        %v2536 = vld [vmem:[%s329 + $0x227] sm:$0xff]
        %v2537 = vld [vmem:[%s329 + $0x22f] sm:$0xff]
        %v2538 = vld [vmem:[%s329 + $0x237] sm:$0xff]
        %v2539 = vld [vmem:[%s329 + $0x23f] sm:$0xff]
        %v2540 = vld [vmem:[%s329 + $0x247] sm:$0xff]
        %v2541 = vld [vmem:[%s329 + $0x24f] sm:$0xff]
        %v2542 = vld [vmem:[%s329 + $0x257] sm:$0xff]
        %v2543 = vld [vmem:[%s329 + $0x25f] sm:$0xff]
        %v2544 = vld [vmem:[%s329 + $0x267] sm:$0xff]
        %v2545 = vld [vmem:[%s329 + $0x26f] sm:$0xff]
        %v2546 = vld [vmem:[%s329 + $0x277] sm:$0xff]
        %v2547 = vld [vmem:[%s329 + $0x27f] sm:$0xff]
        %v2548 = vld [vmem:[%s329 + $0x287] sm:$0xff]
        %v2549 = vld [vmem:[%s329 + $0x28f] sm:$0xff]
        %v2550 = vld [vmem:[%s329 + $0x297] sm:$0xff]
        %v2551 = vld [vmem:[%s329 + $0x29f] sm:$0xff]
        %v2552 = vld [vmem:[%s329 + $0x2a7] sm:$0xff]
        %v2553 = vld [vmem:[%s329 + $0x2af] sm:$0xff]
        %v2554 = vld [vmem:[%s329 + $0x2b7] sm:$0xff]
        %v2555 = vld [vmem:[%s1 + $0x4] sm:$0x1]
        %v2556 = vlaneseq
        %v2557 = vshrl.u32 %v2556, 7
        %v2558 = vsub.s32 0, %v2557
        %v2559 = vrot.slane %v2555, %v2558
        %v2560 = vmul.f32 %v2534, %v2559
        %v2561 = vmul.f32 %v2535, %v2559
        %v2562 = vmul.f32 %v2536, %v2559
        %v2563 = vmul.f32 %v2537, %v2559
        %v2564 = vmul.f32 %v2538, %v2559
        %v2565 = vmul.f32 %v2539, %v2559
        %v2566 = vmul.f32 %v2540, %v2559
        %v2567 = vmul.f32 %v2541, %v2559
        %v2568 = vmul.f32 %v2542, %v2559
        %v2569 = vmul.f32 %v2543, %v2559
        %v2570 = vmul.f32 %v2544, %v2559
        %v2571 = vmul.f32 %v2545, %v2559
        %v2572 = vmul.f32 %v2546, %v2559
        %v2573 = vmul.f32 %v2547, %v2559
        %v2574 = vmul.f32 %v2548, %v2559
        %v2575 = vmul.f32 %v2549, %v2559
        %v2576 = vmul.f32 %v2550, %v2559
        %v2577 = vmul.f32 %v2551, %v2559
        %v2578 = vmul.f32 %v2552, %v2559
        %v2579 = vmul.f32 %v2553, %v2559
        %v2580 = vmul.f32 %v2554, %v2559
        %v2581 = vadd.f32 %v2513, %v2560
        %v2582 = vadd.f32 %v2514, %v2561
        %v2583 = vadd.f32 %v2515, %v2562
        %v2584 = vadd.f32 %v2516, %v2563
        %v2585 = vadd.f32 %v2517, %v2564
        %v2586 = vadd.f32 %v2518, %v2565
        %v2587 = vadd.f32 %v2519, %v2566
        %v2588 = vadd.f32 %v2520, %v2567
        %v2589 = vadd.f32 %v2521, %v2568
        %v2590 = vadd.f32 %v2522, %v2569
        %v2591 = vadd.f32 %v2523, %v2570
        %v2592 = vadd.f32 %v2524, %v2571
        %v2593 = vadd.f32 %v2525, %v2572
        %v2594 = vadd.f32 %v2526, %v2573
        %v2595 = vadd.f32 %v2527, %v2574
        %v2596 = vadd.f32 %v2528, %v2575
        %v2597 = vadd.f32 %v2529, %v2576
        %v2598 = vadd.f32 %v2530, %v2577
        %v2599 = vadd.f32 %v2531, %v2578
        %v2600 = vadd.f32 %v2532, %v2579
        %v2601 = vadd.f32 %v2533, %v2580
        %v2602 = vld [vmem:[%s329 + $0x2a0] sm:$0xff]
        %v2603 = vld [vmem:[%s329 + $0x2a8] sm:$0xff]
        %v2604 = vld [vmem:[%s329 + $0x2b0] sm:$0xff]
        %v2605 = vld [vmem:[%s329 + $0x2b8] sm:$0xff]
        %v2606 = vld [vmem:[%s1 + $0x5] sm:$0x1]
        %v2607 = vlaneseq
        %v2608 = vshrl.u32 %v2607, 7
        %v2609 = vsub.s32 0, %v2608
        %v2610 = vrot.slane %v2606, %v2609
        %v2611 = vmul.f32 %v2266, %v2610
        %v2612 = vmul.f32 %v2267, %v2610
        %v2613 = vmul.f32 %v2268, %v2610
        %v2614 = vmul.f32 %v2269, %v2610
        %v2615 = vmul.f32 %v2270, %v2610
        %v2616 = vmul.f32 %v2271, %v2610
        %v2617 = vmul.f32 %v2272, %v2610
        %v2618 = vmul.f32 %v2273, %v2610
        %v2619 = vmul.f32 %v2274, %v2610
        %v2620 = vmul.f32 %v2275, %v2610
        %v2621 = vmul.f32 %v2276, %v2610
        %v2622 = vmul.f32 %v2277, %v2610
        %v2623 = vmul.f32 %v2278, %v2610
        %v2624 = vmul.f32 %v2279, %v2610
        %v2625 = vmul.f32 %v2280, %v2610
        %v2626 = vmul.f32 %v2281, %v2610
        %v2627 = vmul.f32 %v2282, %v2610
        %v2628 = vmul.f32 %v2602, %v2610
        %v2629 = vmul.f32 %v2603, %v2610
        %v2630 = vmul.f32 %v2604, %v2610
        %v2631 = vmul.f32 %v2605, %v2610
        %v2632 = vadd.f32 %v2581, %v2611
        %v2633 = vadd.f32 %v2582, %v2612
        %v2634 = vadd.f32 %v2583, %v2613
        %v2635 = vadd.f32 %v2584, %v2614
        %v2636 = vadd.f32 %v2585, %v2615
        %v2637 = vadd.f32 %v2586, %v2616
        %v2638 = vadd.f32 %v2587, %v2617
        %v2639 = vadd.f32 %v2588, %v2618
        %v2640 = vadd.f32 %v2589, %v2619
        %v2641 = vadd.f32 %v2590, %v2620
        %v2642 = vadd.f32 %v2591, %v2621
        %v2643 = vadd.f32 %v2592, %v2622
        %v2644 = vadd.f32 %v2593, %v2623
        %v2645 = vadd.f32 %v2594, %v2624
        %v2646 = vadd.f32 %v2595, %v2625
        %v2647 = vadd.f32 %v2596, %v2626
        %v2648 = vadd.f32 %v2597, %v2627
        %v2649 = vadd.f32 %v2598, %v2628
        %v2650 = vadd.f32 %v2599, %v2629
        %v2651 = vadd.f32 %v2600, %v2630
        %v2652 = vadd.f32 %v2601, %v2631
        %v2653 = vld [vmem:[%s329 + $0x234] sm:$0xff]
        %v2654 = vld [vmem:[%s329 + $0x23c] sm:$0xff]
        %v2655 = vld [vmem:[%s329 + $0x244] sm:$0xff]
        %v2656 = vld [vmem:[%s329 + $0x24c] sm:$0xff]
        %v2657 = vld [vmem:[%s329 + $0x254] sm:$0xff]
        %v2658 = vld [vmem:[%s329 + $0x25c] sm:$0xff]
        %v2659 = vld [vmem:[%s329 + $0x264] sm:$0xff]
        %v2660 = vld [vmem:[%s329 + $0x26c] sm:$0xff]
        %v2661 = vld [vmem:[%s329 + $0x274] sm:$0xff]
        %v2662 = vld [vmem:[%s329 + $0x27c] sm:$0xff]
        %v2663 = vld [vmem:[%s329 + $0x284] sm:$0xff]
        %v2664 = vld [vmem:[%s329 + $0x28c] sm:$0xff]
        %v2665 = vld [vmem:[%s329 + $0x294] sm:$0xff]
        %v2666 = vld [vmem:[%s329 + $0x29c] sm:$0xff]
        %v2667 = vld [vmem:[%s329 + $0x2a4] sm:$0xff]
        %v2668 = vld [vmem:[%s329 + $0x2ac] sm:$0xff]
        %v2669 = vld [vmem:[%s329 + $0x2b4] sm:$0xff]
        %v2670 = vld [vmem:[%s329 + $0x2bc] sm:$0xff]
        %v2671 = vld [vmem:[%s329 + $0x2c4] sm:$0xff]
        %v2672 = vld [vmem:[%s329 + $0x2cc] sm:$0xff]
        %v2673 = vld [vmem:[%s329 + $0x2d4] sm:$0xff]
        %v2674 = vld [vmem:[%s1 + $0x6] sm:$0x1]
        %v2675 = vlaneseq
        %v2676 = vshrl.u32 %v2675, 7
        %v2677 = vsub.s32 0, %v2676
        %v2678 = vrot.slane %v2674, %v2677
        %v2679 = vmul.f32 %v2653, %v2678
        %v2680 = vmul.f32 %v2654, %v2678
        %v2681 = vmul.f32 %v2655, %v2678
        %v2682 = vmul.f32 %v2656, %v2678
        %v2683 = vmul.f32 %v2657, %v2678
        %v2684 = vmul.f32 %v2658, %v2678
        %v2685 = vmul.f32 %v2659, %v2678
        %v2686 = vmul.f32 %v2660, %v2678
        %v2687 = vmul.f32 %v2661, %v2678
        %v2688 = vmul.f32 %v2662, %v2678
        %v2689 = vmul.f32 %v2663, %v2678
        %v2690 = vmul.f32 %v2664, %v2678
        %v2691 = vmul.f32 %v2665, %v2678
        %v2692 = vmul.f32 %v2666, %v2678
        %v2693 = vmul.f32 %v2667, %v2678
        %v2694 = vmul.f32 %v2668, %v2678
        %v2695 = vmul.f32 %v2669, %v2678
        %v2696 = vmul.f32 %v2670, %v2678
        %v2697 = vmul.f32 %v2671, %v2678
        %v2698 = vmul.f32 %v2672, %v2678
        %v2699 = vmul.f32 %v2673, %v2678
        %v2700 = vadd.f32 %v2632, %v2679
        %v2701 = vadd.f32 %v2633, %v2680
        %v2702 = vadd.f32 %v2634, %v2681
        %v2703 = vadd.f32 %v2635, %v2682
        %v2704 = vadd.f32 %v2636, %v2683
        %v2705 = vadd.f32 %v2637, %v2684
        %v2706 = vadd.f32 %v2638, %v2685
        %v2707 = vadd.f32 %v2639, %v2686
        %v2708 = vadd.f32 %v2640, %v2687
        %v2709 = vadd.f32 %v2641, %v2688
        %v2710 = vadd.f32 %v2642, %v2689
        %v2711 = vadd.f32 %v2643, %v2690
        %v2712 = vadd.f32 %v2644, %v2691
        %v2713 = vadd.f32 %v2645, %v2692
        %v2714 = vadd.f32 %v2646, %v2693
        %v2715 = vadd.f32 %v2647, %v2694
        %v2716 = vadd.f32 %v2648, %v2695
        %v2717 = vadd.f32 %v2649, %v2696
        %v2718 = vadd.f32 %v2650, %v2697
        %v2719 = vadd.f32 %v2651, %v2698
        %v2720 = vadd.f32 %v2652, %v2699
        %v2721 = vld [vmem:[%s329 + $0x235] sm:$0xff]
        %v2722 = vld [vmem:[%s329 + $0x23d] sm:$0xff]
        %v2723 = vld [vmem:[%s329 + $0x245] sm:$0xff]
        %v2724 = vld [vmem:[%s329 + $0x24d] sm:$0xff]
        %v2725 = vld [vmem:[%s329 + $0x255] sm:$0xff]
        %v2726 = vld [vmem:[%s329 + $0x25d] sm:$0xff]
        %v2727 = vld [vmem:[%s329 + $0x265] sm:$0xff]
        %v2728 = vld [vmem:[%s329 + $0x26d] sm:$0xff]
        %v2729 = vld [vmem:[%s329 + $0x275] sm:$0xff]
        %v2730 = vld [vmem:[%s329 + $0x27d] sm:$0xff]
        %v2731 = vld [vmem:[%s329 + $0x285] sm:$0xff]
        %v2732 = vld [vmem:[%s329 + $0x28d] sm:$0xff]
        %v2733 = vld [vmem:[%s329 + $0x295] sm:$0xff]
        %v2734 = vld [vmem:[%s329 + $0x29d] sm:$0xff]
        %v2735 = vld [vmem:[%s329 + $0x2a5] sm:$0xff]
        %v2736 = vld [vmem:[%s329 + $0x2ad] sm:$0xff]
        %v2737 = vld [vmem:[%s329 + $0x2b5] sm:$0xff]
        %v2738 = vld [vmem:[%s329 + $0x2bd] sm:$0xff]
        %v2739 = vld [vmem:[%s329 + $0x2c5] sm:$0xff]
        %v2740 = vld [vmem:[%s329 + $0x2cd] sm:$0xff]
        %v2741 = vld [vmem:[%s329 + $0x2d5] sm:$0xff]
        %v2742 = vld [vmem:[%s1 + $0x7] sm:$0x1]
        %v2743 = vlaneseq
        %v2744 = vshrl.u32 %v2743, 7
        %v2745 = vsub.s32 0, %v2744
        %v2746 = vrot.slane %v2742, %v2745
        %v2747 = vmul.f32 %v2721, %v2746
        %v2748 = vmul.f32 %v2722, %v2746
        %v2749 = vmul.f32 %v2723, %v2746
        %v2750 = vmul.f32 %v2724, %v2746
        %v2751 = vmul.f32 %v2725, %v2746
        %v2752 = vmul.f32 %v2726, %v2746
        %v2753 = vmul.f32 %v2727, %v2746
        %v2754 = vmul.f32 %v2728, %v2746
        %v2755 = vmul.f32 %v2729, %v2746
        %v2756 = vmul.f32 %v2730, %v2746
        %v2757 = vmul.f32 %v2731, %v2746
        %v2758 = vmul.f32 %v2732, %v2746
        %v2759 = vmul.f32 %v2733, %v2746
        %v2760 = vmul.f32 %v2734, %v2746
        %v2761 = vmul.f32 %v2735, %v2746
        %v2762 = vmul.f32 %v2736, %v2746
        %v2763 = vmul.f32 %v2737, %v2746
        %v2764 = vmul.f32 %v2738, %v2746
        %v2765 = vmul.f32 %v2739, %v2746
        %v2766 = vmul.f32 %v2740, %v2746
        %v2767 = vmul.f32 %v2741, %v2746
        %v2768 = vadd.f32 %v2700, %v2747
        %v2769 = vadd.f32 %v2701, %v2748
        %v2770 = vadd.f32 %v2702, %v2749
        %v2771 = vadd.f32 %v2703, %v2750
        %v2772 = vadd.f32 %v2704, %v2751
        %v2773 = vadd.f32 %v2705, %v2752
        %v2774 = vadd.f32 %v2706, %v2753
        %v2775 = vadd.f32 %v2707, %v2754
        %v2776 = vadd.f32 %v2708, %v2755
        %v2777 = vadd.f32 %v2709, %v2756
        %v2778 = vadd.f32 %v2710, %v2757
        %v2779 = vadd.f32 %v2711, %v2758
        %v2780 = vadd.f32 %v2712, %v2759
        %v2781 = vadd.f32 %v2713, %v2760
        %v2782 = vadd.f32 %v2714, %v2761
        %v2783 = vadd.f32 %v2715, %v2762
        %v2784 = vadd.f32 %v2716, %v2763
        %v2785 = vadd.f32 %v2717, %v2764
        %v2786 = vadd.f32 %v2718, %v2765
        %v2787 = vadd.f32 %v2719, %v2766
        %v2788 = vadd.f32 %v2720, %v2767
        %v2789 = vld [vmem:[%s329 + $0x2be] sm:$0xff]
        %v2790 = vld [vmem:[%s329 + $0x2c6] sm:$0xff]
        %v2791 = vld [vmem:[%s329 + $0x2ce] sm:$0xff]
        %v2792 = vld [vmem:[%s329 + $0x2d6] sm:$0xff]
        %v2793 = vld [vmem:[%s1 + $0x8] sm:$0x1]
        %v2794 = vlaneseq
        %v2795 = vshrl.u32 %v2794, 7
        %v2796 = vsub.s32 0, %v2795
        %v2797 = vrot.slane %v2793, %v2796
        %v2798 = vmul.f32 %v2470, %v2797
        %v2799 = vmul.f32 %v2471, %v2797
        %v2800 = vmul.f32 %v2472, %v2797
        %v2801 = vmul.f32 %v2473, %v2797
        %v2802 = vmul.f32 %v2474, %v2797
        %v2803 = vmul.f32 %v2475, %v2797
        %v2804 = vmul.f32 %v2476, %v2797
        %v2805 = vmul.f32 %v2477, %v2797
        %v2806 = vmul.f32 %v2478, %v2797
        %v2807 = vmul.f32 %v2479, %v2797
        %v2808 = vmul.f32 %v2480, %v2797
        %v2809 = vmul.f32 %v2481, %v2797
        %v2810 = vmul.f32 %v2482, %v2797
        %v2811 = vmul.f32 %v2483, %v2797
        %v2812 = vmul.f32 %v2484, %v2797
        %v2813 = vmul.f32 %v2485, %v2797
        %v2814 = vmul.f32 %v2486, %v2797
        %v2815 = vmul.f32 %v2789, %v2797
        %v2816 = vmul.f32 %v2790, %v2797
        %v2817 = vmul.f32 %v2791, %v2797
        %v2818 = vmul.f32 %v2792, %v2797
        %v2819 = vadd.f32 %v2768, %v2798
        %v2820 = vadd.f32 %v2769, %v2799
        %v2821 = vadd.f32 %v2770, %v2800
        %v2822 = vadd.f32 %v2771, %v2801
        %v2823 = vadd.f32 %v2772, %v2802
        %v2824 = vadd.f32 %v2773, %v2803
        %v2825 = vadd.f32 %v2774, %v2804
        %v2826 = vadd.f32 %v2775, %v2805
        %v2827 = vadd.f32 %v2776, %v2806
        %v2828 = vadd.f32 %v2777, %v2807
        %v2829 = vadd.f32 %v2778, %v2808
        %v2830 = vadd.f32 %v2779, %v2809
        %v2831 = vadd.f32 %v2780, %v2810
        %v2832 = vadd.f32 %v2781, %v2811
        %v2833 = vadd.f32 %v2782, %v2812
        %v2834 = vadd.f32 %v2783, %v2813
        %v2835 = vadd.f32 %v2784, %v2814
        %v2836 = vadd.f32 %v2785, %v2815
        %v2837 = vadd.f32 %v2786, %v2816
        %v2838 = vadd.f32 %v2787, %v2817
        %v2839 = vadd.f32 %v2788, %v2818
        %v2840 = vadd.f32 %v2819, %v914
        %v2841 = vadd.f32 %v2820, %v914
        %v2842 = vadd.f32 %v2821, %v914
        %v2843 = vadd.f32 %v2822, %v914
        %v2844 = vadd.f32 %v2823, %v914
        %v2845 = vadd.f32 %v2824, %v914
        %v2846 = vadd.f32 %v2825, %v914
        %v2847 = vadd.f32 %v2826, %v914
        %v2848 = vadd.f32 %v2827, %v914
        %v2849 = vadd.f32 %v2828, %v914
        %v2850 = vadd.f32 %v2829, %v914
        %v2851 = vadd.f32 %v2830, %v914
        %v2852 = vadd.f32 %v2831, %v914
        %v2853 = vadd.f32 %v2832, %v914
        %v2854 = vadd.f32 %v2833, %v914
        %v2855 = vadd.f32 %v2834, %v914
        %v2856 = vadd.f32 %v2835, %v914
        %v2857 = vadd.f32 %v2836, %v914
        %v2858 = vadd.f32 %v2837, %v914
        %v2859 = vadd.f32 %v2838, %v914
        %v2860 = vadd.f32 %v2839, %v914
        %v2861 = vmax.f32 %v2840, 0.0
        %v2862 = vmax.f32 %v2841, 0.0
        %v2863 = vmax.f32 %v2842, 0.0
        %v2864 = vmax.f32 %v2843, 0.0
        %v2865 = vmax.f32 %v2844, 0.0
        %v2866 = vmax.f32 %v2845, 0.0
        %v2867 = vmax.f32 %v2846, 0.0
        %v2868 = vmax.f32 %v2847, 0.0
        %v2869 = vmax.f32 %v2848, 0.0
        %v2870 = vmax.f32 %v2849, 0.0
        %v2871 = vmax.f32 %v2850, 0.0
        %v2872 = vmax.f32 %v2851, 0.0
        %v2873 = vmax.f32 %v2852, 0.0
        %v2874 = vmax.f32 %v2853, 0.0
        %v2875 = vmax.f32 %v2854, 0.0
        %v2876 = vmax.f32 %v2855, 0.0
        %v2877 = vmax.f32 %v2856, 0.0
        %v2878 = vmax.f32 %v2857, 0.0
        %v2879 = vmax.f32 %v2858, 0.0
        %v2880 = vmax.f32 %v2859, 0.0
        %v2881 = vmax.f32 %v2860, 0.0
        %2882 = vst.msk [vmem:[#allocation2 + $0x1f8] sm:$0xff] %vm958, %v2861
        %2883 = vst.msk [vmem:[#allocation2 + $0x200] sm:$0xff] %vm958, %v2862
        %2884 = vst.msk [vmem:[#allocation2 + $0x208] sm:$0xff] %vm958, %v2863
        %2885 = vst.msk [vmem:[#allocation2 + $0x210] sm:$0xff] %vm958, %v2864
        %2886 = vst.msk [vmem:[#allocation2 + $0x218] sm:$0xff] %vm958, %v2865
        %2887 = vst.msk [vmem:[#allocation2 + $0x220] sm:$0xff] %vm958, %v2866
        %2888 = vst.msk [vmem:[#allocation2 + $0x228] sm:$0xff] %vm958, %v2867
        %2889 = vst.msk [vmem:[#allocation2 + $0x230] sm:$0xff] %vm958, %v2868
        %2890 = vst.msk [vmem:[#allocation2 + $0x238] sm:$0xff] %vm958, %v2869
        %2891 = vst.msk [vmem:[#allocation2 + $0x240] sm:$0xff] %vm958, %v2870
        %2892 = vst.msk [vmem:[#allocation2 + $0x248] sm:$0xff] %vm958, %v2871
        %2893 = vst.msk [vmem:[#allocation2 + $0x250] sm:$0xff] %vm958, %v2872
        %2894 = vst.msk [vmem:[#allocation2 + $0x258] sm:$0xff] %vm958, %v2873
        %2895 = vst.msk [vmem:[#allocation2 + $0x260] sm:$0xff] %vm958, %v2874
        %2896 = vst.msk [vmem:[#allocation2 + $0x268] sm:$0xff] %vm958, %v2875
        %2897 = vst.msk [vmem:[#allocation2 + $0x270] sm:$0xff] %vm958, %v2876
        %2898 = vst.msk [vmem:[#allocation2 + $0x278] sm:$0xff] %vm958, %v2877
        %2899 = vst.msk [vmem:[#allocation2 + $0x280] sm:$0xff] %vm958, %v2878
        %2900 = vst.msk [vmem:[#allocation2 + $0x288] sm:$0xff] %vm958, %v2879
        %2901 = vst.msk [vmem:[#allocation2 + $0x290] sm:$0xff] %vm958, %v2880
        %2902 = vst.msk [vmem:[#allocation2 + $0x298] sm:$0xff] %vm958, %v2881
        %v2903 = vld [vmem:[%s329 + $0x2a0] sm:$0xff]
        %v2904 = vld [vmem:[%s329 + $0x2a8] sm:$0xff]
        %v2905 = vld [vmem:[%s329 + $0x2b0] sm:$0xff]
        %v2906 = vld [vmem:[%s329 + $0x2b8] sm:$0xff]
        %v2907 = vld [vmem:[%s329 + $0x2c0] sm:$0xff]
        %v2908 = vld [vmem:[%s329 + $0x2c8] sm:$0xff]
        %v2909 = vld [vmem:[%s329 + $0x2d0] sm:$0xff]
        %v2910 = vld [vmem:[%s329 + $0x2d8] sm:$0xff]
        %v2911 = vld [vmem:[%s329 + $0x2e0] sm:$0xff]
        %v2912 = vld [vmem:[%s329 + $0x2e8] sm:$0xff]
        %v2913 = vld [vmem:[%s329 + $0x2f0] sm:$0xff]
        %v2914 = vld [vmem:[%s329 + $0x2f8] sm:$0xff]
        %v2915 = vld [vmem:[%s329 + $0x300] sm:$0xff]
        %v2916 = vld [vmem:[%s329 + $0x308] sm:$0xff]
        %v2917 = vld [vmem:[%s329 + $0x310] sm:$0xff]
        %v2918 = vld [vmem:[%s329 + $0x318] sm:$0xff]
        %v2919 = vld [vmem:[%s329 + $0x320] sm:$0xff]
        %v2920 = vld [vmem:[%s329 + $0x328] sm:$0xff]
        %v2921 = vld [vmem:[%s329 + $0x330] sm:$0xff]
        %v2922 = vld [vmem:[%s329 + $0x338] sm:$0xff]
        %v2923 = vld [vmem:[%s329 + $0x340] sm:$0xff]
        %v2924 = vld [vmem:[%s1] sm:$0x1]
        %v2925 = vlaneseq
        %v2926 = vshrl.u32 %v2925, 7
        %v2927 = vsub.s32 0, %v2926
        %v2928 = vrot.slane %v2924, %v2927
        %v2929 = vmul.f32 %v2903, %v2928
        %v2930 = vmul.f32 %v2904, %v2928
        %v2931 = vmul.f32 %v2905, %v2928
        %v2932 = vmul.f32 %v2906, %v2928
        %v2933 = vmul.f32 %v2907, %v2928
        %v2934 = vmul.f32 %v2908, %v2928
        %v2935 = vmul.f32 %v2909, %v2928
        %v2936 = vmul.f32 %v2910, %v2928
        %v2937 = vmul.f32 %v2911, %v2928
        %v2938 = vmul.f32 %v2912, %v2928
        %v2939 = vmul.f32 %v2913, %v2928
        %v2940 = vmul.f32 %v2914, %v2928
        %v2941 = vmul.f32 %v2915, %v2928
        %v2942 = vmul.f32 %v2916, %v2928
        %v2943 = vmul.f32 %v2917, %v2928
        %v2944 = vmul.f32 %v2918, %v2928
        %v2945 = vmul.f32 %v2919, %v2928
        %v2946 = vmul.f32 %v2920, %v2928
        %v2947 = vmul.f32 %v2921, %v2928
        %v2948 = vmul.f32 %v2922, %v2928
        %v2949 = vmul.f32 %v2923, %v2928
        %v2950 = vadd.f32 %v2929, 0.0
        %v2951 = vadd.f32 %v2930, 0.0
        %v2952 = vadd.f32 %v2931, 0.0
        %v2953 = vadd.f32 %v2932, 0.0
        %v2954 = vadd.f32 %v2933, 0.0
        %v2955 = vadd.f32 %v2934, 0.0
        %v2956 = vadd.f32 %v2935, 0.0
        %v2957 = vadd.f32 %v2936, 0.0
        %v2958 = vadd.f32 %v2937, 0.0
        %v2959 = vadd.f32 %v2938, 0.0
        %v2960 = vadd.f32 %v2939, 0.0
        %v2961 = vadd.f32 %v2940, 0.0
        %v2962 = vadd.f32 %v2941, 0.0
        %v2963 = vadd.f32 %v2942, 0.0
        %v2964 = vadd.f32 %v2943, 0.0
        %v2965 = vadd.f32 %v2944, 0.0
        %v2966 = vadd.f32 %v2945, 0.0
        %v2967 = vadd.f32 %v2946, 0.0
        %v2968 = vadd.f32 %v2947, 0.0
        %v2969 = vadd.f32 %v2948, 0.0
        %v2970 = vadd.f32 %v2949, 0.0
        %v2971 = vld [vmem:[%s329 + $0x2a1] sm:$0xff]
        %v2972 = vld [vmem:[%s329 + $0x2a9] sm:$0xff]
        %v2973 = vld [vmem:[%s329 + $0x2b1] sm:$0xff]
        %v2974 = vld [vmem:[%s329 + $0x2b9] sm:$0xff]
        %v2975 = vld [vmem:[%s329 + $0x2c1] sm:$0xff]
        %v2976 = vld [vmem:[%s329 + $0x2c9] sm:$0xff]
        %v2977 = vld [vmem:[%s329 + $0x2d1] sm:$0xff]
        %v2978 = vld [vmem:[%s329 + $0x2d9] sm:$0xff]
        %v2979 = vld [vmem:[%s329 + $0x2e1] sm:$0xff]
        %v2980 = vld [vmem:[%s329 + $0x2e9] sm:$0xff]
        %v2981 = vld [vmem:[%s329 + $0x2f1] sm:$0xff]
        %v2982 = vld [vmem:[%s329 + $0x2f9] sm:$0xff]
        %v2983 = vld [vmem:[%s329 + $0x301] sm:$0xff]
        %v2984 = vld [vmem:[%s329 + $0x309] sm:$0xff]
        %v2985 = vld [vmem:[%s329 + $0x311] sm:$0xff]
        %v2986 = vld [vmem:[%s329 + $0x319] sm:$0xff]
        %v2987 = vld [vmem:[%s329 + $0x321] sm:$0xff]
        %v2988 = vld [vmem:[%s329 + $0x329] sm:$0xff]
        %v2989 = vld [vmem:[%s329 + $0x331] sm:$0xff]
        %v2990 = vld [vmem:[%s329 + $0x339] sm:$0xff]
        %v2991 = vld [vmem:[%s329 + $0x341] sm:$0xff]
        %v2992 = vld [vmem:[%s1 + $0x1] sm:$0x1]
        %v2993 = vlaneseq
        %v2994 = vshrl.u32 %v2993, 7
        %v2995 = vsub.s32 0, %v2994
        %v2996 = vrot.slane %v2992, %v2995
        %v2997 = vmul.f32 %v2971, %v2996
        %v2998 = vmul.f32 %v2972, %v2996
        %v2999 = vmul.f32 %v2973, %v2996
        %v3000 = vmul.f32 %v2974, %v2996
        %v3001 = vmul.f32 %v2975, %v2996
        %v3002 = vmul.f32 %v2976, %v2996
        %v3003 = vmul.f32 %v2977, %v2996
        %v3004 = vmul.f32 %v2978, %v2996
        %v3005 = vmul.f32 %v2979, %v2996
        %v3006 = vmul.f32 %v2980, %v2996
        %v3007 = vmul.f32 %v2981, %v2996
        %v3008 = vmul.f32 %v2982, %v2996
        %v3009 = vmul.f32 %v2983, %v2996
        %v3010 = vmul.f32 %v2984, %v2996
        %v3011 = vmul.f32 %v2985, %v2996
        %v3012 = vmul.f32 %v2986, %v2996
        %v3013 = vmul.f32 %v2987, %v2996
        %v3014 = vmul.f32 %v2988, %v2996
        %v3015 = vmul.f32 %v2989, %v2996
        %v3016 = vmul.f32 %v2990, %v2996
        %v3017 = vmul.f32 %v2991, %v2996
        %v3018 = vadd.f32 %v2950, %v2997
        %v3019 = vadd.f32 %v2951, %v2998
        %v3020 = vadd.f32 %v2952, %v2999
        %v3021 = vadd.f32 %v2953, %v3000
        %v3022 = vadd.f32 %v2954, %v3001
        %v3023 = vadd.f32 %v2955, %v3002
        %v3024 = vadd.f32 %v2956, %v3003
        %v3025 = vadd.f32 %v2957, %v3004
        %v3026 = vadd.f32 %v2958, %v3005
        %v3027 = vadd.f32 %v2959, %v3006
        %v3028 = vadd.f32 %v2960, %v3007
        %v3029 = vadd.f32 %v2961, %v3008
        %v3030 = vadd.f32 %v2962, %v3009
        %v3031 = vadd.f32 %v2963, %v3010
        %v3032 = vadd.f32 %v2964, %v3011
        %v3033 = vadd.f32 %v2965, %v3012
        %v3034 = vadd.f32 %v2966, %v3013
        %v3035 = vadd.f32 %v2967, %v3014
        %v3036 = vadd.f32 %v2968, %v3015
        %v3037 = vadd.f32 %v2969, %v3016
        %v3038 = vadd.f32 %v2970, %v3017
        %v3039 = vld [vmem:[%s329 + $0x2a2] sm:$0xff]
        %v3040 = vld [vmem:[%s329 + $0x2aa] sm:$0xff]
        %v3041 = vld [vmem:[%s329 + $0x2b2] sm:$0xff]
        %v3042 = vld [vmem:[%s329 + $0x2ba] sm:$0xff]
        %v3043 = vld [vmem:[%s329 + $0x2c2] sm:$0xff]
        %v3044 = vld [vmem:[%s329 + $0x2ca] sm:$0xff]
        %v3045 = vld [vmem:[%s329 + $0x2d2] sm:$0xff]
        %v3046 = vld [vmem:[%s329 + $0x2da] sm:$0xff]
        %v3047 = vld [vmem:[%s329 + $0x2e2] sm:$0xff]
        %v3048 = vld [vmem:[%s329 + $0x2ea] sm:$0xff]
        %v3049 = vld [vmem:[%s329 + $0x2f2] sm:$0xff]
        %v3050 = vld [vmem:[%s329 + $0x2fa] sm:$0xff]
        %v3051 = vld [vmem:[%s329 + $0x302] sm:$0xff]
        %v3052 = vld [vmem:[%s329 + $0x30a] sm:$0xff]
        %v3053 = vld [vmem:[%s329 + $0x312] sm:$0xff]
        %v3054 = vld [vmem:[%s329 + $0x31a] sm:$0xff]
        %v3055 = vld [vmem:[%s329 + $0x322] sm:$0xff]
        %v3056 = vld [vmem:[%s329 + $0x32a] sm:$0xff]
        %v3057 = vld [vmem:[%s329 + $0x332] sm:$0xff]
        %v3058 = vld [vmem:[%s329 + $0x33a] sm:$0xff]
        %v3059 = vld [vmem:[%s329 + $0x342] sm:$0xff]
        %v3060 = vld [vmem:[%s1 + $0x2] sm:$0x1]
        %v3061 = vlaneseq
        %v3062 = vshrl.u32 %v3061, 7
        %v3063 = vsub.s32 0, %v3062
        %v3064 = vrot.slane %v3060, %v3063
        %v3065 = vmul.f32 %v3039, %v3064
        %v3066 = vmul.f32 %v3040, %v3064
        %v3067 = vmul.f32 %v3041, %v3064
        %v3068 = vmul.f32 %v3042, %v3064
        %v3069 = vmul.f32 %v3043, %v3064
        %v3070 = vmul.f32 %v3044, %v3064
        %v3071 = vmul.f32 %v3045, %v3064
        %v3072 = vmul.f32 %v3046, %v3064
        %v3073 = vmul.f32 %v3047, %v3064
        %v3074 = vmul.f32 %v3048, %v3064
        %v3075 = vmul.f32 %v3049, %v3064
        %v3076 = vmul.f32 %v3050, %v3064
        %v3077 = vmul.f32 %v3051, %v3064
        %v3078 = vmul.f32 %v3052, %v3064
        %v3079 = vmul.f32 %v3053, %v3064
        %v3080 = vmul.f32 %v3054, %v3064
        %v3081 = vmul.f32 %v3055, %v3064
        %v3082 = vmul.f32 %v3056, %v3064
        %v3083 = vmul.f32 %v3057, %v3064
        %v3084 = vmul.f32 %v3058, %v3064
        %v3085 = vmul.f32 %v3059, %v3064
        %v3086 = vadd.f32 %v3018, %v3065
        %v3087 = vadd.f32 %v3019, %v3066
        %v3088 = vadd.f32 %v3020, %v3067
        %v3089 = vadd.f32 %v3021, %v3068
        %v3090 = vadd.f32 %v3022, %v3069
        %v3091 = vadd.f32 %v3023, %v3070
        %v3092 = vadd.f32 %v3024, %v3071
        %v3093 = vadd.f32 %v3025, %v3072
        %v3094 = vadd.f32 %v3026, %v3073
        %v3095 = vadd.f32 %v3027, %v3074
        %v3096 = vadd.f32 %v3028, %v3075
        %v3097 = vadd.f32 %v3029, %v3076
        %v3098 = vadd.f32 %v3030, %v3077
        %v3099 = vadd.f32 %v3031, %v3078
        %v3100 = vadd.f32 %v3032, %v3079
        %v3101 = vadd.f32 %v3033, %v3080
        %v3102 = vadd.f32 %v3034, %v3081
        %v3103 = vadd.f32 %v3035, %v3082
        %v3104 = vadd.f32 %v3036, %v3083
        %v3105 = vadd.f32 %v3037, %v3084
        %v3106 = vadd.f32 %v3038, %v3085
        %v3107 = vld [vmem:[%s329 + $0x2be] sm:$0xff]
        %v3108 = vld [vmem:[%s329 + $0x2c6] sm:$0xff]
        %v3109 = vld [vmem:[%s329 + $0x2ce] sm:$0xff]
        %v3110 = vld [vmem:[%s329 + $0x2d6] sm:$0xff]
        %v3111 = vld [vmem:[%s329 + $0x2de] sm:$0xff]
        %v3112 = vld [vmem:[%s329 + $0x2e6] sm:$0xff]
        %v3113 = vld [vmem:[%s329 + $0x2ee] sm:$0xff]
        %v3114 = vld [vmem:[%s329 + $0x2f6] sm:$0xff]
        %v3115 = vld [vmem:[%s329 + $0x2fe] sm:$0xff]
        %v3116 = vld [vmem:[%s329 + $0x306] sm:$0xff]
        %v3117 = vld [vmem:[%s329 + $0x30e] sm:$0xff]
        %v3118 = vld [vmem:[%s329 + $0x316] sm:$0xff]
        %v3119 = vld [vmem:[%s329 + $0x31e] sm:$0xff]
        %v3120 = vld [vmem:[%s329 + $0x326] sm:$0xff]
        %v3121 = vld [vmem:[%s329 + $0x32e] sm:$0xff]
        %v3122 = vld [vmem:[%s329 + $0x336] sm:$0xff]
        %v3123 = vld [vmem:[%s329 + $0x33e] sm:$0xff]
        %v3124 = vld [vmem:[%s329 + $0x346] sm:$0xff]
        %v3125 = vld [vmem:[%s329 + $0x34e] sm:$0xff]
        %v3126 = vld [vmem:[%s329 + $0x356] sm:$0xff]
        %v3127 = vld [vmem:[%s329 + $0x35e] sm:$0xff]
        %v3128 = vld [vmem:[%s1 + $0x3] sm:$0x1]
        %v3129 = vlaneseq
        %v3130 = vshrl.u32 %v3129, 7
        %v3131 = vsub.s32 0, %v3130
        %v3132 = vrot.slane %v3128, %v3131
        %v3133 = vmul.f32 %v3107, %v3132
        %v3134 = vmul.f32 %v3108, %v3132
        %v3135 = vmul.f32 %v3109, %v3132
        %v3136 = vmul.f32 %v3110, %v3132
        %v3137 = vmul.f32 %v3111, %v3132
        %v3138 = vmul.f32 %v3112, %v3132
        %v3139 = vmul.f32 %v3113, %v3132
        %v3140 = vmul.f32 %v3114, %v3132
        %v3141 = vmul.f32 %v3115, %v3132
        %v3142 = vmul.f32 %v3116, %v3132
        %v3143 = vmul.f32 %v3117, %v3132
        %v3144 = vmul.f32 %v3118, %v3132
        %v3145 = vmul.f32 %v3119, %v3132
        %v3146 = vmul.f32 %v3120, %v3132
        %v3147 = vmul.f32 %v3121, %v3132
        %v3148 = vmul.f32 %v3122, %v3132
        %v3149 = vmul.f32 %v3123, %v3132
        %v3150 = vmul.f32 %v3124, %v3132
        %v3151 = vmul.f32 %v3125, %v3132
        %v3152 = vmul.f32 %v3126, %v3132
        %v3153 = vmul.f32 %v3127, %v3132
        %v3154 = vadd.f32 %v3086, %v3133
        %v3155 = vadd.f32 %v3087, %v3134
        %v3156 = vadd.f32 %v3088, %v3135
        %v3157 = vadd.f32 %v3089, %v3136
        %v3158 = vadd.f32 %v3090, %v3137
        %v3159 = vadd.f32 %v3091, %v3138
        %v3160 = vadd.f32 %v3092, %v3139
        %v3161 = vadd.f32 %v3093, %v3140
        %v3162 = vadd.f32 %v3094, %v3141
        %v3163 = vadd.f32 %v3095, %v3142
        %v3164 = vadd.f32 %v3096, %v3143
        %v3165 = vadd.f32 %v3097, %v3144
        %v3166 = vadd.f32 %v3098, %v3145
        %v3167 = vadd.f32 %v3099, %v3146
        %v3168 = vadd.f32 %v3100, %v3147
        %v3169 = vadd.f32 %v3101, %v3148
        %v3170 = vadd.f32 %v3102, %v3149
        %v3171 = vadd.f32 %v3103, %v3150
        %v3172 = vadd.f32 %v3104, %v3151
        %v3173 = vadd.f32 %v3105, %v3152
        %v3174 = vadd.f32 %v3106, %v3153
        %v3175 = vld [vmem:[%s329 + $0x2bf] sm:$0xff]
        %v3176 = vld [vmem:[%s329 + $0x2c7] sm:$0xff]
        %v3177 = vld [vmem:[%s329 + $0x2cf] sm:$0xff]
        %v3178 = vld [vmem:[%s329 + $0x2d7] sm:$0xff]
        %v3179 = vld [vmem:[%s329 + $0x2df] sm:$0xff]
        %v3180 = vld [vmem:[%s329 + $0x2e7] sm:$0xff]
        %v3181 = vld [vmem:[%s329 + $0x2ef] sm:$0xff]
        %v3182 = vld [vmem:[%s329 + $0x2f7] sm:$0xff]
        %v3183 = vld [vmem:[%s329 + $0x2ff] sm:$0xff]
        %v3184 = vld [vmem:[%s329 + $0x307] sm:$0xff]
        %v3185 = vld [vmem:[%s329 + $0x30f] sm:$0xff]
        %v3186 = vld [vmem:[%s329 + $0x317] sm:$0xff]
        %v3187 = vld [vmem:[%s329 + $0x31f] sm:$0xff]
        %v3188 = vld [vmem:[%s329 + $0x327] sm:$0xff]
        %v3189 = vld [vmem:[%s329 + $0x32f] sm:$0xff]
        %v3190 = vld [vmem:[%s329 + $0x337] sm:$0xff]
        %v3191 = vld [vmem:[%s329 + $0x33f] sm:$0xff]
        %v3192 = vld [vmem:[%s329 + $0x347] sm:$0xff]
        %v3193 = vld [vmem:[%s329 + $0x34f] sm:$0xff]
        %v3194 = vld [vmem:[%s329 + $0x357] sm:$0xff]
        %v3195 = vld [vmem:[%s329 + $0x35f] sm:$0xff]
        %v3196 = vld [vmem:[%s1 + $0x4] sm:$0x1]
        %v3197 = vlaneseq
        %v3198 = vshrl.u32 %v3197, 7
        %v3199 = vsub.s32 0, %v3198
        %v3200 = vrot.slane %v3196, %v3199
        %v3201 = vmul.f32 %v3175, %v3200
        %v3202 = vmul.f32 %v3176, %v3200
        %v3203 = vmul.f32 %v3177, %v3200
        %v3204 = vmul.f32 %v3178, %v3200
        %v3205 = vmul.f32 %v3179, %v3200
        %v3206 = vmul.f32 %v3180, %v3200
        %v3207 = vmul.f32 %v3181, %v3200
        %v3208 = vmul.f32 %v3182, %v3200
        %v3209 = vmul.f32 %v3183, %v3200
        %v3210 = vmul.f32 %v3184, %v3200
        %v3211 = vmul.f32 %v3185, %v3200
        %v3212 = vmul.f32 %v3186, %v3200
        %v3213 = vmul.f32 %v3187, %v3200
        %v3214 = vmul.f32 %v3188, %v3200
        %v3215 = vmul.f32 %v3189, %v3200
        %v3216 = vmul.f32 %v3190, %v3200
        %v3217 = vmul.f32 %v3191, %v3200
        %v3218 = vmul.f32 %v3192, %v3200
        %v3219 = vmul.f32 %v3193, %v3200
        %v3220 = vmul.f32 %v3194, %v3200
        %v3221 = vmul.f32 %v3195, %v3200
        %v3222 = vadd.f32 %v3154, %v3201
        %v3223 = vadd.f32 %v3155, %v3202
        %v3224 = vadd.f32 %v3156, %v3203
        %v3225 = vadd.f32 %v3157, %v3204
        %v3226 = vadd.f32 %v3158, %v3205
        %v3227 = vadd.f32 %v3159, %v3206
        %v3228 = vadd.f32 %v3160, %v3207
        %v3229 = vadd.f32 %v3161, %v3208
        %v3230 = vadd.f32 %v3162, %v3209
        %v3231 = vadd.f32 %v3163, %v3210
        %v3232 = vadd.f32 %v3164, %v3211
        %v3233 = vadd.f32 %v3165, %v3212
        %v3234 = vadd.f32 %v3166, %v3213
        %v3235 = vadd.f32 %v3167, %v3214
        %v3236 = vadd.f32 %v3168, %v3215
        %v3237 = vadd.f32 %v3169, %v3216
        %v3238 = vadd.f32 %v3170, %v3217
        %v3239 = vadd.f32 %v3171, %v3218
        %v3240 = vadd.f32 %v3172, %v3219
        %v3241 = vadd.f32 %v3173, %v3220
        %v3242 = vadd.f32 %v3174, %v3221
        %v3243 = vld [vmem:[%s329 + $0x348] sm:$0xff]
        %v3244 = vld [vmem:[%s329 + $0x350] sm:$0xff]
        %v3245 = vld [vmem:[%s329 + $0x358] sm:$0xff]
        %v3246 = vld [vmem:[%s329 + $0x360] sm:$0xff]
        %v3247 = vld [vmem:[%s1 + $0x5] sm:$0x1]
        %v3248 = vlaneseq
        %v3249 = vshrl.u32 %v3248, 7
        %v3250 = vsub.s32 0, %v3249
        %v3251 = vrot.slane %v3247, %v3250
        %v3252 = vmul.f32 %v2907, %v3251
        %v3253 = vmul.f32 %v2908, %v3251
        %v3254 = vmul.f32 %v2909, %v3251
        %v3255 = vmul.f32 %v2910, %v3251
        %v3256 = vmul.f32 %v2911, %v3251
        %v3257 = vmul.f32 %v2912, %v3251
        %v3258 = vmul.f32 %v2913, %v3251
        %v3259 = vmul.f32 %v2914, %v3251
        %v3260 = vmul.f32 %v2915, %v3251
        %v3261 = vmul.f32 %v2916, %v3251
        %v3262 = vmul.f32 %v2917, %v3251
        %v3263 = vmul.f32 %v2918, %v3251
        %v3264 = vmul.f32 %v2919, %v3251
        %v3265 = vmul.f32 %v2920, %v3251
        %v3266 = vmul.f32 %v2921, %v3251
        %v3267 = vmul.f32 %v2922, %v3251
        %v3268 = vmul.f32 %v2923, %v3251
        %v3269 = vmul.f32 %v3243, %v3251
        %v3270 = vmul.f32 %v3244, %v3251
        %v3271 = vmul.f32 %v3245, %v3251
        %v3272 = vmul.f32 %v3246, %v3251
        %v3273 = vadd.f32 %v3222, %v3252
        %v3274 = vadd.f32 %v3223, %v3253
        %v3275 = vadd.f32 %v3224, %v3254
        %v3276 = vadd.f32 %v3225, %v3255
        %v3277 = vadd.f32 %v3226, %v3256
        %v3278 = vadd.f32 %v3227, %v3257
        %v3279 = vadd.f32 %v3228, %v3258
        %v3280 = vadd.f32 %v3229, %v3259
        %v3281 = vadd.f32 %v3230, %v3260
        %v3282 = vadd.f32 %v3231, %v3261
        %v3283 = vadd.f32 %v3232, %v3262
        %v3284 = vadd.f32 %v3233, %v3263
        %v3285 = vadd.f32 %v3234, %v3264
        %v3286 = vadd.f32 %v3235, %v3265
        %v3287 = vadd.f32 %v3236, %v3266
        %v3288 = vadd.f32 %v3237, %v3267
        %v3289 = vadd.f32 %v3238, %v3268
        %v3290 = vadd.f32 %v3239, %v3269
        %v3291 = vadd.f32 %v3240, %v3270
        %v3292 = vadd.f32 %v3241, %v3271
        %v3293 = vadd.f32 %v3242, %v3272
        %v3294 = vld [vmem:[%s329 + $0x2dc] sm:$0xff]
        %v3295 = vld [vmem:[%s329 + $0x2e4] sm:$0xff]
        %v3296 = vld [vmem:[%s329 + $0x2ec] sm:$0xff]
        %v3297 = vld [vmem:[%s329 + $0x2f4] sm:$0xff]
        %v3298 = vld [vmem:[%s329 + $0x2fc] sm:$0xff]
        %v3299 = vld [vmem:[%s329 + $0x304] sm:$0xff]
        %v3300 = vld [vmem:[%s329 + $0x30c] sm:$0xff]
        %v3301 = vld [vmem:[%s329 + $0x314] sm:$0xff]
        %v3302 = vld [vmem:[%s329 + $0x31c] sm:$0xff]
        %v3303 = vld [vmem:[%s329 + $0x324] sm:$0xff]
        %v3304 = vld [vmem:[%s329 + $0x32c] sm:$0xff]
        %v3305 = vld [vmem:[%s329 + $0x334] sm:$0xff]
        %v3306 = vld [vmem:[%s329 + $0x33c] sm:$0xff]
        %v3307 = vld [vmem:[%s329 + $0x344] sm:$0xff]
        %v3308 = vld [vmem:[%s329 + $0x34c] sm:$0xff]
        %v3309 = vld [vmem:[%s329 + $0x354] sm:$0xff]
        %v3310 = vld [vmem:[%s329 + $0x35c] sm:$0xff]
        %v3311 = vld [vmem:[%s329 + $0x364] sm:$0xff]
        %v3312 = vld [vmem:[%s329 + $0x36c] sm:$0xff]
        %v3313 = vld [vmem:[%s329 + $0x374] sm:$0xff]
        %v3314 = vld [vmem:[%s329 + $0x37c] sm:$0xff]
        %v3315 = vld [vmem:[%s1 + $0x6] sm:$0x1]
        %v3316 = vlaneseq
        %v3317 = vshrl.u32 %v3316, 7
        %v3318 = vsub.s32 0, %v3317
        %v3319 = vrot.slane %v3315, %v3318
        %v3320 = vmul.f32 %v3294, %v3319
        %v3321 = vmul.f32 %v3295, %v3319
        %v3322 = vmul.f32 %v3296, %v3319
        %v3323 = vmul.f32 %v3297, %v3319
        %v3324 = vmul.f32 %v3298, %v3319
        %v3325 = vmul.f32 %v3299, %v3319
        %v3326 = vmul.f32 %v3300, %v3319
        %v3327 = vmul.f32 %v3301, %v3319
        %v3328 = vmul.f32 %v3302, %v3319
        %v3329 = vmul.f32 %v3303, %v3319
        %v3330 = vmul.f32 %v3304, %v3319
        %v3331 = vmul.f32 %v3305, %v3319
        %v3332 = vmul.f32 %v3306, %v3319
        %v3333 = vmul.f32 %v3307, %v3319
        %v3334 = vmul.f32 %v3308, %v3319
        %v3335 = vmul.f32 %v3309, %v3319
        %v3336 = vmul.f32 %v3310, %v3319
        %v3337 = vmul.f32 %v3311, %v3319
        %v3338 = vmul.f32 %v3312, %v3319
        %v3339 = vmul.f32 %v3313, %v3319
        %v3340 = vmul.f32 %v3314, %v3319
        %v3341 = vadd.f32 %v3273, %v3320
        %v3342 = vadd.f32 %v3274, %v3321
        %v3343 = vadd.f32 %v3275, %v3322
        %v3344 = vadd.f32 %v3276, %v3323
        %v3345 = vadd.f32 %v3277, %v3324
        %v3346 = vadd.f32 %v3278, %v3325
        %v3347 = vadd.f32 %v3279, %v3326
        %v3348 = vadd.f32 %v3280, %v3327
        %v3349 = vadd.f32 %v3281, %v3328
        %v3350 = vadd.f32 %v3282, %v3329
        %v3351 = vadd.f32 %v3283, %v3330
        %v3352 = vadd.f32 %v3284, %v3331
        %v3353 = vadd.f32 %v3285, %v3332
        %v3354 = vadd.f32 %v3286, %v3333
        %v3355 = vadd.f32 %v3287, %v3334
        %v3356 = vadd.f32 %v3288, %v3335
        %v3357 = vadd.f32 %v3289, %v3336
        %v3358 = vadd.f32 %v3290, %v3337
        %v3359 = vadd.f32 %v3291, %v3338
        %v3360 = vadd.f32 %v3292, %v3339
        %v3361 = vadd.f32 %v3293, %v3340
        %v3362 = vld [vmem:[%s329 + $0x2dd] sm:$0xff]
        %v3363 = vld [vmem:[%s329 + $0x2e5] sm:$0xff]
        %v3364 = vld [vmem:[%s329 + $0x2ed] sm:$0xff]
        %v3365 = vld [vmem:[%s329 + $0x2f5] sm:$0xff]
        %v3366 = vld [vmem:[%s329 + $0x2fd] sm:$0xff]
        %v3367 = vld [vmem:[%s329 + $0x305] sm:$0xff]
        %v3368 = vld [vmem:[%s329 + $0x30d] sm:$0xff]
        %v3369 = vld [vmem:[%s329 + $0x315] sm:$0xff]
        %v3370 = vld [vmem:[%s329 + $0x31d] sm:$0xff]
        %v3371 = vld [vmem:[%s329 + $0x325] sm:$0xff]
        %v3372 = vld [vmem:[%s329 + $0x32d] sm:$0xff]
        %v3373 = vld [vmem:[%s329 + $0x335] sm:$0xff]
        %v3374 = vld [vmem:[%s329 + $0x33d] sm:$0xff]
        %v3375 = vld [vmem:[%s329 + $0x345] sm:$0xff]
        %v3376 = vld [vmem:[%s329 + $0x34d] sm:$0xff]
        %v3377 = vld [vmem:[%s329 + $0x355] sm:$0xff]
        %v3378 = vld [vmem:[%s329 + $0x35d] sm:$0xff]
        %v3379 = vld [vmem:[%s329 + $0x365] sm:$0xff]
        %v3380 = vld [vmem:[%s329 + $0x36d] sm:$0xff]
        %v3381 = vld [vmem:[%s329 + $0x375] sm:$0xff]
        %v3382 = vld [vmem:[%s329 + $0x37d] sm:$0xff]
        %v3383 = vld [vmem:[%s1 + $0x7] sm:$0x1]
        %v3384 = vlaneseq
        %v3385 = vshrl.u32 %v3384, 7
        %v3386 = vsub.s32 0, %v3385
        %v3387 = vrot.slane %v3383, %v3386
        %v3388 = vmul.f32 %v3362, %v3387
        %v3389 = vmul.f32 %v3363, %v3387
        %v3390 = vmul.f32 %v3364, %v3387
        %v3391 = vmul.f32 %v3365, %v3387
        %v3392 = vmul.f32 %v3366, %v3387
        %v3393 = vmul.f32 %v3367, %v3387
        %v3394 = vmul.f32 %v3368, %v3387
        %v3395 = vmul.f32 %v3369, %v3387
        %v3396 = vmul.f32 %v3370, %v3387
        %v3397 = vmul.f32 %v3371, %v3387
        %v3398 = vmul.f32 %v3372, %v3387
        %v3399 = vmul.f32 %v3373, %v3387
        %v3400 = vmul.f32 %v3374, %v3387
        %v3401 = vmul.f32 %v3375, %v3387
        %v3402 = vmul.f32 %v3376, %v3387
        %v3403 = vmul.f32 %v3377, %v3387
        %v3404 = vmul.f32 %v3378, %v3387
        %v3405 = vmul.f32 %v3379, %v3387
        %v3406 = vmul.f32 %v3380, %v3387
        %v3407 = vmul.f32 %v3381, %v3387
        %v3408 = vmul.f32 %v3382, %v3387
        %v3409 = vadd.f32 %v3341, %v3388
        %v3410 = vadd.f32 %v3342, %v3389
        %v3411 = vadd.f32 %v3343, %v3390
        %v3412 = vadd.f32 %v3344, %v3391
        %v3413 = vadd.f32 %v3345, %v3392
        %v3414 = vadd.f32 %v3346, %v3393
        %v3415 = vadd.f32 %v3347, %v3394
        %v3416 = vadd.f32 %v3348, %v3395
        %v3417 = vadd.f32 %v3349, %v3396
        %v3418 = vadd.f32 %v3350, %v3397
        %v3419 = vadd.f32 %v3351, %v3398
        %v3420 = vadd.f32 %v3352, %v3399
        %v3421 = vadd.f32 %v3353, %v3400
        %v3422 = vadd.f32 %v3354, %v3401
        %v3423 = vadd.f32 %v3355, %v3402
        %v3424 = vadd.f32 %v3356, %v3403
        %v3425 = vadd.f32 %v3357, %v3404
        %v3426 = vadd.f32 %v3358, %v3405
        %v3427 = vadd.f32 %v3359, %v3406
        %v3428 = vadd.f32 %v3360, %v3407
        %v3429 = vadd.f32 %v3361, %v3408
        %v3430 = vld [vmem:[%s329 + $0x366] sm:$0xff]
        %v3431 = vld [vmem:[%s329 + $0x36e] sm:$0xff]
        %v3432 = vld [vmem:[%s329 + $0x376] sm:$0xff]
        %v3433 = vld [vmem:[%s329 + $0x37e] sm:$0xff]
        %v3434 = vld [vmem:[%s1 + $0x8] sm:$0x1]
        %v3435 = vlaneseq
        %v3436 = vshrl.u32 %v3435, 7
        %v3437 = vsub.s32 0, %v3436
        %v3438 = vrot.slane %v3434, %v3437
        %v3439 = vmul.f32 %v3111, %v3438
        %v3440 = vmul.f32 %v3112, %v3438
        %v3441 = vmul.f32 %v3113, %v3438
        %v3442 = vmul.f32 %v3114, %v3438
        %v3443 = vmul.f32 %v3115, %v3438
        %v3444 = vmul.f32 %v3116, %v3438
        %v3445 = vmul.f32 %v3117, %v3438
        %v3446 = vmul.f32 %v3118, %v3438
        %v3447 = vmul.f32 %v3119, %v3438
        %v3448 = vmul.f32 %v3120, %v3438
        %v3449 = vmul.f32 %v3121, %v3438
        %v3450 = vmul.f32 %v3122, %v3438
        %v3451 = vmul.f32 %v3123, %v3438
        %v3452 = vmul.f32 %v3124, %v3438
        %v3453 = vmul.f32 %v3125, %v3438
        %v3454 = vmul.f32 %v3126, %v3438
        %v3455 = vmul.f32 %v3127, %v3438
        %v3456 = vmul.f32 %v3430, %v3438
        %v3457 = vmul.f32 %v3431, %v3438
        %v3458 = vmul.f32 %v3432, %v3438
        %v3459 = vmul.f32 %v3433, %v3438
        %v3460 = vadd.f32 %v3409, %v3439
        %v3461 = vadd.f32 %v3410, %v3440
        %v3462 = vadd.f32 %v3411, %v3441
        %v3463 = vadd.f32 %v3412, %v3442
        %v3464 = vadd.f32 %v3413, %v3443
        %v3465 = vadd.f32 %v3414, %v3444
        %v3466 = vadd.f32 %v3415, %v3445
        %v3467 = vadd.f32 %v3416, %v3446
        %v3468 = vadd.f32 %v3417, %v3447
        %v3469 = vadd.f32 %v3418, %v3448
        %v3470 = vadd.f32 %v3419, %v3449
        %v3471 = vadd.f32 %v3420, %v3450
        %v3472 = vadd.f32 %v3421, %v3451
        %v3473 = vadd.f32 %v3422, %v3452
        %v3474 = vadd.f32 %v3423, %v3453
        %v3475 = vadd.f32 %v3424, %v3454
        %v3476 = vadd.f32 %v3425, %v3455
        %v3477 = vadd.f32 %v3426, %v3456
        %v3478 = vadd.f32 %v3427, %v3457
        %v3479 = vadd.f32 %v3428, %v3458
        %v3480 = vadd.f32 %v3429, %v3459
        %v3481 = vadd.f32 %v3460, %v914
        %v3482 = vadd.f32 %v3461, %v914
        %v3483 = vadd.f32 %v3462, %v914
        %v3484 = vadd.f32 %v3463, %v914
        %v3485 = vadd.f32 %v3464, %v914
        %v3486 = vadd.f32 %v3465, %v914
        %v3487 = vadd.f32 %v3466, %v914
        %v3488 = vadd.f32 %v3467, %v914
        %v3489 = vadd.f32 %v3468, %v914
        %v3490 = vadd.f32 %v3469, %v914
        %v3491 = vadd.f32 %v3470, %v914
        %v3492 = vadd.f32 %v3471, %v914
        %v3493 = vadd.f32 %v3472, %v914
        %v3494 = vadd.f32 %v3473, %v914
        %v3495 = vadd.f32 %v3474, %v914
        %v3496 = vadd.f32 %v3475, %v914
        %v3497 = vadd.f32 %v3476, %v914
        %v3498 = vadd.f32 %v3477, %v914
        %v3499 = vadd.f32 %v3478, %v914
        %v3500 = vadd.f32 %v3479, %v914
        %v3501 = vadd.f32 %v3480, %v914
        %v3502 = vmax.f32 %v3481, 0.0
        %v3503 = vmax.f32 %v3482, 0.0
        %v3504 = vmax.f32 %v3483, 0.0
        %v3505 = vmax.f32 %v3484, 0.0
        %v3506 = vmax.f32 %v3485, 0.0
        %v3507 = vmax.f32 %v3486, 0.0
        %v3508 = vmax.f32 %v3487, 0.0
        %v3509 = vmax.f32 %v3488, 0.0
        %v3510 = vmax.f32 %v3489, 0.0
        %v3511 = vmax.f32 %v3490, 0.0
        %v3512 = vmax.f32 %v3491, 0.0
        %v3513 = vmax.f32 %v3492, 0.0
        %v3514 = vmax.f32 %v3493, 0.0
        %v3515 = vmax.f32 %v3494, 0.0
        %v3516 = vmax.f32 %v3495, 0.0
        %v3517 = vmax.f32 %v3496, 0.0
        %v3518 = vmax.f32 %v3497, 0.0
        %v3519 = vmax.f32 %v3498, 0.0
        %v3520 = vmax.f32 %v3499, 0.0
        %v3521 = vmax.f32 %v3500, 0.0
        %v3522 = vmax.f32 %v3501, 0.0
        %3523 = vst.msk [vmem:[#allocation2 + $0x2a0] sm:$0xff] %vm958, %v3502
        %3524 = vst.msk [vmem:[#allocation2 + $0x2a8] sm:$0xff] %vm958, %v3503
        %3525 = vst.msk [vmem:[#allocation2 + $0x2b0] sm:$0xff] %vm958, %v3504
        %3526 = vst.msk [vmem:[#allocation2 + $0x2b8] sm:$0xff] %vm958, %v3505
        %3527 = vst.msk [vmem:[#allocation2 + $0x2c0] sm:$0xff] %vm958, %v3506
        %3528 = vst.msk [vmem:[#allocation2 + $0x2c8] sm:$0xff] %vm958, %v3507
        %3529 = vst.msk [vmem:[#allocation2 + $0x2d0] sm:$0xff] %vm958, %v3508
        %3530 = vst.msk [vmem:[#allocation2 + $0x2d8] sm:$0xff] %vm958, %v3509
        %3531 = vst.msk [vmem:[#allocation2 + $0x2e0] sm:$0xff] %vm958, %v3510
        %3532 = vst.msk [vmem:[#allocation2 + $0x2e8] sm:$0xff] %vm958, %v3511
        %3533 = vst.msk [vmem:[#allocation2 + $0x2f0] sm:$0xff] %vm958, %v3512
        %3534 = vst.msk [vmem:[#allocation2 + $0x2f8] sm:$0xff] %vm958, %v3513
        %3535 = vst.msk [vmem:[#allocation2 + $0x300] sm:$0xff] %vm958, %v3514
        %3536 = vst.msk [vmem:[#allocation2 + $0x308] sm:$0xff] %vm958, %v3515
        %3537 = vst.msk [vmem:[#allocation2 + $0x310] sm:$0xff] %vm958, %v3516
        %3538 = vst.msk [vmem:[#allocation2 + $0x318] sm:$0xff] %vm958, %v3517
        %3539 = vst.msk [vmem:[#allocation2 + $0x320] sm:$0xff] %vm958, %v3518
        %3540 = vst.msk [vmem:[#allocation2 + $0x328] sm:$0xff] %vm958, %v3519
        %3541 = vst.msk [vmem:[#allocation2 + $0x330] sm:$0xff] %vm958, %v3520
        %3542 = vst.msk [vmem:[#allocation2 + $0x338] sm:$0xff] %vm958, %v3521
        %3543 = vst.msk [vmem:[#allocation2 + $0x340] sm:$0xff] %vm958, %v3522
        %3544 = vst.msk [vmem:[#allocation3] sm:$0xff] %vm958, 0.0
        %3545 = vst.msk [vmem:[#allocation3 + $0x8] sm:$0xff] %vm958, 0.0
        %3546 = vst.msk [vmem:[#allocation3 + $0x10] sm:$0xff] %vm958, 0.0
        %3547 = vst.msk [vmem:[#allocation3 + $0x18] sm:$0xff] %vm958, 0.0
        %3548 = vst.msk [vmem:[#allocation3 + $0x20] sm:$0xff] %vm958, 0.0
        %3549 = vst.msk [vmem:[#allocation3 + $0x28] sm:$0xff] %vm958, 0.0
        %3550 = vst.msk [vmem:[#allocation3 + $0x30] sm:$0xff] %vm958, 0.0
        %3551 = vst.msk [vmem:[#allocation3 + $0x38] sm:$0xff] %vm958, 0.0
        %3552 = vst.msk [vmem:[#allocation3 + $0x40] sm:$0xff] %vm958, 0.0
        %3553 = vst.msk [vmem:[#allocation3 + $0x48] sm:$0xff] %vm958, 0.0
        %3554 = vst.msk [vmem:[#allocation3 + $0x50] sm:$0xff] %vm958, 0.0
        %3555 = vst.msk [vmem:[#allocation3 + $0x58] sm:$0xff] %vm958, 0.0
        %3556 = vst.msk [vmem:[#allocation3 + $0x60] sm:$0xff] %vm958, 0.0
        %3557 = vst.msk [vmem:[#allocation3 + $0x68] sm:$0xff] %vm958, 0.0
        %3558 = vst.msk [vmem:[#allocation3 + $0x70] sm:$0xff] %vm958, 0.0
        %3559 = vst.msk [vmem:[#allocation3 + $0x78] sm:$0xff] %vm958, 0.0
        %3560 = vst.msk [vmem:[#allocation3 + $0x80] sm:$0xff] %vm958, 0.0
        %3561 = vst.msk [vmem:[#allocation3 + $0x88] sm:$0xff] %vm958, 0.0
        %3562 = vst.msk [vmem:[#allocation3 + $0x90] sm:$0xff] %vm958, 0.0
        %3563 = vst.msk [vmem:[#allocation3 + $0x98] sm:$0xff] %vm958, 0.0
        %3564 = vst.msk [vmem:[#allocation3 + $0xa0] sm:$0xff] %vm958, 0.0
        %3565 = vst.msk [vmem:[#allocation3 + $0xa8] sm:$0xff] %vm958, 0.0
        %3566 = vst.msk [vmem:[#allocation3 + $0xb0] sm:$0xff] %vm958, 0.0
        %3567 = vst.msk [vmem:[#allocation3 + $0xb8] sm:$0xff] %vm958, 0.0
        %3568 = vst.msk [vmem:[#allocation3 + $0xc0] sm:$0xff] %vm958, 0.0
        %3569 = vst.msk [vmem:[#allocation3 + $0xc8] sm:$0xff] %vm958, 0.0
        %3570 = vst.msk [vmem:[#allocation3 + $0xd0] sm:$0xff] %vm958, 0.0
        %3571 = vst.msk [vmem:[#allocation3 + $0xd8] sm:$0xff] %vm958, 0.0
        %3572 = vst.msk [vmem:[#allocation3 + $0xe0] sm:$0xff] %vm958, 0.0
        %3573 = vst.msk [vmem:[#allocation3 + $0xe8] sm:$0xff] %vm958, 0.0
        %3574 = vst.msk [vmem:[#allocation3 + $0xf0] sm:$0xff] %vm958, 0.0
        %3575 = vst.msk [vmem:[#allocation3 + $0xf8] sm:$0xff] %vm958, 0.0
        %3576 = vst.msk [vmem:[#allocation3 + $0x100] sm:$0xff] %vm958, 0.0
        %3577 = vst.msk [vmem:[#allocation3 + $0x108] sm:$0xff] %vm958, 0.0
        %3578 = vst.msk [vmem:[#allocation3 + $0x110] sm:$0xff] %vm958, 0.0
        %v3579 = vld [vmem:[#allocation2] ss:$2 sm:$0xff]
        %s3580 = scalar_lea.vmem [#allocation2], 16
        %v3581 = vld [vmem:[%s3580] ss:$2 sm:$0x3f]
        %s3582 = scalar_lea.vmem [#allocation2], 1
        %v3583 = vld [vmem:[%s3582] ss:$2 sm:$0xff]
        %s3584 = scalar_lea.vmem [#allocation2], 17
        %v3585 = vld [vmem:[%s3584] ss:$2 sm:$0x3f]
        %v3586 = vmax.f32 %v3579, %v3583
        %v3587 = vmax.f32 %v3581, %v3585
        %s3588 = scalar_lea.vmem [#allocation2], 30
        %v3589 = vld [vmem:[%s3588] ss:$2 sm:$0xff]
        %s3590 = scalar_lea.vmem [#allocation2], 46
        %v3591 = vld [vmem:[%s3590] ss:$2 sm:$0x3f]
        %v3592 = vmax.f32 %v3586, %v3589
        %v3593 = vmax.f32 %v3587, %v3591
        %s3594 = scalar_lea.vmem [#allocation2], 31
        %v3595 = vld [vmem:[%s3594] ss:$2 sm:$0xff]
        %s3596 = scalar_lea.vmem [#allocation2], 47
        %v3597 = vld [vmem:[%s3596] ss:$2 sm:$0x3f]
        %v3598 = vmax.f32 %v3592, %v3595
        %v3599 = vmax.f32 %v3593, %v3597
        %3600 = vst.msk [vmem:[#allocation3 + $0x20] sm:$0xff] %vm958, %v3598
        %vm3601 = vcmask 259072
        %3602 = vst.msk [vmem:[#allocation3 + $0x28] sm:$0x3f] %vm3601, %v3599
        %s3603 = scalar_lea.vmem [#allocation2], 60
        %v3604 = vld [vmem:[%s3603] ss:$2 sm:$0xff]
        %s3605 = scalar_lea.vmem [#allocation2], 76
        %v3606 = vld [vmem:[%s3605] ss:$2 sm:$0x3f]
        %s3607 = scalar_lea.vmem [#allocation2], 61
        %v3608 = vld [vmem:[%s3607] ss:$2 sm:$0xff]
        %s3609 = scalar_lea.vmem [#allocation2], 77
        %v3610 = vld [vmem:[%s3609] ss:$2 sm:$0x3f]
        %v3611 = vmax.f32 %v3604, %v3608
        %v3612 = vmax.f32 %v3606, %v3610
        %s3613 = scalar_lea.vmem [#allocation2], 90
        %v3614 = vld [vmem:[%s3613] ss:$2 sm:$0xff]
        %s3615 = scalar_lea.vmem [#allocation2], 106
        %v3616 = vld [vmem:[%s3615] ss:$2 sm:$0x3f]
        %v3617 = vmax.f32 %v3611, %v3614
        %v3618 = vmax.f32 %v3612, %v3616
        %s3619 = scalar_lea.vmem [#allocation2], 91
        %v3620 = vld [vmem:[%s3619] ss:$2 sm:$0xff]
        %s3621 = scalar_lea.vmem [#allocation2], 107
        %v3622 = vld [vmem:[%s3621] ss:$2 sm:$0x3f]
        %v3623 = vmax.f32 %v3617, %v3620
        %v3624 = vmax.f32 %v3618, %v3622
        %3625 = vst.msk [vmem:[#allocation3 + $0x30] sm:$0xff] %vm958, %v3623
        %3626 = vst.msk [vmem:[#allocation3 + $0x38] sm:$0x3f] %vm3601, %v3624
        %s3627 = scalar_lea.vmem [#allocation2], 120
        %v3628 = vld [vmem:[%s3627] ss:$2 sm:$0xff]
        %s3629 = scalar_lea.vmem [#allocation2], 136
        %v3630 = vld [vmem:[%s3629] ss:$2 sm:$0x3f]
        %s3631 = scalar_lea.vmem [#allocation2], 121
        %v3632 = vld [vmem:[%s3631] ss:$2 sm:$0xff]
        %s3633 = scalar_lea.vmem [#allocation2], 137
        %v3634 = vld [vmem:[%s3633] ss:$2 sm:$0x3f]
        %v3635 = vmax.f32 %v3628, %v3632
        %v3636 = vmax.f32 %v3630, %v3634
        %s3637 = scalar_lea.vmem [#allocation2], 150
        %v3638 = vld [vmem:[%s3637] ss:$2 sm:$0xff]
        %s3639 = scalar_lea.vmem [#allocation2], 166
        %v3640 = vld [vmem:[%s3639] ss:$2 sm:$0x3f]
        %v3641 = vmax.f32 %v3635, %v3638
        %v3642 = vmax.f32 %v3636, %v3640
        %s3643 = scalar_lea.vmem [#allocation2], 151
        %v3644 = vld [vmem:[%s3643] ss:$2 sm:$0xff]
        %s3645 = scalar_lea.vmem [#allocation2], 167
        %v3646 = vld [vmem:[%s3645] ss:$2 sm:$0x3f]
        %v3647 = vmax.f32 %v3641, %v3644
        %v3648 = vmax.f32 %v3642, %v3646
        %3649 = vst.msk [vmem:[#allocation3 + $0x40] sm:$0xff] %vm958, %v3647
        %3650 = vst.msk [vmem:[#allocation3 + $0x48] sm:$0x3f] %vm3601, %v3648
        %s3651 = scalar_lea.vmem [#allocation2], 180
        %v3652 = vld [vmem:[%s3651] ss:$2 sm:$0xff]
        %s3653 = scalar_lea.vmem [#allocation2], 196
        %v3654 = vld [vmem:[%s3653] ss:$2 sm:$0x3f]
        %s3655 = scalar_lea.vmem [#allocation2], 181
        %v3656 = vld [vmem:[%s3655] ss:$2 sm:$0xff]
        %s3657 = scalar_lea.vmem [#allocation2], 197
        %v3658 = vld [vmem:[%s3657] ss:$2 sm:$0x3f]
        %v3659 = vmax.f32 %v3652, %v3656
        %v3660 = vmax.f32 %v3654, %v3658
        %s3661 = scalar_lea.vmem [#allocation2], 210
        %v3662 = vld [vmem:[%s3661] ss:$2 sm:$0xff]
        %s3663 = scalar_lea.vmem [#allocation2], 226
        %v3664 = vld [vmem:[%s3663] ss:$2 sm:$0x3f]
        %v3665 = vmax.f32 %v3659, %v3662
        %v3666 = vmax.f32 %v3660, %v3664
        %s3667 = scalar_lea.vmem [#allocation2], 211
        %v3668 = vld [vmem:[%s3667] ss:$2 sm:$0xff]
        %s3669 = scalar_lea.vmem [#allocation2], 227
        %v3670 = vld [vmem:[%s3669] ss:$2 sm:$0x3f]
        %v3671 = vmax.f32 %v3665, %v3668
        %v3672 = vmax.f32 %v3666, %v3670
        %3673 = vst.msk [vmem:[#allocation3 + $0x50] sm:$0xff] %vm958, %v3671
        %3674 = vst.msk [vmem:[#allocation3 + $0x58] sm:$0x3f] %vm3601, %v3672
        %s3675 = scalar_lea.vmem [#allocation2], 240
        %v3676 = vld [vmem:[%s3675] ss:$2 sm:$0xff]
        %s3677 = scalar_lea.vmem [#allocation2], 256
        %v3678 = vld [vmem:[%s3677] ss:$2 sm:$0x3f]
        %s3679 = scalar_lea.vmem [#allocation2], 241
        %v3680 = vld [vmem:[%s3679] ss:$2 sm:$0xff]
        %s3681 = scalar_lea.vmem [#allocation2], 257
        %v3682 = vld [vmem:[%s3681] ss:$2 sm:$0x3f]
        %v3683 = vmax.f32 %v3676, %v3680
        %v3684 = vmax.f32 %v3678, %v3682
        %s3685 = scalar_lea.vmem [#allocation2], 270
        %v3686 = vld [vmem:[%s3685] ss:$2 sm:$0xff]
        %s3687 = scalar_lea.vmem [#allocation2], 286
        %v3688 = vld [vmem:[%s3687] ss:$2 sm:$0x3f]
        %v3689 = vmax.f32 %v3683, %v3686
        %v3690 = vmax.f32 %v3684, %v3688
        %s3691 = scalar_lea.vmem [#allocation2], 271
        %v3692 = vld [vmem:[%s3691] ss:$2 sm:$0xff]
        %s3693 = scalar_lea.vmem [#allocation2], 287
        %v3694 = vld [vmem:[%s3693] ss:$2 sm:$0x3f]
        %v3695 = vmax.f32 %v3689, %v3692
        %v3696 = vmax.f32 %v3690, %v3694
        %3697 = vst.msk [vmem:[#allocation3 + $0x60] sm:$0xff] %vm958, %v3695
        %3698 = vst.msk [vmem:[#allocation3 + $0x68] sm:$0x3f] %vm3601, %v3696
        %s3699 = scalar_lea.vmem [#allocation2], 300
        %v3700 = vld [vmem:[%s3699] ss:$2 sm:$0xff]
        %s3701 = scalar_lea.vmem [#allocation2], 316
        %v3702 = vld [vmem:[%s3701] ss:$2 sm:$0x3f]
        %s3703 = scalar_lea.vmem [#allocation2], 301
        %v3704 = vld [vmem:[%s3703] ss:$2 sm:$0xff]
        %s3705 = scalar_lea.vmem [#allocation2], 317
        %v3706 = vld [vmem:[%s3705] ss:$2 sm:$0x3f]
        %v3707 = vmax.f32 %v3700, %v3704
        %v3708 = vmax.f32 %v3702, %v3706
        %s3709 = scalar_lea.vmem [#allocation2], 330
        %v3710 = vld [vmem:[%s3709] ss:$2 sm:$0xff]
        %s3711 = scalar_lea.vmem [#allocation2], 346
        %v3712 = vld [vmem:[%s3711] ss:$2 sm:$0x3f]
        %v3713 = vmax.f32 %v3707, %v3710
        %v3714 = vmax.f32 %v3708, %v3712
        %s3715 = scalar_lea.vmem [#allocation2], 331
        %v3716 = vld [vmem:[%s3715] ss:$2 sm:$0xff]
        %s3717 = scalar_lea.vmem [#allocation2], 347
        %v3718 = vld [vmem:[%s3717] ss:$2 sm:$0x3f]
        %v3719 = vmax.f32 %v3713, %v3716
        %v3720 = vmax.f32 %v3714, %v3718
        %3721 = vst.msk [vmem:[#allocation3 + $0x70] sm:$0xff] %vm958, %v3719
        %3722 = vst.msk [vmem:[#allocation3 + $0x78] sm:$0x3f] %vm3601, %v3720
        %s3723 = scalar_lea.vmem [#allocation2], 360
        %v3724 = vld [vmem:[%s3723] ss:$2 sm:$0xff]
        %s3725 = scalar_lea.vmem [#allocation2], 376
        %v3726 = vld [vmem:[%s3725] ss:$2 sm:$0x3f]
        %s3727 = scalar_lea.vmem [#allocation2], 361
        %v3728 = vld [vmem:[%s3727] ss:$2 sm:$0xff]
        %s3729 = scalar_lea.vmem [#allocation2], 377
        %v3730 = vld [vmem:[%s3729] ss:$2 sm:$0x3f]
        %v3731 = vmax.f32 %v3724, %v3728
        %v3732 = vmax.f32 %v3726, %v3730
        %s3733 = scalar_lea.vmem [#allocation2], 390
        %v3734 = vld [vmem:[%s3733] ss:$2 sm:$0xff]
        %s3735 = scalar_lea.vmem [#allocation2], 406
        %v3736 = vld [vmem:[%s3735] ss:$2 sm:$0x3f]
        %v3737 = vmax.f32 %v3731, %v3734
        %v3738 = vmax.f32 %v3732, %v3736
        %s3739 = scalar_lea.vmem [#allocation2], 391
        %v3740 = vld [vmem:[%s3739] ss:$2 sm:$0xff]
        %s3741 = scalar_lea.vmem [#allocation2], 407
        %v3742 = vld [vmem:[%s3741] ss:$2 sm:$0x3f]
        %v3743 = vmax.f32 %v3737, %v3740
        %v3744 = vmax.f32 %v3738, %v3742
        %3745 = vst.msk [vmem:[#allocation3 + $0x80] sm:$0xff] %vm958, %v3743
        %3746 = vst.msk [vmem:[#allocation3 + $0x88] sm:$0x3f] %vm3601, %v3744
        %s3747 = scalar_lea.vmem [#allocation2], 420
        %v3748 = vld [vmem:[%s3747] ss:$2 sm:$0xff]
        %s3749 = scalar_lea.vmem [#allocation2], 436
        %v3750 = vld [vmem:[%s3749] ss:$2 sm:$0x3f]
        %s3751 = scalar_lea.vmem [#allocation2], 421
        %v3752 = vld [vmem:[%s3751] ss:$2 sm:$0xff]
        %s3753 = scalar_lea.vmem [#allocation2], 437
        %v3754 = vld [vmem:[%s3753] ss:$2 sm:$0x3f]
        %v3755 = vmax.f32 %v3748, %v3752
        %v3756 = vmax.f32 %v3750, %v3754
        %s3757 = scalar_lea.vmem [#allocation2], 450
        %v3758 = vld [vmem:[%s3757] ss:$2 sm:$0xff]
        %s3759 = scalar_lea.vmem [#allocation2], 466
        %v3760 = vld [vmem:[%s3759] ss:$2 sm:$0x3f]
        %v3761 = vmax.f32 %v3755, %v3758
        %v3762 = vmax.f32 %v3756, %v3760
        %s3763 = scalar_lea.vmem [#allocation2], 451
        %v3764 = vld [vmem:[%s3763] ss:$2 sm:$0xff]
        %s3765 = scalar_lea.vmem [#allocation2], 467
        %v3766 = vld [vmem:[%s3765] ss:$2 sm:$0x3f]
        %v3767 = vmax.f32 %v3761, %v3764
        %v3768 = vmax.f32 %v3762, %v3766
        %3769 = vst.msk [vmem:[#allocation3 + $0x90] sm:$0xff] %vm958, %v3767
        %3770 = vst.msk [vmem:[#allocation3 + $0x98] sm:$0x3f] %vm3601, %v3768
        %s3771 = scalar_lea.vmem [#allocation2], 480
        %v3772 = vld [vmem:[%s3771] ss:$2 sm:$0xff]
        %s3773 = scalar_lea.vmem [#allocation2], 496
        %v3774 = vld [vmem:[%s3773] ss:$2 sm:$0x3f]
        %s3775 = scalar_lea.vmem [#allocation2], 481
        %v3776 = vld [vmem:[%s3775] ss:$2 sm:$0xff]
        %s3777 = scalar_lea.vmem [#allocation2], 497
        %v3778 = vld [vmem:[%s3777] ss:$2 sm:$0x3f]
        %v3779 = vmax.f32 %v3772, %v3776
        %v3780 = vmax.f32 %v3774, %v3778
        %s3781 = scalar_lea.vmem [#allocation2], 510
        %v3782 = vld [vmem:[%s3781] ss:$2 sm:$0xff]
        %s3783 = scalar_lea.vmem [#allocation2], 526
        %v3784 = vld [vmem:[%s3783] ss:$2 sm:$0x3f]
        %v3785 = vmax.f32 %v3779, %v3782
        %v3786 = vmax.f32 %v3780, %v3784
        %s3787 = scalar_lea.vmem [#allocation2], 511
        %v3788 = vld [vmem:[%s3787] ss:$2 sm:$0xff]
        %s3789 = scalar_lea.vmem [#allocation2], 527
        %v3790 = vld [vmem:[%s3789] ss:$2 sm:$0x3f]
        %v3791 = vmax.f32 %v3785, %v3788
        %v3792 = vmax.f32 %v3786, %v3790
        %3793 = vst.msk [vmem:[#allocation3 + $0xa0] sm:$0xff] %vm958, %v3791
        %3794 = vst.msk [vmem:[#allocation3 + $0xa8] sm:$0x3f] %vm3601, %v3792
        %s3795 = scalar_lea.vmem [#allocation2], 540
        %v3796 = vld [vmem:[%s3795] ss:$2 sm:$0xff]
        %s3797 = scalar_lea.vmem [#allocation2], 556
        %v3798 = vld [vmem:[%s3797] ss:$2 sm:$0x3f]
        %s3799 = scalar_lea.vmem [#allocation2], 541
        %v3800 = vld [vmem:[%s3799] ss:$2 sm:$0xff]
        %s3801 = scalar_lea.vmem [#allocation2], 557
        %v3802 = vld [vmem:[%s3801] ss:$2 sm:$0x3f]
        %v3803 = vmax.f32 %v3796, %v3800
        %v3804 = vmax.f32 %v3798, %v3802
        %s3805 = scalar_lea.vmem [#allocation2], 570
        %v3806 = vld [vmem:[%s3805] ss:$2 sm:$0xff]
        %s3807 = scalar_lea.vmem [#allocation2], 586
        %v3808 = vld [vmem:[%s3807] ss:$2 sm:$0x3f]
        %v3809 = vmax.f32 %v3803, %v3806
        %v3810 = vmax.f32 %v3804, %v3808
        %s3811 = scalar_lea.vmem [#allocation2], 571
        %v3812 = vld [vmem:[%s3811] ss:$2 sm:$0xff]
        %s3813 = scalar_lea.vmem [#allocation2], 587
        %v3814 = vld [vmem:[%s3813] ss:$2 sm:$0x3f]
        %v3815 = vmax.f32 %v3809, %v3812
        %v3816 = vmax.f32 %v3810, %v3814
        %3817 = vst.msk [vmem:[#allocation3 + $0xb0] sm:$0xff] %vm958, %v3815
        %3818 = vst.msk [vmem:[#allocation3 + $0xb8] sm:$0x3f] %vm3601, %v3816
        %s3819 = scalar_lea.vmem [#allocation2], 600
        %v3820 = vld [vmem:[%s3819] ss:$2 sm:$0xff]
        %s3821 = scalar_lea.vmem [#allocation2], 616
        %v3822 = vld [vmem:[%s3821] ss:$2 sm:$0x3f]
        %s3823 = scalar_lea.vmem [#allocation2], 601
        %v3824 = vld [vmem:[%s3823] ss:$2 sm:$0xff]
        %s3825 = scalar_lea.vmem [#allocation2], 617
        %v3826 = vld [vmem:[%s3825] ss:$2 sm:$0x3f]
        %v3827 = vmax.f32 %v3820, %v3824
        %v3828 = vmax.f32 %v3822, %v3826
        %s3829 = scalar_lea.vmem [#allocation2], 630
        %v3830 = vld [vmem:[%s3829] ss:$2 sm:$0xff]
        %s3831 = scalar_lea.vmem [#allocation2], 646
        %v3832 = vld [vmem:[%s3831] ss:$2 sm:$0x3f]
        %v3833 = vmax.f32 %v3827, %v3830
        %v3834 = vmax.f32 %v3828, %v3832
        %s3835 = scalar_lea.vmem [#allocation2], 631
        %v3836 = vld [vmem:[%s3835] ss:$2 sm:$0xff]
        %s3837 = scalar_lea.vmem [#allocation2], 647
        %v3838 = vld [vmem:[%s3837] ss:$2 sm:$0x3f]
        %v3839 = vmax.f32 %v3833, %v3836
        %v3840 = vmax.f32 %v3834, %v3838
        %3841 = vst.msk [vmem:[#allocation3 + $0xc0] sm:$0xff] %vm958, %v3839
        %3842 = vst.msk [vmem:[#allocation3 + $0xc8] sm:$0x3f] %vm3601, %v3840
        %s3843 = scalar_lea.vmem [#allocation2], 660
        %v3844 = vld [vmem:[%s3843] ss:$2 sm:$0xff]
        %s3845 = scalar_lea.vmem [#allocation2], 676
        %v3846 = vld [vmem:[%s3845] ss:$2 sm:$0x3f]
        %s3847 = scalar_lea.vmem [#allocation2], 661
        %v3848 = vld [vmem:[%s3847] ss:$2 sm:$0xff]
        %s3849 = scalar_lea.vmem [#allocation2], 677
        %v3850 = vld [vmem:[%s3849] ss:$2 sm:$0x3f]
        %v3851 = vmax.f32 %v3844, %v3848
        %v3852 = vmax.f32 %v3846, %v3850
        %s3853 = scalar_lea.vmem [#allocation2], 690
        %v3854 = vld [vmem:[%s3853] ss:$2 sm:$0xff]
        %s3855 = scalar_lea.vmem [#allocation2], 706
        %v3856 = vld [vmem:[%s3855] ss:$2 sm:$0x3f]
        %v3857 = vmax.f32 %v3851, %v3854
        %v3858 = vmax.f32 %v3852, %v3856
        %s3859 = scalar_lea.vmem [#allocation2], 691
        %v3860 = vld [vmem:[%s3859] ss:$2 sm:$0xff]
        %s3861 = scalar_lea.vmem [#allocation2], 707
        %v3862 = vld [vmem:[%s3861] ss:$2 sm:$0x3f]
        %v3863 = vmax.f32 %v3857, %v3860
        %v3864 = vmax.f32 %v3858, %v3862
        %3865 = vst.msk [vmem:[#allocation3 + $0xd0] sm:$0xff] %vm958, %v3863
        %3866 = vst.msk [vmem:[#allocation3 + $0xd8] sm:$0x3f] %vm3601, %v3864
        %s3867 = scalar_lea.vmem [#allocation2], 720
        %v3868 = vld [vmem:[%s3867] ss:$2 sm:$0xff]
        %s3869 = scalar_lea.vmem [#allocation2], 736
        %v3870 = vld [vmem:[%s3869] ss:$2 sm:$0x3f]
        %s3871 = scalar_lea.vmem [#allocation2], 721
        %v3872 = vld [vmem:[%s3871] ss:$2 sm:$0xff]
        %s3873 = scalar_lea.vmem [#allocation2], 737
        %v3874 = vld [vmem:[%s3873] ss:$2 sm:$0x3f]
        %v3875 = vmax.f32 %v3868, %v3872
        %v3876 = vmax.f32 %v3870, %v3874
        %s3877 = scalar_lea.vmem [#allocation2], 750
        %v3878 = vld [vmem:[%s3877] ss:$2 sm:$0xff]
        %s3879 = scalar_lea.vmem [#allocation2], 766
        %v3880 = vld [vmem:[%s3879] ss:$2 sm:$0x3f]
        %v3881 = vmax.f32 %v3875, %v3878
        %v3882 = vmax.f32 %v3876, %v3880
        %s3883 = scalar_lea.vmem [#allocation2], 751
        %v3884 = vld [vmem:[%s3883] ss:$2 sm:$0xff]
        %s3885 = scalar_lea.vmem [#allocation2], 767
        %v3886 = vld [vmem:[%s3885] ss:$2 sm:$0x3f]
        %v3887 = vmax.f32 %v3881, %v3884
        %v3888 = vmax.f32 %v3882, %v3886
        %3889 = vst.msk [vmem:[#allocation3 + $0xe0] sm:$0xff] %vm958, %v3887
        %3890 = vst.msk [vmem:[#allocation3 + $0xe8] sm:$0x3f] %vm3601, %v3888
        %s3891 = scalar_lea.vmem [#allocation2], 780
        %v3892 = vld [vmem:[%s3891] ss:$2 sm:$0xff]
        %s3893 = scalar_lea.vmem [#allocation2], 796
        %v3894 = vld [vmem:[%s3893] ss:$2 sm:$0x3f]
        %s3895 = scalar_lea.vmem [#allocation2], 781
        %v3896 = vld [vmem:[%s3895] ss:$2 sm:$0xff]
        %s3897 = scalar_lea.vmem [#allocation2], 797
        %v3898 = vld [vmem:[%s3897] ss:$2 sm:$0x3f]
        %v3899 = vmax.f32 %v3892, %v3896
        %v3900 = vmax.f32 %v3894, %v3898
        %s3901 = scalar_lea.vmem [#allocation2], 810
        %v3902 = vld [vmem:[%s3901] ss:$2 sm:$0xff]
        %s3903 = scalar_lea.vmem [#allocation2], 826
        %v3904 = vld [vmem:[%s3903] ss:$2 sm:$0x3f]
        %v3905 = vmax.f32 %v3899, %v3902
        %v3906 = vmax.f32 %v3900, %v3904
        %s3907 = scalar_lea.vmem [#allocation2], 811
        %v3908 = vld [vmem:[%s3907] ss:$2 sm:$0xff]
        %s3909 = scalar_lea.vmem [#allocation2], 827
        %v3910 = vld [vmem:[%s3909] ss:$2 sm:$0x3f]
        %v3911 = vmax.f32 %v3905, %v3908
        %v3912 = vmax.f32 %v3906, %v3910
        %3913 = vst.msk [vmem:[#allocation3 + $0xf0] sm:$0xff] %vm958, %v3911
        %3914 = vst.msk [vmem:[#allocation3 + $0xf8] sm:$0x3f] %vm3601, %v3912
        %v3915 = vld [vmem:[#allocation3 + $0xf] sm:$0xff]
        %v3916 = vld [vmem:[#allocation3 + $0x17] sm:$0xff]
        %v3917 = vld [vmem:[#allocation3 + $0x1f] sm:$0xff]
        %v3918 = vld [vmem:[#allocation3 + $0x27] sm:$0xff]
        %v3919 = vld [vmem:[#allocation3 + $0x2f] sm:$0xff]
        %v3920 = vld [vmem:[#allocation3 + $0x37] sm:$0xff]
        %v3921 = vld [vmem:[#allocation3 + $0x3f] sm:$0xff]
        %v3922 = vld [vmem:[#allocation3 + $0x47] sm:$0xff]
        %v3923 = vld [vmem:[#allocation3 + $0x4f] sm:$0xff]
        %v3924 = vld [vmem:[#allocation3 + $0x57] sm:$0xff]
        %v3925 = vld [vmem:[#allocation3 + $0x5f] sm:$0xff]
        %v3926 = vld [vmem:[#allocation3 + $0x67] sm:$0xff]
        %v3927 = vld [vmem:[#allocation3 + $0x6f] sm:$0xff]
        %v3928 = vld [vmem:[#allocation3 + $0x77] sm:$0xff]
        %v3929 = vld [vmem:[#allocation3 + $0x7f] sm:$0xff]
        %v3930 = vld [vmem:[#allocation3 + $0x87] sm:$0xff]
        %v3931 = vld [vmem:[#allocation3 + $0x8f] sm:$0xff]
        %v3932 = vld [vmem:[#allocation3 + $0x97] sm:$0xff]
        %v3933 = vld [vmem:[#allocation3 + $0x9f] sm:$0xff]
        %v3934 = vld [vmem:[#allocation3 + $0xa7] sm:$0xff]
        %v3935 = vld [vmem:[#allocation3 + $0xaf] sm:$0xff]
        %v3936 = vld [vmem:[#allocation3 + $0xb7] sm:$0xff]
        %v3937 = vld [vmem:[#allocation3 + $0xbf] sm:$0xff]
        %v3938 = vld [vmem:[#allocation3 + $0xc7] sm:$0xff]
        %v3939 = vld [vmem:[#allocation3 + $0xcf] sm:$0xff]
        %v3940 = vld [vmem:[#allocation3 + $0xd7] sm:$0xff]
        %v3941 = vld [vmem:[#allocation3 + $0xdf] sm:$0xff]
        %v3942 = vld [vmem:[#allocation3 + $0xe7] sm:$0xff]
        %v3943 = vpack.c.bf16 %v3916, %v3915
        %v3944 = vpack.c.bf16 %v3918, %v3917
        %v3945 = vpack.c.bf16 %v3920, %v3919
        %v3946 = vpack.c.bf16 %v3922, %v3921
        %v3947 = vpack.c.bf16 %v3924, %v3923
        %v3948 = vpack.c.bf16 %v3926, %v3925
        %v3949 = vpack.c.bf16 %v3928, %v3927
        %v3950 = vpack.c.bf16 %v3930, %v3929
        %v3951 = vpack.c.bf16 %v3932, %v3931
        %v3952 = vpack.c.bf16 %v3934, %v3933
        %v3953 = vpack.c.bf16 %v3936, %v3935
        %v3954 = vpack.c.bf16 %v3938, %v3937
        %v3955 = vpack.c.bf16 %v3940, %v3939
        %v3956 = vpack.c.bf16 %v3942, %v3941
        %v3971 = vunpack.c.l.b16 %v3943
        %v3972 = vunpack.c.h.b16 %v3943
        %v3973 = vunpack.c.l.b16 %v3944
        %v3974 = vunpack.c.h.b16 %v3944
        %v3975 = vunpack.c.l.b16 %v3945
        %v3976 = vunpack.c.h.b16 %v3945
        %v3977 = vunpack.c.l.b16 %v3946
        %v3978 = vunpack.c.h.b16 %v3946
        %v3979 = vunpack.c.l.b16 %v3947
        %v3980 = vunpack.c.h.b16 %v3947
        %v3981 = vunpack.c.l.b16 %v3948
        %v3982 = vunpack.c.h.b16 %v3948
        %v3983 = vunpack.c.l.b16 %v3949
        %v3984 = vunpack.c.h.b16 %v3949
        %v3985 = vunpack.c.l.b16 %v3950
        %v3986 = vunpack.c.h.b16 %v3950
        %v3987 = vunpack.c.l.b16 %v3951
        %v3988 = vunpack.c.h.b16 %v3951
        %v3989 = vunpack.c.l.b16 %v3952
        %v3990 = vunpack.c.h.b16 %v3952
        %v3991 = vunpack.c.l.b16 %v3953
        %v3992 = vunpack.c.h.b16 %v3953
        %v3993 = vunpack.c.l.b16 %v3954
        %v3994 = vunpack.c.h.b16 %v3954
        %v3995 = vunpack.c.l.b16 %v3955
        %v3996 = vunpack.c.h.b16 %v3955
        %v3997 = vunpack.c.l.b16 %v3956
        %v3998 = vunpack.c.h.b16 %v3956
        %v3999 = vpack.c.b16 %v3971, %v3971
        %v4000 = vpack.c.b16 %v3972, %v3972
        %v4001 = vpack.c.b16 %v3973, %v3973
        %v4002 = vpack.c.b16 %v3974, %v3974
        %v4003 = vpack.c.b16 %v3975, %v3975
        %v4004 = vpack.c.b16 %v3976, %v3976
        %v4005 = vpack.c.b16 %v3977, %v3977
        %v4006 = vpack.c.b16 %v3978, %v3978
        %v4007 = vpack.c.b16 %v3979, %v3979
        %v4008 = vpack.c.b16 %v3980, %v3980
        %v4009 = vpack.c.b16 %v3981, %v3981
        %v4010 = vpack.c.b16 %v3982, %v3982
        %v4011 = vpack.c.b16 %v3983, %v3983
        %v4012 = vpack.c.b16 %v3984, %v3984
        %v4013 = vpack.c.b16 %v3985, %v3985
        %v4014 = vpack.c.b16 %v3986, %v3986
        %v4015 = vpack.c.b16 %v3987, %v3987
        %v4016 = vpack.c.b16 %v3988, %v3988
        %v4017 = vpack.c.b16 %v3989, %v3989
        %v4018 = vpack.c.b16 %v3990, %v3990
        %v4019 = vpack.c.b16 %v3991, %v3991
        %v4020 = vpack.c.b16 %v3992, %v3992
        %v4021 = vpack.c.b16 %v3993, %v3993
        %v4022 = vpack.c.b16 %v3994, %v3994
        %v4023 = vpack.c.b16 %v3995, %v3995
        %v4024 = vpack.c.b16 %v3996, %v3996
        %v4025 = vpack.c.b16 %v3997, %v3997
        %v4026 = vpack.c.b16 %v3998, %v3998
        %vm4055 = vcmask 257024
        %4056 = vst.msk [vmem:[#allocation4] sm:$0xf] %vm4055, %v3999
        %4057 = vst.msk [vmem:[#allocation4 + $0xc] sm:$0xf] %vm4055, %v4000
        %4058 = vst.msk [vmem:[#allocation4 + $0x18] sm:$0xf] %vm4055, %v4001
        %4059 = vst.msk [vmem:[#allocation4 + $0x24] sm:$0xf] %vm4055, %v4002
        %4060 = vst.msk [vmem:[#allocation4 + $0x30] sm:$0xf] %vm4055, %v4003
        %4061 = vst.msk [vmem:[#allocation4 + $0x3c] sm:$0xf] %vm4055, %v4004
        %4062 = vst.msk [vmem:[#allocation4 + $0x48] sm:$0xf] %vm4055, %v4005
        %4063 = vst.msk [vmem:[#allocation4 + $0x54] sm:$0xf] %vm4055, %v4006
        %4064 = vst.msk [vmem:[#allocation4 + $0x60] sm:$0xf] %vm4055, %v4007
        %4065 = vst.msk [vmem:[#allocation4 + $0x6c] sm:$0xf] %vm4055, %v4008
        %4066 = vst.msk [vmem:[#allocation4 + $0x78] sm:$0xf] %vm4055, %v4009
        %4067 = vst.msk [vmem:[#allocation4 + $0x84] sm:$0xf] %vm4055, %v4010
        %4068 = vst.msk [vmem:[#allocation4 + $0x90] sm:$0xf] %vm4055, %v4011
        %4069 = vst.msk [vmem:[#allocation4 + $0x9c] sm:$0xf] %vm4055, %v4012
        %4070 = vst.msk [vmem:[#allocation4 + $0xa8] sm:$0xf] %vm4055, %v4013
        %4071 = vst.msk [vmem:[#allocation4 + $0xb4] sm:$0xf] %vm4055, %v4014
        %4072 = vst.msk [vmem:[#allocation4 + $0xc0] sm:$0xf] %vm4055, %v4015
        %4073 = vst.msk [vmem:[#allocation4 + $0xcc] sm:$0xf] %vm4055, %v4016
        %4074 = vst.msk [vmem:[#allocation4 + $0xd8] sm:$0xf] %vm4055, %v4017
        %4075 = vst.msk [vmem:[#allocation4 + $0xe4] sm:$0xf] %vm4055, %v4018
        %4076 = vst.msk [vmem:[#allocation4 + $0xf0] sm:$0xf] %vm4055, %v4019
        %4077 = vst.msk [vmem:[#allocation4 + $0xfc] sm:$0xf] %vm4055, %v4020
        %4078 = vst.msk [vmem:[#allocation4 + $0x108] sm:$0xf] %vm4055, %v4021
        %4079 = vst.msk [vmem:[#allocation4 + $0x114] sm:$0xf] %vm4055, %v4022
        %4080 = vst.msk [vmem:[#allocation4 + $0x120] sm:$0xf] %vm4055, %v4023
        %4081 = vst.msk [vmem:[#allocation4 + $0x12c] sm:$0xf] %vm4055, %v4024
        %4082 = vst.msk [vmem:[#allocation4 + $0x138] sm:$0xf] %vm4055, %v4025
        %4083 = vst.msk [vmem:[#allocation4 + $0x144] sm:$0xf] %vm4055, %v4026
        %v4084 = vld [vmem:[#allocation3 + $0x10] sm:$0xff]
        %v4085 = vld [vmem:[#allocation3 + $0x18] sm:$0xff]
        %v4086 = vld [vmem:[#allocation3 + $0x20] sm:$0xff]
        %v4087 = vld [vmem:[#allocation3 + $0x28] sm:$0xff]
        %v4088 = vld [vmem:[#allocation3 + $0x30] sm:$0xff]
        %v4089 = vld [vmem:[#allocation3 + $0x38] sm:$0xff]
        %v4090 = vld [vmem:[#allocation3 + $0x40] sm:$0xff]
        %v4091 = vld [vmem:[#allocation3 + $0x48] sm:$0xff]
        %v4092 = vld [vmem:[#allocation3 + $0x50] sm:$0xff]
        %v4093 = vld [vmem:[#allocation3 + $0x58] sm:$0xff]
        %v4094 = vld [vmem:[#allocation3 + $0x60] sm:$0xff]
        %v4095 = vld [vmem:[#allocation3 + $0x68] sm:$0xff]
        %v4096 = vld [vmem:[#allocation3 + $0x70] sm:$0xff]
        %v4097 = vld [vmem:[#allocation3 + $0x78] sm:$0xff]
        %v4098 = vld [vmem:[#allocation3 + $0x80] sm:$0xff]
        %v4099 = vld [vmem:[#allocation3 + $0x88] sm:$0xff]
        %v4100 = vld [vmem:[#allocation3 + $0x90] sm:$0xff]
        %v4101 = vld [vmem:[#allocation3 + $0x98] sm:$0xff]
        %v4102 = vld [vmem:[#allocation3 + $0xa0] sm:$0xff]
        %v4103 = vld [vmem:[#allocation3 + $0xa8] sm:$0xff]
        %v4104 = vld [vmem:[#allocation3 + $0xb0] sm:$0xff]
        %v4105 = vld [vmem:[#allocation3 + $0xb8] sm:$0xff]
        %v4106 = vld [vmem:[#allocation3 + $0xc0] sm:$0xff]
        %v4107 = vld [vmem:[#allocation3 + $0xc8] sm:$0xff]
        %v4108 = vld [vmem:[#allocation3 + $0xd0] sm:$0xff]
        %v4109 = vld [vmem:[#allocation3 + $0xd8] sm:$0xff]
        %v4110 = vld [vmem:[#allocation3 + $0xe0] sm:$0xff]
        %v4111 = vld [vmem:[#allocation3 + $0xe8] sm:$0xff]
        %v4112 = vpack.c.bf16 %v4085, %v4084
        %v4113 = vpack.c.bf16 %v4087, %v4086
        %v4114 = vpack.c.bf16 %v4089, %v4088
        %v4115 = vpack.c.bf16 %v4091, %v4090
        %v4116 = vpack.c.bf16 %v4093, %v4092
        %v4117 = vpack.c.bf16 %v4095, %v4094
        %v4118 = vpack.c.bf16 %v4097, %v4096
        %v4119 = vpack.c.bf16 %v4099, %v4098
        %v4120 = vpack.c.bf16 %v4101, %v4100
        %v4121 = vpack.c.bf16 %v4103, %v4102
        %v4122 = vpack.c.bf16 %v4105, %v4104
        %v4123 = vpack.c.bf16 %v4107, %v4106
        %v4124 = vpack.c.bf16 %v4109, %v4108
        %v4125 = vpack.c.bf16 %v4111, %v4110
        %v4140 = vunpack.c.l.b16 %v4112
        %v4141 = vunpack.c.h.b16 %v4112
        %v4142 = vunpack.c.l.b16 %v4113
        %v4143 = vunpack.c.h.b16 %v4113
        %v4144 = vunpack.c.l.b16 %v4114
        %v4145 = vunpack.c.h.b16 %v4114
        %v4146 = vunpack.c.l.b16 %v4115
        %v4147 = vunpack.c.h.b16 %v4115
        %v4148 = vunpack.c.l.b16 %v4116
        %v4149 = vunpack.c.h.b16 %v4116
        %v4150 = vunpack.c.l.b16 %v4117
        %v4151 = vunpack.c.h.b16 %v4117
        %v4152 = vunpack.c.l.b16 %v4118
        %v4153 = vunpack.c.h.b16 %v4118
        %v4154 = vunpack.c.l.b16 %v4119
        %v4155 = vunpack.c.h.b16 %v4119
        %v4156 = vunpack.c.l.b16 %v4120
        %v4157 = vunpack.c.h.b16 %v4120
        %v4158 = vunpack.c.l.b16 %v4121
        %v4159 = vunpack.c.h.b16 %v4121
        %v4160 = vunpack.c.l.b16 %v4122
        %v4161 = vunpack.c.h.b16 %v4122
        %v4162 = vunpack.c.l.b16 %v4123
        %v4163 = vunpack.c.h.b16 %v4123
        %v4164 = vunpack.c.l.b16 %v4124
        %v4165 = vunpack.c.h.b16 %v4124
        %v4166 = vunpack.c.l.b16 %v4125
        %v4167 = vunpack.c.h.b16 %v4125
        %v4168 = vpack.c.b16 %v4140, %v4140
        %v4169 = vpack.c.b16 %v4141, %v4141
        %v4170 = vpack.c.b16 %v4142, %v4142
        %v4171 = vpack.c.b16 %v4143, %v4143
        %v4172 = vpack.c.b16 %v4144, %v4144
        %v4173 = vpack.c.b16 %v4145, %v4145
        %v4174 = vpack.c.b16 %v4146, %v4146
        %v4175 = vpack.c.b16 %v4147, %v4147
        %v4176 = vpack.c.b16 %v4148, %v4148
        %v4177 = vpack.c.b16 %v4149, %v4149
        %v4178 = vpack.c.b16 %v4150, %v4150
        %v4179 = vpack.c.b16 %v4151, %v4151
        %v4180 = vpack.c.b16 %v4152, %v4152
        %v4181 = vpack.c.b16 %v4153, %v4153
        %v4182 = vpack.c.b16 %v4154, %v4154
        %v4183 = vpack.c.b16 %v4155, %v4155
        %v4184 = vpack.c.b16 %v4156, %v4156
        %v4185 = vpack.c.b16 %v4157, %v4157
        %v4186 = vpack.c.b16 %v4158, %v4158
        %v4187 = vpack.c.b16 %v4159, %v4159
        %v4188 = vpack.c.b16 %v4160, %v4160
        %v4189 = vpack.c.b16 %v4161, %v4161
        %v4190 = vpack.c.b16 %v4162, %v4162
        %v4191 = vpack.c.b16 %v4163, %v4163
        %v4192 = vpack.c.b16 %v4164, %v4164
        %v4193 = vpack.c.b16 %v4165, %v4165
        %v4194 = vpack.c.b16 %v4166, %v4166
        %v4195 = vpack.c.b16 %v4167, %v4167
        %4196 = vrot.lane.b32.xlu0 %v4168, 32
        %v4197 = vpop.permute.xlu0 %4196
        %4198 = vrot.lane.b32.xlu0 %v4169, 32
        %v4199 = vpop.permute.xlu0 %4198
        %4200 = vrot.lane.b32.xlu0 %v4170, 32
        %v4201 = vpop.permute.xlu0 %4200
        %4202 = vrot.lane.b32.xlu0 %v4171, 32
        %v4203 = vpop.permute.xlu0 %4202
        %4204 = vrot.lane.b32.xlu0 %v4172, 32
        %v4205 = vpop.permute.xlu0 %4204
        %4206 = vrot.lane.b32.xlu0 %v4173, 32
        %v4207 = vpop.permute.xlu0 %4206
        %4208 = vrot.lane.b32.xlu0 %v4174, 32
        %v4209 = vpop.permute.xlu0 %4208
        %4210 = vrot.lane.b32.xlu0 %v4175, 32
        %v4211 = vpop.permute.xlu0 %4210
        %4212 = vrot.lane.b32.xlu0 %v4176, 32
        %v4213 = vpop.permute.xlu0 %4212
        %4214 = vrot.lane.b32.xlu0 %v4177, 32
        %v4215 = vpop.permute.xlu0 %4214
        %4216 = vrot.lane.b32.xlu0 %v4178, 32
        %v4217 = vpop.permute.xlu0 %4216
        %4218 = vrot.lane.b32.xlu0 %v4179, 32
        %v4219 = vpop.permute.xlu0 %4218
        %4220 = vrot.lane.b32.xlu0 %v4180, 32
        %v4221 = vpop.permute.xlu0 %4220
        %4222 = vrot.lane.b32.xlu0 %v4181, 32
        %v4223 = vpop.permute.xlu0 %4222
        %4224 = vrot.lane.b32.xlu0 %v4182, 32
        %v4225 = vpop.permute.xlu0 %4224
        %4226 = vrot.lane.b32.xlu0 %v4183, 32
        %v4227 = vpop.permute.xlu0 %4226
        %4228 = vrot.lane.b32.xlu0 %v4184, 32
        %v4229 = vpop.permute.xlu0 %4228
        %4230 = vrot.lane.b32.xlu0 %v4185, 32
        %v4231 = vpop.permute.xlu0 %4230
        %4232 = vrot.lane.b32.xlu0 %v4186, 32
        %v4233 = vpop.permute.xlu0 %4232
        %4234 = vrot.lane.b32.xlu0 %v4187, 32
        %v4235 = vpop.permute.xlu0 %4234
        %4236 = vrot.lane.b32.xlu0 %v4188, 32
        %v4237 = vpop.permute.xlu0 %4236
        %4238 = vrot.lane.b32.xlu0 %v4189, 32
        %v4239 = vpop.permute.xlu0 %4238
        %4240 = vrot.lane.b32.xlu0 %v4190, 32
        %v4241 = vpop.permute.xlu0 %4240
        %4242 = vrot.lane.b32.xlu0 %v4191, 32
        %v4243 = vpop.permute.xlu0 %4242
        %4244 = vrot.lane.b32.xlu0 %v4192, 32
        %v4245 = vpop.permute.xlu0 %4244
        %4246 = vrot.lane.b32.xlu0 %v4193, 32
        %v4247 = vpop.permute.xlu0 %4246
        %4248 = vrot.lane.b32.xlu0 %v4194, 32
        %v4249 = vpop.permute.xlu0 %4248
        %4250 = vrot.lane.b32.xlu0 %v4195, 32
        %v4251 = vpop.permute.xlu0 %4250
        %vm4280 = vcmask 519424
        %4281 = vst.msk [vmem:[#allocation4] sm:$0xf] %vm4280, %v4197
        %4282 = vst.msk [vmem:[#allocation4 + $0xc] sm:$0xf] %vm4280, %v4199
        %4283 = vst.msk [vmem:[#allocation4 + $0x18] sm:$0xf] %vm4280, %v4201
        %4284 = vst.msk [vmem:[#allocation4 + $0x24] sm:$0xf] %vm4280, %v4203
        %4285 = vst.msk [vmem:[#allocation4 + $0x30] sm:$0xf] %vm4280, %v4205
        %4286 = vst.msk [vmem:[#allocation4 + $0x3c] sm:$0xf] %vm4280, %v4207
        %4287 = vst.msk [vmem:[#allocation4 + $0x48] sm:$0xf] %vm4280, %v4209
        %4288 = vst.msk [vmem:[#allocation4 + $0x54] sm:$0xf] %vm4280, %v4211
        %4289 = vst.msk [vmem:[#allocation4 + $0x60] sm:$0xf] %vm4280, %v4213
        %4290 = vst.msk [vmem:[#allocation4 + $0x6c] sm:$0xf] %vm4280, %v4215
        %4291 = vst.msk [vmem:[#allocation4 + $0x78] sm:$0xf] %vm4280, %v4217
        %4292 = vst.msk [vmem:[#allocation4 + $0x84] sm:$0xf] %vm4280, %v4219
        %4293 = vst.msk [vmem:[#allocation4 + $0x90] sm:$0xf] %vm4280, %v4221
        %4294 = vst.msk [vmem:[#allocation4 + $0x9c] sm:$0xf] %vm4280, %v4223
        %4295 = vst.msk [vmem:[#allocation4 + $0xa8] sm:$0xf] %vm4280, %v4225
        %4296 = vst.msk [vmem:[#allocation4 + $0xb4] sm:$0xf] %vm4280, %v4227
        %4297 = vst.msk [vmem:[#allocation4 + $0xc0] sm:$0xf] %vm4280, %v4229
        %4298 = vst.msk [vmem:[#allocation4 + $0xcc] sm:$0xf] %vm4280, %v4231
        %4299 = vst.msk [vmem:[#allocation4 + $0xd8] sm:$0xf] %vm4280, %v4233
        %4300 = vst.msk [vmem:[#allocation4 + $0xe4] sm:$0xf] %vm4280, %v4235
        %4301 = vst.msk [vmem:[#allocation4 + $0xf0] sm:$0xf] %vm4280, %v4237
        %4302 = vst.msk [vmem:[#allocation4 + $0xfc] sm:$0xf] %vm4280, %v4239
        %4303 = vst.msk [vmem:[#allocation4 + $0x108] sm:$0xf] %vm4280, %v4241
        %4304 = vst.msk [vmem:[#allocation4 + $0x114] sm:$0xf] %vm4280, %v4243
        %4305 = vst.msk [vmem:[#allocation4 + $0x120] sm:$0xf] %vm4280, %v4245
        %4306 = vst.msk [vmem:[#allocation4 + $0x12c] sm:$0xf] %vm4280, %v4247
        %4307 = vst.msk [vmem:[#allocation4 + $0x138] sm:$0xf] %vm4280, %v4249
        %4308 = vst.msk [vmem:[#allocation4 + $0x144] sm:$0xf] %vm4280, %v4251
        %v4309 = vld [vmem:[#allocation3 + $0x11] sm:$0xff]
        %v4310 = vld [vmem:[#allocation3 + $0x19] sm:$0xff]
        %v4311 = vld [vmem:[#allocation3 + $0x21] sm:$0xff]
        %v4312 = vld [vmem:[#allocation3 + $0x29] sm:$0xff]
        %v4313 = vld [vmem:[#allocation3 + $0x31] sm:$0xff]
        %v4314 = vld [vmem:[#allocation3 + $0x39] sm:$0xff]
        %v4315 = vld [vmem:[#allocation3 + $0x41] sm:$0xff]
        %v4316 = vld [vmem:[#allocation3 + $0x49] sm:$0xff]
        %v4317 = vld [vmem:[#allocation3 + $0x51] sm:$0xff]
        %v4318 = vld [vmem:[#allocation3 + $0x59] sm:$0xff]
        %v4319 = vld [vmem:[#allocation3 + $0x61] sm:$0xff]
        %v4320 = vld [vmem:[#allocation3 + $0x69] sm:$0xff]
        %v4321 = vld [vmem:[#allocation3 + $0x71] sm:$0xff]
        %v4322 = vld [vmem:[#allocation3 + $0x79] sm:$0xff]
        %v4323 = vld [vmem:[#allocation3 + $0x81] sm:$0xff]
        %v4324 = vld [vmem:[#allocation3 + $0x89] sm:$0xff]
        %v4325 = vld [vmem:[#allocation3 + $0x91] sm:$0xff]
        %v4326 = vld [vmem:[#allocation3 + $0x99] sm:$0xff]
        %v4327 = vld [vmem:[#allocation3 + $0xa1] sm:$0xff]
        %v4328 = vld [vmem:[#allocation3 + $0xa9] sm:$0xff]
        %v4329 = vld [vmem:[#allocation3 + $0xb1] sm:$0xff]
        %v4330 = vld [vmem:[#allocation3 + $0xb9] sm:$0xff]
        %v4331 = vld [vmem:[#allocation3 + $0xc1] sm:$0xff]
        %v4332 = vld [vmem:[#allocation3 + $0xc9] sm:$0xff]
        %v4333 = vld [vmem:[#allocation3 + $0xd1] sm:$0xff]
        %v4334 = vld [vmem:[#allocation3 + $0xd9] sm:$0xff]
        %v4335 = vld [vmem:[#allocation3 + $0xe1] sm:$0xff]
        %v4336 = vld [vmem:[#allocation3 + $0xe9] sm:$0xff]
        %v4337 = vpack.c.bf16 %v4310, %v4309
        %v4338 = vpack.c.bf16 %v4312, %v4311
        %v4339 = vpack.c.bf16 %v4314, %v4313
        %v4340 = vpack.c.bf16 %v4316, %v4315
        %v4341 = vpack.c.bf16 %v4318, %v4317
        %v4342 = vpack.c.bf16 %v4320, %v4319
        %v4343 = vpack.c.bf16 %v4322, %v4321
        %v4344 = vpack.c.bf16 %v4324, %v4323
        %v4345 = vpack.c.bf16 %v4326, %v4325
        %v4346 = vpack.c.bf16 %v4328, %v4327
        %v4347 = vpack.c.bf16 %v4330, %v4329
        %v4348 = vpack.c.bf16 %v4332, %v4331
        %v4349 = vpack.c.bf16 %v4334, %v4333
        %v4350 = vpack.c.bf16 %v4336, %v4335
        %v4365 = vunpack.c.l.b16 %v4337
        %v4366 = vunpack.c.h.b16 %v4337
        %v4367 = vunpack.c.l.b16 %v4338
        %v4368 = vunpack.c.h.b16 %v4338
        %v4369 = vunpack.c.l.b16 %v4339
        %v4370 = vunpack.c.h.b16 %v4339
        %v4371 = vunpack.c.l.b16 %v4340
        %v4372 = vunpack.c.h.b16 %v4340
        %v4373 = vunpack.c.l.b16 %v4341
        %v4374 = vunpack.c.h.b16 %v4341
        %v4375 = vunpack.c.l.b16 %v4342
        %v4376 = vunpack.c.h.b16 %v4342
        %v4377 = vunpack.c.l.b16 %v4343
        %v4378 = vunpack.c.h.b16 %v4343
        %v4379 = vunpack.c.l.b16 %v4344
        %v4380 = vunpack.c.h.b16 %v4344
        %v4381 = vunpack.c.l.b16 %v4345
        %v4382 = vunpack.c.h.b16 %v4345
        %v4383 = vunpack.c.l.b16 %v4346
        %v4384 = vunpack.c.h.b16 %v4346
        %v4385 = vunpack.c.l.b16 %v4347
        %v4386 = vunpack.c.h.b16 %v4347
        %v4387 = vunpack.c.l.b16 %v4348
        %v4388 = vunpack.c.h.b16 %v4348
        %v4389 = vunpack.c.l.b16 %v4349
        %v4390 = vunpack.c.h.b16 %v4349
        %v4391 = vunpack.c.l.b16 %v4350
        %v4392 = vunpack.c.h.b16 %v4350
        %v4393 = vpack.c.b16 %v4365, %v4365
        %v4394 = vpack.c.b16 %v4366, %v4366
        %v4395 = vpack.c.b16 %v4367, %v4367
        %v4396 = vpack.c.b16 %v4368, %v4368
        %v4397 = vpack.c.b16 %v4369, %v4369
        %v4398 = vpack.c.b16 %v4370, %v4370
        %v4399 = vpack.c.b16 %v4371, %v4371
        %v4400 = vpack.c.b16 %v4372, %v4372
        %v4401 = vpack.c.b16 %v4373, %v4373
        %v4402 = vpack.c.b16 %v4374, %v4374
        %v4403 = vpack.c.b16 %v4375, %v4375
        %v4404 = vpack.c.b16 %v4376, %v4376
        %v4405 = vpack.c.b16 %v4377, %v4377
        %v4406 = vpack.c.b16 %v4378, %v4378
        %v4407 = vpack.c.b16 %v4379, %v4379
        %v4408 = vpack.c.b16 %v4380, %v4380
        %v4409 = vpack.c.b16 %v4381, %v4381
        %v4410 = vpack.c.b16 %v4382, %v4382
        %v4411 = vpack.c.b16 %v4383, %v4383
        %v4412 = vpack.c.b16 %v4384, %v4384
        %v4413 = vpack.c.b16 %v4385, %v4385
        %v4414 = vpack.c.b16 %v4386, %v4386
        %v4415 = vpack.c.b16 %v4387, %v4387
        %v4416 = vpack.c.b16 %v4388, %v4388
        %v4417 = vpack.c.b16 %v4389, %v4389
        %v4418 = vpack.c.b16 %v4390, %v4390
        %v4419 = vpack.c.b16 %v4391, %v4391
        %v4420 = vpack.c.b16 %v4392, %v4392
        %4421 = vrot.lane.b32.xlu0 %v4393, 64
        %v4422 = vpop.permute.xlu0 %4421
        %4423 = vrot.lane.b32.xlu0 %v4394, 64
        %v4424 = vpop.permute.xlu0 %4423
        %4425 = vrot.lane.b32.xlu0 %v4395, 64
        %v4426 = vpop.permute.xlu0 %4425
        %4427 = vrot.lane.b32.xlu0 %v4396, 64
        %v4428 = vpop.permute.xlu0 %4427
        %4429 = vrot.lane.b32.xlu0 %v4397, 64
        %v4430 = vpop.permute.xlu0 %4429
        %4431 = vrot.lane.b32.xlu0 %v4398, 64
        %v4432 = vpop.permute.xlu0 %4431
        %4433 = vrot.lane.b32.xlu0 %v4399, 64
        %v4434 = vpop.permute.xlu0 %4433
        %4435 = vrot.lane.b32.xlu0 %v4400, 64
        %v4436 = vpop.permute.xlu0 %4435
        %4437 = vrot.lane.b32.xlu0 %v4401, 64
        %v4438 = vpop.permute.xlu0 %4437
        %4439 = vrot.lane.b32.xlu0 %v4402, 64
        %v4440 = vpop.permute.xlu0 %4439
        %4441 = vrot.lane.b32.xlu0 %v4403, 64
        %v4442 = vpop.permute.xlu0 %4441
        %4443 = vrot.lane.b32.xlu0 %v4404, 64
        %v4444 = vpop.permute.xlu0 %4443
        %4445 = vrot.lane.b32.xlu0 %v4405, 64
        %v4446 = vpop.permute.xlu0 %4445
        %4447 = vrot.lane.b32.xlu0 %v4406, 64
        %v4448 = vpop.permute.xlu0 %4447
        %4449 = vrot.lane.b32.xlu0 %v4407, 64
        %v4450 = vpop.permute.xlu0 %4449
        %4451 = vrot.lane.b32.xlu0 %v4408, 64
        %v4452 = vpop.permute.xlu0 %4451
        %4453 = vrot.lane.b32.xlu0 %v4409, 64
        %v4454 = vpop.permute.xlu0 %4453
        %4455 = vrot.lane.b32.xlu0 %v4410, 64
        %v4456 = vpop.permute.xlu0 %4455
        %4457 = vrot.lane.b32.xlu0 %v4411, 64
        %v4458 = vpop.permute.xlu0 %4457
        %4459 = vrot.lane.b32.xlu0 %v4412, 64
        %v4460 = vpop.permute.xlu0 %4459
        %4461 = vrot.lane.b32.xlu0 %v4413, 64
        %v4462 = vpop.permute.xlu0 %4461
        %4463 = vrot.lane.b32.xlu0 %v4414, 64
        %v4464 = vpop.permute.xlu0 %4463
        %4465 = vrot.lane.b32.xlu0 %v4415, 64
        %v4466 = vpop.permute.xlu0 %4465
        %4467 = vrot.lane.b32.xlu0 %v4416, 64
        %v4468 = vpop.permute.xlu0 %4467
        %4469 = vrot.lane.b32.xlu0 %v4417, 64
        %v4470 = vpop.permute.xlu0 %4469
        %4471 = vrot.lane.b32.xlu0 %v4418, 64
        %v4472 = vpop.permute.xlu0 %4471
        %4473 = vrot.lane.b32.xlu0 %v4419, 64
        %v4474 = vpop.permute.xlu0 %4473
        %4475 = vrot.lane.b32.xlu0 %v4420, 64
        %v4476 = vpop.permute.xlu0 %4475
        %vm4505 = vcmask 781824
        %4506 = vst.msk [vmem:[#allocation4] sm:$0xf] %vm4505, %v4422
        %4507 = vst.msk [vmem:[#allocation4 + $0xc] sm:$0xf] %vm4505, %v4424
        %4508 = vst.msk [vmem:[#allocation4 + $0x18] sm:$0xf] %vm4505, %v4426
        %4509 = vst.msk [vmem:[#allocation4 + $0x24] sm:$0xf] %vm4505, %v4428
        %4510 = vst.msk [vmem:[#allocation4 + $0x30] sm:$0xf] %vm4505, %v4430
        %4511 = vst.msk [vmem:[#allocation4 + $0x3c] sm:$0xf] %vm4505, %v4432
        %4512 = vst.msk [vmem:[#allocation4 + $0x48] sm:$0xf] %vm4505, %v4434
        %4513 = vst.msk [vmem:[#allocation4 + $0x54] sm:$0xf] %vm4505, %v4436
        %4514 = vst.msk [vmem:[#allocation4 + $0x60] sm:$0xf] %vm4505, %v4438
        %4515 = vst.msk [vmem:[#allocation4 + $0x6c] sm:$0xf] %vm4505, %v4440
        %4516 = vst.msk [vmem:[#allocation4 + $0x78] sm:$0xf] %vm4505, %v4442
        %4517 = vst.msk [vmem:[#allocation4 + $0x84] sm:$0xf] %vm4505, %v4444
        %4518 = vst.msk [vmem:[#allocation4 + $0x90] sm:$0xf] %vm4505, %v4446
        %4519 = vst.msk [vmem:[#allocation4 + $0x9c] sm:$0xf] %vm4505, %v4448
        %4520 = vst.msk [vmem:[#allocation4 + $0xa8] sm:$0xf] %vm4505, %v4450
        %4521 = vst.msk [vmem:[#allocation4 + $0xb4] sm:$0xf] %vm4505, %v4452
        %4522 = vst.msk [vmem:[#allocation4 + $0xc0] sm:$0xf] %vm4505, %v4454
        %4523 = vst.msk [vmem:[#allocation4 + $0xcc] sm:$0xf] %vm4505, %v4456
        %4524 = vst.msk [vmem:[#allocation4 + $0xd8] sm:$0xf] %vm4505, %v4458
        %4525 = vst.msk [vmem:[#allocation4 + $0xe4] sm:$0xf] %vm4505, %v4460
        %4526 = vst.msk [vmem:[#allocation4 + $0xf0] sm:$0xf] %vm4505, %v4462
        %4527 = vst.msk [vmem:[#allocation4 + $0xfc] sm:$0xf] %vm4505, %v4464
        %4528 = vst.msk [vmem:[#allocation4 + $0x108] sm:$0xf] %vm4505, %v4466
        %4529 = vst.msk [vmem:[#allocation4 + $0x114] sm:$0xf] %vm4505, %v4468
        %4530 = vst.msk [vmem:[#allocation4 + $0x120] sm:$0xf] %vm4505, %v4470
        %4531 = vst.msk [vmem:[#allocation4 + $0x12c] sm:$0xf] %vm4505, %v4472
        %4532 = vst.msk [vmem:[#allocation4 + $0x138] sm:$0xf] %vm4505, %v4474
        %4533 = vst.msk [vmem:[#allocation4 + $0x144] sm:$0xf] %vm4505, %v4476
        %v4534 = vld [vmem:[#allocation3 + $0x1f] sm:$0xff]
        %v4535 = vld [vmem:[#allocation3 + $0x27] sm:$0xff]
        %v4536 = vld [vmem:[#allocation3 + $0x2f] sm:$0xff]
        %v4537 = vld [vmem:[#allocation3 + $0x37] sm:$0xff]
        %v4538 = vld [vmem:[#allocation3 + $0x3f] sm:$0xff]
        %v4539 = vld [vmem:[#allocation3 + $0x47] sm:$0xff]
        %v4540 = vld [vmem:[#allocation3 + $0x4f] sm:$0xff]
        %v4541 = vld [vmem:[#allocation3 + $0x57] sm:$0xff]
        %v4542 = vld [vmem:[#allocation3 + $0x5f] sm:$0xff]
        %v4543 = vld [vmem:[#allocation3 + $0x67] sm:$0xff]
        %v4544 = vld [vmem:[#allocation3 + $0x6f] sm:$0xff]
        %v4545 = vld [vmem:[#allocation3 + $0x77] sm:$0xff]
        %v4546 = vld [vmem:[#allocation3 + $0x7f] sm:$0xff]
        %v4547 = vld [vmem:[#allocation3 + $0x87] sm:$0xff]
        %v4548 = vld [vmem:[#allocation3 + $0x8f] sm:$0xff]
        %v4549 = vld [vmem:[#allocation3 + $0x97] sm:$0xff]
        %v4550 = vld [vmem:[#allocation3 + $0x9f] sm:$0xff]
        %v4551 = vld [vmem:[#allocation3 + $0xa7] sm:$0xff]
        %v4552 = vld [vmem:[#allocation3 + $0xaf] sm:$0xff]
        %v4553 = vld [vmem:[#allocation3 + $0xb7] sm:$0xff]
        %v4554 = vld [vmem:[#allocation3 + $0xbf] sm:$0xff]
        %v4555 = vld [vmem:[#allocation3 + $0xc7] sm:$0xff]
        %v4556 = vld [vmem:[#allocation3 + $0xcf] sm:$0xff]
        %v4557 = vld [vmem:[#allocation3 + $0xd7] sm:$0xff]
        %v4558 = vld [vmem:[#allocation3 + $0xdf] sm:$0xff]
        %v4559 = vld [vmem:[#allocation3 + $0xe7] sm:$0xff]
        %v4560 = vld [vmem:[#allocation3 + $0xef] sm:$0xff]
        %v4561 = vld [vmem:[#allocation3 + $0xf7] sm:$0xff]
        %v4562 = vpack.c.bf16 %v4535, %v4534
        %v4563 = vpack.c.bf16 %v4537, %v4536
        %v4564 = vpack.c.bf16 %v4539, %v4538
        %v4565 = vpack.c.bf16 %v4541, %v4540
        %v4566 = vpack.c.bf16 %v4543, %v4542
        %v4567 = vpack.c.bf16 %v4545, %v4544
        %v4568 = vpack.c.bf16 %v4547, %v4546
        %v4569 = vpack.c.bf16 %v4549, %v4548
        %v4570 = vpack.c.bf16 %v4551, %v4550
        %v4571 = vpack.c.bf16 %v4553, %v4552
        %v4572 = vpack.c.bf16 %v4555, %v4554
        %v4573 = vpack.c.bf16 %v4557, %v4556
        %v4574 = vpack.c.bf16 %v4559, %v4558
        %v4575 = vpack.c.bf16 %v4561, %v4560
        %v4590 = vunpack.c.l.b16 %v4562
        %v4591 = vunpack.c.h.b16 %v4562
        %v4592 = vunpack.c.l.b16 %v4563
        %v4593 = vunpack.c.h.b16 %v4563
        %v4594 = vunpack.c.l.b16 %v4564
        %v4595 = vunpack.c.h.b16 %v4564
        %v4596 = vunpack.c.l.b16 %v4565
        %v4597 = vunpack.c.h.b16 %v4565
        %v4598 = vunpack.c.l.b16 %v4566
        %v4599 = vunpack.c.h.b16 %v4566
        %v4600 = vunpack.c.l.b16 %v4567
        %v4601 = vunpack.c.h.b16 %v4567
        %v4602 = vunpack.c.l.b16 %v4568
        %v4603 = vunpack.c.h.b16 %v4568
        %v4604 = vunpack.c.l.b16 %v4569
        %v4605 = vunpack.c.h.b16 %v4569
        %v4606 = vunpack.c.l.b16 %v4570
        %v4607 = vunpack.c.h.b16 %v4570
        %v4608 = vunpack.c.l.b16 %v4571
        %v4609 = vunpack.c.h.b16 %v4571
        %v4610 = vunpack.c.l.b16 %v4572
        %v4611 = vunpack.c.h.b16 %v4572
        %v4612 = vunpack.c.l.b16 %v4573
        %v4613 = vunpack.c.h.b16 %v4573
        %v4614 = vunpack.c.l.b16 %v4574
        %v4615 = vunpack.c.h.b16 %v4574
        %v4616 = vunpack.c.l.b16 %v4575
        %v4617 = vunpack.c.h.b16 %v4575
        %v4618 = vpack.c.b16 %v4590, %v4590
        %v4619 = vpack.c.b16 %v4591, %v4591
        %v4620 = vpack.c.b16 %v4592, %v4592
        %v4621 = vpack.c.b16 %v4593, %v4593
        %v4622 = vpack.c.b16 %v4594, %v4594
        %v4623 = vpack.c.b16 %v4595, %v4595
        %v4624 = vpack.c.b16 %v4596, %v4596
        %v4625 = vpack.c.b16 %v4597, %v4597
        %v4626 = vpack.c.b16 %v4598, %v4598
        %v4627 = vpack.c.b16 %v4599, %v4599
        %v4628 = vpack.c.b16 %v4600, %v4600
        %v4629 = vpack.c.b16 %v4601, %v4601
        %v4630 = vpack.c.b16 %v4602, %v4602
        %v4631 = vpack.c.b16 %v4603, %v4603
        %v4632 = vpack.c.b16 %v4604, %v4604
        %v4633 = vpack.c.b16 %v4605, %v4605
        %v4634 = vpack.c.b16 %v4606, %v4606
        %v4635 = vpack.c.b16 %v4607, %v4607
        %v4636 = vpack.c.b16 %v4608, %v4608
        %v4637 = vpack.c.b16 %v4609, %v4609
        %v4638 = vpack.c.b16 %v4610, %v4610
        %v4639 = vpack.c.b16 %v4611, %v4611
        %v4640 = vpack.c.b16 %v4612, %v4612
        %v4641 = vpack.c.b16 %v4613, %v4613
        %v4642 = vpack.c.b16 %v4614, %v4614
        %v4643 = vpack.c.b16 %v4615, %v4615
        %v4644 = vpack.c.b16 %v4616, %v4616
        %v4645 = vpack.c.b16 %v4617, %v4617
        %4646 = vrot.lane.b32.xlu0 %v4618, 96
        %v4647 = vpop.permute.xlu0 %4646
        %4648 = vrot.lane.b32.xlu0 %v4619, 96
        %v4649 = vpop.permute.xlu0 %4648
        %4650 = vrot.lane.b32.xlu0 %v4620, 96
        %v4651 = vpop.permute.xlu0 %4650
        %4652 = vrot.lane.b32.xlu0 %v4621, 96
        %v4653 = vpop.permute.xlu0 %4652
        %4654 = vrot.lane.b32.xlu0 %v4622, 96
        %v4655 = vpop.permute.xlu0 %4654
        %4656 = vrot.lane.b32.xlu0 %v4623, 96
        %v4657 = vpop.permute.xlu0 %4656
        %4658 = vrot.lane.b32.xlu0 %v4624, 96
        %v4659 = vpop.permute.xlu0 %4658
        %4660 = vrot.lane.b32.xlu0 %v4625, 96
        %v4661 = vpop.permute.xlu0 %4660
        %4662 = vrot.lane.b32.xlu0 %v4626, 96
        %v4663 = vpop.permute.xlu0 %4662
        %4664 = vrot.lane.b32.xlu0 %v4627, 96
        %v4665 = vpop.permute.xlu0 %4664
        %4666 = vrot.lane.b32.xlu0 %v4628, 96
        %v4667 = vpop.permute.xlu0 %4666
        %4668 = vrot.lane.b32.xlu0 %v4629, 96
        %v4669 = vpop.permute.xlu0 %4668
        %4670 = vrot.lane.b32.xlu0 %v4630, 96
        %v4671 = vpop.permute.xlu0 %4670
        %4672 = vrot.lane.b32.xlu0 %v4631, 96
        %v4673 = vpop.permute.xlu0 %4672
        %4674 = vrot.lane.b32.xlu0 %v4632, 96
        %v4675 = vpop.permute.xlu0 %4674
        %4676 = vrot.lane.b32.xlu0 %v4633, 96
        %v4677 = vpop.permute.xlu0 %4676
        %4678 = vrot.lane.b32.xlu0 %v4634, 96
        %v4679 = vpop.permute.xlu0 %4678
        %4680 = vrot.lane.b32.xlu0 %v4635, 96
        %v4681 = vpop.permute.xlu0 %4680
        %4682 = vrot.lane.b32.xlu0 %v4636, 96
        %v4683 = vpop.permute.xlu0 %4682
        %4684 = vrot.lane.b32.xlu0 %v4637, 96
        %v4685 = vpop.permute.xlu0 %4684
        %4686 = vrot.lane.b32.xlu0 %v4638, 96
        %v4687 = vpop.permute.xlu0 %4686
        %4688 = vrot.lane.b32.xlu0 %v4639, 96
        %v4689 = vpop.permute.xlu0 %4688
        %4690 = vrot.lane.b32.xlu0 %v4640, 96
        %v4691 = vpop.permute.xlu0 %4690
        %4692 = vrot.lane.b32.xlu0 %v4641, 96
        %v4693 = vpop.permute.xlu0 %4692
        %4694 = vrot.lane.b32.xlu0 %v4642, 96
        %v4695 = vpop.permute.xlu0 %4694
        %4696 = vrot.lane.b32.xlu0 %v4643, 96
        %v4697 = vpop.permute.xlu0 %4696
        %4698 = vrot.lane.b32.xlu0 %v4644, 96
        %v4699 = vpop.permute.xlu0 %4698
        %4700 = vrot.lane.b32.xlu0 %v4645, 96
        %v4701 = vpop.permute.xlu0 %4700
        %vm4730 = vcmask 1044224
        %4731 = vst.msk [vmem:[#allocation4] sm:$0xf] %vm4730, %v4647
        %4732 = vst.msk [vmem:[#allocation4 + $0xc] sm:$0xf] %vm4730, %v4649
        %4733 = vst.msk [vmem:[#allocation4 + $0x18] sm:$0xf] %vm4730, %v4651
        %4734 = vst.msk [vmem:[#allocation4 + $0x24] sm:$0xf] %vm4730, %v4653
        %4735 = vst.msk [vmem:[#allocation4 + $0x30] sm:$0xf] %vm4730, %v4655
        %4736 = vst.msk [vmem:[#allocation4 + $0x3c] sm:$0xf] %vm4730, %v4657
        %4737 = vst.msk [vmem:[#allocation4 + $0x48] sm:$0xf] %vm4730, %v4659
        %4738 = vst.msk [vmem:[#allocation4 + $0x54] sm:$0xf] %vm4730, %v4661
        %4739 = vst.msk [vmem:[#allocation4 + $0x60] sm:$0xf] %vm4730, %v4663
        %4740 = vst.msk [vmem:[#allocation4 + $0x6c] sm:$0xf] %vm4730, %v4665
        %4741 = vst.msk [vmem:[#allocation4 + $0x78] sm:$0xf] %vm4730, %v4667
        %4742 = vst.msk [vmem:[#allocation4 + $0x84] sm:$0xf] %vm4730, %v4669
        %4743 = vst.msk [vmem:[#allocation4 + $0x90] sm:$0xf] %vm4730, %v4671
        %4744 = vst.msk [vmem:[#allocation4 + $0x9c] sm:$0xf] %vm4730, %v4673
        %4745 = vst.msk [vmem:[#allocation4 + $0xa8] sm:$0xf] %vm4730, %v4675
        %4746 = vst.msk [vmem:[#allocation4 + $0xb4] sm:$0xf] %vm4730, %v4677
        %4747 = vst.msk [vmem:[#allocation4 + $0xc0] sm:$0xf] %vm4730, %v4679
        %4748 = vst.msk [vmem:[#allocation4 + $0xcc] sm:$0xf] %vm4730, %v4681
        %4749 = vst.msk [vmem:[#allocation4 + $0xd8] sm:$0xf] %vm4730, %v4683
        %4750 = vst.msk [vmem:[#allocation4 + $0xe4] sm:$0xf] %vm4730, %v4685
        %4751 = vst.msk [vmem:[#allocation4 + $0xf0] sm:$0xf] %vm4730, %v4687
        %4752 = vst.msk [vmem:[#allocation4 + $0xfc] sm:$0xf] %vm4730, %v4689
        %4753 = vst.msk [vmem:[#allocation4 + $0x108] sm:$0xf] %vm4730, %v4691
        %4754 = vst.msk [vmem:[#allocation4 + $0x114] sm:$0xf] %vm4730, %v4693
        %4755 = vst.msk [vmem:[#allocation4 + $0x120] sm:$0xf] %vm4730, %v4695
        %4756 = vst.msk [vmem:[#allocation4 + $0x12c] sm:$0xf] %vm4730, %v4697
        %4757 = vst.msk [vmem:[#allocation4 + $0x138] sm:$0xf] %vm4730, %v4699
        %4758 = vst.msk [vmem:[#allocation4 + $0x144] sm:$0xf] %vm4730, %v4701
        %v4759 = vld [vmem:[#allocation3 + $0x20] sm:$0xff]
        %v4760 = vld [vmem:[#allocation3 + $0x28] sm:$0xff]
        %v4761 = vld [vmem:[#allocation3 + $0x30] sm:$0xff]
        %v4762 = vld [vmem:[#allocation3 + $0x38] sm:$0xff]
        %v4763 = vld [vmem:[#allocation3 + $0x40] sm:$0xff]
        %v4764 = vld [vmem:[#allocation3 + $0x48] sm:$0xff]
        %v4765 = vld [vmem:[#allocation3 + $0x50] sm:$0xff]
        %v4766 = vld [vmem:[#allocation3 + $0x58] sm:$0xff]
        %v4767 = vld [vmem:[#allocation3 + $0x60] sm:$0xff]
        %v4768 = vld [vmem:[#allocation3 + $0x68] sm:$0xff]
        %v4769 = vld [vmem:[#allocation3 + $0x70] sm:$0xff]
        %v4770 = vld [vmem:[#allocation3 + $0x78] sm:$0xff]
        %v4771 = vld [vmem:[#allocation3 + $0x80] sm:$0xff]
        %v4772 = vld [vmem:[#allocation3 + $0x88] sm:$0xff]
        %v4773 = vld [vmem:[#allocation3 + $0x90] sm:$0xff]
        %v4774 = vld [vmem:[#allocation3 + $0x98] sm:$0xff]
        %v4775 = vld [vmem:[#allocation3 + $0xa0] sm:$0xff]
        %v4776 = vld [vmem:[#allocation3 + $0xa8] sm:$0xff]
        %v4777 = vld [vmem:[#allocation3 + $0xb0] sm:$0xff]
        %v4778 = vld [vmem:[#allocation3 + $0xb8] sm:$0xff]
        %v4779 = vld [vmem:[#allocation3 + $0xc0] sm:$0xff]
        %v4780 = vld [vmem:[#allocation3 + $0xc8] sm:$0xff]
        %v4781 = vld [vmem:[#allocation3 + $0xd0] sm:$0xff]
        %v4782 = vld [vmem:[#allocation3 + $0xd8] sm:$0xff]
        %v4783 = vld [vmem:[#allocation3 + $0xe0] sm:$0xff]
        %v4784 = vld [vmem:[#allocation3 + $0xe8] sm:$0xff]
        %v4785 = vld [vmem:[#allocation3 + $0xf0] sm:$0xff]
        %v4786 = vld [vmem:[#allocation3 + $0xf8] sm:$0xff]
        %v4787 = vpack.c.bf16 %v4760, %v4759
        %v4788 = vpack.c.bf16 %v4762, %v4761
        %v4789 = vpack.c.bf16 %v4764, %v4763
        %v4790 = vpack.c.bf16 %v4766, %v4765
        %v4791 = vpack.c.bf16 %v4768, %v4767
        %v4792 = vpack.c.bf16 %v4770, %v4769
        %v4793 = vpack.c.bf16 %v4772, %v4771
        %v4794 = vpack.c.bf16 %v4774, %v4773
        %v4795 = vpack.c.bf16 %v4776, %v4775
        %v4796 = vpack.c.bf16 %v4778, %v4777
        %v4797 = vpack.c.bf16 %v4780, %v4779
        %v4798 = vpack.c.bf16 %v4782, %v4781
        %v4799 = vpack.c.bf16 %v4784, %v4783
        %v4800 = vpack.c.bf16 %v4786, %v4785
        %v4815 = vunpack.c.l.b16 %v4787
        %v4816 = vunpack.c.h.b16 %v4787
        %v4817 = vunpack.c.l.b16 %v4788
        %v4818 = vunpack.c.h.b16 %v4788
        %v4819 = vunpack.c.l.b16 %v4789
        %v4820 = vunpack.c.h.b16 %v4789
        %v4821 = vunpack.c.l.b16 %v4790
        %v4822 = vunpack.c.h.b16 %v4790
        %v4823 = vunpack.c.l.b16 %v4791
        %v4824 = vunpack.c.h.b16 %v4791
        %v4825 = vunpack.c.l.b16 %v4792
        %v4826 = vunpack.c.h.b16 %v4792
        %v4827 = vunpack.c.l.b16 %v4793
        %v4828 = vunpack.c.h.b16 %v4793
        %v4829 = vunpack.c.l.b16 %v4794
        %v4830 = vunpack.c.h.b16 %v4794
        %v4831 = vunpack.c.l.b16 %v4795
        %v4832 = vunpack.c.h.b16 %v4795
        %v4833 = vunpack.c.l.b16 %v4796
        %v4834 = vunpack.c.h.b16 %v4796
        %v4835 = vunpack.c.l.b16 %v4797
        %v4836 = vunpack.c.h.b16 %v4797
        %v4837 = vunpack.c.l.b16 %v4798
        %v4838 = vunpack.c.h.b16 %v4798
        %v4839 = vunpack.c.l.b16 %v4799
        %v4840 = vunpack.c.h.b16 %v4799
        %v4841 = vunpack.c.l.b16 %v4800
        %v4842 = vunpack.c.h.b16 %v4800
        %v4843 = vpack.c.b16 %v4815, %v4815
        %v4844 = vpack.c.b16 %v4816, %v4816
        %v4845 = vpack.c.b16 %v4817, %v4817
        %v4846 = vpack.c.b16 %v4818, %v4818
        %v4847 = vpack.c.b16 %v4819, %v4819
        %v4848 = vpack.c.b16 %v4820, %v4820
        %v4849 = vpack.c.b16 %v4821, %v4821
        %v4850 = vpack.c.b16 %v4822, %v4822
        %v4851 = vpack.c.b16 %v4823, %v4823
        %v4852 = vpack.c.b16 %v4824, %v4824
        %v4853 = vpack.c.b16 %v4825, %v4825
        %v4854 = vpack.c.b16 %v4826, %v4826
        %v4855 = vpack.c.b16 %v4827, %v4827
        %v4856 = vpack.c.b16 %v4828, %v4828
        %v4857 = vpack.c.b16 %v4829, %v4829
        %v4858 = vpack.c.b16 %v4830, %v4830
        %v4859 = vpack.c.b16 %v4831, %v4831
        %v4860 = vpack.c.b16 %v4832, %v4832
        %v4861 = vpack.c.b16 %v4833, %v4833
        %v4862 = vpack.c.b16 %v4834, %v4834
        %v4863 = vpack.c.b16 %v4835, %v4835
        %v4864 = vpack.c.b16 %v4836, %v4836
        %v4865 = vpack.c.b16 %v4837, %v4837
        %v4866 = vpack.c.b16 %v4838, %v4838
        %v4867 = vpack.c.b16 %v4839, %v4839
        %v4868 = vpack.c.b16 %v4840, %v4840
        %v4869 = vpack.c.b16 %v4841, %v4841
        %v4870 = vpack.c.b16 %v4842, %v4842
        %4899 = vst.msk [vmem:[#allocation4 + $0x4] sm:$0xf] %vm4055, %v4843
        %4900 = vst.msk [vmem:[#allocation4 + $0x10] sm:$0xf] %vm4055, %v4844
        %4901 = vst.msk [vmem:[#allocation4 + $0x1c] sm:$0xf] %vm4055, %v4845
        %4902 = vst.msk [vmem:[#allocation4 + $0x28] sm:$0xf] %vm4055, %v4846
        %4903 = vst.msk [vmem:[#allocation4 + $0x34] sm:$0xf] %vm4055, %v4847
        %4904 = vst.msk [vmem:[#allocation4 + $0x40] sm:$0xf] %vm4055, %v4848
        %4905 = vst.msk [vmem:[#allocation4 + $0x4c] sm:$0xf] %vm4055, %v4849
        %4906 = vst.msk [vmem:[#allocation4 + $0x58] sm:$0xf] %vm4055, %v4850
        %4907 = vst.msk [vmem:[#allocation4 + $0x64] sm:$0xf] %vm4055, %v4851
        %4908 = vst.msk [vmem:[#allocation4 + $0x70] sm:$0xf] %vm4055, %v4852
        %4909 = vst.msk [vmem:[#allocation4 + $0x7c] sm:$0xf] %vm4055, %v4853
        %4910 = vst.msk [vmem:[#allocation4 + $0x88] sm:$0xf] %vm4055, %v4854
        %4911 = vst.msk [vmem:[#allocation4 + $0x94] sm:$0xf] %vm4055, %v4855
        %4912 = vst.msk [vmem:[#allocation4 + $0xa0] sm:$0xf] %vm4055, %v4856
        %4913 = vst.msk [vmem:[#allocation4 + $0xac] sm:$0xf] %vm4055, %v4857
        %4914 = vst.msk [vmem:[#allocation4 + $0xb8] sm:$0xf] %vm4055, %v4858
        %4915 = vst.msk [vmem:[#allocation4 + $0xc4] sm:$0xf] %vm4055, %v4859
        %4916 = vst.msk [vmem:[#allocation4 + $0xd0] sm:$0xf] %vm4055, %v4860
        %4917 = vst.msk [vmem:[#allocation4 + $0xdc] sm:$0xf] %vm4055, %v4861
        %4918 = vst.msk [vmem:[#allocation4 + $0xe8] sm:$0xf] %vm4055, %v4862
        %4919 = vst.msk [vmem:[#allocation4 + $0xf4] sm:$0xf] %vm4055, %v4863
        %4920 = vst.msk [vmem:[#allocation4 + $0x100] sm:$0xf] %vm4055, %v4864
        %4921 = vst.msk [vmem:[#allocation4 + $0x10c] sm:$0xf] %vm4055, %v4865
        %4922 = vst.msk [vmem:[#allocation4 + $0x118] sm:$0xf] %vm4055, %v4866
        %4923 = vst.msk [vmem:[#allocation4 + $0x124] sm:$0xf] %vm4055, %v4867
        %4924 = vst.msk [vmem:[#allocation4 + $0x130] sm:$0xf] %vm4055, %v4868
        %4925 = vst.msk [vmem:[#allocation4 + $0x13c] sm:$0xf] %vm4055, %v4869
        %4926 = vst.msk [vmem:[#allocation4 + $0x148] sm:$0xf] %vm4055, %v4870
        %v4927 = vld [vmem:[#allocation3 + $0x21] sm:$0xff]
        %v4928 = vld [vmem:[#allocation3 + $0x29] sm:$0xff]
        %v4929 = vld [vmem:[#allocation3 + $0x31] sm:$0xff]
        %v4930 = vld [vmem:[#allocation3 + $0x39] sm:$0xff]
        %v4931 = vld [vmem:[#allocation3 + $0x41] sm:$0xff]
        %v4932 = vld [vmem:[#allocation3 + $0x49] sm:$0xff]
        %v4933 = vld [vmem:[#allocation3 + $0x51] sm:$0xff]
        %v4934 = vld [vmem:[#allocation3 + $0x59] sm:$0xff]
        %v4935 = vld [vmem:[#allocation3 + $0x61] sm:$0xff]
        %v4936 = vld [vmem:[#allocation3 + $0x69] sm:$0xff]
        %v4937 = vld [vmem:[#allocation3 + $0x71] sm:$0xff]
        %v4938 = vld [vmem:[#allocation3 + $0x79] sm:$0xff]
        %v4939 = vld [vmem:[#allocation3 + $0x81] sm:$0xff]
        %v4940 = vld [vmem:[#allocation3 + $0x89] sm:$0xff]
        %v4941 = vld [vmem:[#allocation3 + $0x91] sm:$0xff]
        %v4942 = vld [vmem:[#allocation3 + $0x99] sm:$0xff]
        %v4943 = vld [vmem:[#allocation3 + $0xa1] sm:$0xff]
        %v4944 = vld [vmem:[#allocation3 + $0xa9] sm:$0xff]
        %v4945 = vld [vmem:[#allocation3 + $0xb1] sm:$0xff]
        %v4946 = vld [vmem:[#allocation3 + $0xb9] sm:$0xff]
        %v4947 = vld [vmem:[#allocation3 + $0xc1] sm:$0xff]
        %v4948 = vld [vmem:[#allocation3 + $0xc9] sm:$0xff]
        %v4949 = vld [vmem:[#allocation3 + $0xd1] sm:$0xff]
        %v4950 = vld [vmem:[#allocation3 + $0xd9] sm:$0xff]
        %v4951 = vld [vmem:[#allocation3 + $0xe1] sm:$0xff]
        %v4952 = vld [vmem:[#allocation3 + $0xe9] sm:$0xff]
        %v4953 = vld [vmem:[#allocation3 + $0xf1] sm:$0xff]
        %v4954 = vld [vmem:[#allocation3 + $0xf9] sm:$0xff]
        %v4955 = vpack.c.bf16 %v4928, %v4927
        %v4956 = vpack.c.bf16 %v4930, %v4929
        %v4957 = vpack.c.bf16 %v4932, %v4931
        %v4958 = vpack.c.bf16 %v4934, %v4933
        %v4959 = vpack.c.bf16 %v4936, %v4935
        %v4960 = vpack.c.bf16 %v4938, %v4937
        %v4961 = vpack.c.bf16 %v4940, %v4939
        %v4962 = vpack.c.bf16 %v4942, %v4941
        %v4963 = vpack.c.bf16 %v4944, %v4943
        %v4964 = vpack.c.bf16 %v4946, %v4945
        %v4965 = vpack.c.bf16 %v4948, %v4947
        %v4966 = vpack.c.bf16 %v4950, %v4949
        %v4967 = vpack.c.bf16 %v4952, %v4951
        %v4968 = vpack.c.bf16 %v4954, %v4953
        %v4983 = vunpack.c.l.b16 %v4955
        %v4984 = vunpack.c.h.b16 %v4955
        %v4985 = vunpack.c.l.b16 %v4956
        %v4986 = vunpack.c.h.b16 %v4956
        %v4987 = vunpack.c.l.b16 %v4957
        %v4988 = vunpack.c.h.b16 %v4957
        %v4989 = vunpack.c.l.b16 %v4958
        %v4990 = vunpack.c.h.b16 %v4958
        %v4991 = vunpack.c.l.b16 %v4959
        %v4992 = vunpack.c.h.b16 %v4959
        %v4993 = vunpack.c.l.b16 %v4960
        %v4994 = vunpack.c.h.b16 %v4960
        %v4995 = vunpack.c.l.b16 %v4961
        %v4996 = vunpack.c.h.b16 %v4961
        %v4997 = vunpack.c.l.b16 %v4962
        %v4998 = vunpack.c.h.b16 %v4962
        %v4999 = vunpack.c.l.b16 %v4963
        %v5000 = vunpack.c.h.b16 %v4963
        %v5001 = vunpack.c.l.b16 %v4964
        %v5002 = vunpack.c.h.b16 %v4964
        %v5003 = vunpack.c.l.b16 %v4965
        %v5004 = vunpack.c.h.b16 %v4965
        %v5005 = vunpack.c.l.b16 %v4966
        %v5006 = vunpack.c.h.b16 %v4966
        %v5007 = vunpack.c.l.b16 %v4967
        %v5008 = vunpack.c.h.b16 %v4967
        %v5009 = vunpack.c.l.b16 %v4968
        %v5010 = vunpack.c.h.b16 %v4968
        %v5011 = vpack.c.b16 %v4983, %v4983
        %v5012 = vpack.c.b16 %v4984, %v4984
        %v5013 = vpack.c.b16 %v4985, %v4985
        %v5014 = vpack.c.b16 %v4986, %v4986
        %v5015 = vpack.c.b16 %v4987, %v4987
        %v5016 = vpack.c.b16 %v4988, %v4988
        %v5017 = vpack.c.b16 %v4989, %v4989
        %v5018 = vpack.c.b16 %v4990, %v4990
        %v5019 = vpack.c.b16 %v4991, %v4991
        %v5020 = vpack.c.b16 %v4992, %v4992
        %v5021 = vpack.c.b16 %v4993, %v4993
        %v5022 = vpack.c.b16 %v4994, %v4994
        %v5023 = vpack.c.b16 %v4995, %v4995
        %v5024 = vpack.c.b16 %v4996, %v4996
        %v5025 = vpack.c.b16 %v4997, %v4997
        %v5026 = vpack.c.b16 %v4998, %v4998
        %v5027 = vpack.c.b16 %v4999, %v4999
        %v5028 = vpack.c.b16 %v5000, %v5000
        %v5029 = vpack.c.b16 %v5001, %v5001
        %v5030 = vpack.c.b16 %v5002, %v5002
        %v5031 = vpack.c.b16 %v5003, %v5003
        %v5032 = vpack.c.b16 %v5004, %v5004
        %v5033 = vpack.c.b16 %v5005, %v5005
        %v5034 = vpack.c.b16 %v5006, %v5006
        %v5035 = vpack.c.b16 %v5007, %v5007
        %v5036 = vpack.c.b16 %v5008, %v5008
        %v5037 = vpack.c.b16 %v5009, %v5009
        %v5038 = vpack.c.b16 %v5010, %v5010
        %5039 = vrot.lane.b32.xlu0 %v5011, 32
        %v5040 = vpop.permute.xlu0 %5039
        %5041 = vrot.lane.b32.xlu0 %v5012, 32
        %v5042 = vpop.permute.xlu0 %5041
        %5043 = vrot.lane.b32.xlu0 %v5013, 32
        %v5044 = vpop.permute.xlu0 %5043
        %5045 = vrot.lane.b32.xlu0 %v5014, 32
        %v5046 = vpop.permute.xlu0 %5045
        %5047 = vrot.lane.b32.xlu0 %v5015, 32
        %v5048 = vpop.permute.xlu0 %5047
        %5049 = vrot.lane.b32.xlu0 %v5016, 32
        %v5050 = vpop.permute.xlu0 %5049
        %5051 = vrot.lane.b32.xlu0 %v5017, 32
        %v5052 = vpop.permute.xlu0 %5051
        %5053 = vrot.lane.b32.xlu0 %v5018, 32
        %v5054 = vpop.permute.xlu0 %5053
        %5055 = vrot.lane.b32.xlu0 %v5019, 32
        %v5056 = vpop.permute.xlu0 %5055
        %5057 = vrot.lane.b32.xlu0 %v5020, 32
        %v5058 = vpop.permute.xlu0 %5057
        %5059 = vrot.lane.b32.xlu0 %v5021, 32
        %v5060 = vpop.permute.xlu0 %5059
        %5061 = vrot.lane.b32.xlu0 %v5022, 32
        %v5062 = vpop.permute.xlu0 %5061
        %5063 = vrot.lane.b32.xlu0 %v5023, 32
        %v5064 = vpop.permute.xlu0 %5063
        %5065 = vrot.lane.b32.xlu0 %v5024, 32
        %v5066 = vpop.permute.xlu0 %5065
        %5067 = vrot.lane.b32.xlu0 %v5025, 32
        %v5068 = vpop.permute.xlu0 %5067
        %5069 = vrot.lane.b32.xlu0 %v5026, 32
        %v5070 = vpop.permute.xlu0 %5069
        %5071 = vrot.lane.b32.xlu0 %v5027, 32
        %v5072 = vpop.permute.xlu0 %5071
        %5073 = vrot.lane.b32.xlu0 %v5028, 32
        %v5074 = vpop.permute.xlu0 %5073
        %5075 = vrot.lane.b32.xlu0 %v5029, 32
        %v5076 = vpop.permute.xlu0 %5075
        %5077 = vrot.lane.b32.xlu0 %v5030, 32
        %v5078 = vpop.permute.xlu0 %5077
        %5079 = vrot.lane.b32.xlu0 %v5031, 32
        %v5080 = vpop.permute.xlu0 %5079
        %5081 = vrot.lane.b32.xlu0 %v5032, 32
        %v5082 = vpop.permute.xlu0 %5081
        %5083 = vrot.lane.b32.xlu0 %v5033, 32
        %v5084 = vpop.permute.xlu0 %5083
        %5085 = vrot.lane.b32.xlu0 %v5034, 32
        %v5086 = vpop.permute.xlu0 %5085
        %5087 = vrot.lane.b32.xlu0 %v5035, 32
        %v5088 = vpop.permute.xlu0 %5087
        %5089 = vrot.lane.b32.xlu0 %v5036, 32
        %v5090 = vpop.permute.xlu0 %5089
        %5091 = vrot.lane.b32.xlu0 %v5037, 32
        %v5092 = vpop.permute.xlu0 %5091
        %5093 = vrot.lane.b32.xlu0 %v5038, 32
        %v5094 = vpop.permute.xlu0 %5093
        %5123 = vst.msk [vmem:[#allocation4 + $0x4] sm:$0xf] %vm4280, %v5040
        %5124 = vst.msk [vmem:[#allocation4 + $0x10] sm:$0xf] %vm4280, %v5042
        %5125 = vst.msk [vmem:[#allocation4 + $0x1c] sm:$0xf] %vm4280, %v5044
        %5126 = vst.msk [vmem:[#allocation4 + $0x28] sm:$0xf] %vm4280, %v5046
        %5127 = vst.msk [vmem:[#allocation4 + $0x34] sm:$0xf] %vm4280, %v5048
        %5128 = vst.msk [vmem:[#allocation4 + $0x40] sm:$0xf] %vm4280, %v5050
        %5129 = vst.msk [vmem:[#allocation4 + $0x4c] sm:$0xf] %vm4280, %v5052
        %5130 = vst.msk [vmem:[#allocation4 + $0x58] sm:$0xf] %vm4280, %v5054
        %5131 = vst.msk [vmem:[#allocation4 + $0x64] sm:$0xf] %vm4280, %v5056
        %5132 = vst.msk [vmem:[#allocation4 + $0x70] sm:$0xf] %vm4280, %v5058
        %5133 = vst.msk [vmem:[#allocation4 + $0x7c] sm:$0xf] %vm4280, %v5060
        %5134 = vst.msk [vmem:[#allocation4 + $0x88] sm:$0xf] %vm4280, %v5062
        %5135 = vst.msk [vmem:[#allocation4 + $0x94] sm:$0xf] %vm4280, %v5064
        %5136 = vst.msk [vmem:[#allocation4 + $0xa0] sm:$0xf] %vm4280, %v5066
        %5137 = vst.msk [vmem:[#allocation4 + $0xac] sm:$0xf] %vm4280, %v5068
        %5138 = vst.msk [vmem:[#allocation4 + $0xb8] sm:$0xf] %vm4280, %v5070
        %5139 = vst.msk [vmem:[#allocation4 + $0xc4] sm:$0xf] %vm4280, %v5072
        %5140 = vst.msk [vmem:[#allocation4 + $0xd0] sm:$0xf] %vm4280, %v5074
        %5141 = vst.msk [vmem:[#allocation4 + $0xdc] sm:$0xf] %vm4280, %v5076
        %5142 = vst.msk [vmem:[#allocation4 + $0xe8] sm:$0xf] %vm4280, %v5078
        %5143 = vst.msk [vmem:[#allocation4 + $0xf4] sm:$0xf] %vm4280, %v5080
        %5144 = vst.msk [vmem:[#allocation4 + $0x100] sm:$0xf] %vm4280, %v5082
        %5145 = vst.msk [vmem:[#allocation4 + $0x10c] sm:$0xf] %vm4280, %v5084
        %5146 = vst.msk [vmem:[#allocation4 + $0x118] sm:$0xf] %vm4280, %v5086
        %5147 = vst.msk [vmem:[#allocation4 + $0x124] sm:$0xf] %vm4280, %v5088
        %5148 = vst.msk [vmem:[#allocation4 + $0x130] sm:$0xf] %vm4280, %v5090
        %5149 = vst.msk [vmem:[#allocation4 + $0x13c] sm:$0xf] %vm4280, %v5092
        %5150 = vst.msk [vmem:[#allocation4 + $0x148] sm:$0xf] %vm4280, %v5094
        %v5151 = vld [vmem:[#allocation3 + $0x2f] sm:$0xff]
        %v5152 = vld [vmem:[#allocation3 + $0x37] sm:$0xff]
        %v5153 = vld [vmem:[#allocation3 + $0x3f] sm:$0xff]
        %v5154 = vld [vmem:[#allocation3 + $0x47] sm:$0xff]
        %v5155 = vld [vmem:[#allocation3 + $0x4f] sm:$0xff]
        %v5156 = vld [vmem:[#allocation3 + $0x57] sm:$0xff]
        %v5157 = vld [vmem:[#allocation3 + $0x5f] sm:$0xff]
        %v5158 = vld [vmem:[#allocation3 + $0x67] sm:$0xff]
        %v5159 = vld [vmem:[#allocation3 + $0x6f] sm:$0xff]
        %v5160 = vld [vmem:[#allocation3 + $0x77] sm:$0xff]
        %v5161 = vld [vmem:[#allocation3 + $0x7f] sm:$0xff]
        %v5162 = vld [vmem:[#allocation3 + $0x87] sm:$0xff]
        %v5163 = vld [vmem:[#allocation3 + $0x8f] sm:$0xff]
        %v5164 = vld [vmem:[#allocation3 + $0x97] sm:$0xff]
        %v5165 = vld [vmem:[#allocation3 + $0x9f] sm:$0xff]
        %v5166 = vld [vmem:[#allocation3 + $0xa7] sm:$0xff]
        %v5167 = vld [vmem:[#allocation3 + $0xaf] sm:$0xff]
        %v5168 = vld [vmem:[#allocation3 + $0xb7] sm:$0xff]
        %v5169 = vld [vmem:[#allocation3 + $0xbf] sm:$0xff]
        %v5170 = vld [vmem:[#allocation3 + $0xc7] sm:$0xff]
        %v5171 = vld [vmem:[#allocation3 + $0xcf] sm:$0xff]
        %v5172 = vld [vmem:[#allocation3 + $0xd7] sm:$0xff]
        %v5173 = vld [vmem:[#allocation3 + $0xdf] sm:$0xff]
        %v5174 = vld [vmem:[#allocation3 + $0xe7] sm:$0xff]
        %v5175 = vld [vmem:[#allocation3 + $0xef] sm:$0xff]
        %v5176 = vld [vmem:[#allocation3 + $0xf7] sm:$0xff]
        %v5177 = vld [vmem:[#allocation3 + $0xff] sm:$0xff]
        %v5178 = vld [vmem:[#allocation3 + $0x107] sm:$0xff]
        %v5179 = vpack.c.bf16 %v5152, %v5151
        %v5180 = vpack.c.bf16 %v5154, %v5153
        %v5181 = vpack.c.bf16 %v5156, %v5155
        %v5182 = vpack.c.bf16 %v5158, %v5157
        %v5183 = vpack.c.bf16 %v5160, %v5159
        %v5184 = vpack.c.bf16 %v5162, %v5161
        %v5185 = vpack.c.bf16 %v5164, %v5163
        %v5186 = vpack.c.bf16 %v5166, %v5165
        %v5187 = vpack.c.bf16 %v5168, %v5167
        %v5188 = vpack.c.bf16 %v5170, %v5169
        %v5189 = vpack.c.bf16 %v5172, %v5171
        %v5190 = vpack.c.bf16 %v5174, %v5173
        %v5191 = vpack.c.bf16 %v5176, %v5175
        %v5192 = vpack.c.bf16 %v5178, %v5177
        %v5207 = vunpack.c.l.b16 %v5179
        %v5208 = vunpack.c.h.b16 %v5179
        %v5209 = vunpack.c.l.b16 %v5180
        %v5210 = vunpack.c.h.b16 %v5180
        %v5211 = vunpack.c.l.b16 %v5181
        %v5212 = vunpack.c.h.b16 %v5181
        %v5213 = vunpack.c.l.b16 %v5182
        %v5214 = vunpack.c.h.b16 %v5182
        %v5215 = vunpack.c.l.b16 %v5183
        %v5216 = vunpack.c.h.b16 %v5183
        %v5217 = vunpack.c.l.b16 %v5184
        %v5218 = vunpack.c.h.b16 %v5184
        %v5219 = vunpack.c.l.b16 %v5185
        %v5220 = vunpack.c.h.b16 %v5185
        %v5221 = vunpack.c.l.b16 %v5186
        %v5222 = vunpack.c.h.b16 %v5186
        %v5223 = vunpack.c.l.b16 %v5187
        %v5224 = vunpack.c.h.b16 %v5187
        %v5225 = vunpack.c.l.b16 %v5188
        %v5226 = vunpack.c.h.b16 %v5188
        %v5227 = vunpack.c.l.b16 %v5189
        %v5228 = vunpack.c.h.b16 %v5189
        %v5229 = vunpack.c.l.b16 %v5190
        %v5230 = vunpack.c.h.b16 %v5190
        %v5231 = vunpack.c.l.b16 %v5191
        %v5232 = vunpack.c.h.b16 %v5191
        %v5233 = vunpack.c.l.b16 %v5192
        %v5234 = vunpack.c.h.b16 %v5192
        %v5235 = vpack.c.b16 %v5207, %v5207
        %v5236 = vpack.c.b16 %v5208, %v5208
        %v5237 = vpack.c.b16 %v5209, %v5209
        %v5238 = vpack.c.b16 %v5210, %v5210
        %v5239 = vpack.c.b16 %v5211, %v5211
        %v5240 = vpack.c.b16 %v5212, %v5212
        %v5241 = vpack.c.b16 %v5213, %v5213
        %v5242 = vpack.c.b16 %v5214, %v5214
        %v5243 = vpack.c.b16 %v5215, %v5215
        %v5244 = vpack.c.b16 %v5216, %v5216
        %v5245 = vpack.c.b16 %v5217, %v5217
        %v5246 = vpack.c.b16 %v5218, %v5218
        %v5247 = vpack.c.b16 %v5219, %v5219
        %v5248 = vpack.c.b16 %v5220, %v5220
        %v5249 = vpack.c.b16 %v5221, %v5221
        %v5250 = vpack.c.b16 %v5222, %v5222
        %v5251 = vpack.c.b16 %v5223, %v5223
        %v5252 = vpack.c.b16 %v5224, %v5224
        %v5253 = vpack.c.b16 %v5225, %v5225
        %v5254 = vpack.c.b16 %v5226, %v5226
        %v5255 = vpack.c.b16 %v5227, %v5227
        %v5256 = vpack.c.b16 %v5228, %v5228
        %v5257 = vpack.c.b16 %v5229, %v5229
        %v5258 = vpack.c.b16 %v5230, %v5230
        %v5259 = vpack.c.b16 %v5231, %v5231
        %v5260 = vpack.c.b16 %v5232, %v5232
        %v5261 = vpack.c.b16 %v5233, %v5233
        %v5262 = vpack.c.b16 %v5234, %v5234
        %5263 = vrot.lane.b32.xlu0 %v5235, 64
        %v5264 = vpop.permute.xlu0 %5263
        %5265 = vrot.lane.b32.xlu0 %v5236, 64
        %v5266 = vpop.permute.xlu0 %5265
        %5267 = vrot.lane.b32.xlu0 %v5237, 64
        %v5268 = vpop.permute.xlu0 %5267
        %5269 = vrot.lane.b32.xlu0 %v5238, 64
        %v5270 = vpop.permute.xlu0 %5269
        %5271 = vrot.lane.b32.xlu0 %v5239, 64
        %v5272 = vpop.permute.xlu0 %5271
        %5273 = vrot.lane.b32.xlu0 %v5240, 64
        %v5274 = vpop.permute.xlu0 %5273
        %5275 = vrot.lane.b32.xlu0 %v5241, 64
        %v5276 = vpop.permute.xlu0 %5275
        %5277 = vrot.lane.b32.xlu0 %v5242, 64
        %v5278 = vpop.permute.xlu0 %5277
        %5279 = vrot.lane.b32.xlu0 %v5243, 64
        %v5280 = vpop.permute.xlu0 %5279
        %5281 = vrot.lane.b32.xlu0 %v5244, 64
        %v5282 = vpop.permute.xlu0 %5281
        %5283 = vrot.lane.b32.xlu0 %v5245, 64
        %v5284 = vpop.permute.xlu0 %5283
        %5285 = vrot.lane.b32.xlu0 %v5246, 64
        %v5286 = vpop.permute.xlu0 %5285
        %5287 = vrot.lane.b32.xlu0 %v5247, 64
        %v5288 = vpop.permute.xlu0 %5287
        %5289 = vrot.lane.b32.xlu0 %v5248, 64
        %v5290 = vpop.permute.xlu0 %5289
        %5291 = vrot.lane.b32.xlu0 %v5249, 64
        %v5292 = vpop.permute.xlu0 %5291
        %5293 = vrot.lane.b32.xlu0 %v5250, 64
        %v5294 = vpop.permute.xlu0 %5293
        %5295 = vrot.lane.b32.xlu0 %v5251, 64
        %v5296 = vpop.permute.xlu0 %5295
        %5297 = vrot.lane.b32.xlu0 %v5252, 64
        %v5298 = vpop.permute.xlu0 %5297
        %5299 = vrot.lane.b32.xlu0 %v5253, 64
        %v5300 = vpop.permute.xlu0 %5299
        %5301 = vrot.lane.b32.xlu0 %v5254, 64
        %v5302 = vpop.permute.xlu0 %5301
        %5303 = vrot.lane.b32.xlu0 %v5255, 64
        %v5304 = vpop.permute.xlu0 %5303
        %5305 = vrot.lane.b32.xlu0 %v5256, 64
        %v5306 = vpop.permute.xlu0 %5305
        %5307 = vrot.lane.b32.xlu0 %v5257, 64
        %v5308 = vpop.permute.xlu0 %5307
        %5309 = vrot.lane.b32.xlu0 %v5258, 64
        %v5310 = vpop.permute.xlu0 %5309
        %5311 = vrot.lane.b32.xlu0 %v5259, 64
        %v5312 = vpop.permute.xlu0 %5311
        %5313 = vrot.lane.b32.xlu0 %v5260, 64
        %v5314 = vpop.permute.xlu0 %5313
        %5315 = vrot.lane.b32.xlu0 %v5261, 64
        %v5316 = vpop.permute.xlu0 %5315
        %5317 = vrot.lane.b32.xlu0 %v5262, 64
        %v5318 = vpop.permute.xlu0 %5317
        %5347 = vst.msk [vmem:[#allocation4 + $0x4] sm:$0xf] %vm4505, %v5264
        %5348 = vst.msk [vmem:[#allocation4 + $0x10] sm:$0xf] %vm4505, %v5266
        %5349 = vst.msk [vmem:[#allocation4 + $0x1c] sm:$0xf] %vm4505, %v5268
        %5350 = vst.msk [vmem:[#allocation4 + $0x28] sm:$0xf] %vm4505, %v5270
        %5351 = vst.msk [vmem:[#allocation4 + $0x34] sm:$0xf] %vm4505, %v5272
        %5352 = vst.msk [vmem:[#allocation4 + $0x40] sm:$0xf] %vm4505, %v5274
        %5353 = vst.msk [vmem:[#allocation4 + $0x4c] sm:$0xf] %vm4505, %v5276
        %5354 = vst.msk [vmem:[#allocation4 + $0x58] sm:$0xf] %vm4505, %v5278
        %5355 = vst.msk [vmem:[#allocation4 + $0x64] sm:$0xf] %vm4505, %v5280
        %5356 = vst.msk [vmem:[#allocation4 + $0x70] sm:$0xf] %vm4505, %v5282
        %5357 = vst.msk [vmem:[#allocation4 + $0x7c] sm:$0xf] %vm4505, %v5284
        %5358 = vst.msk [vmem:[#allocation4 + $0x88] sm:$0xf] %vm4505, %v5286
        %5359 = vst.msk [vmem:[#allocation4 + $0x94] sm:$0xf] %vm4505, %v5288
        %5360 = vst.msk [vmem:[#allocation4 + $0xa0] sm:$0xf] %vm4505, %v5290
        %5361 = vst.msk [vmem:[#allocation4 + $0xac] sm:$0xf] %vm4505, %v5292
        %5362 = vst.msk [vmem:[#allocation4 + $0xb8] sm:$0xf] %vm4505, %v5294
        %5363 = vst.msk [vmem:[#allocation4 + $0xc4] sm:$0xf] %vm4505, %v5296
        %5364 = vst.msk [vmem:[#allocation4 + $0xd0] sm:$0xf] %vm4505, %v5298
        %5365 = vst.msk [vmem:[#allocation4 + $0xdc] sm:$0xf] %vm4505, %v5300
        %5366 = vst.msk [vmem:[#allocation4 + $0xe8] sm:$0xf] %vm4505, %v5302
        %5367 = vst.msk [vmem:[#allocation4 + $0xf4] sm:$0xf] %vm4505, %v5304
        %5368 = vst.msk [vmem:[#allocation4 + $0x100] sm:$0xf] %vm4505, %v5306
        %5369 = vst.msk [vmem:[#allocation4 + $0x10c] sm:$0xf] %vm4505, %v5308
        %5370 = vst.msk [vmem:[#allocation4 + $0x118] sm:$0xf] %vm4505, %v5310
        %5371 = vst.msk [vmem:[#allocation4 + $0x124] sm:$0xf] %vm4505, %v5312
        %5372 = vst.msk [vmem:[#allocation4 + $0x130] sm:$0xf] %vm4505, %v5314
        %5373 = vst.msk [vmem:[#allocation4 + $0x13c] sm:$0xf] %vm4505, %v5316
        %5374 = vst.msk [vmem:[#allocation4 + $0x148] sm:$0xf] %vm4505, %v5318
        %v5375 = vld [vmem:[#allocation3 + $0x30] sm:$0xff]
        %v5376 = vld [vmem:[#allocation3 + $0x38] sm:$0xff]
        %v5377 = vld [vmem:[#allocation3 + $0x40] sm:$0xff]
        %v5378 = vld [vmem:[#allocation3 + $0x48] sm:$0xff]
        %v5379 = vld [vmem:[#allocation3 + $0x50] sm:$0xff]
        %v5380 = vld [vmem:[#allocation3 + $0x58] sm:$0xff]
        %v5381 = vld [vmem:[#allocation3 + $0x60] sm:$0xff]
        %v5382 = vld [vmem:[#allocation3 + $0x68] sm:$0xff]
        %v5383 = vld [vmem:[#allocation3 + $0x70] sm:$0xff]
        %v5384 = vld [vmem:[#allocation3 + $0x78] sm:$0xff]
        %v5385 = vld [vmem:[#allocation3 + $0x80] sm:$0xff]
        %v5386 = vld [vmem:[#allocation3 + $0x88] sm:$0xff]
        %v5387 = vld [vmem:[#allocation3 + $0x90] sm:$0xff]
        %v5388 = vld [vmem:[#allocation3 + $0x98] sm:$0xff]
        %v5389 = vld [vmem:[#allocation3 + $0xa0] sm:$0xff]
        %v5390 = vld [vmem:[#allocation3 + $0xa8] sm:$0xff]
        %v5391 = vld [vmem:[#allocation3 + $0xb0] sm:$0xff]
        %v5392 = vld [vmem:[#allocation3 + $0xb8] sm:$0xff]
        %v5393 = vld [vmem:[#allocation3 + $0xc0] sm:$0xff]
        %v5394 = vld [vmem:[#allocation3 + $0xc8] sm:$0xff]
        %v5395 = vld [vmem:[#allocation3 + $0xd0] sm:$0xff]
        %v5396 = vld [vmem:[#allocation3 + $0xd8] sm:$0xff]
        %v5397 = vld [vmem:[#allocation3 + $0xe0] sm:$0xff]
        %v5398 = vld [vmem:[#allocation3 + $0xe8] sm:$0xff]
        %v5399 = vld [vmem:[#allocation3 + $0xf0] sm:$0xff]
        %v5400 = vld [vmem:[#allocation3 + $0xf8] sm:$0xff]
        %v5401 = vld [vmem:[#allocation3 + $0x100] sm:$0xff]
        %v5402 = vld [vmem:[#allocation3 + $0x108] sm:$0xff]
        %v5403 = vpack.c.bf16 %v5376, %v5375
        %v5404 = vpack.c.bf16 %v5378, %v5377
        %v5405 = vpack.c.bf16 %v5380, %v5379
        %v5406 = vpack.c.bf16 %v5382, %v5381
        %v5407 = vpack.c.bf16 %v5384, %v5383
        %v5408 = vpack.c.bf16 %v5386, %v5385
        %v5409 = vpack.c.bf16 %v5388, %v5387
        %v5410 = vpack.c.bf16 %v5390, %v5389
        %v5411 = vpack.c.bf16 %v5392, %v5391
        %v5412 = vpack.c.bf16 %v5394, %v5393
        %v5413 = vpack.c.bf16 %v5396, %v5395
        %v5414 = vpack.c.bf16 %v5398, %v5397
        %v5415 = vpack.c.bf16 %v5400, %v5399
        %v5416 = vpack.c.bf16 %v5402, %v5401
        %v5431 = vunpack.c.l.b16 %v5403
        %v5432 = vunpack.c.h.b16 %v5403
        %v5433 = vunpack.c.l.b16 %v5404
        %v5434 = vunpack.c.h.b16 %v5404
        %v5435 = vunpack.c.l.b16 %v5405
        %v5436 = vunpack.c.h.b16 %v5405
        %v5437 = vunpack.c.l.b16 %v5406
        %v5438 = vunpack.c.h.b16 %v5406
        %v5439 = vunpack.c.l.b16 %v5407
        %v5440 = vunpack.c.h.b16 %v5407
        %v5441 = vunpack.c.l.b16 %v5408
        %v5442 = vunpack.c.h.b16 %v5408
        %v5443 = vunpack.c.l.b16 %v5409
        %v5444 = vunpack.c.h.b16 %v5409
        %v5445 = vunpack.c.l.b16 %v5410
        %v5446 = vunpack.c.h.b16 %v5410
        %v5447 = vunpack.c.l.b16 %v5411
        %v5448 = vunpack.c.h.b16 %v5411
        %v5449 = vunpack.c.l.b16 %v5412
        %v5450 = vunpack.c.h.b16 %v5412
        %v5451 = vunpack.c.l.b16 %v5413
        %v5452 = vunpack.c.h.b16 %v5413
        %v5453 = vunpack.c.l.b16 %v5414
        %v5454 = vunpack.c.h.b16 %v5414
        %v5455 = vunpack.c.l.b16 %v5415
        %v5456 = vunpack.c.h.b16 %v5415
        %v5457 = vunpack.c.l.b16 %v5416
        %v5458 = vunpack.c.h.b16 %v5416
        %v5459 = vpack.c.b16 %v5431, %v5431
        %v5460 = vpack.c.b16 %v5432, %v5432
        %v5461 = vpack.c.b16 %v5433, %v5433
        %v5462 = vpack.c.b16 %v5434, %v5434
        %v5463 = vpack.c.b16 %v5435, %v5435
        %v5464 = vpack.c.b16 %v5436, %v5436
        %v5465 = vpack.c.b16 %v5437, %v5437
        %v5466 = vpack.c.b16 %v5438, %v5438
        %v5467 = vpack.c.b16 %v5439, %v5439
        %v5468 = vpack.c.b16 %v5440, %v5440
        %v5469 = vpack.c.b16 %v5441, %v5441
        %v5470 = vpack.c.b16 %v5442, %v5442
        %v5471 = vpack.c.b16 %v5443, %v5443
        %v5472 = vpack.c.b16 %v5444, %v5444
        %v5473 = vpack.c.b16 %v5445, %v5445
        %v5474 = vpack.c.b16 %v5446, %v5446
        %v5475 = vpack.c.b16 %v5447, %v5447
        %v5476 = vpack.c.b16 %v5448, %v5448
        %v5477 = vpack.c.b16 %v5449, %v5449
        %v5478 = vpack.c.b16 %v5450, %v5450
        %v5479 = vpack.c.b16 %v5451, %v5451
        %v5480 = vpack.c.b16 %v5452, %v5452
        %v5481 = vpack.c.b16 %v5453, %v5453
        %v5482 = vpack.c.b16 %v5454, %v5454
        %v5483 = vpack.c.b16 %v5455, %v5455
        %v5484 = vpack.c.b16 %v5456, %v5456
        %v5485 = vpack.c.b16 %v5457, %v5457
        %v5486 = vpack.c.b16 %v5458, %v5458
        %5487 = vrot.lane.b32.xlu0 %v5459, 96
        %v5488 = vpop.permute.xlu0 %5487
        %5489 = vrot.lane.b32.xlu0 %v5460, 96
        %v5490 = vpop.permute.xlu0 %5489
        %5491 = vrot.lane.b32.xlu0 %v5461, 96
        %v5492 = vpop.permute.xlu0 %5491
        %5493 = vrot.lane.b32.xlu0 %v5462, 96
        %v5494 = vpop.permute.xlu0 %5493
        %5495 = vrot.lane.b32.xlu0 %v5463, 96
        %v5496 = vpop.permute.xlu0 %5495
        %5497 = vrot.lane.b32.xlu0 %v5464, 96
        %v5498 = vpop.permute.xlu0 %5497
        %5499 = vrot.lane.b32.xlu0 %v5465, 96
        %v5500 = vpop.permute.xlu0 %5499
        %5501 = vrot.lane.b32.xlu0 %v5466, 96
        %v5502 = vpop.permute.xlu0 %5501
        %5503 = vrot.lane.b32.xlu0 %v5467, 96
        %v5504 = vpop.permute.xlu0 %5503
        %5505 = vrot.lane.b32.xlu0 %v5468, 96
        %v5506 = vpop.permute.xlu0 %5505
        %5507 = vrot.lane.b32.xlu0 %v5469, 96
        %v5508 = vpop.permute.xlu0 %5507
        %5509 = vrot.lane.b32.xlu0 %v5470, 96
        %v5510 = vpop.permute.xlu0 %5509
        %5511 = vrot.lane.b32.xlu0 %v5471, 96
        %v5512 = vpop.permute.xlu0 %5511
        %5513 = vrot.lane.b32.xlu0 %v5472, 96
        %v5514 = vpop.permute.xlu0 %5513
        %5515 = vrot.lane.b32.xlu0 %v5473, 96
        %v5516 = vpop.permute.xlu0 %5515
        %5517 = vrot.lane.b32.xlu0 %v5474, 96
        %v5518 = vpop.permute.xlu0 %5517
        %5519 = vrot.lane.b32.xlu0 %v5475, 96
        %v5520 = vpop.permute.xlu0 %5519
        %5521 = vrot.lane.b32.xlu0 %v5476, 96
        %v5522 = vpop.permute.xlu0 %5521
        %5523 = vrot.lane.b32.xlu0 %v5477, 96
        %v5524 = vpop.permute.xlu0 %5523
        %5525 = vrot.lane.b32.xlu0 %v5478, 96
        %v5526 = vpop.permute.xlu0 %5525
        %5527 = vrot.lane.b32.xlu0 %v5479, 96
        %v5528 = vpop.permute.xlu0 %5527
        %5529 = vrot.lane.b32.xlu0 %v5480, 96
        %v5530 = vpop.permute.xlu0 %5529
        %5531 = vrot.lane.b32.xlu0 %v5481, 96
        %v5532 = vpop.permute.xlu0 %5531
        %5533 = vrot.lane.b32.xlu0 %v5482, 96
        %v5534 = vpop.permute.xlu0 %5533
        %5535 = vrot.lane.b32.xlu0 %v5483, 96
        %v5536 = vpop.permute.xlu0 %5535
        %5537 = vrot.lane.b32.xlu0 %v5484, 96
        %v5538 = vpop.permute.xlu0 %5537
        %5539 = vrot.lane.b32.xlu0 %v5485, 96
        %v5540 = vpop.permute.xlu0 %5539
        %5541 = vrot.lane.b32.xlu0 %v5486, 96
        %v5542 = vpop.permute.xlu0 %5541
        %5571 = vst.msk [vmem:[#allocation4 + $0x4] sm:$0xf] %vm4730, %v5488
        %5572 = vst.msk [vmem:[#allocation4 + $0x10] sm:$0xf] %vm4730, %v5490
        %5573 = vst.msk [vmem:[#allocation4 + $0x1c] sm:$0xf] %vm4730, %v5492
        %5574 = vst.msk [vmem:[#allocation4 + $0x28] sm:$0xf] %vm4730, %v5494
        %5575 = vst.msk [vmem:[#allocation4 + $0x34] sm:$0xf] %vm4730, %v5496
        %5576 = vst.msk [vmem:[#allocation4 + $0x40] sm:$0xf] %vm4730, %v5498
        %5577 = vst.msk [vmem:[#allocation4 + $0x4c] sm:$0xf] %vm4730, %v5500
        %5578 = vst.msk [vmem:[#allocation4 + $0x58] sm:$0xf] %vm4730, %v5502
        %5579 = vst.msk [vmem:[#allocation4 + $0x64] sm:$0xf] %vm4730, %v5504
        %5580 = vst.msk [vmem:[#allocation4 + $0x70] sm:$0xf] %vm4730, %v5506
        %5581 = vst.msk [vmem:[#allocation4 + $0x7c] sm:$0xf] %vm4730, %v5508
        %5582 = vst.msk [vmem:[#allocation4 + $0x88] sm:$0xf] %vm4730, %v5510
        %5583 = vst.msk [vmem:[#allocation4 + $0x94] sm:$0xf] %vm4730, %v5512
        %5584 = vst.msk [vmem:[#allocation4 + $0xa0] sm:$0xf] %vm4730, %v5514
        %5585 = vst.msk [vmem:[#allocation4 + $0xac] sm:$0xf] %vm4730, %v5516
        %5586 = vst.msk [vmem:[#allocation4 + $0xb8] sm:$0xf] %vm4730, %v5518
        %5587 = vst.msk [vmem:[#allocation4 + $0xc4] sm:$0xf] %vm4730, %v5520
        %5588 = vst.msk [vmem:[#allocation4 + $0xd0] sm:$0xf] %vm4730, %v5522
        %5589 = vst.msk [vmem:[#allocation4 + $0xdc] sm:$0xf] %vm4730, %v5524
        %5590 = vst.msk [vmem:[#allocation4 + $0xe8] sm:$0xf] %vm4730, %v5526
        %5591 = vst.msk [vmem:[#allocation4 + $0xf4] sm:$0xf] %vm4730, %v5528
        %5592 = vst.msk [vmem:[#allocation4 + $0x100] sm:$0xf] %vm4730, %v5530
        %5593 = vst.msk [vmem:[#allocation4 + $0x10c] sm:$0xf] %vm4730, %v5532
        %5594 = vst.msk [vmem:[#allocation4 + $0x118] sm:$0xf] %vm4730, %v5534
        %5595 = vst.msk [vmem:[#allocation4 + $0x124] sm:$0xf] %vm4730, %v5536
        %5596 = vst.msk [vmem:[#allocation4 + $0x130] sm:$0xf] %vm4730, %v5538
        %5597 = vst.msk [vmem:[#allocation4 + $0x13c] sm:$0xf] %vm4730, %v5540
        %5598 = vst.msk [vmem:[#allocation4 + $0x148] sm:$0xf] %vm4730, %v5542
        %v5599 = vld [vmem:[#allocation3 + $0x31] sm:$0xff]
        %v5600 = vld [vmem:[#allocation3 + $0x39] sm:$0xff]
        %v5601 = vld [vmem:[#allocation3 + $0x41] sm:$0xff]
        %v5602 = vld [vmem:[#allocation3 + $0x49] sm:$0xff]
        %v5603 = vld [vmem:[#allocation3 + $0x51] sm:$0xff]
        %v5604 = vld [vmem:[#allocation3 + $0x59] sm:$0xff]
        %v5605 = vld [vmem:[#allocation3 + $0x61] sm:$0xff]
        %v5606 = vld [vmem:[#allocation3 + $0x69] sm:$0xff]
        %v5607 = vld [vmem:[#allocation3 + $0x71] sm:$0xff]
        %v5608 = vld [vmem:[#allocation3 + $0x79] sm:$0xff]
        %v5609 = vld [vmem:[#allocation3 + $0x81] sm:$0xff]
        %v5610 = vld [vmem:[#allocation3 + $0x89] sm:$0xff]
        %v5611 = vld [vmem:[#allocation3 + $0x91] sm:$0xff]
        %v5612 = vld [vmem:[#allocation3 + $0x99] sm:$0xff]
        %v5613 = vld [vmem:[#allocation3 + $0xa1] sm:$0xff]
        %v5614 = vld [vmem:[#allocation3 + $0xa9] sm:$0xff]
        %v5615 = vld [vmem:[#allocation3 + $0xb1] sm:$0xff]
        %v5616 = vld [vmem:[#allocation3 + $0xb9] sm:$0xff]
        %v5617 = vld [vmem:[#allocation3 + $0xc1] sm:$0xff]
        %v5618 = vld [vmem:[#allocation3 + $0xc9] sm:$0xff]
        %v5619 = vld [vmem:[#allocation3 + $0xd1] sm:$0xff]
        %v5620 = vld [vmem:[#allocation3 + $0xd9] sm:$0xff]
        %v5621 = vld [vmem:[#allocation3 + $0xe1] sm:$0xff]
        %v5622 = vld [vmem:[#allocation3 + $0xe9] sm:$0xff]
        %v5623 = vld [vmem:[#allocation3 + $0xf1] sm:$0xff]
        %v5624 = vld [vmem:[#allocation3 + $0xf9] sm:$0xff]
        %v5625 = vld [vmem:[#allocation3 + $0x101] sm:$0xff]
        %v5626 = vld [vmem:[#allocation3 + $0x109] sm:$0xff]
        %v5627 = vpack.c.bf16 %v5600, %v5599
        %v5628 = vpack.c.bf16 %v5602, %v5601
        %v5629 = vpack.c.bf16 %v5604, %v5603
        %v5630 = vpack.c.bf16 %v5606, %v5605
        %v5631 = vpack.c.bf16 %v5608, %v5607
        %v5632 = vpack.c.bf16 %v5610, %v5609
        %v5633 = vpack.c.bf16 %v5612, %v5611
        %v5634 = vpack.c.bf16 %v5614, %v5613
        %v5635 = vpack.c.bf16 %v5616, %v5615
        %v5636 = vpack.c.bf16 %v5618, %v5617
        %v5637 = vpack.c.bf16 %v5620, %v5619
        %v5638 = vpack.c.bf16 %v5622, %v5621
        %v5639 = vpack.c.bf16 %v5624, %v5623
        %v5640 = vpack.c.bf16 %v5626, %v5625
        %v5655 = vunpack.c.l.b16 %v5627
        %v5656 = vunpack.c.h.b16 %v5627
        %v5657 = vunpack.c.l.b16 %v5628
        %v5658 = vunpack.c.h.b16 %v5628
        %v5659 = vunpack.c.l.b16 %v5629
        %v5660 = vunpack.c.h.b16 %v5629
        %v5661 = vunpack.c.l.b16 %v5630
        %v5662 = vunpack.c.h.b16 %v5630
        %v5663 = vunpack.c.l.b16 %v5631
        %v5664 = vunpack.c.h.b16 %v5631
        %v5665 = vunpack.c.l.b16 %v5632
        %v5666 = vunpack.c.h.b16 %v5632
        %v5667 = vunpack.c.l.b16 %v5633
        %v5668 = vunpack.c.h.b16 %v5633
        %v5669 = vunpack.c.l.b16 %v5634
        %v5670 = vunpack.c.h.b16 %v5634
        %v5671 = vunpack.c.l.b16 %v5635
        %v5672 = vunpack.c.h.b16 %v5635
        %v5673 = vunpack.c.l.b16 %v5636
        %v5674 = vunpack.c.h.b16 %v5636
        %v5675 = vunpack.c.l.b16 %v5637
        %v5676 = vunpack.c.h.b16 %v5637
        %v5677 = vunpack.c.l.b16 %v5638
        %v5678 = vunpack.c.h.b16 %v5638
        %v5679 = vunpack.c.l.b16 %v5639
        %v5680 = vunpack.c.h.b16 %v5639
        %v5681 = vunpack.c.l.b16 %v5640
        %v5682 = vunpack.c.h.b16 %v5640
        %v5683 = vpack.c.b16 %v5655, %v5655
        %v5684 = vpack.c.b16 %v5656, %v5656
        %v5685 = vpack.c.b16 %v5657, %v5657
        %v5686 = vpack.c.b16 %v5658, %v5658
        %v5687 = vpack.c.b16 %v5659, %v5659
        %v5688 = vpack.c.b16 %v5660, %v5660
        %v5689 = vpack.c.b16 %v5661, %v5661
        %v5690 = vpack.c.b16 %v5662, %v5662
        %v5691 = vpack.c.b16 %v5663, %v5663
        %v5692 = vpack.c.b16 %v5664, %v5664
        %v5693 = vpack.c.b16 %v5665, %v5665
        %v5694 = vpack.c.b16 %v5666, %v5666
        %v5695 = vpack.c.b16 %v5667, %v5667
        %v5696 = vpack.c.b16 %v5668, %v5668
        %v5697 = vpack.c.b16 %v5669, %v5669
        %v5698 = vpack.c.b16 %v5670, %v5670
        %v5699 = vpack.c.b16 %v5671, %v5671
        %v5700 = vpack.c.b16 %v5672, %v5672
        %v5701 = vpack.c.b16 %v5673, %v5673
        %v5702 = vpack.c.b16 %v5674, %v5674
        %v5703 = vpack.c.b16 %v5675, %v5675
        %v5704 = vpack.c.b16 %v5676, %v5676
        %v5705 = vpack.c.b16 %v5677, %v5677
        %v5706 = vpack.c.b16 %v5678, %v5678
        %v5707 = vpack.c.b16 %v5679, %v5679
        %v5708 = vpack.c.b16 %v5680, %v5680
        %v5709 = vpack.c.b16 %v5681, %v5681
        %v5710 = vpack.c.b16 %v5682, %v5682
        %5739 = vst.msk [vmem:[#allocation4 + $0x8] sm:$0xf] %vm4055, %v5683
        %5740 = vst.msk [vmem:[#allocation4 + $0x14] sm:$0xf] %vm4055, %v5684
        %5741 = vst.msk [vmem:[#allocation4 + $0x20] sm:$0xf] %vm4055, %v5685
        %5742 = vst.msk [vmem:[#allocation4 + $0x2c] sm:$0xf] %vm4055, %v5686
        %5743 = vst.msk [vmem:[#allocation4 + $0x38] sm:$0xf] %vm4055, %v5687
        %5744 = vst.msk [vmem:[#allocation4 + $0x44] sm:$0xf] %vm4055, %v5688
        %5745 = vst.msk [vmem:[#allocation4 + $0x50] sm:$0xf] %vm4055, %v5689
        %5746 = vst.msk [vmem:[#allocation4 + $0x5c] sm:$0xf] %vm4055, %v5690
        %5747 = vst.msk [vmem:[#allocation4 + $0x68] sm:$0xf] %vm4055, %v5691
        %5748 = vst.msk [vmem:[#allocation4 + $0x74] sm:$0xf] %vm4055, %v5692
        %5749 = vst.msk [vmem:[#allocation4 + $0x80] sm:$0xf] %vm4055, %v5693
        %5750 = vst.msk [vmem:[#allocation4 + $0x8c] sm:$0xf] %vm4055, %v5694
        %5751 = vst.msk [vmem:[#allocation4 + $0x98] sm:$0xf] %vm4055, %v5695
        %5752 = vst.msk [vmem:[#allocation4 + $0xa4] sm:$0xf] %vm4055, %v5696
        %5753 = vst.msk [vmem:[#allocation4 + $0xb0] sm:$0xf] %vm4055, %v5697
        %5754 = vst.msk [vmem:[#allocation4 + $0xbc] sm:$0xf] %vm4055, %v5698
        %5755 = vst.msk [vmem:[#allocation4 + $0xc8] sm:$0xf] %vm4055, %v5699
        %5756 = vst.msk [vmem:[#allocation4 + $0xd4] sm:$0xf] %vm4055, %v5700
        %5757 = vst.msk [vmem:[#allocation4 + $0xe0] sm:$0xf] %vm4055, %v5701
        %5758 = vst.msk [vmem:[#allocation4 + $0xec] sm:$0xf] %vm4055, %v5702
        %5759 = vst.msk [vmem:[#allocation4 + $0xf8] sm:$0xf] %vm4055, %v5703
        %5760 = vst.msk [vmem:[#allocation4 + $0x104] sm:$0xf] %vm4055, %v5704
        %5761 = vst.msk [vmem:[#allocation4 + $0x110] sm:$0xf] %vm4055, %v5705
        %5762 = vst.msk [vmem:[#allocation4 + $0x11c] sm:$0xf] %vm4055, %v5706
        %5763 = vst.msk [vmem:[#allocation4 + $0x128] sm:$0xf] %vm4055, %v5707
        %5764 = vst.msk [vmem:[#allocation4 + $0x134] sm:$0xf] %vm4055, %v5708
        %5765 = vst.msk [vmem:[#allocation4 + $0x140] sm:$0xf] %vm4055, %v5709
        %5766 = vst.msk [vmem:[#allocation4 + $0x14c] sm:$0xf] %vm4055, %v5710
        %v5767 = vld [vmem:[%s3] sm:$0xf]
        %v5768 = vld [vmem:[%s3 + $0x4] sm:$0xf]
        %v5769 = vld [vmem:[%s3 + $0x8] sm:$0xf]
        %v5770 = vld [vmem:[%s3 + $0xc] sm:$0xf]
        %v5771 = vld [vmem:[%s3 + $0x10] sm:$0xf]
        %v5772 = vld [vmem:[%s3 + $0x14] sm:$0xf]
        %v5773 = vld [vmem:[%s3 + $0x18] sm:$0xf]
        %v5774 = vld [vmem:[%s3 + $0x1c] sm:$0xf]
        %v5775 = vld [vmem:[%s3 + $0x20] sm:$0xf]
        %v5776 = vld [vmem:[%s3 + $0x24] sm:$0xf]
        %v5777 = vld [vmem:[%s3 + $0x28] sm:$0xf]
        %v5778 = vld [vmem:[%s3 + $0x2c] sm:$0xf]
        %v5779 = vld [vmem:[%s3 + $0x30] sm:$0xf]
        %v5780 = vld [vmem:[%s3 + $0x34] sm:$0xf]
        %v5781 = vld [vmem:[%s3 + $0x38] sm:$0xf]
        %v5782 = vld [vmem:[%s3 + $0x3c] sm:$0xf]
        %v5783 = vld [vmem:[%s3 + $0x40] sm:$0xf]
        %v5784 = vld [vmem:[%s3 + $0x44] sm:$0xf]
        %v5785 = vld [vmem:[%s3 + $0x48] sm:$0xf]
        %v5786 = vld [vmem:[%s3 + $0x4c] sm:$0xf]
        %v5787 = vld [vmem:[%s3 + $0x50] sm:$0xf]
        %v5788 = vld [vmem:[%s3 + $0x54] sm:$0xf]
        %v5789 = vld [vmem:[%s3 + $0x58] sm:$0xf]
        %v5790 = vld [vmem:[%s3 + $0x5c] sm:$0xf]
        %v5791 = vld [vmem:[%s3 + $0x60] sm:$0xf]
        %v5792 = vld [vmem:[%s3 + $0x64] sm:$0xf]
        %v5793 = vld [vmem:[%s3 + $0x68] sm:$0xf]
        %v5794 = vld [vmem:[%s3 + $0x6c] sm:$0xf]
        %v5795 = vld [vmem:[%s3 + $0x70] sm:$0xf]
        %v5796 = vld [vmem:[%s3 + $0x74] sm:$0xf]
        %v5797 = vld [vmem:[%s3 + $0x78] sm:$0xf]
        %v5798 = vld [vmem:[%s3 + $0x7c] sm:$0xf]
        %v5799 = vld [vmem:[%s3 + $0x80] sm:$0xf]
        %v5800 = vld [vmem:[%s3 + $0x84] sm:$0xf]
        %v5801 = vld [vmem:[%s3 + $0x88] sm:$0xf]
        %v5802 = vld [vmem:[%s3 + $0x8c] sm:$0xf]
        %v5803 = vld [vmem:[%s4] sm:$0x1]
        %v5804 = vld [vmem:[#allocation4] sm:$0xff]
        %v5805 = vld [vmem:[#allocation4 + $0x8] sm:$0xf]
        %v5806 = vld [vmem:[#allocation4 + $0xc] sm:$0xff]
        %v5807 = vld [vmem:[#allocation4 + $0x14] sm:$0xf]
        %v5808 = vld [vmem:[#allocation4 + $0x18] sm:$0xff]
        %v5809 = vld [vmem:[#allocation4 + $0x20] sm:$0xf]
        %v5810 = vld [vmem:[#allocation4 + $0x24] sm:$0xff]
        %v5811 = vld [vmem:[#allocation4 + $0x2c] sm:$0xf]
        %v5812 = vld [vmem:[#allocation4 + $0x30] sm:$0xff]
        %v5813 = vld [vmem:[#allocation4 + $0x38] sm:$0xf]
        %v5814 = vld [vmem:[#allocation4 + $0x3c] sm:$0xff]
        %v5815 = vld [vmem:[#allocation4 + $0x44] sm:$0xf]
        %v5816 = vld [vmem:[#allocation4 + $0x48] sm:$0xff]
        %v5817 = vld [vmem:[#allocation4 + $0x50] sm:$0xf]
        %v5818 = vld [vmem:[#allocation4 + $0x54] sm:$0xff]
        %v5819 = vld [vmem:[#allocation4 + $0x5c] sm:$0xf]
        %v5820 = vld [vmem:[#allocation4 + $0x60] sm:$0xff]
        %v5821 = vld [vmem:[#allocation4 + $0x68] sm:$0xf]
        %v5822 = vld [vmem:[#allocation4 + $0x6c] sm:$0xff]
        %v5823 = vld [vmem:[#allocation4 + $0x74] sm:$0xf]
        %v5824 = vld [vmem:[#allocation4 + $0x78] sm:$0xff]
        %v5825 = vld [vmem:[#allocation4 + $0x80] sm:$0xf]
        %v5826 = vld [vmem:[#allocation4 + $0x84] sm:$0xff]
        %v5827 = vld [vmem:[#allocation4 + $0x8c] sm:$0xf]
        %v5828 = vld [vmem:[#allocation4 + $0x90] sm:$0xff]
        %v5829 = vld [vmem:[#allocation4 + $0x98] sm:$0xf]
        %v5830 = vld [vmem:[#allocation4 + $0x9c] sm:$0xff]
        %v5831 = vld [vmem:[#allocation4 + $0xa4] sm:$0xf]
        %v5833 = vlaneseq
        %v5834 = vshrl.u32 %v5833, 7
        %v5835 = vsub.s32 0, %v5834
        %v5836 = vrot.slane %v5803, %v5835
        %v5866 = vunpack.c.l.b16 %v5804
        %v5867 = vunpack.c.h.b16 %v5804
        %v5868 = vunpack.c.l.b16 %v5805
        %v5869 = vunpack.c.l.b16 %v5806
        %v5870 = vunpack.c.h.b16 %v5806
        %v5871 = vunpack.c.l.b16 %v5807
        %v5872 = vunpack.c.l.b16 %v5808
        %v5873 = vunpack.c.h.b16 %v5808
        %v5874 = vunpack.c.l.b16 %v5809
        %v5875 = vunpack.c.l.b16 %v5810
        %v5876 = vunpack.c.h.b16 %v5810
        %v5877 = vunpack.c.l.b16 %v5811
        %v5878 = vunpack.c.l.b16 %v5812
        %v5879 = vunpack.c.h.b16 %v5812
        %v5880 = vunpack.c.l.b16 %v5813
        %v5881 = vunpack.c.l.b16 %v5814
        %v5882 = vunpack.c.h.b16 %v5814
        %v5883 = vunpack.c.l.b16 %v5815
        %v5884 = vunpack.c.l.b16 %v5816
        %v5885 = vunpack.c.h.b16 %v5816
        %v5886 = vunpack.c.l.b16 %v5817
        %v5887 = vunpack.c.l.b16 %v5818
        %v5888 = vunpack.c.h.b16 %v5818
        %v5889 = vunpack.c.l.b16 %v5819
        %v5890 = vunpack.c.l.b16 %v5820
        %v5891 = vunpack.c.h.b16 %v5820
        %v5892 = vunpack.c.l.b16 %v5821
        %v5893 = vunpack.c.l.b16 %v5822
        %v5894 = vunpack.c.h.b16 %v5822
        %v5895 = vunpack.c.l.b16 %v5823
        %v5896 = vunpack.c.l.b16 %v5824
        %v5897 = vunpack.c.h.b16 %v5824
        %v5898 = vunpack.c.l.b16 %v5825
        %v5899 = vunpack.c.l.b16 %v5826
        %v5900 = vunpack.c.h.b16 %v5826
        %v5901 = vunpack.c.l.b16 %v5827
        %v5902 = vunpack.c.l.b16 %v5828
        %v5903 = vunpack.c.h.b16 %v5828
        %v5904 = vunpack.c.l.b16 %v5829
        %v5905 = vunpack.c.l.b16 %v5830
        %v5906 = vunpack.c.h.b16 %v5830
        %v5907 = vunpack.c.l.b16 %v5831
        %v5908 = vpack.c.b16 %v5869, %v5866
        %v5909 = vpack.c.b16 %v5870, %v5867
        %v5910 = vpack.c.b16 %v5871, %v5868
        %v5911 = vpack.c.b16 %v5875, %v5872
        %v5912 = vpack.c.b16 %v5876, %v5873
        %v5913 = vpack.c.b16 %v5877, %v5874
        %v5914 = vpack.c.b16 %v5881, %v5878
        %v5915 = vpack.c.b16 %v5882, %v5879
        %v5916 = vpack.c.b16 %v5883, %v5880
        %v5917 = vpack.c.b16 %v5887, %v5884
        %v5918 = vpack.c.b16 %v5888, %v5885
        %v5919 = vpack.c.b16 %v5889, %v5886
        %v5920 = vpack.c.b16 %v5893, %v5890
        %v5921 = vpack.c.b16 %v5894, %v5891
        %v5922 = vpack.c.b16 %v5895, %v5892
        %v5923 = vpack.c.b16 %v5899, %v5896
        %v5924 = vpack.c.b16 %v5900, %v5897
        %v5925 = vpack.c.b16 %v5901, %v5898
        %v5926 = vpack.c.b16 %v5905, %v5902
        %v5927 = vpack.c.b16 %v5906, %v5903
        %v5928 = vpack.c.b16 %v5907, %v5904
        %v5979 = vunpack.c.l.b16 %v5767
        %v5980 = vunpack.c.l.b16 %v5768
        %v5981 = vunpack.c.l.b16 %v5769
        %v5982 = vunpack.c.l.b16 %v5770
        %v5983 = vunpack.c.l.b16 %v5771
        %v5984 = vunpack.c.l.b16 %v5772
        %v5985 = vunpack.c.l.b16 %v5773
        %v5986 = vunpack.c.l.b16 %v5774
        %v5987 = vunpack.c.l.b16 %v5775
        %v5988 = vunpack.c.l.b16 %v5776
        %v5989 = vunpack.c.l.b16 %v5777
        %v5990 = vunpack.c.l.b16 %v5778
        %v5991 = vunpack.c.l.b16 %v5779
        %v5992 = vunpack.c.l.b16 %v5780
        %v5993 = vunpack.c.l.b16 %v5781
        %v5994 = vunpack.c.l.b16 %v5782
        %v5995 = vunpack.c.l.b16 %v5783
        %v5996 = vunpack.c.l.b16 %v5784
        %v5997 = vunpack.c.l.b16 %v5785
        %v5998 = vunpack.c.l.b16 %v5786
        %v5999 = vunpack.c.l.b16 %v5787
        %v6000 = vunpack.c.l.b16 %v5788
        %v6001 = vunpack.c.l.b16 %v5789
        %v6002 = vunpack.c.l.b16 %v5790
        %v6003 = vunpack.c.l.b16 %v5791
        %v6004 = vunpack.c.l.b16 %v5792
        %v6005 = vunpack.c.l.b16 %v5793
        %v6006 = vunpack.c.l.b16 %v5794
        %v6007 = vunpack.c.l.b16 %v5795
        %v6008 = vunpack.c.l.b16 %v5796
        %v6009 = vunpack.c.l.b16 %v5797
        %v6010 = vunpack.c.l.b16 %v5798
        %v6011 = vunpack.c.l.b16 %v5799
        %v6012 = vunpack.c.l.b16 %v5800
        %v6013 = vunpack.c.l.b16 %v5801
        %v6014 = vunpack.c.l.b16 %v5802
        %v6015 = vpack.c.b16 %v5980, %v5979
        %v6016 = vpack.c.b16 %v5982, %v5981
        %v6017 = vpack.c.b16 %v5984, %v5983
        %v6018 = vpack.c.b16 %v5986, %v5985
        %v6019 = vpack.c.b16 %v5988, %v5987
        %v6020 = vpack.c.b16 %v5990, %v5989
        %v6021 = vpack.c.b16 %v5992, %v5991
        %v6022 = vpack.c.b16 %v5994, %v5993
        %v6023 = vpack.c.b16 %v5996, %v5995
        %v6024 = vpack.c.b16 %v5998, %v5997
        %v6025 = vpack.c.b16 %v6000, %v5999
        %v6026 = vpack.c.b16 %v6002, %v6001
        %v6027 = vpack.c.b16 %v6004, %v6003
        %v6028 = vpack.c.b16 %v6006, %v6005
        %v6029 = vpack.c.b16 %v6008, %v6007
        %v6030 = vpack.c.b16 %v6010, %v6009
        %v6031 = vpack.c.b16 %v6012, %v6011
        %v6032 = vpack.c.b16 %v6014, %v6013
        %v6052 = vsel %vm958, %v5910, 0
        %v6055 = vsel %vm958, %v5913, 0
        %v6058 = vsel %vm958, %v5916, 0
        %v6061 = vsel %vm958, %v5919, 0
        %v6064 = vsel %vm958, %v5922, 0
        %v6067 = vsel %vm958, %v5925, 0
        %v6070 = vsel %vm958, %v5928, 0
        %6072 = vmatprep.subr.bf16.mxu0 0
        %6073 = vmatpush1.bf16.msra.mxu0 %v6022
        %6074 = vmatprep.subr.bf16.mxu0 0
        %6075 = vmatpush1.bf16.msra.mxu0 %v6021
        %6076 = vmatprep.subr.bf16.mxu0 0
        %6077 = vmatpush1.bf16.msra.mxu0 %v6020
        %6078 = vmatprep.subr.bf16.mxu0 0
        %6079 = vmatpush1.bf16.msra.mxu0 %v6019
        %6080 = vmatprep.subr.bf16.mxu0 0
        %6081 = vmatpush1.bf16.msra.mxu0 %v6018
        %6082 = vmatprep.subr.bf16.mxu0 0
        %6083 = vmatpush1.bf16.msra.mxu0 %v6017
        %6084 = vmatprep.subr.bf16.mxu0 0
        %6085 = vmatpush1.bf16.msra.mxu0 %v6016
        %6086 = vmatprep.subr.bf16.mxu0 0
        %6087 = vmatpush1.bf16.msra.mxu0 %v6015
        %6088 = vmatprep.subr.bf16.mxu0 0
        %6089 = vmatpush2.bf16.msra.mxu0 %v6030
        %6090 = vmatprep.subr.bf16.mxu0 0
        %6091 = vmatpush2.bf16.msra.mxu0 %v6029
        %6092 = vmatprep.subr.bf16.mxu0 0
        %6093 = vmatpush2.bf16.msra.mxu0 %v6028
        %6094 = vmatprep.subr.bf16.mxu0 0
        %6095 = vmatpush2.bf16.msra.mxu0 %v6027
        %6096 = vmatprep.subr.bf16.mxu0 0
        %6097 = vmatpush2.bf16.msra.mxu0 %v6026
        %6098 = vmatprep.subr.bf16.mxu0 0
        %6099 = vmatpush2.bf16.msra.mxu0 %v6025
        %6100 = vmatprep.subr.bf16.mxu0 0
        %6101 = vmatpush2.bf16.msra.mxu0 %v6024
        %6102 = vmatprep.subr.bf16.mxu0 0
        %6103 = vmatpush2.bf16.msra.mxu0 %v6023
        %6104 = vmatprep.mubr.bf16.mxu0 %v5909
        %6105 = vmatmul.mubr.bf16.gmra.mxu0 %v5908
        %v6106 = vpop.f32.mrf.mxu0
        %v6107 = vadd.f32 %v5836, %v6106
        %v6108 = vpop.f32.mrf.mxu0
        %v6109 = vpop.f32.mrf.mxu0
        %v6110 = vadd.f32 %v5836, %v6109
        %v6111 = vpop.f32.mrf.mxu0
        %6112 = vmatprep.mubr.bf16.mxu0 %v5912
        %6113 = vmatmul.mubr.bf16.gmra.mxu0 %v5911
        %v6114 = vpop.f32.mrf.mxu0
        %v6115 = vadd.f32 %v5836, %v6114
        %v6116 = vpop.f32.mrf.mxu0
        %v6117 = vpop.f32.mrf.mxu0
        %v6118 = vadd.f32 %v5836, %v6117
        %v6119 = vpop.f32.mrf.mxu0
        %6120 = vmatprep.mubr.bf16.mxu0 %v5915
        %6121 = vmatmul.mubr.bf16.gmra.mxu0 %v5914
        %v6122 = vpop.f32.mrf.mxu0
        %v6123 = vadd.f32 %v5836, %v6122
        %v6124 = vpop.f32.mrf.mxu0
        %v6125 = vpop.f32.mrf.mxu0
        %v6126 = vadd.f32 %v5836, %v6125
        %v6127 = vpop.f32.mrf.mxu0
        %6128 = vmatprep.mubr.bf16.mxu0 %v5918
        %6129 = vmatmul.mubr.bf16.gmra.mxu0 %v5917
        %v6130 = vpop.f32.mrf.mxu0
        %v6131 = vadd.f32 %v5836, %v6130
        %v6132 = vpop.f32.mrf.mxu0
        %v6133 = vpop.f32.mrf.mxu0
        %v6134 = vadd.f32 %v5836, %v6133
        %v6135 = vpop.f32.mrf.mxu0
        %6136 = vmatprep.mubr.bf16.mxu0 %v5921
        %6137 = vmatmul.mubr.bf16.gmra.mxu0 %v5920
        %v6138 = vpop.f32.mrf.mxu0
        %v6139 = vadd.f32 %v5836, %v6138
        %v6140 = vpop.f32.mrf.mxu0
        %v6141 = vpop.f32.mrf.mxu0
        %v6142 = vadd.f32 %v5836, %v6141
        %v6143 = vpop.f32.mrf.mxu0
        %6144 = vmatprep.mubr.bf16.mxu0 %v5924
        %6145 = vmatmul.mubr.bf16.gmra.mxu0 %v5923
        %v6146 = vpop.f32.mrf.mxu0
        %v6147 = vadd.f32 %v5836, %v6146
        %v6148 = vpop.f32.mrf.mxu0
        %v6149 = vpop.f32.mrf.mxu0
        %v6150 = vadd.f32 %v5836, %v6149
        %v6151 = vpop.f32.mrf.mxu0
        %6152 = vmatprep.mubr.bf16.mxu0 %v5927
        %6153 = vmatmul.mubr.bf16.gmra.mxu0 %v5926
        %v6154 = vpop.f32.mrf.mxu0
        %v6155 = vadd.f32 %v5836, %v6154
        %v6156 = vpop.f32.mrf.mxu0
        %v6157 = vpop.f32.mrf.mxu0
        %v6158 = vadd.f32 %v5836, %v6157
        %v6159 = vpop.f32.mrf.mxu0
        %6160 = vdwg.mxu0
        %6161 = vmatprep.subr.bf16.mxu0 0
        %6162 = vmatpush1.bf16.msra.mxu0 0
        %6163 = vmatprep.subr.bf16.mxu0 0
        %6164 = vmatpush1.bf16.msra.mxu0 0
        %6165 = vmatprep.subr.bf16.mxu0 0
        %6166 = vmatpush1.bf16.msra.mxu0 0
        %6167 = vmatprep.subr.bf16.mxu0 0
        %6168 = vmatpush1.bf16.msra.mxu0 0
        %6169 = vmatprep.subr.bf16.mxu0 0
        %6170 = vmatpush1.bf16.msra.mxu0 0
        %6171 = vmatprep.subr.bf16.mxu0 0
        %6172 = vmatpush1.bf16.msra.mxu0 0
        %6173 = vmatprep.subr.bf16.mxu0 0
        %6174 = vmatpush1.bf16.msra.mxu0 %v6032
        %6175 = vmatprep.subr.bf16.mxu0 0
        %6176 = vmatpush1.bf16.msra.mxu0 %v6031
        %6177 = vmatprep.subr.bf16.mxu0 0
        %6178 = vmatpush2.bf16.msra.mxu0 0
        %6179 = vmatprep.subr.bf16.mxu0 0
        %6180 = vmatpush2.bf16.msra.mxu0 0
        %6181 = vmatprep.subr.bf16.mxu0 0
        %6182 = vmatpush2.bf16.msra.mxu0 0
        %6183 = vmatprep.subr.bf16.mxu0 0
        %6184 = vmatpush2.bf16.msra.mxu0 0
        %6185 = vmatprep.subr.bf16.mxu0 0
        %6186 = vmatpush2.bf16.msra.mxu0 0
        %6187 = vmatprep.subr.bf16.mxu0 0
        %6188 = vmatpush2.bf16.msra.mxu0 0
        %6189 = vmatprep.subr.bf16.mxu0 0
        %6190 = vmatpush2.bf16.msra.mxu0 0
        %6191 = vmatprep.subr.bf16.mxu0 0
        %6192 = vmatpush2.bf16.msra.mxu0 0
        %6193 = vmatprep.mubr.bf16.mxu0 0
        %6194 = vmatmul.mubr.bf16.gmra.mxu0 %v6052
        %v6195 = vpop.f32.mrf.mxu0
        %v6196 = vadd.f32 %v6107, %v6195
        %v6197 = vpop.f32.mrf.mxu0
        %v6198 = vpop.f32.mrf.mxu0
        %v6199 = vadd.f32 %v6110, %v6198
        %v6200 = vpop.f32.mrf.mxu0
        %6201 = vmatprep.mubr.bf16.mxu0 0
        %6202 = vmatmul.mubr.bf16.gmra.mxu0 %v6055
        %v6203 = vpop.f32.mrf.mxu0
        %v6204 = vadd.f32 %v6115, %v6203
        %v6205 = vpop.f32.mrf.mxu0
        %v6206 = vpop.f32.mrf.mxu0
        %v6207 = vadd.f32 %v6118, %v6206
        %v6208 = vpop.f32.mrf.mxu0
        %6209 = vmatprep.mubr.bf16.mxu0 0
        %6210 = vmatmul.mubr.bf16.gmra.mxu0 %v6058
        %v6211 = vpop.f32.mrf.mxu0
        %v6212 = vadd.f32 %v6123, %v6211
        %v6213 = vpop.f32.mrf.mxu0
        %v6214 = vpop.f32.mrf.mxu0
        %v6215 = vadd.f32 %v6126, %v6214
        %v6216 = vpop.f32.mrf.mxu0
        %6217 = vmatprep.mubr.bf16.mxu0 0
        %6218 = vmatmul.mubr.bf16.gmra.mxu0 %v6061
        %v6219 = vpop.f32.mrf.mxu0
        %v6220 = vadd.f32 %v6131, %v6219
        %v6221 = vpop.f32.mrf.mxu0
        %v6222 = vpop.f32.mrf.mxu0
        %v6223 = vadd.f32 %v6134, %v6222
        %v6224 = vpop.f32.mrf.mxu0
        %6225 = vmatprep.mubr.bf16.mxu0 0
        %6226 = vmatmul.mubr.bf16.gmra.mxu0 %v6064
        %v6227 = vpop.f32.mrf.mxu0
        %v6228 = vadd.f32 %v6139, %v6227
        %v6229 = vpop.f32.mrf.mxu0
        %v6230 = vpop.f32.mrf.mxu0
        %v6231 = vadd.f32 %v6142, %v6230
        %v6232 = vpop.f32.mrf.mxu0
        %6233 = vmatprep.mubr.bf16.mxu0 0
        %6234 = vmatmul.mubr.bf16.gmra.mxu0 %v6067
        %v6235 = vpop.f32.mrf.mxu0
        %v6236 = vadd.f32 %v6147, %v6235
        %v6237 = vpop.f32.mrf.mxu0
        %v6238 = vpop.f32.mrf.mxu0
        %v6239 = vadd.f32 %v6150, %v6238
        %v6240 = vpop.f32.mrf.mxu0
        %6241 = vmatprep.mubr.bf16.mxu0 0
        %6242 = vmatmul.mubr.bf16.gmra.mxu0 %v6070
        %v6243 = vpop.f32.mrf.mxu0
        %v6244 = vadd.f32 %v6155, %v6243
        %v6245 = vpop.f32.mrf.mxu0
        %v6246 = vpop.f32.mrf.mxu0
        %v6247 = vadd.f32 %v6158, %v6246
        %v6248 = vpop.f32.mrf.mxu0
        %6249 = vdwg.mxu0
        %v6250 = vmax.f32 %v6196, 0.0
        %v6251 = vmax.f32 %v6199, 0.0
        %v6252 = vmax.f32 %v6204, 0.0
        %v6253 = vmax.f32 %v6207, 0.0
        %v6254 = vmax.f32 %v6212, 0.0
        %v6255 = vmax.f32 %v6215, 0.0
        %v6256 = vmax.f32 %v6220, 0.0
        %v6257 = vmax.f32 %v6223, 0.0
        %v6258 = vmax.f32 %v6228, 0.0
        %v6259 = vmax.f32 %v6231, 0.0
        %v6260 = vmax.f32 %v6236, 0.0
        %v6261 = vmax.f32 %v6239, 0.0
        %v6262 = vmax.f32 %v6244, 0.0
        %v6263 = vmax.f32 %v6247, 0.0
        %vm6264 = vcmask 523264
        %6265 = vst.msk [vmem:[#allocation5] sm:$0xff] %vm6264, %v6250
        %6266 = vst.msk [vmem:[#allocation5 + $0x8] sm:$0xff] %vm6264, %v6251
        %6267 = vst.msk [vmem:[#allocation5 + $0x10] sm:$0xff] %vm6264, %v6252
        %6268 = vst.msk [vmem:[#allocation5 + $0x18] sm:$0xff] %vm6264, %v6253
        %6269 = vst.msk [vmem:[#allocation5 + $0x20] sm:$0xff] %vm6264, %v6254
        %6270 = vst.msk [vmem:[#allocation5 + $0x28] sm:$0xff] %vm6264, %v6255
        %6271 = vst.msk [vmem:[#allocation5 + $0x30] sm:$0xff] %vm6264, %v6256
        %6272 = vst.msk [vmem:[#allocation5 + $0x38] sm:$0xff] %vm6264, %v6257
        %6273 = vst.msk [vmem:[#allocation5 + $0x40] sm:$0xff] %vm6264, %v6258
        %6274 = vst.msk [vmem:[#allocation5 + $0x48] sm:$0xff] %vm6264, %v6259
        %6275 = vst.msk [vmem:[#allocation5 + $0x50] sm:$0xff] %vm6264, %v6260
        %6276 = vst.msk [vmem:[#allocation5 + $0x58] sm:$0xff] %vm6264, %v6261
        %6277 = vst.msk [vmem:[#allocation5 + $0x60] sm:$0xff] %vm6264, %v6262
        %6278 = vst.msk [vmem:[#allocation5 + $0x68] sm:$0xff] %vm6264, %v6263
        %v6279 = vld [vmem:[#allocation4 + $0xa8] sm:$0xff]
        %v6280 = vld [vmem:[#allocation4 + $0xb0] sm:$0xf]
        %v6281 = vld [vmem:[#allocation4 + $0xb4] sm:$0xff]
        %v6282 = vld [vmem:[#allocation4 + $0xbc] sm:$0xf]
        %v6283 = vld [vmem:[#allocation4 + $0xc0] sm:$0xff]
        %v6284 = vld [vmem:[#allocation4 + $0xc8] sm:$0xf]
        %v6285 = vld [vmem:[#allocation4 + $0xcc] sm:$0xff]
        %v6286 = vld [vmem:[#allocation4 + $0xd4] sm:$0xf]
        %v6287 = vld [vmem:[#allocation4 + $0xd8] sm:$0xff]
        %v6288 = vld [vmem:[#allocation4 + $0xe0] sm:$0xf]
        %v6289 = vld [vmem:[#allocation4 + $0xe4] sm:$0xff]
        %v6290 = vld [vmem:[#allocation4 + $0xec] sm:$0xf]
        %v6291 = vld [vmem:[#allocation4 + $0xf0] sm:$0xff]
        %v6292 = vld [vmem:[#allocation4 + $0xf8] sm:$0xf]
        %v6293 = vld [vmem:[#allocation4 + $0xfc] sm:$0xff]
        %v6294 = vld [vmem:[#allocation4 + $0x104] sm:$0xf]
        %v6295 = vld [vmem:[#allocation4 + $0x108] sm:$0xff]
        %v6296 = vld [vmem:[#allocation4 + $0x110] sm:$0xf]
        %v6297 = vld [vmem:[#allocation4 + $0x114] sm:$0xff]
        %v6298 = vld [vmem:[#allocation4 + $0x11c] sm:$0xf]
        %v6299 = vld [vmem:[#allocation4 + $0x120] sm:$0xff]
        %v6300 = vld [vmem:[#allocation4 + $0x128] sm:$0xf]
        %v6301 = vld [vmem:[#allocation4 + $0x12c] sm:$0xff]
        %v6302 = vld [vmem:[#allocation4 + $0x134] sm:$0xf]
        %v6303 = vld [vmem:[#allocation4 + $0x138] sm:$0xff]
        %v6304 = vld [vmem:[#allocation4 + $0x140] sm:$0xf]
        %v6305 = vld [vmem:[#allocation4 + $0x144] sm:$0xff]
        %v6306 = vld [vmem:[#allocation4 + $0x14c] sm:$0xf]
        %v6335 = vunpack.c.l.b16 %v6279
        %v6336 = vunpack.c.h.b16 %v6279
        %v6337 = vunpack.c.l.b16 %v6280
        %v6338 = vunpack.c.l.b16 %v6281
        %v6339 = vunpack.c.h.b16 %v6281
        %v6340 = vunpack.c.l.b16 %v6282
        %v6341 = vunpack.c.l.b16 %v6283
        %v6342 = vunpack.c.h.b16 %v6283
        %v6343 = vunpack.c.l.b16 %v6284
        %v6344 = vunpack.c.l.b16 %v6285
        %v6345 = vunpack.c.h.b16 %v6285
        %v6346 = vunpack.c.l.b16 %v6286
        %v6347 = vunpack.c.l.b16 %v6287
        %v6348 = vunpack.c.h.b16 %v6287
        %v6349 = vunpack.c.l.b16 %v6288
        %v6350 = vunpack.c.l.b16 %v6289
        %v6351 = vunpack.c.h.b16 %v6289
        %v6352 = vunpack.c.l.b16 %v6290
        %v6353 = vunpack.c.l.b16 %v6291
        %v6354 = vunpack.c.h.b16 %v6291
        %v6355 = vunpack.c.l.b16 %v6292
        %v6356 = vunpack.c.l.b16 %v6293
        %v6357 = vunpack.c.h.b16 %v6293
        %v6358 = vunpack.c.l.b16 %v6294
        %v6359 = vunpack.c.l.b16 %v6295
        %v6360 = vunpack.c.h.b16 %v6295
        %v6361 = vunpack.c.l.b16 %v6296
        %v6362 = vunpack.c.l.b16 %v6297
        %v6363 = vunpack.c.h.b16 %v6297
        %v6364 = vunpack.c.l.b16 %v6298
        %v6365 = vunpack.c.l.b16 %v6299
        %v6366 = vunpack.c.h.b16 %v6299
        %v6367 = vunpack.c.l.b16 %v6300
        %v6368 = vunpack.c.l.b16 %v6301
        %v6369 = vunpack.c.h.b16 %v6301
        %v6370 = vunpack.c.l.b16 %v6302
        %v6371 = vunpack.c.l.b16 %v6303
        %v6372 = vunpack.c.h.b16 %v6303
        %v6373 = vunpack.c.l.b16 %v6304
        %v6374 = vunpack.c.l.b16 %v6305
        %v6375 = vunpack.c.h.b16 %v6305
        %v6376 = vunpack.c.l.b16 %v6306
        %v6377 = vpack.c.b16 %v6338, %v6335
        %v6378 = vpack.c.b16 %v6339, %v6336
        %v6379 = vpack.c.b16 %v6340, %v6337
        %v6380 = vpack.c.b16 %v6344, %v6341
        %v6381 = vpack.c.b16 %v6345, %v6342
        %v6382 = vpack.c.b16 %v6346, %v6343
        %v6383 = vpack.c.b16 %v6350, %v6347
        %v6384 = vpack.c.b16 %v6351, %v6348
        %v6385 = vpack.c.b16 %v6352, %v6349
        %v6386 = vpack.c.b16 %v6356, %v6353
        %v6387 = vpack.c.b16 %v6357, %v6354
        %v6388 = vpack.c.b16 %v6358, %v6355
        %v6389 = vpack.c.b16 %v6362, %v6359
        %v6390 = vpack.c.b16 %v6363, %v6360
        %v6391 = vpack.c.b16 %v6364, %v6361
        %v6392 = vpack.c.b16 %v6368, %v6365
        %v6393 = vpack.c.b16 %v6369, %v6366
        %v6394 = vpack.c.b16 %v6370, %v6367
        %v6395 = vpack.c.b16 %v6374, %v6371
        %v6396 = vpack.c.b16 %v6375, %v6372
        %v6397 = vpack.c.b16 %v6376, %v6373
        %v6413 = vsel %vm958, %v6379, 0
        %v6416 = vsel %vm958, %v6382, 0
        %v6419 = vsel %vm958, %v6385, 0
        %v6422 = vsel %vm958, %v6388, 0
        %v6425 = vsel %vm958, %v6391, 0
        %v6428 = vsel %vm958, %v6394, 0
        %v6431 = vsel %vm958, %v6397, 0
        %6433 = vmatprep.subr.bf16.mxu0 0
        %6434 = vmatpush1.bf16.msra.mxu0 %v6022
        %6435 = vmatprep.subr.bf16.mxu0 0
        %6436 = vmatpush1.bf16.msra.mxu0 %v6021
        %6437 = vmatprep.subr.bf16.mxu0 0
        %6438 = vmatpush1.bf16.msra.mxu0 %v6020
        %6439 = vmatprep.subr.bf16.mxu0 0
        %6440 = vmatpush1.bf16.msra.mxu0 %v6019
        %6441 = vmatprep.subr.bf16.mxu0 0
        %6442 = vmatpush1.bf16.msra.mxu0 %v6018
        %6443 = vmatprep.subr.bf16.mxu0 0
        %6444 = vmatpush1.bf16.msra.mxu0 %v6017
        %6445 = vmatprep.subr.bf16.mxu0 0
        %6446 = vmatpush1.bf16.msra.mxu0 %v6016
        %6447 = vmatprep.subr.bf16.mxu0 0
        %6448 = vmatpush1.bf16.msra.mxu0 %v6015
        %6449 = vmatprep.subr.bf16.mxu0 0
        %6450 = vmatpush2.bf16.msra.mxu0 %v6030
        %6451 = vmatprep.subr.bf16.mxu0 0
        %6452 = vmatpush2.bf16.msra.mxu0 %v6029
        %6453 = vmatprep.subr.bf16.mxu0 0
        %6454 = vmatpush2.bf16.msra.mxu0 %v6028
        %6455 = vmatprep.subr.bf16.mxu0 0
        %6456 = vmatpush2.bf16.msra.mxu0 %v6027
        %6457 = vmatprep.subr.bf16.mxu0 0
        %6458 = vmatpush2.bf16.msra.mxu0 %v6026
        %6459 = vmatprep.subr.bf16.mxu0 0
        %6460 = vmatpush2.bf16.msra.mxu0 %v6025
        %6461 = vmatprep.subr.bf16.mxu0 0
        %6462 = vmatpush2.bf16.msra.mxu0 %v6024
        %6463 = vmatprep.subr.bf16.mxu0 0
        %6464 = vmatpush2.bf16.msra.mxu0 %v6023
        %6465 = vmatprep.mubr.bf16.mxu0 %v6378
        %6466 = vmatmul.mubr.bf16.gmra.mxu0 %v6377
        %v6467 = vpop.f32.mrf.mxu0
        %v6468 = vadd.f32 %v5836, %v6467
        %v6469 = vpop.f32.mrf.mxu0
        %v6470 = vpop.f32.mrf.mxu0
        %v6471 = vadd.f32 %v5836, %v6470
        %v6472 = vpop.f32.mrf.mxu0
        %6473 = vmatprep.mubr.bf16.mxu0 %v6381
        %6474 = vmatmul.mubr.bf16.gmra.mxu0 %v6380
        %v6475 = vpop.f32.mrf.mxu0
        %v6476 = vadd.f32 %v5836, %v6475
        %v6477 = vpop.f32.mrf.mxu0
        %v6478 = vpop.f32.mrf.mxu0
        %v6479 = vadd.f32 %v5836, %v6478
        %v6480 = vpop.f32.mrf.mxu0
        %6481 = vmatprep.mubr.bf16.mxu0 %v6384
        %6482 = vmatmul.mubr.bf16.gmra.mxu0 %v6383
        %v6483 = vpop.f32.mrf.mxu0
        %v6484 = vadd.f32 %v5836, %v6483
        %v6485 = vpop.f32.mrf.mxu0
        %v6486 = vpop.f32.mrf.mxu0
        %v6487 = vadd.f32 %v5836, %v6486
        %v6488 = vpop.f32.mrf.mxu0
        %6489 = vmatprep.mubr.bf16.mxu0 %v6387
        %6490 = vmatmul.mubr.bf16.gmra.mxu0 %v6386
        %v6491 = vpop.f32.mrf.mxu0
        %v6492 = vadd.f32 %v5836, %v6491
        %v6493 = vpop.f32.mrf.mxu0
        %v6494 = vpop.f32.mrf.mxu0
        %v6495 = vadd.f32 %v5836, %v6494
        %v6496 = vpop.f32.mrf.mxu0
        %6497 = vmatprep.mubr.bf16.mxu0 %v6390
        %6498 = vmatmul.mubr.bf16.gmra.mxu0 %v6389
        %v6499 = vpop.f32.mrf.mxu0
        %v6500 = vadd.f32 %v5836, %v6499
        %v6501 = vpop.f32.mrf.mxu0
        %v6502 = vpop.f32.mrf.mxu0
        %v6503 = vadd.f32 %v5836, %v6502
        %v6504 = vpop.f32.mrf.mxu0
        %6505 = vmatprep.mubr.bf16.mxu0 %v6393
        %6506 = vmatmul.mubr.bf16.gmra.mxu0 %v6392
        %v6507 = vpop.f32.mrf.mxu0
        %v6508 = vadd.f32 %v5836, %v6507
        %v6509 = vpop.f32.mrf.mxu0
        %v6510 = vpop.f32.mrf.mxu0
        %v6511 = vadd.f32 %v5836, %v6510
        %v6512 = vpop.f32.mrf.mxu0
        %6513 = vmatprep.mubr.bf16.mxu0 %v6396
        %6514 = vmatmul.mubr.bf16.gmra.mxu0 %v6395
        %v6515 = vpop.f32.mrf.mxu0
        %v6516 = vadd.f32 %v5836, %v6515
        %v6517 = vpop.f32.mrf.mxu0
        %v6518 = vpop.f32.mrf.mxu0
        %v6519 = vadd.f32 %v5836, %v6518
        %v6520 = vpop.f32.mrf.mxu0
        %6521 = vdwg.mxu0
        %6522 = vmatprep.subr.bf16.mxu0 0
        %6523 = vmatpush1.bf16.msra.mxu0 0
        %6524 = vmatprep.subr.bf16.mxu0 0
        %6525 = vmatpush1.bf16.msra.mxu0 0
        %6526 = vmatprep.subr.bf16.mxu0 0
        %6527 = vmatpush1.bf16.msra.mxu0 0
        %6528 = vmatprep.subr.bf16.mxu0 0
        %6529 = vmatpush1.bf16.msra.mxu0 0
        %6530 = vmatprep.subr.bf16.mxu0 0
        %6531 = vmatpush1.bf16.msra.mxu0 0
        %6532 = vmatprep.subr.bf16.mxu0 0
        %6533 = vmatpush1.bf16.msra.mxu0 0
        %6534 = vmatprep.subr.bf16.mxu0 0
        %6535 = vmatpush1.bf16.msra.mxu0 %v6032
        %6536 = vmatprep.subr.bf16.mxu0 0
        %6537 = vmatpush1.bf16.msra.mxu0 %v6031
        %6538 = vmatprep.subr.bf16.mxu0 0
        %6539 = vmatpush2.bf16.msra.mxu0 0
        %6540 = vmatprep.subr.bf16.mxu0 0
        %6541 = vmatpush2.bf16.msra.mxu0 0
        %6542 = vmatprep.subr.bf16.mxu0 0
        %6543 = vmatpush2.bf16.msra.mxu0 0
        %6544 = vmatprep.subr.bf16.mxu0 0
        %6545 = vmatpush2.bf16.msra.mxu0 0
        %6546 = vmatprep.subr.bf16.mxu0 0
        %6547 = vmatpush2.bf16.msra.mxu0 0
        %6548 = vmatprep.subr.bf16.mxu0 0
        %6549 = vmatpush2.bf16.msra.mxu0 0
        %6550 = vmatprep.subr.bf16.mxu0 0
        %6551 = vmatpush2.bf16.msra.mxu0 0
        %6552 = vmatprep.subr.bf16.mxu0 0
        %6553 = vmatpush2.bf16.msra.mxu0 0
        %6554 = vmatprep.mubr.bf16.mxu0 0
        %6555 = vmatmul.mubr.bf16.gmra.mxu0 %v6413
        %v6556 = vpop.f32.mrf.mxu0
        %v6557 = vadd.f32 %v6468, %v6556
        %v6558 = vpop.f32.mrf.mxu0
        %v6559 = vpop.f32.mrf.mxu0
        %v6560 = vadd.f32 %v6471, %v6559
        %v6561 = vpop.f32.mrf.mxu0
        %6562 = vmatprep.mubr.bf16.mxu0 0
        %6563 = vmatmul.mubr.bf16.gmra.mxu0 %v6416
        %v6564 = vpop.f32.mrf.mxu0
        %v6565 = vadd.f32 %v6476, %v6564
        %v6566 = vpop.f32.mrf.mxu0
        %v6567 = vpop.f32.mrf.mxu0
        %v6568 = vadd.f32 %v6479, %v6567
        %v6569 = vpop.f32.mrf.mxu0
        %6570 = vmatprep.mubr.bf16.mxu0 0
        %6571 = vmatmul.mubr.bf16.gmra.mxu0 %v6419
        %v6572 = vpop.f32.mrf.mxu0
        %v6573 = vadd.f32 %v6484, %v6572
        %v6574 = vpop.f32.mrf.mxu0
        %v6575 = vpop.f32.mrf.mxu0
        %v6576 = vadd.f32 %v6487, %v6575
        %v6577 = vpop.f32.mrf.mxu0
        %6578 = vmatprep.mubr.bf16.mxu0 0
        %6579 = vmatmul.mubr.bf16.gmra.mxu0 %v6422
        %v6580 = vpop.f32.mrf.mxu0
        %v6581 = vadd.f32 %v6492, %v6580
        %v6582 = vpop.f32.mrf.mxu0
        %v6583 = vpop.f32.mrf.mxu0
        %v6584 = vadd.f32 %v6495, %v6583
        %v6585 = vpop.f32.mrf.mxu0
        %6586 = vmatprep.mubr.bf16.mxu0 0
        %6587 = vmatmul.mubr.bf16.gmra.mxu0 %v6425
        %v6588 = vpop.f32.mrf.mxu0
        %v6589 = vadd.f32 %v6500, %v6588
        %v6590 = vpop.f32.mrf.mxu0
        %v6591 = vpop.f32.mrf.mxu0
        %v6592 = vadd.f32 %v6503, %v6591
        %v6593 = vpop.f32.mrf.mxu0
        %6594 = vmatprep.mubr.bf16.mxu0 0
        %6595 = vmatmul.mubr.bf16.gmra.mxu0 %v6428
        %v6596 = vpop.f32.mrf.mxu0
        %v6597 = vadd.f32 %v6508, %v6596
        %v6598 = vpop.f32.mrf.mxu0
        %v6599 = vpop.f32.mrf.mxu0
        %v6600 = vadd.f32 %v6511, %v6599
        %v6601 = vpop.f32.mrf.mxu0
        %6602 = vmatprep.mubr.bf16.mxu0 0
        %6603 = vmatmul.mubr.bf16.gmra.mxu0 %v6431
        %v6604 = vpop.f32.mrf.mxu0
        %v6605 = vadd.f32 %v6516, %v6604
        %v6606 = vpop.f32.mrf.mxu0
        %v6607 = vpop.f32.mrf.mxu0
        %v6608 = vadd.f32 %v6519, %v6607
        %v6609 = vpop.f32.mrf.mxu0
        %6610 = vdwg.mxu0
        %v6611 = vmax.f32 %v6557, 0.0
        %v6612 = vmax.f32 %v6560, 0.0
        %v6613 = vmax.f32 %v6565, 0.0
        %v6614 = vmax.f32 %v6568, 0.0
        %v6615 = vmax.f32 %v6573, 0.0
        %v6616 = vmax.f32 %v6576, 0.0
        %v6617 = vmax.f32 %v6581, 0.0
        %v6618 = vmax.f32 %v6584, 0.0
        %v6619 = vmax.f32 %v6589, 0.0
        %v6620 = vmax.f32 %v6592, 0.0
        %v6621 = vmax.f32 %v6597, 0.0
        %v6622 = vmax.f32 %v6600, 0.0
        %v6623 = vmax.f32 %v6605, 0.0
        %v6624 = vmax.f32 %v6608, 0.0
        %6625 = vst.msk [vmem:[#allocation5 + $0x70] sm:$0xff] %vm6264, %v6611
        %6626 = vst.msk [vmem:[#allocation5 + $0x78] sm:$0xff] %vm6264, %v6612
        %6627 = vst.msk [vmem:[#allocation5 + $0x80] sm:$0xff] %vm6264, %v6613
        %6628 = vst.msk [vmem:[#allocation5 + $0x88] sm:$0xff] %vm6264, %v6614
        %6629 = vst.msk [vmem:[#allocation5 + $0x90] sm:$0xff] %vm6264, %v6615
        %6630 = vst.msk [vmem:[#allocation5 + $0x98] sm:$0xff] %vm6264, %v6616
        %6631 = vst.msk [vmem:[#allocation5 + $0xa0] sm:$0xff] %vm6264, %v6617
        %6632 = vst.msk [vmem:[#allocation5 + $0xa8] sm:$0xff] %vm6264, %v6618
        %6633 = vst.msk [vmem:[#allocation5 + $0xb0] sm:$0xff] %vm6264, %v6619
        %6634 = vst.msk [vmem:[#allocation5 + $0xb8] sm:$0xff] %vm6264, %v6620
        %6635 = vst.msk [vmem:[#allocation5 + $0xc0] sm:$0xff] %vm6264, %v6621
        %6636 = vst.msk [vmem:[#allocation5 + $0xc8] sm:$0xff] %vm6264, %v6622
        %6637 = vst.msk [vmem:[#allocation5 + $0xd0] sm:$0xff] %vm6264, %v6623
        %6638 = vst.msk [vmem:[#allocation5 + $0xd8] sm:$0xff] %vm6264, %v6624
        %v6639 = vld [vmem:[#allocation5] ss:$2 sm:$0x7f]
        %s6640 = scalar_lea.vmem [#allocation5], 1
        %v6641 = vld [vmem:[%s6640] ss:$2 sm:$0x7f]
        %v6642 = vmax.f32 %v6639, %v6641
        %s6643 = scalar_lea.vmem [#allocation5], 16
        %v6644 = vld [vmem:[%s6643] ss:$2 sm:$0x7f]
        %v6645 = vmax.f32 %v6642, %v6644
        %s6646 = scalar_lea.vmem [#allocation5], 17
        %v6647 = vld [vmem:[%s6646] ss:$2 sm:$0x7f]
        %v6648 = vmax.f32 %v6645, %v6647
        %vm6649 = vcmask 522240
        %6650 = vst.msk [vmem:[#allocation6] sm:$0x7f] %vm6649, %v6648
        %s6651 = scalar_lea.vmem [#allocation5], 32
        %v6652 = vld [vmem:[%s6651] ss:$2 sm:$0x7f]
        %s6653 = scalar_lea.vmem [#allocation5], 33
        %v6654 = vld [vmem:[%s6653] ss:$2 sm:$0x7f]
        %v6655 = vmax.f32 %v6652, %v6654
        %s6656 = scalar_lea.vmem [#allocation5], 48
        %v6657 = vld [vmem:[%s6656] ss:$2 sm:$0x7f]
        %v6658 = vmax.f32 %v6655, %v6657
        %s6659 = scalar_lea.vmem [#allocation5], 49
        %v6660 = vld [vmem:[%s6659] ss:$2 sm:$0x7f]
        %v6661 = vmax.f32 %v6658, %v6660
        %6663 = vrot.lane.b32.xlu0 %v6661, 64
        %v6664 = vpop.permute.xlu0 %6663
        %vm6666 = vcmask 1047040
        %6667 = vst.msk [vmem:[#allocation6] sm:$0x7f] %vm6666, %v6664
        %s6668 = scalar_lea.vmem [#allocation5], 64
        %v6669 = vld [vmem:[%s6668] ss:$2 sm:$0x7f]
        %s6670 = scalar_lea.vmem [#allocation5], 65
        %v6671 = vld [vmem:[%s6670] ss:$2 sm:$0x7f]
        %v6672 = vmax.f32 %v6669, %v6671
        %s6673 = scalar_lea.vmem [#allocation5], 80
        %v6674 = vld [vmem:[%s6673] ss:$2 sm:$0x7f]
        %v6675 = vmax.f32 %v6672, %v6674
        %s6676 = scalar_lea.vmem [#allocation5], 81
        %v6677 = vld [vmem:[%s6676] ss:$2 sm:$0x7f]
        %v6678 = vmax.f32 %v6675, %v6677
        %6679 = vst.msk [vmem:[#allocation6 + $0x8] sm:$0x7f] %vm6649, %v6678
        %s6680 = scalar_lea.vmem [#allocation5], 96
        %v6681 = vld [vmem:[%s6680] ss:$2 sm:$0x7f]
        %s6682 = scalar_lea.vmem [#allocation5], 97
        %v6683 = vld [vmem:[%s6682] ss:$2 sm:$0x7f]
        %v6684 = vmax.f32 %v6681, %v6683
        %s6685 = scalar_lea.vmem [#allocation5], 112
        %v6686 = vld [vmem:[%s6685] ss:$2 sm:$0x7f]
        %v6687 = vmax.f32 %v6684, %v6686
        %s6688 = scalar_lea.vmem [#allocation5], 113
        %v6689 = vld [vmem:[%s6688] ss:$2 sm:$0x7f]
        %v6690 = vmax.f32 %v6687, %v6689
        %6692 = vrot.lane.b32.xlu0 %v6690, 64
        %v6693 = vpop.permute.xlu0 %6692
        %6695 = vst.msk [vmem:[#allocation6 + $0x8] sm:$0x7f] %vm6666, %v6693
        %s6696 = scalar_lea.vmem [#allocation5], 128
        %v6697 = vld [vmem:[%s6696] ss:$2 sm:$0x7f]
        %s6698 = scalar_lea.vmem [#allocation5], 129
        %v6699 = vld [vmem:[%s6698] ss:$2 sm:$0x7f]
        %v6700 = vmax.f32 %v6697, %v6699
        %s6701 = scalar_lea.vmem [#allocation5], 144
        %v6702 = vld [vmem:[%s6701] ss:$2 sm:$0x7f]
        %v6703 = vmax.f32 %v6700, %v6702
        %s6704 = scalar_lea.vmem [#allocation5], 145
        %v6705 = vld [vmem:[%s6704] ss:$2 sm:$0x7f]
        %v6706 = vmax.f32 %v6703, %v6705
        %6707 = vst.msk [vmem:[#allocation6 + $0x10] sm:$0x7f] %vm6649, %v6706
        %s6708 = scalar_lea.vmem [#allocation5], 160
        %v6709 = vld [vmem:[%s6708] ss:$2 sm:$0x7f]
        %s6710 = scalar_lea.vmem [#allocation5], 161
        %v6711 = vld [vmem:[%s6710] ss:$2 sm:$0x7f]
        %v6712 = vmax.f32 %v6709, %v6711
        %s6713 = scalar_lea.vmem [#allocation5], 176
        %v6714 = vld [vmem:[%s6713] ss:$2 sm:$0x7f]
        %v6715 = vmax.f32 %v6712, %v6714
        %s6716 = scalar_lea.vmem [#allocation5], 177
        %v6717 = vld [vmem:[%s6716] ss:$2 sm:$0x7f]
        %v6718 = vmax.f32 %v6715, %v6717
        %6720 = vrot.lane.b32.xlu0 %v6718, 64
        %v6721 = vpop.permute.xlu0 %6720
        %6723 = vst.msk [vmem:[#allocation6 + $0x10] sm:$0x7f] %vm6666, %v6721
        %s6724 = scalar_lea.vmem [#allocation5], 192
        %v6725 = vld [vmem:[%s6724] ss:$2 sm:$0x7f]
        %s6726 = scalar_lea.vmem [#allocation5], 193
        %v6727 = vld [vmem:[%s6726] ss:$2 sm:$0x7f]
        %v6728 = vmax.f32 %v6725, %v6727
        %s6729 = scalar_lea.vmem [#allocation5], 208
        %v6730 = vld [vmem:[%s6729] ss:$2 sm:$0x7f]
        %v6731 = vmax.f32 %v6728, %v6730
        %s6732 = scalar_lea.vmem [#allocation5], 209
        %v6733 = vld [vmem:[%s6732] ss:$2 sm:$0x7f]
        %v6734 = vmax.f32 %v6731, %v6733
        %6735 = vst.msk [vmem:[#allocation6 + $0x18] sm:$0x7f] %vm6649, %v6734
        %v6736 = vld [vmem:[%s6] sm:$0x1]
        %v6737 = vld [vmem:[#allocation6] ss:$8 sm:$0xf]
        %v6739 = vlaneseq
        %v6740 = vshrl.u32 %v6739, 7
        %v6741 = vsub.s32 0, %v6740
        %v6742 = vrot.slane %v6737, %v6741
        %v6743 = vlaneseq
        %v6744 = vshrl.u32 %v6743, 7
        %v6745 = vsub.s32 1, %v6744
        %v6746 = vrot.slane %v6737, %v6745
        %v6747 = vlaneseq
        %v6748 = vshrl.u32 %v6747, 7
        %v6749 = vsub.s32 2, %v6748
        %v6750 = vrot.slane %v6737, %v6749
        %v6751 = vlaneseq
        %v6752 = vshrl.u32 %v6751, 7
        %v6753 = vsub.s32 3, %v6752
        %v6754 = vrot.slane %v6737, %v6753
        %v6759 = vpack.c.bf16 %v6742, %v6742
        %v6760 = vpack.c.bf16 %v6746, %v6746
        %v6761 = vpack.c.bf16 %v6750, %v6750
        %v6762 = vpack.c.bf16 %v6754, %v6754
        %v6763 = vld [vmem:[%s5] sm:$0xf]
        %v6764 = vld [vmem:[%s5 + $0x4] sm:$0xf]
        %v6765 = vld [vmem:[%s5 + $0x8] sm:$0xf]
        %v6766 = vld [vmem:[%s5 + $0xc] sm:$0xf]
        %v6767 = vld [vmem:[%s5 + $0x10] sm:$0xf]
        %v6768 = vld [vmem:[%s5 + $0x14] sm:$0xf]
        %v6769 = vld [vmem:[%s5 + $0x18] sm:$0xf]
        %v6770 = vld [vmem:[%s5 + $0x1c] sm:$0xf]
        %v6771 = vld [vmem:[%s5 + $0x20] sm:$0xf]
        %v6772 = vld [vmem:[%s5 + $0x24] sm:$0xf]
        %v6773 = vld [vmem:[%s5 + $0x28] sm:$0xf]
        %v6774 = vld [vmem:[%s5 + $0x2c] sm:$0xf]
        %v6775 = vld [vmem:[%s5 + $0x30] sm:$0xf]
        %v6776 = vld [vmem:[%s5 + $0x34] sm:$0xf]
        %v6777 = vld [vmem:[%s5 + $0x38] sm:$0xf]
        %v6778 = vld [vmem:[%s5 + $0x3c] sm:$0xf]
        %v6779 = vld [vmem:[%s5 + $0x40] sm:$0xf]
        %v6780 = vld [vmem:[%s5 + $0x44] sm:$0xf]
        %v6781 = vld [vmem:[%s5 + $0x48] sm:$0xf]
        %v6782 = vld [vmem:[%s5 + $0x4c] sm:$0xf]
        %v6783 = vld [vmem:[%s5 + $0x50] sm:$0xf]
        %v6784 = vld [vmem:[%s5 + $0x54] sm:$0xf]
        %v6785 = vld [vmem:[%s5 + $0x58] sm:$0xf]
        %v6786 = vld [vmem:[%s5 + $0x5c] sm:$0xf]
        %v6787 = vld [vmem:[%s5 + $0x60] sm:$0xf]
        %v6788 = vld [vmem:[%s5 + $0x64] sm:$0xf]
        %v6789 = vld [vmem:[%s5 + $0x68] sm:$0xf]
        %v6790 = vld [vmem:[%s5 + $0x6c] sm:$0xf]
        %v6791 = vld [vmem:[%s5 + $0x70] sm:$0xf]
        %v6792 = vld [vmem:[%s5 + $0x74] sm:$0xf]
        %v6793 = vld [vmem:[%s5 + $0x78] sm:$0xf]
        %v6794 = vld [vmem:[%s5 + $0x7c] sm:$0xf]
        %v6795 = vld [vmem:[%s5 + $0x80] sm:$0xf]
        %v6796 = vld [vmem:[%s5 + $0x84] sm:$0xf]
        %v6797 = vld [vmem:[%s5 + $0x88] sm:$0xf]
        %v6798 = vld [vmem:[%s5 + $0x8c] sm:$0xf]
        %v6799 = vld [vmem:[%s5 + $0x90] sm:$0xf]
        %v6800 = vld [vmem:[%s5 + $0x94] sm:$0xf]
        %v6801 = vld [vmem:[%s5 + $0x98] sm:$0xf]
        %v6802 = vld [vmem:[%s5 + $0x9c] sm:$0xf]
        %v6803 = vld [vmem:[%s5 + $0xa0] sm:$0xf]
        %v6804 = vld [vmem:[%s5 + $0xa4] sm:$0xf]
        %v6805 = vld [vmem:[%s5 + $0xa8] sm:$0xf]
        %v6806 = vld [vmem:[%s5 + $0xac] sm:$0xf]
        %v6807 = vld [vmem:[%s5 + $0xb0] sm:$0xf]
        %v6808 = vld [vmem:[%s5 + $0xb4] sm:$0xf]
        %v6809 = vld [vmem:[%s5 + $0xb8] sm:$0xf]
        %v6810 = vld [vmem:[%s5 + $0xbc] sm:$0xf]
        %v6811 = vld [vmem:[%s5 + $0xc0] sm:$0xf]
        %v6812 = vld [vmem:[%s5 + $0xc4] sm:$0xf]
        %v6813 = vld [vmem:[%s5 + $0xc8] sm:$0xf]
        %v6814 = vld [vmem:[%s5 + $0xcc] sm:$0xf]
        %v6815 = vld [vmem:[%s5 + $0xd0] sm:$0xf]
        %v6816 = vld [vmem:[%s5 + $0xd4] sm:$0xf]
        %v6817 = vld [vmem:[%s5 + $0xd8] sm:$0xf]
        %v6818 = vld [vmem:[%s5 + $0xdc] sm:$0xf]
        %v6875 = vunpack.c.l.b16 %v6763
        %v6876 = vunpack.c.l.b16 %v6764
        %v6877 = vunpack.c.l.b16 %v6765
        %v6878 = vunpack.c.l.b16 %v6766
        %v6879 = vunpack.c.l.b16 %v6767
        %v6880 = vunpack.c.l.b16 %v6768
        %v6881 = vunpack.c.l.b16 %v6769
        %v6882 = vunpack.c.l.b16 %v6770
        %v6883 = vunpack.c.l.b16 %v6771
        %v6884 = vunpack.c.l.b16 %v6772
        %v6885 = vunpack.c.l.b16 %v6773
        %v6886 = vunpack.c.l.b16 %v6774
        %v6887 = vunpack.c.l.b16 %v6775
        %v6888 = vunpack.c.l.b16 %v6776
        %v6889 = vunpack.c.l.b16 %v6777
        %v6890 = vunpack.c.l.b16 %v6778
        %v6891 = vunpack.c.l.b16 %v6779
        %v6892 = vunpack.c.l.b16 %v6780
        %v6893 = vunpack.c.l.b16 %v6781
        %v6894 = vunpack.c.l.b16 %v6782
        %v6895 = vunpack.c.l.b16 %v6783
        %v6896 = vunpack.c.l.b16 %v6784
        %v6897 = vunpack.c.l.b16 %v6785
        %v6898 = vunpack.c.l.b16 %v6786
        %v6899 = vunpack.c.l.b16 %v6787
        %v6900 = vunpack.c.l.b16 %v6788
        %v6901 = vunpack.c.l.b16 %v6789
        %v6902 = vunpack.c.l.b16 %v6790
        %v6903 = vunpack.c.l.b16 %v6791
        %v6904 = vunpack.c.l.b16 %v6792
        %v6905 = vunpack.c.l.b16 %v6793
        %v6906 = vunpack.c.l.b16 %v6794
        %v6907 = vunpack.c.l.b16 %v6795
        %v6908 = vunpack.c.l.b16 %v6796
        %v6909 = vunpack.c.l.b16 %v6797
        %v6910 = vunpack.c.l.b16 %v6798
        %v6911 = vunpack.c.l.b16 %v6799
        %v6912 = vunpack.c.l.b16 %v6800
        %v6913 = vunpack.c.l.b16 %v6801
        %v6914 = vunpack.c.l.b16 %v6802
        %v6915 = vunpack.c.l.b16 %v6803
        %v6916 = vunpack.c.l.b16 %v6804
        %v6917 = vunpack.c.l.b16 %v6805
        %v6918 = vunpack.c.l.b16 %v6806
        %v6919 = vunpack.c.l.b16 %v6807
        %v6920 = vunpack.c.l.b16 %v6808
        %v6921 = vunpack.c.l.b16 %v6809
        %v6922 = vunpack.c.l.b16 %v6810
        %v6923 = vunpack.c.l.b16 %v6811
        %v6924 = vunpack.c.l.b16 %v6812
        %v6925 = vunpack.c.l.b16 %v6813
        %v6926 = vunpack.c.l.b16 %v6814
        %v6927 = vunpack.c.l.b16 %v6815
        %v6928 = vunpack.c.l.b16 %v6816
        %v6929 = vunpack.c.l.b16 %v6817
        %v6930 = vunpack.c.l.b16 %v6818
        %v6931 = vpack.c.b16 %v6876, %v6875
        %v6932 = vpack.c.b16 %v6878, %v6877
        %v6933 = vpack.c.b16 %v6880, %v6879
        %v6934 = vpack.c.b16 %v6882, %v6881
        %v6935 = vpack.c.b16 %v6884, %v6883
        %v6936 = vpack.c.b16 %v6886, %v6885
        %v6937 = vpack.c.b16 %v6888, %v6887
        %v6938 = vpack.c.b16 %v6890, %v6889
        %v6939 = vpack.c.b16 %v6892, %v6891
        %v6940 = vpack.c.b16 %v6894, %v6893
        %v6941 = vpack.c.b16 %v6896, %v6895
        %v6942 = vpack.c.b16 %v6898, %v6897
        %v6943 = vpack.c.b16 %v6900, %v6899
        %v6944 = vpack.c.b16 %v6902, %v6901
        %v6945 = vpack.c.b16 %v6904, %v6903
        %v6946 = vpack.c.b16 %v6906, %v6905
        %v6947 = vpack.c.b16 %v6908, %v6907
        %v6948 = vpack.c.b16 %v6910, %v6909
        %v6949 = vpack.c.b16 %v6912, %v6911
        %v6950 = vpack.c.b16 %v6914, %v6913
        %v6951 = vpack.c.b16 %v6916, %v6915
        %v6952 = vpack.c.b16 %v6918, %v6917
        %v6953 = vpack.c.b16 %v6920, %v6919
        %v6954 = vpack.c.b16 %v6922, %v6921
        %v6955 = vpack.c.b16 %v6924, %v6923
        %v6956 = vpack.c.b16 %v6926, %v6925
        %v6957 = vpack.c.b16 %v6928, %v6927
        %v6958 = vpack.c.b16 %v6930, %v6929
        %v6988 = vsel %vm6264, %v6762, 0
        %6990 = vmatprep.subr.bf16.mxu0 0
        %6991 = vmatpush1.bf16.msra.mxu0 %v6938
        %6992 = vmatprep.subr.bf16.mxu0 0
        %6993 = vmatpush1.bf16.msra.mxu0 %v6937
        %6994 = vmatprep.subr.bf16.mxu0 0
        %6995 = vmatpush1.bf16.msra.mxu0 %v6936
        %6996 = vmatprep.subr.bf16.mxu0 0
        %6997 = vmatpush1.bf16.msra.mxu0 %v6935
        %6998 = vmatprep.subr.bf16.mxu0 0
        %6999 = vmatpush1.bf16.msra.mxu0 %v6934
        %7000 = vmatprep.subr.bf16.mxu0 0
        %7001 = vmatpush1.bf16.msra.mxu0 %v6933
        %7002 = vmatprep.subr.bf16.mxu0 0
        %7003 = vmatpush1.bf16.msra.mxu0 %v6932
        %7004 = vmatprep.subr.bf16.mxu0 0
        %7005 = vmatpush1.bf16.msra.mxu0 %v6931
        %7006 = vmatprep.subr.bf16.mxu0 0
        %7007 = vmatpush2.bf16.msra.mxu0 %v6946
        %7008 = vmatprep.subr.bf16.mxu0 0
        %7009 = vmatpush2.bf16.msra.mxu0 %v6945
        %7010 = vmatprep.subr.bf16.mxu0 0
        %7011 = vmatpush2.bf16.msra.mxu0 %v6944
        %7012 = vmatprep.subr.bf16.mxu0 0
        %7013 = vmatpush2.bf16.msra.mxu0 %v6943
        %7014 = vmatprep.subr.bf16.mxu0 0
        %7015 = vmatpush2.bf16.msra.mxu0 %v6942
        %7016 = vmatprep.subr.bf16.mxu0 0
        %7017 = vmatpush2.bf16.msra.mxu0 %v6941
        %7018 = vmatprep.subr.bf16.mxu0 0
        %7019 = vmatpush2.bf16.msra.mxu0 %v6940
        %7020 = vmatprep.subr.bf16.mxu0 0
        %7021 = vmatpush2.bf16.msra.mxu0 %v6939
        %7022 = vmatprep.mubr.bf16.mxu0 %v6760
        %7023 = vmatmul.mubr.bf16.gmra.mxu0 %v6759
        %v7024 = vpop.f32.mrf.mxu0
        %v7025 = vadd.f32 0.0, %v7024
        %v7026 = vpop.f32.mrf.mxu0
        %v7027 = vpop.f32.mrf.mxu0
        %v7028 = vpop.f32.mrf.mxu0
        %7029 = vdwg.mxu0
        %7030 = vmatprep.subr.bf16.mxu0 0
        %7031 = vmatpush1.bf16.msra.mxu0 %v6954
        %7032 = vmatprep.subr.bf16.mxu0 0
        %7033 = vmatpush1.bf16.msra.mxu0 %v6953
        %7034 = vmatprep.subr.bf16.mxu0 0
        %7035 = vmatpush1.bf16.msra.mxu0 %v6952
        %7036 = vmatprep.subr.bf16.mxu0 0
        %7037 = vmatpush1.bf16.msra.mxu0 %v6951
        %7038 = vmatprep.subr.bf16.mxu0 0
        %7039 = vmatpush1.bf16.msra.mxu0 %v6950
        %7040 = vmatprep.subr.bf16.mxu0 0
        %7041 = vmatpush1.bf16.msra.mxu0 %v6949
        %7042 = vmatprep.subr.bf16.mxu0 0
        %7043 = vmatpush1.bf16.msra.mxu0 %v6948
        %7044 = vmatprep.subr.bf16.mxu0 0
        %7045 = vmatpush1.bf16.msra.mxu0 %v6947
        %7046 = vmatprep.subr.bf16.mxu0 0
        %7047 = vmatpush2.bf16.msra.mxu0 0
        %7048 = vmatprep.subr.bf16.mxu0 0
        %7049 = vmatpush2.bf16.msra.mxu0 0
        %7050 = vmatprep.subr.bf16.mxu0 0
        %7051 = vmatpush2.bf16.msra.mxu0 0
        %7052 = vmatprep.subr.bf16.mxu0 0
        %7053 = vmatpush2.bf16.msra.mxu0 0
        %7054 = vmatprep.subr.bf16.mxu0 0
        %7055 = vmatpush2.bf16.msra.mxu0 %v6958
        %7056 = vmatprep.subr.bf16.mxu0 0
        %7057 = vmatpush2.bf16.msra.mxu0 %v6957
        %7058 = vmatprep.subr.bf16.mxu0 0
        %7059 = vmatpush2.bf16.msra.mxu0 %v6956
        %7060 = vmatprep.subr.bf16.mxu0 0
        %7061 = vmatpush2.bf16.msra.mxu0 %v6955
        %7062 = vmatprep.mubr.bf16.mxu0 %v6988
        %7063 = vmatmul.mubr.bf16.gmra.mxu0 %v6761
        %v7064 = vpop.f32.mrf.mxu0
        %v7065 = vadd.f32 %v7025, %v7064
        %v7066 = vpop.f32.mrf.mxu0
        %v7067 = vpop.f32.mrf.mxu0
        %v7068 = vpop.f32.mrf.mxu0
        %7069 = vdwg.mxu0
        %v7070 = vadd.f32 %v6736, %v7065
        %s7071 = scalar_lea.vmem [#allocation6], 1
        %v7072 = vld [vmem:[%s7071] ss:$8 sm:$0xf]
        %v7074 = vlaneseq
        %v7075 = vshrl.u32 %v7074, 7
        %v7076 = vsub.s32 0, %v7075
        %v7077 = vrot.slane %v7072, %v7076
        %v7078 = vlaneseq
        %v7079 = vshrl.u32 %v7078, 7
        %v7080 = vsub.s32 1, %v7079
        %v7081 = vrot.slane %v7072, %v7080
        %v7082 = vlaneseq
        %v7083 = vshrl.u32 %v7082, 7
        %v7084 = vsub.s32 2, %v7083
        %v7085 = vrot.slane %v7072, %v7084
        %v7086 = vlaneseq
        %v7087 = vshrl.u32 %v7086, 7
        %v7088 = vsub.s32 3, %v7087
        %v7089 = vrot.slane %v7072, %v7088
        %v7094 = vpack.c.bf16 %v7077, %v7077
        %v7095 = vpack.c.bf16 %v7081, %v7081
        %v7096 = vpack.c.bf16 %v7085, %v7085
        %v7097 = vpack.c.bf16 %v7089, %v7089
        %s7098 = scalar_lea.vmem %s5, 224
        %v7099 = vld [vmem:[%s7098] sm:$0xf]
        %v7100 = vld [vmem:[%s7098 + $0x4] sm:$0xf]
        %v7101 = vld [vmem:[%s7098 + $0x8] sm:$0xf]
        %v7102 = vld [vmem:[%s7098 + $0xc] sm:$0xf]
        %v7103 = vld [vmem:[%s7098 + $0x10] sm:$0xf]
        %v7104 = vld [vmem:[%s7098 + $0x14] sm:$0xf]
        %v7105 = vld [vmem:[%s7098 + $0x18] sm:$0xf]
        %v7106 = vld [vmem:[%s7098 + $0x1c] sm:$0xf]
        %v7107 = vld [vmem:[%s7098 + $0x20] sm:$0xf]
        %v7108 = vld [vmem:[%s7098 + $0x24] sm:$0xf]
        %v7109 = vld [vmem:[%s7098 + $0x28] sm:$0xf]
        %v7110 = vld [vmem:[%s7098 + $0x2c] sm:$0xf]
        %v7111 = vld [vmem:[%s7098 + $0x30] sm:$0xf]
        %v7112 = vld [vmem:[%s7098 + $0x34] sm:$0xf]
        %v7113 = vld [vmem:[%s7098 + $0x38] sm:$0xf]
        %v7114 = vld [vmem:[%s7098 + $0x3c] sm:$0xf]
        %v7115 = vld [vmem:[%s7098 + $0x40] sm:$0xf]
        %v7116 = vld [vmem:[%s7098 + $0x44] sm:$0xf]
        %v7117 = vld [vmem:[%s7098 + $0x48] sm:$0xf]
        %v7118 = vld [vmem:[%s7098 + $0x4c] sm:$0xf]
        %v7119 = vld [vmem:[%s7098 + $0x50] sm:$0xf]
        %v7120 = vld [vmem:[%s7098 + $0x54] sm:$0xf]
        %v7121 = vld [vmem:[%s7098 + $0x58] sm:$0xf]
        %v7122 = vld [vmem:[%s7098 + $0x5c] sm:$0xf]
        %v7123 = vld [vmem:[%s7098 + $0x60] sm:$0xf]
        %v7124 = vld [vmem:[%s7098 + $0x64] sm:$0xf]
        %v7125 = vld [vmem:[%s7098 + $0x68] sm:$0xf]
        %v7126 = vld [vmem:[%s7098 + $0x6c] sm:$0xf]
        %v7127 = vld [vmem:[%s7098 + $0x70] sm:$0xf]
        %v7128 = vld [vmem:[%s7098 + $0x74] sm:$0xf]
        %v7129 = vld [vmem:[%s7098 + $0x78] sm:$0xf]
        %v7130 = vld [vmem:[%s7098 + $0x7c] sm:$0xf]
        %v7131 = vld [vmem:[%s7098 + $0x80] sm:$0xf]
        %v7132 = vld [vmem:[%s7098 + $0x84] sm:$0xf]
        %v7133 = vld [vmem:[%s7098 + $0x88] sm:$0xf]
        %v7134 = vld [vmem:[%s7098 + $0x8c] sm:$0xf]
        %v7135 = vld [vmem:[%s7098 + $0x90] sm:$0xf]
        %v7136 = vld [vmem:[%s7098 + $0x94] sm:$0xf]
        %v7137 = vld [vmem:[%s7098 + $0x98] sm:$0xf]
        %v7138 = vld [vmem:[%s7098 + $0x9c] sm:$0xf]
        %v7139 = vld [vmem:[%s7098 + $0xa0] sm:$0xf]
        %v7140 = vld [vmem:[%s7098 + $0xa4] sm:$0xf]
        %v7141 = vld [vmem:[%s7098 + $0xa8] sm:$0xf]
        %v7142 = vld [vmem:[%s7098 + $0xac] sm:$0xf]
        %v7143 = vld [vmem:[%s7098 + $0xb0] sm:$0xf]
        %v7144 = vld [vmem:[%s7098 + $0xb4] sm:$0xf]
        %v7145 = vld [vmem:[%s7098 + $0xb8] sm:$0xf]
        %v7146 = vld [vmem:[%s7098 + $0xbc] sm:$0xf]
        %v7147 = vld [vmem:[%s7098 + $0xc0] sm:$0xf]
        %v7148 = vld [vmem:[%s7098 + $0xc4] sm:$0xf]
        %v7149 = vld [vmem:[%s7098 + $0xc8] sm:$0xf]
        %v7150 = vld [vmem:[%s7098 + $0xcc] sm:$0xf]
        %v7151 = vld [vmem:[%s7098 + $0xd0] sm:$0xf]
        %v7152 = vld [vmem:[%s7098 + $0xd4] sm:$0xf]
        %v7153 = vld [vmem:[%s7098 + $0xd8] sm:$0xf]
        %v7154 = vld [vmem:[%s7098 + $0xdc] sm:$0xf]
        %v7211 = vunpack.c.l.b16 %v7099
        %v7212 = vunpack.c.l.b16 %v7100
        %v7213 = vunpack.c.l.b16 %v7101
        %v7214 = vunpack.c.l.b16 %v7102
        %v7215 = vunpack.c.l.b16 %v7103
        %v7216 = vunpack.c.l.b16 %v7104
        %v7217 = vunpack.c.l.b16 %v7105
        %v7218 = vunpack.c.l.b16 %v7106
        %v7219 = vunpack.c.l.b16 %v7107
        %v7220 = vunpack.c.l.b16 %v7108
        %v7221 = vunpack.c.l.b16 %v7109
        %v7222 = vunpack.c.l.b16 %v7110
        %v7223 = vunpack.c.l.b16 %v7111
        %v7224 = vunpack.c.l.b16 %v7112
        %v7225 = vunpack.c.l.b16 %v7113
        %v7226 = vunpack.c.l.b16 %v7114
        %v7227 = vunpack.c.l.b16 %v7115
        %v7228 = vunpack.c.l.b16 %v7116
        %v7229 = vunpack.c.l.b16 %v7117
        %v7230 = vunpack.c.l.b16 %v7118
        %v7231 = vunpack.c.l.b16 %v7119
        %v7232 = vunpack.c.l.b16 %v7120
        %v7233 = vunpack.c.l.b16 %v7121
        %v7234 = vunpack.c.l.b16 %v7122
        %v7235 = vunpack.c.l.b16 %v7123
        %v7236 = vunpack.c.l.b16 %v7124
        %v7237 = vunpack.c.l.b16 %v7125
        %v7238 = vunpack.c.l.b16 %v7126
        %v7239 = vunpack.c.l.b16 %v7127
        %v7240 = vunpack.c.l.b16 %v7128
        %v7241 = vunpack.c.l.b16 %v7129
        %v7242 = vunpack.c.l.b16 %v7130
        %v7243 = vunpack.c.l.b16 %v7131
        %v7244 = vunpack.c.l.b16 %v7132
        %v7245 = vunpack.c.l.b16 %v7133
        %v7246 = vunpack.c.l.b16 %v7134
        %v7247 = vunpack.c.l.b16 %v7135
        %v7248 = vunpack.c.l.b16 %v7136
        %v7249 = vunpack.c.l.b16 %v7137
        %v7250 = vunpack.c.l.b16 %v7138
        %v7251 = vunpack.c.l.b16 %v7139
        %v7252 = vunpack.c.l.b16 %v7140
        %v7253 = vunpack.c.l.b16 %v7141
        %v7254 = vunpack.c.l.b16 %v7142
        %v7255 = vunpack.c.l.b16 %v7143
        %v7256 = vunpack.c.l.b16 %v7144
        %v7257 = vunpack.c.l.b16 %v7145
        %v7258 = vunpack.c.l.b16 %v7146
        %v7259 = vunpack.c.l.b16 %v7147
        %v7260 = vunpack.c.l.b16 %v7148
        %v7261 = vunpack.c.l.b16 %v7149
        %v7262 = vunpack.c.l.b16 %v7150
        %v7263 = vunpack.c.l.b16 %v7151
        %v7264 = vunpack.c.l.b16 %v7152
        %v7265 = vunpack.c.l.b16 %v7153
        %v7266 = vunpack.c.l.b16 %v7154
        %v7267 = vpack.c.b16 %v7212, %v7211
        %v7268 = vpack.c.b16 %v7214, %v7213
        %v7269 = vpack.c.b16 %v7216, %v7215
        %v7270 = vpack.c.b16 %v7218, %v7217
        %v7271 = vpack.c.b16 %v7220, %v7219
        %v7272 = vpack.c.b16 %v7222, %v7221
        %v7273 = vpack.c.b16 %v7224, %v7223
        %v7274 = vpack.c.b16 %v7226, %v7225
        %v7275 = vpack.c.b16 %v7228, %v7227
        %v7276 = vpack.c.b16 %v7230, %v7229
        %v7277 = vpack.c.b16 %v7232, %v7231
        %v7278 = vpack.c.b16 %v7234, %v7233
        %v7279 = vpack.c.b16 %v7236, %v7235
        %v7280 = vpack.c.b16 %v7238, %v7237
        %v7281 = vpack.c.b16 %v7240, %v7239
        %v7282 = vpack.c.b16 %v7242, %v7241
        %v7283 = vpack.c.b16 %v7244, %v7243
        %v7284 = vpack.c.b16 %v7246, %v7245
        %v7285 = vpack.c.b16 %v7248, %v7247
        %v7286 = vpack.c.b16 %v7250, %v7249
        %v7287 = vpack.c.b16 %v7252, %v7251
        %v7288 = vpack.c.b16 %v7254, %v7253
        %v7289 = vpack.c.b16 %v7256, %v7255
        %v7290 = vpack.c.b16 %v7258, %v7257
        %v7291 = vpack.c.b16 %v7260, %v7259
        %v7292 = vpack.c.b16 %v7262, %v7261
        %v7293 = vpack.c.b16 %v7264, %v7263
        %v7294 = vpack.c.b16 %v7266, %v7265
        %v7324 = vsel %vm6264, %v7097, 0
        %7326 = vmatprep.subr.bf16.mxu0 0
        %7327 = vmatpush1.bf16.msra.mxu0 %v7274
        %7328 = vmatprep.subr.bf16.mxu0 0
        %7329 = vmatpush1.bf16.msra.mxu0 %v7273
        %7330 = vmatprep.subr.bf16.mxu0 0
        %7331 = vmatpush1.bf16.msra.mxu0 %v7272
        %7332 = vmatprep.subr.bf16.mxu0 0
        %7333 = vmatpush1.bf16.msra.mxu0 %v7271
        %7334 = vmatprep.subr.bf16.mxu0 0
        %7335 = vmatpush1.bf16.msra.mxu0 %v7270
        %7336 = vmatprep.subr.bf16.mxu0 0
        %7337 = vmatpush1.bf16.msra.mxu0 %v7269
        %7338 = vmatprep.subr.bf16.mxu0 0
        %7339 = vmatpush1.bf16.msra.mxu0 %v7268
        %7340 = vmatprep.subr.bf16.mxu0 0
        %7341 = vmatpush1.bf16.msra.mxu0 %v7267
        %7342 = vmatprep.subr.bf16.mxu0 0
        %7343 = vmatpush2.bf16.msra.mxu0 %v7282
        %7344 = vmatprep.subr.bf16.mxu0 0
        %7345 = vmatpush2.bf16.msra.mxu0 %v7281
        %7346 = vmatprep.subr.bf16.mxu0 0
        %7347 = vmatpush2.bf16.msra.mxu0 %v7280
        %7348 = vmatprep.subr.bf16.mxu0 0
        %7349 = vmatpush2.bf16.msra.mxu0 %v7279
        %7350 = vmatprep.subr.bf16.mxu0 0
        %7351 = vmatpush2.bf16.msra.mxu0 %v7278
        %7352 = vmatprep.subr.bf16.mxu0 0
        %7353 = vmatpush2.bf16.msra.mxu0 %v7277
        %7354 = vmatprep.subr.bf16.mxu0 0
        %7355 = vmatpush2.bf16.msra.mxu0 %v7276
        %7356 = vmatprep.subr.bf16.mxu0 0
        %7357 = vmatpush2.bf16.msra.mxu0 %v7275
        %7358 = vmatprep.mubr.bf16.mxu0 %v7095
        %7359 = vmatmul.mubr.bf16.gmra.mxu0 %v7094
        %v7360 = vpop.f32.mrf.mxu0
        %v7361 = vadd.f32 0.0, %v7360
        %v7362 = vpop.f32.mrf.mxu0
        %v7363 = vpop.f32.mrf.mxu0
        %v7364 = vpop.f32.mrf.mxu0
        %7365 = vdwg.mxu0
        %7366 = vmatprep.subr.bf16.mxu0 0
        %7367 = vmatpush1.bf16.msra.mxu0 %v7290
        %7368 = vmatprep.subr.bf16.mxu0 0
        %7369 = vmatpush1.bf16.msra.mxu0 %v7289
        %7370 = vmatprep.subr.bf16.mxu0 0
        %7371 = vmatpush1.bf16.msra.mxu0 %v7288
        %7372 = vmatprep.subr.bf16.mxu0 0
        %7373 = vmatpush1.bf16.msra.mxu0 %v7287
        %7374 = vmatprep.subr.bf16.mxu0 0
        %7375 = vmatpush1.bf16.msra.mxu0 %v7286
        %7376 = vmatprep.subr.bf16.mxu0 0
        %7377 = vmatpush1.bf16.msra.mxu0 %v7285
        %7378 = vmatprep.subr.bf16.mxu0 0
        %7379 = vmatpush1.bf16.msra.mxu0 %v7284
        %7380 = vmatprep.subr.bf16.mxu0 0
        %7381 = vmatpush1.bf16.msra.mxu0 %v7283
        %7382 = vmatprep.subr.bf16.mxu0 0
        %7383 = vmatpush2.bf16.msra.mxu0 0
        %7384 = vmatprep.subr.bf16.mxu0 0
        %7385 = vmatpush2.bf16.msra.mxu0 0
        %7386 = vmatprep.subr.bf16.mxu0 0
        %7387 = vmatpush2.bf16.msra.mxu0 0
        %7388 = vmatprep.subr.bf16.mxu0 0
        %7389 = vmatpush2.bf16.msra.mxu0 0
        %7390 = vmatprep.subr.bf16.mxu0 0
        %7391 = vmatpush2.bf16.msra.mxu0 %v7294
        %7392 = vmatprep.subr.bf16.mxu0 0
        %7393 = vmatpush2.bf16.msra.mxu0 %v7293
        %7394 = vmatprep.subr.bf16.mxu0 0
        %7395 = vmatpush2.bf16.msra.mxu0 %v7292
        %7396 = vmatprep.subr.bf16.mxu0 0
        %7397 = vmatpush2.bf16.msra.mxu0 %v7291
        %7398 = vmatprep.mubr.bf16.mxu0 %v7324
        %7399 = vmatmul.mubr.bf16.gmra.mxu0 %v7096
        %v7400 = vpop.f32.mrf.mxu0
        %v7401 = vadd.f32 %v7361, %v7400
        %v7402 = vpop.f32.mrf.mxu0
        %v7403 = vpop.f32.mrf.mxu0
        %v7404 = vpop.f32.mrf.mxu0
        %7405 = vdwg.mxu0
        %v7406 = vadd.f32 %v7070, %v7401
        %s7407 = scalar_lea.vmem [#allocation6], 2
        %v7408 = vld [vmem:[%s7407] ss:$8 sm:$0xf]
        %v7410 = vlaneseq
        %v7411 = vshrl.u32 %v7410, 7
        %v7412 = vsub.s32 0, %v7411
        %v7413 = vrot.slane %v7408, %v7412
        %v7414 = vlaneseq
        %v7415 = vshrl.u32 %v7414, 7
        %v7416 = vsub.s32 1, %v7415
        %v7417 = vrot.slane %v7408, %v7416
        %v7418 = vlaneseq
        %v7419 = vshrl.u32 %v7418, 7
        %v7420 = vsub.s32 2, %v7419
        %v7421 = vrot.slane %v7408, %v7420
        %v7422 = vlaneseq
        %v7423 = vshrl.u32 %v7422, 7
        %v7424 = vsub.s32 3, %v7423
        %v7425 = vrot.slane %v7408, %v7424
        %v7430 = vpack.c.bf16 %v7413, %v7413
        %v7431 = vpack.c.bf16 %v7417, %v7417
        %v7432 = vpack.c.bf16 %v7421, %v7421
        %v7433 = vpack.c.bf16 %v7425, %v7425
        %s7434 = scalar_lea.vmem %s5, 448
        %v7435 = vld [vmem:[%s7434] sm:$0xf]
        %v7436 = vld [vmem:[%s7434 + $0x4] sm:$0xf]
        %v7437 = vld [vmem:[%s7434 + $0x8] sm:$0xf]
        %v7438 = vld [vmem:[%s7434 + $0xc] sm:$0xf]
        %v7439 = vld [vmem:[%s7434 + $0x10] sm:$0xf]
        %v7440 = vld [vmem:[%s7434 + $0x14] sm:$0xf]
        %v7441 = vld [vmem:[%s7434 + $0x18] sm:$0xf]
        %v7442 = vld [vmem:[%s7434 + $0x1c] sm:$0xf]
        %v7443 = vld [vmem:[%s7434 + $0x20] sm:$0xf]
        %v7444 = vld [vmem:[%s7434 + $0x24] sm:$0xf]
        %v7445 = vld [vmem:[%s7434 + $0x28] sm:$0xf]
        %v7446 = vld [vmem:[%s7434 + $0x2c] sm:$0xf]
        %v7447 = vld [vmem:[%s7434 + $0x30] sm:$0xf]
        %v7448 = vld [vmem:[%s7434 + $0x34] sm:$0xf]
        %v7449 = vld [vmem:[%s7434 + $0x38] sm:$0xf]
        %v7450 = vld [vmem:[%s7434 + $0x3c] sm:$0xf]
        %v7451 = vld [vmem:[%s7434 + $0x40] sm:$0xf]
        %v7452 = vld [vmem:[%s7434 + $0x44] sm:$0xf]
        %v7453 = vld [vmem:[%s7434 + $0x48] sm:$0xf]
        %v7454 = vld [vmem:[%s7434 + $0x4c] sm:$0xf]
        %v7455 = vld [vmem:[%s7434 + $0x50] sm:$0xf]
        %v7456 = vld [vmem:[%s7434 + $0x54] sm:$0xf]
        %v7457 = vld [vmem:[%s7434 + $0x58] sm:$0xf]
        %v7458 = vld [vmem:[%s7434 + $0x5c] sm:$0xf]
        %v7459 = vld [vmem:[%s7434 + $0x60] sm:$0xf]
        %v7460 = vld [vmem:[%s7434 + $0x64] sm:$0xf]
        %v7461 = vld [vmem:[%s7434 + $0x68] sm:$0xf]
        %v7462 = vld [vmem:[%s7434 + $0x6c] sm:$0xf]
        %v7463 = vld [vmem:[%s7434 + $0x70] sm:$0xf]
        %v7464 = vld [vmem:[%s7434 + $0x74] sm:$0xf]
        %v7465 = vld [vmem:[%s7434 + $0x78] sm:$0xf]
        %v7466 = vld [vmem:[%s7434 + $0x7c] sm:$0xf]
        %v7467 = vld [vmem:[%s7434 + $0x80] sm:$0xf]
        %v7468 = vld [vmem:[%s7434 + $0x84] sm:$0xf]
        %v7469 = vld [vmem:[%s7434 + $0x88] sm:$0xf]
        %v7470 = vld [vmem:[%s7434 + $0x8c] sm:$0xf]
        %v7471 = vld [vmem:[%s7434 + $0x90] sm:$0xf]
        %v7472 = vld [vmem:[%s7434 + $0x94] sm:$0xf]
        %v7473 = vld [vmem:[%s7434 + $0x98] sm:$0xf]
        %v7474 = vld [vmem:[%s7434 + $0x9c] sm:$0xf]
        %v7475 = vld [vmem:[%s7434 + $0xa0] sm:$0xf]
        %v7476 = vld [vmem:[%s7434 + $0xa4] sm:$0xf]
        %v7477 = vld [vmem:[%s7434 + $0xa8] sm:$0xf]
        %v7478 = vld [vmem:[%s7434 + $0xac] sm:$0xf]
        %v7479 = vld [vmem:[%s7434 + $0xb0] sm:$0xf]
        %v7480 = vld [vmem:[%s7434 + $0xb4] sm:$0xf]
        %v7481 = vld [vmem:[%s7434 + $0xb8] sm:$0xf]
        %v7482 = vld [vmem:[%s7434 + $0xbc] sm:$0xf]
        %v7483 = vld [vmem:[%s7434 + $0xc0] sm:$0xf]
        %v7484 = vld [vmem:[%s7434 + $0xc4] sm:$0xf]
        %v7485 = vld [vmem:[%s7434 + $0xc8] sm:$0xf]
        %v7486 = vld [vmem:[%s7434 + $0xcc] sm:$0xf]
        %v7487 = vld [vmem:[%s7434 + $0xd0] sm:$0xf]
        %v7488 = vld [vmem:[%s7434 + $0xd4] sm:$0xf]
        %v7489 = vld [vmem:[%s7434 + $0xd8] sm:$0xf]
        %v7490 = vld [vmem:[%s7434 + $0xdc] sm:$0xf]
        %v7547 = vunpack.c.l.b16 %v7435
        %v7548 = vunpack.c.l.b16 %v7436
        %v7549 = vunpack.c.l.b16 %v7437
        %v7550 = vunpack.c.l.b16 %v7438
        %v7551 = vunpack.c.l.b16 %v7439
        %v7552 = vunpack.c.l.b16 %v7440
        %v7553 = vunpack.c.l.b16 %v7441
        %v7554 = vunpack.c.l.b16 %v7442
        %v7555 = vunpack.c.l.b16 %v7443
        %v7556 = vunpack.c.l.b16 %v7444
        %v7557 = vunpack.c.l.b16 %v7445
        %v7558 = vunpack.c.l.b16 %v7446
        %v7559 = vunpack.c.l.b16 %v7447
        %v7560 = vunpack.c.l.b16 %v7448
        %v7561 = vunpack.c.l.b16 %v7449
        %v7562 = vunpack.c.l.b16 %v7450
        %v7563 = vunpack.c.l.b16 %v7451
        %v7564 = vunpack.c.l.b16 %v7452
        %v7565 = vunpack.c.l.b16 %v7453
        %v7566 = vunpack.c.l.b16 %v7454
        %v7567 = vunpack.c.l.b16 %v7455
        %v7568 = vunpack.c.l.b16 %v7456
        %v7569 = vunpack.c.l.b16 %v7457
        %v7570 = vunpack.c.l.b16 %v7458
        %v7571 = vunpack.c.l.b16 %v7459
        %v7572 = vunpack.c.l.b16 %v7460
        %v7573 = vunpack.c.l.b16 %v7461
        %v7574 = vunpack.c.l.b16 %v7462
        %v7575 = vunpack.c.l.b16 %v7463
        %v7576 = vunpack.c.l.b16 %v7464
        %v7577 = vunpack.c.l.b16 %v7465
        %v7578 = vunpack.c.l.b16 %v7466
        %v7579 = vunpack.c.l.b16 %v7467
        %v7580 = vunpack.c.l.b16 %v7468
        %v7581 = vunpack.c.l.b16 %v7469
        %v7582 = vunpack.c.l.b16 %v7470
        %v7583 = vunpack.c.l.b16 %v7471
        %v7584 = vunpack.c.l.b16 %v7472
        %v7585 = vunpack.c.l.b16 %v7473
        %v7586 = vunpack.c.l.b16 %v7474
        %v7587 = vunpack.c.l.b16 %v7475
        %v7588 = vunpack.c.l.b16 %v7476
        %v7589 = vunpack.c.l.b16 %v7477
        %v7590 = vunpack.c.l.b16 %v7478
        %v7591 = vunpack.c.l.b16 %v7479
        %v7592 = vunpack.c.l.b16 %v7480
        %v7593 = vunpack.c.l.b16 %v7481
        %v7594 = vunpack.c.l.b16 %v7482
        %v7595 = vunpack.c.l.b16 %v7483
        %v7596 = vunpack.c.l.b16 %v7484
        %v7597 = vunpack.c.l.b16 %v7485
        %v7598 = vunpack.c.l.b16 %v7486
        %v7599 = vunpack.c.l.b16 %v7487
        %v7600 = vunpack.c.l.b16 %v7488
        %v7601 = vunpack.c.l.b16 %v7489
        %v7602 = vunpack.c.l.b16 %v7490
        %v7603 = vpack.c.b16 %v7548, %v7547
        %v7604 = vpack.c.b16 %v7550, %v7549
        %v7605 = vpack.c.b16 %v7552, %v7551
        %v7606 = vpack.c.b16 %v7554, %v7553
        %v7607 = vpack.c.b16 %v7556, %v7555
        %v7608 = vpack.c.b16 %v7558, %v7557
        %v7609 = vpack.c.b16 %v7560, %v7559
        %v7610 = vpack.c.b16 %v7562, %v7561
        %v7611 = vpack.c.b16 %v7564, %v7563
        %v7612 = vpack.c.b16 %v7566, %v7565
        %v7613 = vpack.c.b16 %v7568, %v7567
        %v7614 = vpack.c.b16 %v7570, %v7569
        %v7615 = vpack.c.b16 %v7572, %v7571
        %v7616 = vpack.c.b16 %v7574, %v7573
        %v7617 = vpack.c.b16 %v7576, %v7575
        %v7618 = vpack.c.b16 %v7578, %v7577
        %v7619 = vpack.c.b16 %v7580, %v7579
        %v7620 = vpack.c.b16 %v7582, %v7581
        %v7621 = vpack.c.b16 %v7584, %v7583
        %v7622 = vpack.c.b16 %v7586, %v7585
        %v7623 = vpack.c.b16 %v7588, %v7587
        %v7624 = vpack.c.b16 %v7590, %v7589
        %v7625 = vpack.c.b16 %v7592, %v7591
        %v7626 = vpack.c.b16 %v7594, %v7593
        %v7627 = vpack.c.b16 %v7596, %v7595
        %v7628 = vpack.c.b16 %v7598, %v7597
        %v7629 = vpack.c.b16 %v7600, %v7599
        %v7630 = vpack.c.b16 %v7602, %v7601
        %v7660 = vsel %vm6264, %v7433, 0
        %7662 = vmatprep.subr.bf16.mxu0 0
        %7663 = vmatpush1.bf16.msra.mxu0 %v7610
        %7664 = vmatprep.subr.bf16.mxu0 0
        %7665 = vmatpush1.bf16.msra.mxu0 %v7609
        %7666 = vmatprep.subr.bf16.mxu0 0
        %7667 = vmatpush1.bf16.msra.mxu0 %v7608
        %7668 = vmatprep.subr.bf16.mxu0 0
        %7669 = vmatpush1.bf16.msra.mxu0 %v7607
        %7670 = vmatprep.subr.bf16.mxu0 0
        %7671 = vmatpush1.bf16.msra.mxu0 %v7606
        %7672 = vmatprep.subr.bf16.mxu0 0
        %7673 = vmatpush1.bf16.msra.mxu0 %v7605
        %7674 = vmatprep.subr.bf16.mxu0 0
        %7675 = vmatpush1.bf16.msra.mxu0 %v7604
        %7676 = vmatprep.subr.bf16.mxu0 0
        %7677 = vmatpush1.bf16.msra.mxu0 %v7603
        %7678 = vmatprep.subr.bf16.mxu0 0
        %7679 = vmatpush2.bf16.msra.mxu0 %v7618
        %7680 = vmatprep.subr.bf16.mxu0 0
        %7681 = vmatpush2.bf16.msra.mxu0 %v7617
        %7682 = vmatprep.subr.bf16.mxu0 0
        %7683 = vmatpush2.bf16.msra.mxu0 %v7616
        %7684 = vmatprep.subr.bf16.mxu0 0
        %7685 = vmatpush2.bf16.msra.mxu0 %v7615
        %7686 = vmatprep.subr.bf16.mxu0 0
        %7687 = vmatpush2.bf16.msra.mxu0 %v7614
        %7688 = vmatprep.subr.bf16.mxu0 0
        %7689 = vmatpush2.bf16.msra.mxu0 %v7613
        %7690 = vmatprep.subr.bf16.mxu0 0
        %7691 = vmatpush2.bf16.msra.mxu0 %v7612
        %7692 = vmatprep.subr.bf16.mxu0 0
        %7693 = vmatpush2.bf16.msra.mxu0 %v7611
        %7694 = vmatprep.mubr.bf16.mxu0 %v7431
        %7695 = vmatmul.mubr.bf16.gmra.mxu0 %v7430
        %v7696 = vpop.f32.mrf.mxu0
        %v7697 = vadd.f32 0.0, %v7696
        %v7698 = vpop.f32.mrf.mxu0
        %v7699 = vpop.f32.mrf.mxu0
        %v7700 = vpop.f32.mrf.mxu0
        %7701 = vdwg.mxu0
        %7702 = vmatprep.subr.bf16.mxu0 0
        %7703 = vmatpush1.bf16.msra.mxu0 %v7626
        %7704 = vmatprep.subr.bf16.mxu0 0
        %7705 = vmatpush1.bf16.msra.mxu0 %v7625
        %7706 = vmatprep.subr.bf16.mxu0 0
        %7707 = vmatpush1.bf16.msra.mxu0 %v7624
        %7708 = vmatprep.subr.bf16.mxu0 0
        %7709 = vmatpush1.bf16.msra.mxu0 %v7623
        %7710 = vmatprep.subr.bf16.mxu0 0
        %7711 = vmatpush1.bf16.msra.mxu0 %v7622
        %7712 = vmatprep.subr.bf16.mxu0 0
        %7713 = vmatpush1.bf16.msra.mxu0 %v7621
        %7714 = vmatprep.subr.bf16.mxu0 0
        %7715 = vmatpush1.bf16.msra.mxu0 %v7620
        %7716 = vmatprep.subr.bf16.mxu0 0
        %7717 = vmatpush1.bf16.msra.mxu0 %v7619
        %7718 = vmatprep.subr.bf16.mxu0 0
        %7719 = vmatpush2.bf16.msra.mxu0 0
        %7720 = vmatprep.subr.bf16.mxu0 0
        %7721 = vmatpush2.bf16.msra.mxu0 0
        %7722 = vmatprep.subr.bf16.mxu0 0
        %7723 = vmatpush2.bf16.msra.mxu0 0
        %7724 = vmatprep.subr.bf16.mxu0 0
        %7725 = vmatpush2.bf16.msra.mxu0 0
        %7726 = vmatprep.subr.bf16.mxu0 0
        %7727 = vmatpush2.bf16.msra.mxu0 %v7630
        %7728 = vmatprep.subr.bf16.mxu0 0
        %7729 = vmatpush2.bf16.msra.mxu0 %v7629
        %7730 = vmatprep.subr.bf16.mxu0 0
        %7731 = vmatpush2.bf16.msra.mxu0 %v7628
        %7732 = vmatprep.subr.bf16.mxu0 0
        %7733 = vmatpush2.bf16.msra.mxu0 %v7627
        %7734 = vmatprep.mubr.bf16.mxu0 %v7660
        %7735 = vmatmul.mubr.bf16.gmra.mxu0 %v7432
        %v7736 = vpop.f32.mrf.mxu0
        %v7737 = vadd.f32 %v7697, %v7736
        %v7738 = vpop.f32.mrf.mxu0
        %v7739 = vpop.f32.mrf.mxu0
        %v7740 = vpop.f32.mrf.mxu0
        %7741 = vdwg.mxu0
        %v7742 = vadd.f32 %v7406, %v7737
        %s7743 = scalar_lea.vmem [#allocation6], 3
        %v7744 = vld [vmem:[%s7743] ss:$8 sm:$0xf]
        %v7746 = vlaneseq
        %v7747 = vshrl.u32 %v7746, 7
        %v7748 = vsub.s32 0, %v7747
        %v7749 = vrot.slane %v7744, %v7748
        %v7750 = vlaneseq
        %v7751 = vshrl.u32 %v7750, 7
        %v7752 = vsub.s32 1, %v7751
        %v7753 = vrot.slane %v7744, %v7752
        %v7754 = vlaneseq
        %v7755 = vshrl.u32 %v7754, 7
        %v7756 = vsub.s32 2, %v7755
        %v7757 = vrot.slane %v7744, %v7756
        %v7758 = vlaneseq
        %v7759 = vshrl.u32 %v7758, 7
        %v7760 = vsub.s32 3, %v7759
        %v7761 = vrot.slane %v7744, %v7760
        %v7766 = vpack.c.bf16 %v7749, %v7749
        %v7767 = vpack.c.bf16 %v7753, %v7753
        %v7768 = vpack.c.bf16 %v7757, %v7757
        %v7769 = vpack.c.bf16 %v7761, %v7761
        %s7770 = scalar_lea.vmem %s5, 672
        %v7771 = vld [vmem:[%s7770] sm:$0xf]
        %v7772 = vld [vmem:[%s7770 + $0x4] sm:$0xf]
        %v7773 = vld [vmem:[%s7770 + $0x8] sm:$0xf]
        %v7774 = vld [vmem:[%s7770 + $0xc] sm:$0xf]
        %v7775 = vld [vmem:[%s7770 + $0x10] sm:$0xf]
        %v7776 = vld [vmem:[%s7770 + $0x14] sm:$0xf]
        %v7777 = vld [vmem:[%s7770 + $0x18] sm:$0xf]
        %v7778 = vld [vmem:[%s7770 + $0x1c] sm:$0xf]
        %v7779 = vld [vmem:[%s7770 + $0x20] sm:$0xf]
        %v7780 = vld [vmem:[%s7770 + $0x24] sm:$0xf]
        %v7781 = vld [vmem:[%s7770 + $0x28] sm:$0xf]
        %v7782 = vld [vmem:[%s7770 + $0x2c] sm:$0xf]
        %v7783 = vld [vmem:[%s7770 + $0x30] sm:$0xf]
        %v7784 = vld [vmem:[%s7770 + $0x34] sm:$0xf]
        %v7785 = vld [vmem:[%s7770 + $0x38] sm:$0xf]
        %v7786 = vld [vmem:[%s7770 + $0x3c] sm:$0xf]
        %v7787 = vld [vmem:[%s7770 + $0x40] sm:$0xf]
        %v7788 = vld [vmem:[%s7770 + $0x44] sm:$0xf]
        %v7789 = vld [vmem:[%s7770 + $0x48] sm:$0xf]
        %v7790 = vld [vmem:[%s7770 + $0x4c] sm:$0xf]
        %v7791 = vld [vmem:[%s7770 + $0x50] sm:$0xf]
        %v7792 = vld [vmem:[%s7770 + $0x54] sm:$0xf]
        %v7793 = vld [vmem:[%s7770 + $0x58] sm:$0xf]
        %v7794 = vld [vmem:[%s7770 + $0x5c] sm:$0xf]
        %v7795 = vld [vmem:[%s7770 + $0x60] sm:$0xf]
        %v7796 = vld [vmem:[%s7770 + $0x64] sm:$0xf]
        %v7797 = vld [vmem:[%s7770 + $0x68] sm:$0xf]
        %v7798 = vld [vmem:[%s7770 + $0x6c] sm:$0xf]
        %v7799 = vld [vmem:[%s7770 + $0x70] sm:$0xf]
        %v7800 = vld [vmem:[%s7770 + $0x74] sm:$0xf]
        %v7801 = vld [vmem:[%s7770 + $0x78] sm:$0xf]
        %v7802 = vld [vmem:[%s7770 + $0x7c] sm:$0xf]
        %v7803 = vld [vmem:[%s7770 + $0x80] sm:$0xf]
        %v7804 = vld [vmem:[%s7770 + $0x84] sm:$0xf]
        %v7805 = vld [vmem:[%s7770 + $0x88] sm:$0xf]
        %v7806 = vld [vmem:[%s7770 + $0x8c] sm:$0xf]
        %v7807 = vld [vmem:[%s7770 + $0x90] sm:$0xf]
        %v7808 = vld [vmem:[%s7770 + $0x94] sm:$0xf]
        %v7809 = vld [vmem:[%s7770 + $0x98] sm:$0xf]
        %v7810 = vld [vmem:[%s7770 + $0x9c] sm:$0xf]
        %v7811 = vld [vmem:[%s7770 + $0xa0] sm:$0xf]
        %v7812 = vld [vmem:[%s7770 + $0xa4] sm:$0xf]
        %v7813 = vld [vmem:[%s7770 + $0xa8] sm:$0xf]
        %v7814 = vld [vmem:[%s7770 + $0xac] sm:$0xf]
        %v7815 = vld [vmem:[%s7770 + $0xb0] sm:$0xf]
        %v7816 = vld [vmem:[%s7770 + $0xb4] sm:$0xf]
        %v7817 = vld [vmem:[%s7770 + $0xb8] sm:$0xf]
        %v7818 = vld [vmem:[%s7770 + $0xbc] sm:$0xf]
        %v7819 = vld [vmem:[%s7770 + $0xc0] sm:$0xf]
        %v7820 = vld [vmem:[%s7770 + $0xc4] sm:$0xf]
        %v7821 = vld [vmem:[%s7770 + $0xc8] sm:$0xf]
        %v7822 = vld [vmem:[%s7770 + $0xcc] sm:$0xf]
        %v7823 = vld [vmem:[%s7770 + $0xd0] sm:$0xf]
        %v7824 = vld [vmem:[%s7770 + $0xd4] sm:$0xf]
        %v7825 = vld [vmem:[%s7770 + $0xd8] sm:$0xf]
        %v7826 = vld [vmem:[%s7770 + $0xdc] sm:$0xf]
        %v7883 = vunpack.c.l.b16 %v7771
        %v7884 = vunpack.c.l.b16 %v7772
        %v7885 = vunpack.c.l.b16 %v7773
        %v7886 = vunpack.c.l.b16 %v7774
        %v7887 = vunpack.c.l.b16 %v7775
        %v7888 = vunpack.c.l.b16 %v7776
        %v7889 = vunpack.c.l.b16 %v7777
        %v7890 = vunpack.c.l.b16 %v7778
        %v7891 = vunpack.c.l.b16 %v7779
        %v7892 = vunpack.c.l.b16 %v7780
        %v7893 = vunpack.c.l.b16 %v7781
        %v7894 = vunpack.c.l.b16 %v7782
        %v7895 = vunpack.c.l.b16 %v7783
        %v7896 = vunpack.c.l.b16 %v7784
        %v7897 = vunpack.c.l.b16 %v7785
        %v7898 = vunpack.c.l.b16 %v7786
        %v7899 = vunpack.c.l.b16 %v7787
        %v7900 = vunpack.c.l.b16 %v7788
        %v7901 = vunpack.c.l.b16 %v7789
        %v7902 = vunpack.c.l.b16 %v7790
        %v7903 = vunpack.c.l.b16 %v7791
        %v7904 = vunpack.c.l.b16 %v7792
        %v7905 = vunpack.c.l.b16 %v7793
        %v7906 = vunpack.c.l.b16 %v7794
        %v7907 = vunpack.c.l.b16 %v7795
        %v7908 = vunpack.c.l.b16 %v7796
        %v7909 = vunpack.c.l.b16 %v7797
        %v7910 = vunpack.c.l.b16 %v7798
        %v7911 = vunpack.c.l.b16 %v7799
        %v7912 = vunpack.c.l.b16 %v7800
        %v7913 = vunpack.c.l.b16 %v7801
        %v7914 = vunpack.c.l.b16 %v7802
        %v7915 = vunpack.c.l.b16 %v7803
        %v7916 = vunpack.c.l.b16 %v7804
        %v7917 = vunpack.c.l.b16 %v7805
        %v7918 = vunpack.c.l.b16 %v7806
        %v7919 = vunpack.c.l.b16 %v7807
        %v7920 = vunpack.c.l.b16 %v7808
        %v7921 = vunpack.c.l.b16 %v7809
        %v7922 = vunpack.c.l.b16 %v7810
        %v7923 = vunpack.c.l.b16 %v7811
        %v7924 = vunpack.c.l.b16 %v7812
        %v7925 = vunpack.c.l.b16 %v7813
        %v7926 = vunpack.c.l.b16 %v7814
        %v7927 = vunpack.c.l.b16 %v7815
        %v7928 = vunpack.c.l.b16 %v7816
        %v7929 = vunpack.c.l.b16 %v7817
        %v7930 = vunpack.c.l.b16 %v7818
        %v7931 = vunpack.c.l.b16 %v7819
        %v7932 = vunpack.c.l.b16 %v7820
        %v7933 = vunpack.c.l.b16 %v7821
        %v7934 = vunpack.c.l.b16 %v7822
        %v7935 = vunpack.c.l.b16 %v7823
        %v7936 = vunpack.c.l.b16 %v7824
        %v7937 = vunpack.c.l.b16 %v7825
        %v7938 = vunpack.c.l.b16 %v7826
        %v7939 = vpack.c.b16 %v7884, %v7883
        %v7940 = vpack.c.b16 %v7886, %v7885
        %v7941 = vpack.c.b16 %v7888, %v7887
        %v7942 = vpack.c.b16 %v7890, %v7889
        %v7943 = vpack.c.b16 %v7892, %v7891
        %v7944 = vpack.c.b16 %v7894, %v7893
        %v7945 = vpack.c.b16 %v7896, %v7895
        %v7946 = vpack.c.b16 %v7898, %v7897
        %v7947 = vpack.c.b16 %v7900, %v7899
        %v7948 = vpack.c.b16 %v7902, %v7901
        %v7949 = vpack.c.b16 %v7904, %v7903
        %v7950 = vpack.c.b16 %v7906, %v7905
        %v7951 = vpack.c.b16 %v7908, %v7907
        %v7952 = vpack.c.b16 %v7910, %v7909
        %v7953 = vpack.c.b16 %v7912, %v7911
        %v7954 = vpack.c.b16 %v7914, %v7913
        %v7955 = vpack.c.b16 %v7916, %v7915
        %v7956 = vpack.c.b16 %v7918, %v7917
        %v7957 = vpack.c.b16 %v7920, %v7919
        %v7958 = vpack.c.b16 %v7922, %v7921
        %v7959 = vpack.c.b16 %v7924, %v7923
        %v7960 = vpack.c.b16 %v7926, %v7925
        %v7961 = vpack.c.b16 %v7928, %v7927
        %v7962 = vpack.c.b16 %v7930, %v7929
        %v7963 = vpack.c.b16 %v7932, %v7931
        %v7964 = vpack.c.b16 %v7934, %v7933
        %v7965 = vpack.c.b16 %v7936, %v7935
        %v7966 = vpack.c.b16 %v7938, %v7937
        %v7996 = vsel %vm6264, %v7769, 0
        %7998 = vmatprep.subr.bf16.mxu0 0
        %7999 = vmatpush1.bf16.msra.mxu0 %v7946
        %8000 = vmatprep.subr.bf16.mxu0 0
        %8001 = vmatpush1.bf16.msra.mxu0 %v7945
        %8002 = vmatprep.subr.bf16.mxu0 0
        %8003 = vmatpush1.bf16.msra.mxu0 %v7944
        %8004 = vmatprep.subr.bf16.mxu0 0
        %8005 = vmatpush1.bf16.msra.mxu0 %v7943
        %8006 = vmatprep.subr.bf16.mxu0 0
        %8007 = vmatpush1.bf16.msra.mxu0 %v7942
        %8008 = vmatprep.subr.bf16.mxu0 0
        %8009 = vmatpush1.bf16.msra.mxu0 %v7941
        %8010 = vmatprep.subr.bf16.mxu0 0
        %8011 = vmatpush1.bf16.msra.mxu0 %v7940
        %8012 = vmatprep.subr.bf16.mxu0 0
        %8013 = vmatpush1.bf16.msra.mxu0 %v7939
        %8014 = vmatprep.subr.bf16.mxu0 0
        %8015 = vmatpush2.bf16.msra.mxu0 %v7954
        %8016 = vmatprep.subr.bf16.mxu0 0
        %8017 = vmatpush2.bf16.msra.mxu0 %v7953
        %8018 = vmatprep.subr.bf16.mxu0 0
        %8019 = vmatpush2.bf16.msra.mxu0 %v7952
        %8020 = vmatprep.subr.bf16.mxu0 0
        %8021 = vmatpush2.bf16.msra.mxu0 %v7951
        %8022 = vmatprep.subr.bf16.mxu0 0
        %8023 = vmatpush2.bf16.msra.mxu0 %v7950
        %8024 = vmatprep.subr.bf16.mxu0 0
        %8025 = vmatpush2.bf16.msra.mxu0 %v7949
        %8026 = vmatprep.subr.bf16.mxu0 0
        %8027 = vmatpush2.bf16.msra.mxu0 %v7948
        %8028 = vmatprep.subr.bf16.mxu0 0
        %8029 = vmatpush2.bf16.msra.mxu0 %v7947
        %8030 = vmatprep.mubr.bf16.mxu0 %v7767
        %8031 = vmatmul.mubr.bf16.gmra.mxu0 %v7766
        %v8032 = vpop.f32.mrf.mxu0
        %v8033 = vadd.f32 0.0, %v8032
        %v8034 = vpop.f32.mrf.mxu0
        %v8035 = vpop.f32.mrf.mxu0
        %v8036 = vpop.f32.mrf.mxu0
        %8037 = vdwg.mxu0
        %8038 = vmatprep.subr.bf16.mxu0 0
        %8039 = vmatpush1.bf16.msra.mxu0 %v7962
        %8040 = vmatprep.subr.bf16.mxu0 0
        %8041 = vmatpush1.bf16.msra.mxu0 %v7961
        %8042 = vmatprep.subr.bf16.mxu0 0
        %8043 = vmatpush1.bf16.msra.mxu0 %v7960
        %8044 = vmatprep.subr.bf16.mxu0 0
        %8045 = vmatpush1.bf16.msra.mxu0 %v7959
        %8046 = vmatprep.subr.bf16.mxu0 0
        %8047 = vmatpush1.bf16.msra.mxu0 %v7958
        %8048 = vmatprep.subr.bf16.mxu0 0
        %8049 = vmatpush1.bf16.msra.mxu0 %v7957
        %8050 = vmatprep.subr.bf16.mxu0 0
        %8051 = vmatpush1.bf16.msra.mxu0 %v7956
        %8052 = vmatprep.subr.bf16.mxu0 0
        %8053 = vmatpush1.bf16.msra.mxu0 %v7955
        %8054 = vmatprep.subr.bf16.mxu0 0
        %8055 = vmatpush2.bf16.msra.mxu0 0
        %8056 = vmatprep.subr.bf16.mxu0 0
        %8057 = vmatpush2.bf16.msra.mxu0 0
        %8058 = vmatprep.subr.bf16.mxu0 0
        %8059 = vmatpush2.bf16.msra.mxu0 0
        %8060 = vmatprep.subr.bf16.mxu0 0
        %8061 = vmatpush2.bf16.msra.mxu0 0
        %8062 = vmatprep.subr.bf16.mxu0 0
        %8063 = vmatpush2.bf16.msra.mxu0 %v7966
        %8064 = vmatprep.subr.bf16.mxu0 0
        %8065 = vmatpush2.bf16.msra.mxu0 %v7965
        %8066 = vmatprep.subr.bf16.mxu0 0
        %8067 = vmatpush2.bf16.msra.mxu0 %v7964
        %8068 = vmatprep.subr.bf16.mxu0 0
        %8069 = vmatpush2.bf16.msra.mxu0 %v7963
        %8070 = vmatprep.mubr.bf16.mxu0 %v7996
        %8071 = vmatmul.mubr.bf16.gmra.mxu0 %v7768
        %v8072 = vpop.f32.mrf.mxu0
        %v8073 = vadd.f32 %v8033, %v8072
        %v8074 = vpop.f32.mrf.mxu0
        %v8075 = vpop.f32.mrf.mxu0
        %v8076 = vpop.f32.mrf.mxu0
        %8077 = vdwg.mxu0
        %v8078 = vadd.f32 %v7742, %v8073
        %s8079 = scalar_lea.vmem [#allocation6], 4
        %v8080 = vld [vmem:[%s8079] ss:$8 sm:$0xf]
        %v8082 = vlaneseq
        %v8083 = vshrl.u32 %v8082, 7
        %v8084 = vsub.s32 0, %v8083
        %v8085 = vrot.slane %v8080, %v8084
        %v8086 = vlaneseq
        %v8087 = vshrl.u32 %v8086, 7
        %v8088 = vsub.s32 1, %v8087
        %v8089 = vrot.slane %v8080, %v8088
        %v8090 = vlaneseq
        %v8091 = vshrl.u32 %v8090, 7
        %v8092 = vsub.s32 2, %v8091
        %v8093 = vrot.slane %v8080, %v8092
        %v8094 = vlaneseq
        %v8095 = vshrl.u32 %v8094, 7
        %v8096 = vsub.s32 3, %v8095
        %v8097 = vrot.slane %v8080, %v8096
        %v8102 = vpack.c.bf16 %v8085, %v8085
        %v8103 = vpack.c.bf16 %v8089, %v8089
        %v8104 = vpack.c.bf16 %v8093, %v8093
        %v8105 = vpack.c.bf16 %v8097, %v8097
        %s8106 = scalar_lea.vmem %s5, 896
        %v8107 = vld [vmem:[%s8106] sm:$0xf]
        %v8108 = vld [vmem:[%s8106 + $0x4] sm:$0xf]
        %v8109 = vld [vmem:[%s8106 + $0x8] sm:$0xf]
        %v8110 = vld [vmem:[%s8106 + $0xc] sm:$0xf]
        %v8111 = vld [vmem:[%s8106 + $0x10] sm:$0xf]
        %v8112 = vld [vmem:[%s8106 + $0x14] sm:$0xf]
        %v8113 = vld [vmem:[%s8106 + $0x18] sm:$0xf]
        %v8114 = vld [vmem:[%s8106 + $0x1c] sm:$0xf]
        %v8115 = vld [vmem:[%s8106 + $0x20] sm:$0xf]
        %v8116 = vld [vmem:[%s8106 + $0x24] sm:$0xf]
        %v8117 = vld [vmem:[%s8106 + $0x28] sm:$0xf]
        %v8118 = vld [vmem:[%s8106 + $0x2c] sm:$0xf]
        %v8119 = vld [vmem:[%s8106 + $0x30] sm:$0xf]
        %v8120 = vld [vmem:[%s8106 + $0x34] sm:$0xf]
        %v8121 = vld [vmem:[%s8106 + $0x38] sm:$0xf]
        %v8122 = vld [vmem:[%s8106 + $0x3c] sm:$0xf]
        %v8123 = vld [vmem:[%s8106 + $0x40] sm:$0xf]
        %v8124 = vld [vmem:[%s8106 + $0x44] sm:$0xf]
        %v8125 = vld [vmem:[%s8106 + $0x48] sm:$0xf]
        %v8126 = vld [vmem:[%s8106 + $0x4c] sm:$0xf]
        %v8127 = vld [vmem:[%s8106 + $0x50] sm:$0xf]
        %v8128 = vld [vmem:[%s8106 + $0x54] sm:$0xf]
        %v8129 = vld [vmem:[%s8106 + $0x58] sm:$0xf]
        %v8130 = vld [vmem:[%s8106 + $0x5c] sm:$0xf]
        %v8131 = vld [vmem:[%s8106 + $0x60] sm:$0xf]
        %v8132 = vld [vmem:[%s8106 + $0x64] sm:$0xf]
        %v8133 = vld [vmem:[%s8106 + $0x68] sm:$0xf]
        %v8134 = vld [vmem:[%s8106 + $0x6c] sm:$0xf]
        %v8135 = vld [vmem:[%s8106 + $0x70] sm:$0xf]
        %v8136 = vld [vmem:[%s8106 + $0x74] sm:$0xf]
        %v8137 = vld [vmem:[%s8106 + $0x78] sm:$0xf]
        %v8138 = vld [vmem:[%s8106 + $0x7c] sm:$0xf]
        %v8139 = vld [vmem:[%s8106 + $0x80] sm:$0xf]
        %v8140 = vld [vmem:[%s8106 + $0x84] sm:$0xf]
        %v8141 = vld [vmem:[%s8106 + $0x88] sm:$0xf]
        %v8142 = vld [vmem:[%s8106 + $0x8c] sm:$0xf]
        %v8143 = vld [vmem:[%s8106 + $0x90] sm:$0xf]
        %v8144 = vld [vmem:[%s8106 + $0x94] sm:$0xf]
        %v8145 = vld [vmem:[%s8106 + $0x98] sm:$0xf]
        %v8146 = vld [vmem:[%s8106 + $0x9c] sm:$0xf]
        %v8147 = vld [vmem:[%s8106 + $0xa0] sm:$0xf]
        %v8148 = vld [vmem:[%s8106 + $0xa4] sm:$0xf]
        %v8149 = vld [vmem:[%s8106 + $0xa8] sm:$0xf]
        %v8150 = vld [vmem:[%s8106 + $0xac] sm:$0xf]
        %v8151 = vld [vmem:[%s8106 + $0xb0] sm:$0xf]
        %v8152 = vld [vmem:[%s8106 + $0xb4] sm:$0xf]
        %v8153 = vld [vmem:[%s8106 + $0xb8] sm:$0xf]
        %v8154 = vld [vmem:[%s8106 + $0xbc] sm:$0xf]
        %v8155 = vld [vmem:[%s8106 + $0xc0] sm:$0xf]
        %v8156 = vld [vmem:[%s8106 + $0xc4] sm:$0xf]
        %v8157 = vld [vmem:[%s8106 + $0xc8] sm:$0xf]
        %v8158 = vld [vmem:[%s8106 + $0xcc] sm:$0xf]
        %v8159 = vld [vmem:[%s8106 + $0xd0] sm:$0xf]
        %v8160 = vld [vmem:[%s8106 + $0xd4] sm:$0xf]
        %v8161 = vld [vmem:[%s8106 + $0xd8] sm:$0xf]
        %v8162 = vld [vmem:[%s8106 + $0xdc] sm:$0xf]
        %v8219 = vunpack.c.l.b16 %v8107
        %v8220 = vunpack.c.l.b16 %v8108
        %v8221 = vunpack.c.l.b16 %v8109
        %v8222 = vunpack.c.l.b16 %v8110
        %v8223 = vunpack.c.l.b16 %v8111
        %v8224 = vunpack.c.l.b16 %v8112
        %v8225 = vunpack.c.l.b16 %v8113
        %v8226 = vunpack.c.l.b16 %v8114
        %v8227 = vunpack.c.l.b16 %v8115
        %v8228 = vunpack.c.l.b16 %v8116
        %v8229 = vunpack.c.l.b16 %v8117
        %v8230 = vunpack.c.l.b16 %v8118
        %v8231 = vunpack.c.l.b16 %v8119
        %v8232 = vunpack.c.l.b16 %v8120
        %v8233 = vunpack.c.l.b16 %v8121
        %v8234 = vunpack.c.l.b16 %v8122
        %v8235 = vunpack.c.l.b16 %v8123
        %v8236 = vunpack.c.l.b16 %v8124
        %v8237 = vunpack.c.l.b16 %v8125
        %v8238 = vunpack.c.l.b16 %v8126
        %v8239 = vunpack.c.l.b16 %v8127
        %v8240 = vunpack.c.l.b16 %v8128
        %v8241 = vunpack.c.l.b16 %v8129
        %v8242 = vunpack.c.l.b16 %v8130
        %v8243 = vunpack.c.l.b16 %v8131
        %v8244 = vunpack.c.l.b16 %v8132
        %v8245 = vunpack.c.l.b16 %v8133
        %v8246 = vunpack.c.l.b16 %v8134
        %v8247 = vunpack.c.l.b16 %v8135
        %v8248 = vunpack.c.l.b16 %v8136
        %v8249 = vunpack.c.l.b16 %v8137
        %v8250 = vunpack.c.l.b16 %v8138
        %v8251 = vunpack.c.l.b16 %v8139
        %v8252 = vunpack.c.l.b16 %v8140
        %v8253 = vunpack.c.l.b16 %v8141
        %v8254 = vunpack.c.l.b16 %v8142
        %v8255 = vunpack.c.l.b16 %v8143
        %v8256 = vunpack.c.l.b16 %v8144
        %v8257 = vunpack.c.l.b16 %v8145
        %v8258 = vunpack.c.l.b16 %v8146
        %v8259 = vunpack.c.l.b16 %v8147
        %v8260 = vunpack.c.l.b16 %v8148
        %v8261 = vunpack.c.l.b16 %v8149
        %v8262 = vunpack.c.l.b16 %v8150
        %v8263 = vunpack.c.l.b16 %v8151
        %v8264 = vunpack.c.l.b16 %v8152
        %v8265 = vunpack.c.l.b16 %v8153
        %v8266 = vunpack.c.l.b16 %v8154
        %v8267 = vunpack.c.l.b16 %v8155
        %v8268 = vunpack.c.l.b16 %v8156
        %v8269 = vunpack.c.l.b16 %v8157
        %v8270 = vunpack.c.l.b16 %v8158
        %v8271 = vunpack.c.l.b16 %v8159
        %v8272 = vunpack.c.l.b16 %v8160
        %v8273 = vunpack.c.l.b16 %v8161
        %v8274 = vunpack.c.l.b16 %v8162
        %v8275 = vpack.c.b16 %v8220, %v8219
        %v8276 = vpack.c.b16 %v8222, %v8221
        %v8277 = vpack.c.b16 %v8224, %v8223
        %v8278 = vpack.c.b16 %v8226, %v8225
        %v8279 = vpack.c.b16 %v8228, %v8227
        %v8280 = vpack.c.b16 %v8230, %v8229
        %v8281 = vpack.c.b16 %v8232, %v8231
        %v8282 = vpack.c.b16 %v8234, %v8233
        %v8283 = vpack.c.b16 %v8236, %v8235
        %v8284 = vpack.c.b16 %v8238, %v8237
        %v8285 = vpack.c.b16 %v8240, %v8239
        %v8286 = vpack.c.b16 %v8242, %v8241
        %v8287 = vpack.c.b16 %v8244, %v8243
        %v8288 = vpack.c.b16 %v8246, %v8245
        %v8289 = vpack.c.b16 %v8248, %v8247
        %v8290 = vpack.c.b16 %v8250, %v8249
        %v8291 = vpack.c.b16 %v8252, %v8251
        %v8292 = vpack.c.b16 %v8254, %v8253
        %v8293 = vpack.c.b16 %v8256, %v8255
        %v8294 = vpack.c.b16 %v8258, %v8257
        %v8295 = vpack.c.b16 %v8260, %v8259
        %v8296 = vpack.c.b16 %v8262, %v8261
        %v8297 = vpack.c.b16 %v8264, %v8263
        %v8298 = vpack.c.b16 %v8266, %v8265
        %v8299 = vpack.c.b16 %v8268, %v8267
        %v8300 = vpack.c.b16 %v8270, %v8269
        %v8301 = vpack.c.b16 %v8272, %v8271
        %v8302 = vpack.c.b16 %v8274, %v8273
        %v8332 = vsel %vm6264, %v8105, 0
        %8334 = vmatprep.subr.bf16.mxu0 0
        %8335 = vmatpush1.bf16.msra.mxu0 %v8282
        %8336 = vmatprep.subr.bf16.mxu0 0
        %8337 = vmatpush1.bf16.msra.mxu0 %v8281
        %8338 = vmatprep.subr.bf16.mxu0 0
        %8339 = vmatpush1.bf16.msra.mxu0 %v8280
        %8340 = vmatprep.subr.bf16.mxu0 0
        %8341 = vmatpush1.bf16.msra.mxu0 %v8279
        %8342 = vmatprep.subr.bf16.mxu0 0
        %8343 = vmatpush1.bf16.msra.mxu0 %v8278
        %8344 = vmatprep.subr.bf16.mxu0 0
        %8345 = vmatpush1.bf16.msra.mxu0 %v8277
        %8346 = vmatprep.subr.bf16.mxu0 0
        %8347 = vmatpush1.bf16.msra.mxu0 %v8276
        %8348 = vmatprep.subr.bf16.mxu0 0
        %8349 = vmatpush1.bf16.msra.mxu0 %v8275
        %8350 = vmatprep.subr.bf16.mxu0 0
        %8351 = vmatpush2.bf16.msra.mxu0 %v8290
        %8352 = vmatprep.subr.bf16.mxu0 0
        %8353 = vmatpush2.bf16.msra.mxu0 %v8289
        %8354 = vmatprep.subr.bf16.mxu0 0
        %8355 = vmatpush2.bf16.msra.mxu0 %v8288
        %8356 = vmatprep.subr.bf16.mxu0 0
        %8357 = vmatpush2.bf16.msra.mxu0 %v8287
        %8358 = vmatprep.subr.bf16.mxu0 0
        %8359 = vmatpush2.bf16.msra.mxu0 %v8286
        %8360 = vmatprep.subr.bf16.mxu0 0
        %8361 = vmatpush2.bf16.msra.mxu0 %v8285
        %8362 = vmatprep.subr.bf16.mxu0 0
        %8363 = vmatpush2.bf16.msra.mxu0 %v8284
        %8364 = vmatprep.subr.bf16.mxu0 0
        %8365 = vmatpush2.bf16.msra.mxu0 %v8283
        %8366 = vmatprep.mubr.bf16.mxu0 %v8103
        %8367 = vmatmul.mubr.bf16.gmra.mxu0 %v8102
        %v8368 = vpop.f32.mrf.mxu0
        %v8369 = vadd.f32 0.0, %v8368
        %v8370 = vpop.f32.mrf.mxu0
        %v8371 = vpop.f32.mrf.mxu0
        %v8372 = vpop.f32.mrf.mxu0
        %8373 = vdwg.mxu0
        %8374 = vmatprep.subr.bf16.mxu0 0
        %8375 = vmatpush1.bf16.msra.mxu0 %v8298
        %8376 = vmatprep.subr.bf16.mxu0 0
        %8377 = vmatpush1.bf16.msra.mxu0 %v8297
        %8378 = vmatprep.subr.bf16.mxu0 0
        %8379 = vmatpush1.bf16.msra.mxu0 %v8296
        %8380 = vmatprep.subr.bf16.mxu0 0
        %8381 = vmatpush1.bf16.msra.mxu0 %v8295
        %8382 = vmatprep.subr.bf16.mxu0 0
        %8383 = vmatpush1.bf16.msra.mxu0 %v8294
        %8384 = vmatprep.subr.bf16.mxu0 0
        %8385 = vmatpush1.bf16.msra.mxu0 %v8293
        %8386 = vmatprep.subr.bf16.mxu0 0
        %8387 = vmatpush1.bf16.msra.mxu0 %v8292
        %8388 = vmatprep.subr.bf16.mxu0 0
        %8389 = vmatpush1.bf16.msra.mxu0 %v8291
        %8390 = vmatprep.subr.bf16.mxu0 0
        %8391 = vmatpush2.bf16.msra.mxu0 0
        %8392 = vmatprep.subr.bf16.mxu0 0
        %8393 = vmatpush2.bf16.msra.mxu0 0
        %8394 = vmatprep.subr.bf16.mxu0 0
        %8395 = vmatpush2.bf16.msra.mxu0 0
        %8396 = vmatprep.subr.bf16.mxu0 0
        %8397 = vmatpush2.bf16.msra.mxu0 0
        %8398 = vmatprep.subr.bf16.mxu0 0
        %8399 = vmatpush2.bf16.msra.mxu0 %v8302
        %8400 = vmatprep.subr.bf16.mxu0 0
        %8401 = vmatpush2.bf16.msra.mxu0 %v8301
        %8402 = vmatprep.subr.bf16.mxu0 0
        %8403 = vmatpush2.bf16.msra.mxu0 %v8300
        %8404 = vmatprep.subr.bf16.mxu0 0
        %8405 = vmatpush2.bf16.msra.mxu0 %v8299
        %8406 = vmatprep.mubr.bf16.mxu0 %v8332
        %8407 = vmatmul.mubr.bf16.gmra.mxu0 %v8104
        %v8408 = vpop.f32.mrf.mxu0
        %v8409 = vadd.f32 %v8369, %v8408
        %v8410 = vpop.f32.mrf.mxu0
        %v8411 = vpop.f32.mrf.mxu0
        %v8412 = vpop.f32.mrf.mxu0
        %8413 = vdwg.mxu0
        %v8414 = vadd.f32 %v8078, %v8409
        %s8415 = scalar_lea.vmem [#allocation6], 5
        %v8416 = vld [vmem:[%s8415] ss:$8 sm:$0xf]
        %v8418 = vlaneseq
        %v8419 = vshrl.u32 %v8418, 7
        %v8420 = vsub.s32 0, %v8419
        %v8421 = vrot.slane %v8416, %v8420
        %v8422 = vlaneseq
        %v8423 = vshrl.u32 %v8422, 7
        %v8424 = vsub.s32 1, %v8423
        %v8425 = vrot.slane %v8416, %v8424
        %v8426 = vlaneseq
        %v8427 = vshrl.u32 %v8426, 7
        %v8428 = vsub.s32 2, %v8427
        %v8429 = vrot.slane %v8416, %v8428
        %v8430 = vlaneseq
        %v8431 = vshrl.u32 %v8430, 7
        %v8432 = vsub.s32 3, %v8431
        %v8433 = vrot.slane %v8416, %v8432
        %v8438 = vpack.c.bf16 %v8421, %v8421
        %v8439 = vpack.c.bf16 %v8425, %v8425
        %v8440 = vpack.c.bf16 %v8429, %v8429
        %v8441 = vpack.c.bf16 %v8433, %v8433
        %s8442 = scalar_lea.vmem %s5, 1120
        %v8443 = vld [vmem:[%s8442] sm:$0xf]
        %v8444 = vld [vmem:[%s8442 + $0x4] sm:$0xf]
        %v8445 = vld [vmem:[%s8442 + $0x8] sm:$0xf]
        %v8446 = vld [vmem:[%s8442 + $0xc] sm:$0xf]
        %v8447 = vld [vmem:[%s8442 + $0x10] sm:$0xf]
        %v8448 = vld [vmem:[%s8442 + $0x14] sm:$0xf]
        %v8449 = vld [vmem:[%s8442 + $0x18] sm:$0xf]
        %v8450 = vld [vmem:[%s8442 + $0x1c] sm:$0xf]
        %v8451 = vld [vmem:[%s8442 + $0x20] sm:$0xf]
        %v8452 = vld [vmem:[%s8442 + $0x24] sm:$0xf]
        %v8453 = vld [vmem:[%s8442 + $0x28] sm:$0xf]
        %v8454 = vld [vmem:[%s8442 + $0x2c] sm:$0xf]
        %v8455 = vld [vmem:[%s8442 + $0x30] sm:$0xf]
        %v8456 = vld [vmem:[%s8442 + $0x34] sm:$0xf]
        %v8457 = vld [vmem:[%s8442 + $0x38] sm:$0xf]
        %v8458 = vld [vmem:[%s8442 + $0x3c] sm:$0xf]
        %v8459 = vld [vmem:[%s8442 + $0x40] sm:$0xf]
        %v8460 = vld [vmem:[%s8442 + $0x44] sm:$0xf]
        %v8461 = vld [vmem:[%s8442 + $0x48] sm:$0xf]
        %v8462 = vld [vmem:[%s8442 + $0x4c] sm:$0xf]
        %v8463 = vld [vmem:[%s8442 + $0x50] sm:$0xf]
        %v8464 = vld [vmem:[%s8442 + $0x54] sm:$0xf]
        %v8465 = vld [vmem:[%s8442 + $0x58] sm:$0xf]
        %v8466 = vld [vmem:[%s8442 + $0x5c] sm:$0xf]
        %v8467 = vld [vmem:[%s8442 + $0x60] sm:$0xf]
        %v8468 = vld [vmem:[%s8442 + $0x64] sm:$0xf]
        %v8469 = vld [vmem:[%s8442 + $0x68] sm:$0xf]
        %v8470 = vld [vmem:[%s8442 + $0x6c] sm:$0xf]
        %v8471 = vld [vmem:[%s8442 + $0x70] sm:$0xf]
        %v8472 = vld [vmem:[%s8442 + $0x74] sm:$0xf]
        %v8473 = vld [vmem:[%s8442 + $0x78] sm:$0xf]
        %v8474 = vld [vmem:[%s8442 + $0x7c] sm:$0xf]
        %v8475 = vld [vmem:[%s8442 + $0x80] sm:$0xf]
        %v8476 = vld [vmem:[%s8442 + $0x84] sm:$0xf]
        %v8477 = vld [vmem:[%s8442 + $0x88] sm:$0xf]
        %v8478 = vld [vmem:[%s8442 + $0x8c] sm:$0xf]
        %v8479 = vld [vmem:[%s8442 + $0x90] sm:$0xf]
        %v8480 = vld [vmem:[%s8442 + $0x94] sm:$0xf]
        %v8481 = vld [vmem:[%s8442 + $0x98] sm:$0xf]
        %v8482 = vld [vmem:[%s8442 + $0x9c] sm:$0xf]
        %v8483 = vld [vmem:[%s8442 + $0xa0] sm:$0xf]
        %v8484 = vld [vmem:[%s8442 + $0xa4] sm:$0xf]
        %v8485 = vld [vmem:[%s8442 + $0xa8] sm:$0xf]
        %v8486 = vld [vmem:[%s8442 + $0xac] sm:$0xf]
        %v8487 = vld [vmem:[%s8442 + $0xb0] sm:$0xf]
        %v8488 = vld [vmem:[%s8442 + $0xb4] sm:$0xf]
        %v8489 = vld [vmem:[%s8442 + $0xb8] sm:$0xf]
        %v8490 = vld [vmem:[%s8442 + $0xbc] sm:$0xf]
        %v8491 = vld [vmem:[%s8442 + $0xc0] sm:$0xf]
        %v8492 = vld [vmem:[%s8442 + $0xc4] sm:$0xf]
        %v8493 = vld [vmem:[%s8442 + $0xc8] sm:$0xf]
        %v8494 = vld [vmem:[%s8442 + $0xcc] sm:$0xf]
        %v8495 = vld [vmem:[%s8442 + $0xd0] sm:$0xf]
        %v8496 = vld [vmem:[%s8442 + $0xd4] sm:$0xf]
        %v8497 = vld [vmem:[%s8442 + $0xd8] sm:$0xf]
        %v8498 = vld [vmem:[%s8442 + $0xdc] sm:$0xf]
        %v8555 = vunpack.c.l.b16 %v8443
        %v8556 = vunpack.c.l.b16 %v8444
        %v8557 = vunpack.c.l.b16 %v8445
        %v8558 = vunpack.c.l.b16 %v8446
        %v8559 = vunpack.c.l.b16 %v8447
        %v8560 = vunpack.c.l.b16 %v8448
        %v8561 = vunpack.c.l.b16 %v8449
        %v8562 = vunpack.c.l.b16 %v8450
        %v8563 = vunpack.c.l.b16 %v8451
        %v8564 = vunpack.c.l.b16 %v8452
        %v8565 = vunpack.c.l.b16 %v8453
        %v8566 = vunpack.c.l.b16 %v8454
        %v8567 = vunpack.c.l.b16 %v8455
        %v8568 = vunpack.c.l.b16 %v8456
        %v8569 = vunpack.c.l.b16 %v8457
        %v8570 = vunpack.c.l.b16 %v8458
        %v8571 = vunpack.c.l.b16 %v8459
        %v8572 = vunpack.c.l.b16 %v8460
        %v8573 = vunpack.c.l.b16 %v8461
        %v8574 = vunpack.c.l.b16 %v8462
        %v8575 = vunpack.c.l.b16 %v8463
        %v8576 = vunpack.c.l.b16 %v8464
        %v8577 = vunpack.c.l.b16 %v8465
        %v8578 = vunpack.c.l.b16 %v8466
        %v8579 = vunpack.c.l.b16 %v8467
        %v8580 = vunpack.c.l.b16 %v8468
        %v8581 = vunpack.c.l.b16 %v8469
        %v8582 = vunpack.c.l.b16 %v8470
        %v8583 = vunpack.c.l.b16 %v8471
        %v8584 = vunpack.c.l.b16 %v8472
        %v8585 = vunpack.c.l.b16 %v8473
        %v8586 = vunpack.c.l.b16 %v8474
        %v8587 = vunpack.c.l.b16 %v8475
        %v8588 = vunpack.c.l.b16 %v8476
        %v8589 = vunpack.c.l.b16 %v8477
        %v8590 = vunpack.c.l.b16 %v8478
        %v8591 = vunpack.c.l.b16 %v8479
        %v8592 = vunpack.c.l.b16 %v8480
        %v8593 = vunpack.c.l.b16 %v8481
        %v8594 = vunpack.c.l.b16 %v8482
        %v8595 = vunpack.c.l.b16 %v8483
        %v8596 = vunpack.c.l.b16 %v8484
        %v8597 = vunpack.c.l.b16 %v8485
        %v8598 = vunpack.c.l.b16 %v8486
        %v8599 = vunpack.c.l.b16 %v8487
        %v8600 = vunpack.c.l.b16 %v8488
        %v8601 = vunpack.c.l.b16 %v8489
        %v8602 = vunpack.c.l.b16 %v8490
        %v8603 = vunpack.c.l.b16 %v8491
        %v8604 = vunpack.c.l.b16 %v8492
        %v8605 = vunpack.c.l.b16 %v8493
        %v8606 = vunpack.c.l.b16 %v8494
        %v8607 = vunpack.c.l.b16 %v8495
        %v8608 = vunpack.c.l.b16 %v8496
        %v8609 = vunpack.c.l.b16 %v8497
        %v8610 = vunpack.c.l.b16 %v8498
        %v8611 = vpack.c.b16 %v8556, %v8555
        %v8612 = vpack.c.b16 %v8558, %v8557
        %v8613 = vpack.c.b16 %v8560, %v8559
        %v8614 = vpack.c.b16 %v8562, %v8561
        %v8615 = vpack.c.b16 %v8564, %v8563
        %v8616 = vpack.c.b16 %v8566, %v8565
        %v8617 = vpack.c.b16 %v8568, %v8567
        %v8618 = vpack.c.b16 %v8570, %v8569
        %v8619 = vpack.c.b16 %v8572, %v8571
        %v8620 = vpack.c.b16 %v8574, %v8573
        %v8621 = vpack.c.b16 %v8576, %v8575
        %v8622 = vpack.c.b16 %v8578, %v8577
        %v8623 = vpack.c.b16 %v8580, %v8579
        %v8624 = vpack.c.b16 %v8582, %v8581
        %v8625 = vpack.c.b16 %v8584, %v8583
        %v8626 = vpack.c.b16 %v8586, %v8585
        %v8627 = vpack.c.b16 %v8588, %v8587
        %v8628 = vpack.c.b16 %v8590, %v8589
        %v8629 = vpack.c.b16 %v8592, %v8591
        %v8630 = vpack.c.b16 %v8594, %v8593
        %v8631 = vpack.c.b16 %v8596, %v8595
        %v8632 = vpack.c.b16 %v8598, %v8597
        %v8633 = vpack.c.b16 %v8600, %v8599
        %v8634 = vpack.c.b16 %v8602, %v8601
        %v8635 = vpack.c.b16 %v8604, %v8603
        %v8636 = vpack.c.b16 %v8606, %v8605
        %v8637 = vpack.c.b16 %v8608, %v8607
        %v8638 = vpack.c.b16 %v8610, %v8609
        %v8668 = vsel %vm6264, %v8441, 0
        %8670 = vmatprep.subr.bf16.mxu0 0
        %8671 = vmatpush1.bf16.msra.mxu0 %v8618
        %8672 = vmatprep.subr.bf16.mxu0 0
        %8673 = vmatpush1.bf16.msra.mxu0 %v8617
        %8674 = vmatprep.subr.bf16.mxu0 0
        %8675 = vmatpush1.bf16.msra.mxu0 %v8616
        %8676 = vmatprep.subr.bf16.mxu0 0
        %8677 = vmatpush1.bf16.msra.mxu0 %v8615
        %8678 = vmatprep.subr.bf16.mxu0 0
        %8679 = vmatpush1.bf16.msra.mxu0 %v8614
        %8680 = vmatprep.subr.bf16.mxu0 0
        %8681 = vmatpush1.bf16.msra.mxu0 %v8613
        %8682 = vmatprep.subr.bf16.mxu0 0
        %8683 = vmatpush1.bf16.msra.mxu0 %v8612
        %8684 = vmatprep.subr.bf16.mxu0 0
        %8685 = vmatpush1.bf16.msra.mxu0 %v8611
        %8686 = vmatprep.subr.bf16.mxu0 0
        %8687 = vmatpush2.bf16.msra.mxu0 %v8626
        %8688 = vmatprep.subr.bf16.mxu0 0
        %8689 = vmatpush2.bf16.msra.mxu0 %v8625
        %8690 = vmatprep.subr.bf16.mxu0 0
        %8691 = vmatpush2.bf16.msra.mxu0 %v8624
        %8692 = vmatprep.subr.bf16.mxu0 0
        %8693 = vmatpush2.bf16.msra.mxu0 %v8623
        %8694 = vmatprep.subr.bf16.mxu0 0
        %8695 = vmatpush2.bf16.msra.mxu0 %v8622
        %8696 = vmatprep.subr.bf16.mxu0 0
        %8697 = vmatpush2.bf16.msra.mxu0 %v8621
        %8698 = vmatprep.subr.bf16.mxu0 0
        %8699 = vmatpush2.bf16.msra.mxu0 %v8620
        %8700 = vmatprep.subr.bf16.mxu0 0
        %8701 = vmatpush2.bf16.msra.mxu0 %v8619
        %8702 = vmatprep.mubr.bf16.mxu0 %v8439
        %8703 = vmatmul.mubr.bf16.gmra.mxu0 %v8438
        %v8704 = vpop.f32.mrf.mxu0
        %v8705 = vadd.f32 0.0, %v8704
        %v8706 = vpop.f32.mrf.mxu0
        %v8707 = vpop.f32.mrf.mxu0
        %v8708 = vpop.f32.mrf.mxu0
        %8709 = vdwg.mxu0
        %8710 = vmatprep.subr.bf16.mxu0 0
        %8711 = vmatpush1.bf16.msra.mxu0 %v8634
        %8712 = vmatprep.subr.bf16.mxu0 0
        %8713 = vmatpush1.bf16.msra.mxu0 %v8633
        %8714 = vmatprep.subr.bf16.mxu0 0
        %8715 = vmatpush1.bf16.msra.mxu0 %v8632
        %8716 = vmatprep.subr.bf16.mxu0 0
        %8717 = vmatpush1.bf16.msra.mxu0 %v8631
        %8718 = vmatprep.subr.bf16.mxu0 0
        %8719 = vmatpush1.bf16.msra.mxu0 %v8630
        %8720 = vmatprep.subr.bf16.mxu0 0
        %8721 = vmatpush1.bf16.msra.mxu0 %v8629
        %8722 = vmatprep.subr.bf16.mxu0 0
        %8723 = vmatpush1.bf16.msra.mxu0 %v8628
        %8724 = vmatprep.subr.bf16.mxu0 0
        %8725 = vmatpush1.bf16.msra.mxu0 %v8627
        %8726 = vmatprep.subr.bf16.mxu0 0
        %8727 = vmatpush2.bf16.msra.mxu0 0
        %8728 = vmatprep.subr.bf16.mxu0 0
        %8729 = vmatpush2.bf16.msra.mxu0 0
        %8730 = vmatprep.subr.bf16.mxu0 0
        %8731 = vmatpush2.bf16.msra.mxu0 0
        %8732 = vmatprep.subr.bf16.mxu0 0
        %8733 = vmatpush2.bf16.msra.mxu0 0
        %8734 = vmatprep.subr.bf16.mxu0 0
        %8735 = vmatpush2.bf16.msra.mxu0 %v8638
        %8736 = vmatprep.subr.bf16.mxu0 0
        %8737 = vmatpush2.bf16.msra.mxu0 %v8637
        %8738 = vmatprep.subr.bf16.mxu0 0
        %8739 = vmatpush2.bf16.msra.mxu0 %v8636
        %8740 = vmatprep.subr.bf16.mxu0 0
        %8741 = vmatpush2.bf16.msra.mxu0 %v8635
        %8742 = vmatprep.mubr.bf16.mxu0 %v8668
        %8743 = vmatmul.mubr.bf16.gmra.mxu0 %v8440
        %v8744 = vpop.f32.mrf.mxu0
        %v8745 = vadd.f32 %v8705, %v8744
        %v8746 = vpop.f32.mrf.mxu0
        %v8747 = vpop.f32.mrf.mxu0
        %v8748 = vpop.f32.mrf.mxu0
        %8749 = vdwg.mxu0
        %v8750 = vadd.f32 %v8414, %v8745
        %s8751 = scalar_lea.vmem [#allocation6], 6
        %v8752 = vld [vmem:[%s8751] ss:$8 sm:$0xf]
        %v8754 = vlaneseq
        %v8755 = vshrl.u32 %v8754, 7
        %v8756 = vsub.s32 0, %v8755
        %v8757 = vrot.slane %v8752, %v8756
        %v8758 = vlaneseq
        %v8759 = vshrl.u32 %v8758, 7
        %v8760 = vsub.s32 1, %v8759
        %v8761 = vrot.slane %v8752, %v8760
        %v8762 = vlaneseq
        %v8763 = vshrl.u32 %v8762, 7
        %v8764 = vsub.s32 2, %v8763
        %v8765 = vrot.slane %v8752, %v8764
        %v8766 = vlaneseq
        %v8767 = vshrl.u32 %v8766, 7
        %v8768 = vsub.s32 3, %v8767
        %v8769 = vrot.slane %v8752, %v8768
        %v8774 = vpack.c.bf16 %v8757, %v8757
        %v8775 = vpack.c.bf16 %v8761, %v8761
        %v8776 = vpack.c.bf16 %v8765, %v8765
        %v8777 = vpack.c.bf16 %v8769, %v8769
        %s8778 = scalar_lea.vmem %s5, 1344
        %v8779 = vld [vmem:[%s8778] sm:$0xf]
        %v8780 = vld [vmem:[%s8778 + $0x4] sm:$0xf]
        %v8781 = vld [vmem:[%s8778 + $0x8] sm:$0xf]
        %v8782 = vld [vmem:[%s8778 + $0xc] sm:$0xf]
        %v8783 = vld [vmem:[%s8778 + $0x10] sm:$0xf]
        %v8784 = vld [vmem:[%s8778 + $0x14] sm:$0xf]
        %v8785 = vld [vmem:[%s8778 + $0x18] sm:$0xf]
        %v8786 = vld [vmem:[%s8778 + $0x1c] sm:$0xf]
        %v8787 = vld [vmem:[%s8778 + $0x20] sm:$0xf]
        %v8788 = vld [vmem:[%s8778 + $0x24] sm:$0xf]
        %v8789 = vld [vmem:[%s8778 + $0x28] sm:$0xf]
        %v8790 = vld [vmem:[%s8778 + $0x2c] sm:$0xf]
        %v8791 = vld [vmem:[%s8778 + $0x30] sm:$0xf]
        %v8792 = vld [vmem:[%s8778 + $0x34] sm:$0xf]
        %v8793 = vld [vmem:[%s8778 + $0x38] sm:$0xf]
        %v8794 = vld [vmem:[%s8778 + $0x3c] sm:$0xf]
        %v8795 = vld [vmem:[%s8778 + $0x40] sm:$0xf]
        %v8796 = vld [vmem:[%s8778 + $0x44] sm:$0xf]
        %v8797 = vld [vmem:[%s8778 + $0x48] sm:$0xf]
        %v8798 = vld [vmem:[%s8778 + $0x4c] sm:$0xf]
        %v8799 = vld [vmem:[%s8778 + $0x50] sm:$0xf]
        %v8800 = vld [vmem:[%s8778 + $0x54] sm:$0xf]
        %v8801 = vld [vmem:[%s8778 + $0x58] sm:$0xf]
        %v8802 = vld [vmem:[%s8778 + $0x5c] sm:$0xf]
        %v8803 = vld [vmem:[%s8778 + $0x60] sm:$0xf]
        %v8804 = vld [vmem:[%s8778 + $0x64] sm:$0xf]
        %v8805 = vld [vmem:[%s8778 + $0x68] sm:$0xf]
        %v8806 = vld [vmem:[%s8778 + $0x6c] sm:$0xf]
        %v8807 = vld [vmem:[%s8778 + $0x70] sm:$0xf]
        %v8808 = vld [vmem:[%s8778 + $0x74] sm:$0xf]
        %v8809 = vld [vmem:[%s8778 + $0x78] sm:$0xf]
        %v8810 = vld [vmem:[%s8778 + $0x7c] sm:$0xf]
        %v8811 = vld [vmem:[%s8778 + $0x80] sm:$0xf]
        %v8812 = vld [vmem:[%s8778 + $0x84] sm:$0xf]
        %v8813 = vld [vmem:[%s8778 + $0x88] sm:$0xf]
        %v8814 = vld [vmem:[%s8778 + $0x8c] sm:$0xf]
        %v8815 = vld [vmem:[%s8778 + $0x90] sm:$0xf]
        %v8816 = vld [vmem:[%s8778 + $0x94] sm:$0xf]
        %v8817 = vld [vmem:[%s8778 + $0x98] sm:$0xf]
        %v8818 = vld [vmem:[%s8778 + $0x9c] sm:$0xf]
        %v8819 = vld [vmem:[%s8778 + $0xa0] sm:$0xf]
        %v8820 = vld [vmem:[%s8778 + $0xa4] sm:$0xf]
        %v8821 = vld [vmem:[%s8778 + $0xa8] sm:$0xf]
        %v8822 = vld [vmem:[%s8778 + $0xac] sm:$0xf]
        %v8823 = vld [vmem:[%s8778 + $0xb0] sm:$0xf]
        %v8824 = vld [vmem:[%s8778 + $0xb4] sm:$0xf]
        %v8825 = vld [vmem:[%s8778 + $0xb8] sm:$0xf]
        %v8826 = vld [vmem:[%s8778 + $0xbc] sm:$0xf]
        %v8827 = vld [vmem:[%s8778 + $0xc0] sm:$0xf]
        %v8828 = vld [vmem:[%s8778 + $0xc4] sm:$0xf]
        %v8829 = vld [vmem:[%s8778 + $0xc8] sm:$0xf]
        %v8830 = vld [vmem:[%s8778 + $0xcc] sm:$0xf]
        %v8831 = vld [vmem:[%s8778 + $0xd0] sm:$0xf]
        %v8832 = vld [vmem:[%s8778 + $0xd4] sm:$0xf]
        %v8833 = vld [vmem:[%s8778 + $0xd8] sm:$0xf]
        %v8834 = vld [vmem:[%s8778 + $0xdc] sm:$0xf]
        %v8891 = vunpack.c.l.b16 %v8779
        %v8892 = vunpack.c.l.b16 %v8780
        %v8893 = vunpack.c.l.b16 %v8781
        %v8894 = vunpack.c.l.b16 %v8782
        %v8895 = vunpack.c.l.b16 %v8783
        %v8896 = vunpack.c.l.b16 %v8784
        %v8897 = vunpack.c.l.b16 %v8785
        %v8898 = vunpack.c.l.b16 %v8786
        %v8899 = vunpack.c.l.b16 %v8787
        %v8900 = vunpack.c.l.b16 %v8788
        %v8901 = vunpack.c.l.b16 %v8789
        %v8902 = vunpack.c.l.b16 %v8790
        %v8903 = vunpack.c.l.b16 %v8791
        %v8904 = vunpack.c.l.b16 %v8792
        %v8905 = vunpack.c.l.b16 %v8793
        %v8906 = vunpack.c.l.b16 %v8794
        %v8907 = vunpack.c.l.b16 %v8795
        %v8908 = vunpack.c.l.b16 %v8796
        %v8909 = vunpack.c.l.b16 %v8797
        %v8910 = vunpack.c.l.b16 %v8798
        %v8911 = vunpack.c.l.b16 %v8799
        %v8912 = vunpack.c.l.b16 %v8800
        %v8913 = vunpack.c.l.b16 %v8801
        %v8914 = vunpack.c.l.b16 %v8802
        %v8915 = vunpack.c.l.b16 %v8803
        %v8916 = vunpack.c.l.b16 %v8804
        %v8917 = vunpack.c.l.b16 %v8805
        %v8918 = vunpack.c.l.b16 %v8806
        %v8919 = vunpack.c.l.b16 %v8807
        %v8920 = vunpack.c.l.b16 %v8808
        %v8921 = vunpack.c.l.b16 %v8809
        %v8922 = vunpack.c.l.b16 %v8810
        %v8923 = vunpack.c.l.b16 %v8811
        %v8924 = vunpack.c.l.b16 %v8812
        %v8925 = vunpack.c.l.b16 %v8813
        %v8926 = vunpack.c.l.b16 %v8814
        %v8927 = vunpack.c.l.b16 %v8815
        %v8928 = vunpack.c.l.b16 %v8816
        %v8929 = vunpack.c.l.b16 %v8817
        %v8930 = vunpack.c.l.b16 %v8818
        %v8931 = vunpack.c.l.b16 %v8819
        %v8932 = vunpack.c.l.b16 %v8820
        %v8933 = vunpack.c.l.b16 %v8821
        %v8934 = vunpack.c.l.b16 %v8822
        %v8935 = vunpack.c.l.b16 %v8823
        %v8936 = vunpack.c.l.b16 %v8824
        %v8937 = vunpack.c.l.b16 %v8825
        %v8938 = vunpack.c.l.b16 %v8826
        %v8939 = vunpack.c.l.b16 %v8827
        %v8940 = vunpack.c.l.b16 %v8828
        %v8941 = vunpack.c.l.b16 %v8829
        %v8942 = vunpack.c.l.b16 %v8830
        %v8943 = vunpack.c.l.b16 %v8831
        %v8944 = vunpack.c.l.b16 %v8832
        %v8945 = vunpack.c.l.b16 %v8833
        %v8946 = vunpack.c.l.b16 %v8834
        %v8947 = vpack.c.b16 %v8892, %v8891
        %v8948 = vpack.c.b16 %v8894, %v8893
        %v8949 = vpack.c.b16 %v8896, %v8895
        %v8950 = vpack.c.b16 %v8898, %v8897
        %v8951 = vpack.c.b16 %v8900, %v8899
        %v8952 = vpack.c.b16 %v8902, %v8901
        %v8953 = vpack.c.b16 %v8904, %v8903
        %v8954 = vpack.c.b16 %v8906, %v8905
        %v8955 = vpack.c.b16 %v8908, %v8907
        %v8956 = vpack.c.b16 %v8910, %v8909
        %v8957 = vpack.c.b16 %v8912, %v8911
        %v8958 = vpack.c.b16 %v8914, %v8913
        %v8959 = vpack.c.b16 %v8916, %v8915
        %v8960 = vpack.c.b16 %v8918, %v8917
        %v8961 = vpack.c.b16 %v8920, %v8919
        %v8962 = vpack.c.b16 %v8922, %v8921
        %v8963 = vpack.c.b16 %v8924, %v8923
        %v8964 = vpack.c.b16 %v8926, %v8925
        %v8965 = vpack.c.b16 %v8928, %v8927
        %v8966 = vpack.c.b16 %v8930, %v8929
        %v8967 = vpack.c.b16 %v8932, %v8931
        %v8968 = vpack.c.b16 %v8934, %v8933
        %v8969 = vpack.c.b16 %v8936, %v8935
        %v8970 = vpack.c.b16 %v8938, %v8937
        %v8971 = vpack.c.b16 %v8940, %v8939
        %v8972 = vpack.c.b16 %v8942, %v8941
        %v8973 = vpack.c.b16 %v8944, %v8943
        %v8974 = vpack.c.b16 %v8946, %v8945
        %v9004 = vsel %vm6264, %v8777, 0
        %9006 = vmatprep.subr.bf16.mxu0 0
        %9007 = vmatpush1.bf16.msra.mxu0 %v8954
        %9008 = vmatprep.subr.bf16.mxu0 0
        %9009 = vmatpush1.bf16.msra.mxu0 %v8953
        %9010 = vmatprep.subr.bf16.mxu0 0
        %9011 = vmatpush1.bf16.msra.mxu0 %v8952
        %9012 = vmatprep.subr.bf16.mxu0 0
        %9013 = vmatpush1.bf16.msra.mxu0 %v8951
        %9014 = vmatprep.subr.bf16.mxu0 0
        %9015 = vmatpush1.bf16.msra.mxu0 %v8950
        %9016 = vmatprep.subr.bf16.mxu0 0
        %9017 = vmatpush1.bf16.msra.mxu0 %v8949
        %9018 = vmatprep.subr.bf16.mxu0 0
        %9019 = vmatpush1.bf16.msra.mxu0 %v8948
        %9020 = vmatprep.subr.bf16.mxu0 0
        %9021 = vmatpush1.bf16.msra.mxu0 %v8947
        %9022 = vmatprep.subr.bf16.mxu0 0
        %9023 = vmatpush2.bf16.msra.mxu0 %v8962
        %9024 = vmatprep.subr.bf16.mxu0 0
        %9025 = vmatpush2.bf16.msra.mxu0 %v8961
        %9026 = vmatprep.subr.bf16.mxu0 0
        %9027 = vmatpush2.bf16.msra.mxu0 %v8960
        %9028 = vmatprep.subr.bf16.mxu0 0
        %9029 = vmatpush2.bf16.msra.mxu0 %v8959
        %9030 = vmatprep.subr.bf16.mxu0 0
        %9031 = vmatpush2.bf16.msra.mxu0 %v8958
        %9032 = vmatprep.subr.bf16.mxu0 0
        %9033 = vmatpush2.bf16.msra.mxu0 %v8957
        %9034 = vmatprep.subr.bf16.mxu0 0
        %9035 = vmatpush2.bf16.msra.mxu0 %v8956
        %9036 = vmatprep.subr.bf16.mxu0 0
        %9037 = vmatpush2.bf16.msra.mxu0 %v8955
        %9038 = vmatprep.mubr.bf16.mxu0 %v8775
        %9039 = vmatmul.mubr.bf16.gmra.mxu0 %v8774
        %v9040 = vpop.f32.mrf.mxu0
        %v9041 = vadd.f32 0.0, %v9040
        %v9042 = vpop.f32.mrf.mxu0
        %v9043 = vpop.f32.mrf.mxu0
        %v9044 = vpop.f32.mrf.mxu0
        %9045 = vdwg.mxu0
        %9046 = vmatprep.subr.bf16.mxu0 0
        %9047 = vmatpush1.bf16.msra.mxu0 %v8970
        %9048 = vmatprep.subr.bf16.mxu0 0
        %9049 = vmatpush1.bf16.msra.mxu0 %v8969
        %9050 = vmatprep.subr.bf16.mxu0 0
        %9051 = vmatpush1.bf16.msra.mxu0 %v8968
        %9052 = vmatprep.subr.bf16.mxu0 0
        %9053 = vmatpush1.bf16.msra.mxu0 %v8967
        %9054 = vmatprep.subr.bf16.mxu0 0
        %9055 = vmatpush1.bf16.msra.mxu0 %v8966
        %9056 = vmatprep.subr.bf16.mxu0 0
        %9057 = vmatpush1.bf16.msra.mxu0 %v8965
        %9058 = vmatprep.subr.bf16.mxu0 0
        %9059 = vmatpush1.bf16.msra.mxu0 %v8964
        %9060 = vmatprep.subr.bf16.mxu0 0
        %9061 = vmatpush1.bf16.msra.mxu0 %v8963
        %9062 = vmatprep.subr.bf16.mxu0 0
        %9063 = vmatpush2.bf16.msra.mxu0 0
        %9064 = vmatprep.subr.bf16.mxu0 0
        %9065 = vmatpush2.bf16.msra.mxu0 0
        %9066 = vmatprep.subr.bf16.mxu0 0
        %9067 = vmatpush2.bf16.msra.mxu0 0
        %9068 = vmatprep.subr.bf16.mxu0 0
        %9069 = vmatpush2.bf16.msra.mxu0 0
        %9070 = vmatprep.subr.bf16.mxu0 0
        %9071 = vmatpush2.bf16.msra.mxu0 %v8974
        %9072 = vmatprep.subr.bf16.mxu0 0
        %9073 = vmatpush2.bf16.msra.mxu0 %v8973
        %9074 = vmatprep.subr.bf16.mxu0 0
        %9075 = vmatpush2.bf16.msra.mxu0 %v8972
        %9076 = vmatprep.subr.bf16.mxu0 0
        %9077 = vmatpush2.bf16.msra.mxu0 %v8971
        %9078 = vmatprep.mubr.bf16.mxu0 %v9004
        %9079 = vmatmul.mubr.bf16.gmra.mxu0 %v8776
        %v9080 = vpop.f32.mrf.mxu0
        %v9081 = vadd.f32 %v9041, %v9080
        %v9082 = vpop.f32.mrf.mxu0
        %v9083 = vpop.f32.mrf.mxu0
        %v9084 = vpop.f32.mrf.mxu0
        %9085 = vdwg.mxu0
        %v9086 = vadd.f32 %v8750, %v9081
        %v9087 = vmax.f32 %v9086, 0.0
        %v9088 = vpack.c.bf16 %v9087, %v9087
        %v9089 = vld [vmem:[%s7] sm:$0xf]
        %v9090 = vld [vmem:[%s7 + $0x4] sm:$0xf]
        %v9091 = vld [vmem:[%s7 + $0x8] sm:$0xf]
        %v9092 = vld [vmem:[%s7 + $0xc] sm:$0xf]
        %v9093 = vld [vmem:[%s7 + $0x10] sm:$0xf]
        %v9094 = vld [vmem:[%s7 + $0x14] sm:$0xf]
        %v9095 = vld [vmem:[%s7 + $0x18] sm:$0xf]
        %v9096 = vld [vmem:[%s7 + $0x1c] sm:$0xf]
        %v9097 = vld [vmem:[%s7 + $0x20] sm:$0xf]
        %v9098 = vld [vmem:[%s7 + $0x24] sm:$0xf]
        %v9099 = vld [vmem:[%s7 + $0x28] sm:$0xf]
        %v9100 = vld [vmem:[%s7 + $0x2c] sm:$0xf]
        %v9101 = vld [vmem:[%s7 + $0x30] sm:$0xf]
        %v9102 = vld [vmem:[%s7 + $0x34] sm:$0xf]
        %v9103 = vld [vmem:[%s7 + $0x38] sm:$0xf]
        %v9104 = vld [vmem:[%s7 + $0x3c] sm:$0xf]
        %v9105 = vld [vmem:[%s8] sm:$0x1]
        %v9122 = vunpack.c.l.b16 %v9089
        %v9123 = vunpack.c.l.b16 %v9090
        %v9124 = vunpack.c.l.b16 %v9091
        %v9125 = vunpack.c.l.b16 %v9092
        %v9126 = vunpack.c.l.b16 %v9093
        %v9127 = vunpack.c.l.b16 %v9094
        %v9128 = vunpack.c.l.b16 %v9095
        %v9129 = vunpack.c.l.b16 %v9096
        %v9130 = vunpack.c.l.b16 %v9097
        %v9131 = vunpack.c.l.b16 %v9098
        %v9132 = vunpack.c.l.b16 %v9099
        %v9133 = vunpack.c.l.b16 %v9100
        %v9134 = vunpack.c.l.b16 %v9101
        %v9135 = vunpack.c.l.b16 %v9102
        %v9136 = vunpack.c.l.b16 %v9103
        %v9137 = vunpack.c.l.b16 %v9104
        %v9138 = vpack.c.b16 %v9123, %v9122
        %v9139 = vpack.c.b16 %v9125, %v9124
        %v9140 = vpack.c.b16 %v9127, %v9126
        %v9141 = vpack.c.b16 %v9129, %v9128
        %v9142 = vpack.c.b16 %v9131, %v9130
        %v9143 = vpack.c.b16 %v9133, %v9132
        %v9144 = vpack.c.b16 %v9135, %v9134
        %v9145 = vpack.c.b16 %v9137, %v9136
        %9154 = vmatprep.subr.bf16.mxu0 0
        %9155 = vmatpush1.bf16.msra.mxu0 %v9145
        %9156 = vmatprep.subr.bf16.mxu0 0
        %9157 = vmatpush1.bf16.msra.mxu0 %v9144
        %9158 = vmatprep.subr.bf16.mxu0 0
        %9159 = vmatpush1.bf16.msra.mxu0 %v9143
        %9160 = vmatprep.subr.bf16.mxu0 0
        %9161 = vmatpush1.bf16.msra.mxu0 %v9142
        %9162 = vmatprep.subr.bf16.mxu0 0
        %9163 = vmatpush1.bf16.msra.mxu0 %v9141
        %9164 = vmatprep.subr.bf16.mxu0 0
        %9165 = vmatpush1.bf16.msra.mxu0 %v9140
        %9166 = vmatprep.subr.bf16.mxu0 0
        %9167 = vmatpush1.bf16.msra.mxu0 %v9139
        %9168 = vmatprep.subr.bf16.mxu0 0
        %9169 = vmatpush1.bf16.msra.mxu0 %v9138
        %9170 = vmatprep.subr.bf16.mxu0 0
        %9171 = vmatpush2.bf16.msra.mxu0 0
        %9172 = vmatprep.subr.bf16.mxu0 0
        %9173 = vmatpush2.bf16.msra.mxu0 0
        %9174 = vmatprep.subr.bf16.mxu0 0
        %9175 = vmatpush2.bf16.msra.mxu0 0
        %9176 = vmatprep.subr.bf16.mxu0 0
        %9177 = vmatpush2.bf16.msra.mxu0 0
        %9178 = vmatprep.subr.bf16.mxu0 0
        %9179 = vmatpush2.bf16.msra.mxu0 0
        %9180 = vmatprep.subr.bf16.mxu0 0
        %9181 = vmatpush2.bf16.msra.mxu0 0
        %9182 = vmatprep.subr.bf16.mxu0 0
        %9183 = vmatpush2.bf16.msra.mxu0 0
        %9184 = vmatprep.subr.bf16.mxu0 0
        %9185 = vmatpush2.bf16.msra.mxu0 0
        %9186 = vmatprep.mubr.bf16.mxu0 0
        %9187 = vmatmul.mubr.bf16.gmra.mxu0 %v9088
        %v9188 = vpop.f32.mrf.mxu0
        %v9189 = vadd.f32 %v9105, %v9188
        %v9190 = vpop.f32.mrf.mxu0
        %v9191 = vpop.f32.mrf.mxu0
        %v9192 = vpop.f32.mrf.mxu0
        %9193 = vdwg.mxu0
        %9194 = vst [vmem:[%s324] sm:$0x1] %v9189
        %s9195 = sand.u32 %s225, 1
        %s9196 = scalar_lea.sflag [#allocation8], %s9195
        %s9197 = sand.u32 %s225, 1
        %s9198 = scalar_lea.vmem [#allocation7], %s9197
        // Predicated region
        $region57: #{cnn_forward.1} parent=55 // pred_check
          %p9199 = pneg %p235
        $region58: #{cnn_forward.1} parent=55 // pred_check_branch
          %9201 = sbr.rel (%p9199) target = $region60
        $region59: #{cnn_forward.1} parent=55 // pred_region
          %s9203 = ssub.s32 16, 16
          %9204 = vsyncadd %s9196, %s9203
          %s9205 = smul.addr %s23, 16
          %s9206 = scalar_lea.hbm %s9, %s9205
          %s9208 = sshll.u32 %s9198, 4
          %s9209 = int_to_ptr.vmem [resolvable:$true] %s9208
          %9211 = dma.vmem_to_hbm [thread:$0]  %s9209, 16, %s9206, %s9196
        $region60: #{cnn_forward.1} parent=55 // pred_fallthru
          _
      $region56: #{cnn_forward.1} parent=5 // pred_fallthru
        _
      %p9212 = scmp.le.s32.totalorder 2, %s18
      // Predicated region
      $region61: #{cnn_forward.1} parent=5 // pred_check
        %p9213 = pneg %p9212
      $region62: #{cnn_forward.1} parent=5 // pred_check_branch
        %9215 = sbr.rel (%p9213) target = $region64
      $region63: #{cnn_forward.1} parent=5 // pred_region
        %s9216 = ssub.s32 %s18, 2
        // Predicated region
        $region65: #{cnn_forward.1} parent=63 // pred_check
          %p9217 = pneg %p241
        $region66: #{cnn_forward.1} parent=63 // pred_check_branch
          %9219 = sbr.rel (%p9217) target = $region68
        $region67: #{cnn_forward.1} parent=63 // pred_region
          %s9220 = sand.u32 %s226, 1
          %s9221 = scalar_lea.sflag [#allocation8], %s9220
          %s9222 = sand.u32 %s226, 1
          %s9223 = scalar_lea.vmem [#allocation7], %s9222
          %9224 = dma.done %s9221, 16
        $region68: #{cnn_forward.1} parent=63 // pred_fallthru
          _
      $region64: #{cnn_forward.1} parent=5 // pred_fallthru
        _
    $region6: #{cnn_forward.1} parent=1 // loop_footer
      %s22 = sadd.s32 1, %s18
    $region7: #{cnn_forward.1} parent=1 // loop_footer_branch
      %17 = sbr.rel target = $region3
    $region8: #{cnn_forward.1} parent=1 // loop_exit
      _
    %9225 = vsyncpa [#allocation8], 1
    %s9226 = scalar_lea.sflag [#allocation8], 1
    %9227 = vsyncpa %s9226, 1

</llo_original>
